<compile_context>
chip_gen: v5e
topology: v5e:2x2
jax: 0.10.0
libtpu: 0.0.40
codegen_flags: <defaults>
</compile_context>

<pallas_src>
import functools

import jax
import jax.numpy as jnp
from jax import lax
from jax.experimental import pallas as pl
from jax.experimental.pallas import tpu as pltpu


def _round_up(x, m):
    return (x + m - 1) // m * m


# -----------------------------------------------------------------------------
# Fused Pallas kernel: full T x num_layers ConvLSTM recurrence + output conv
# -----------------------------------------------------------------------------
def _make_kernel(num_layers, Cin, W, Wp, hidden_dims, pad_top, M, kh, kw, T):
    taps = [(ky - kh // 2, kx - kw // 2) for ky in range(kh) for kx in range(kw)]

    def kernel(*refs):
        # refs: x, (w, b) per layer, w_out, b_out, out, scratch
        x_ref = refs[0]
        pos = 1
        layer_w = []
        for _ in range(num_layers):
            layer_w.append((refs[pos], refs[pos + 1]))
            pos += 2
        w_out_ref = refs[pos]
        b_out_ref = refs[pos + 1]
        out_ref = refs[pos + 2]
        scratch = refs[pos + 3:]
        comb_refs = scratch[0::2]   # (hrows, hd + cin) bf16: [h_{t-1} | input_t]
        c_refs = scratch[1::2]      # (M, hd) f32 cell state

        # Fresh state for this batch item.  Halo rows and gap columns are
        # zeroed here; only rows pl.ds(pad_top, M) are written afterwards,
        # which preserves the zero "same"-padding invariant of the row-shift
        # convolution below.
        for l in range(num_layers):
            comb_refs[l][...] = jnp.zeros_like(comb_refs[l])
            c_refs[l][...] = jnp.zeros_like(c_refs[l])

        # 1.0 on real pixels, 0.0 on the zero gap columns appended to each
        # image row.  Hoisted out of the time loop (no per-tap masks).
        xpos = lax.broadcasted_iota(jnp.int32, (M, 1), 0) % Wp
        row_mask = (xpos < W).astype(jnp.float32)

        def conv_same(comb_ref, w_ref, b_ref, n_out):
            # kh*kw accumulating MXU dots over row-shifted windows of the
            # width-gapped, spatially-flattened buffer (bf16 operands,
            # f32 accumulation).  acc starts from the broadcast bias.
            acc = jnp.broadcast_to(b_ref[...], (M, n_out)).astype(jnp.float32)
            for tap, (dy, dx) in enumerate(taps):
                start = pad_top + dy * Wp + dx            # static offset
                acc = acc + jnp.dot(comb_ref[pl.ds(start, M), :], w_ref[tap],
                                    preferred_element_type=jnp.float32)
            return acc

        def step(t, h_last):
            # layer-0 input: frame t into the input columns of comb_0
            comb_refs[0][pl.ds(pad_top, M),
                         hidden_dims[0]:hidden_dims[0] + Cin] = x_ref[0, t]
            for l in range(num_layers):
                hd = hidden_dims[l]
                w_ref, b_ref = layer_w[l]
                z = conv_same(comb_refs[l], w_ref, b_ref, 4 * hd)
                sg = jax.nn.sigmoid(z[:, :3 * hd])        # i, f, o gates
                g = jnp.tanh(z[:, 3 * hd:])               # g gate
                i_g = sg[:, 0:hd]
                f_g = sg[:, hd:2 * hd]
                o_g = sg[:, 2 * hd:3 * hd]
                c_new = f_g * c_refs[l][...] + i_g * g
                h_new = (o_g * jnp.tanh(c_new)) * row_mask  # zero gap columns
                c_refs[l][...] = c_new
                hb = h_new.astype(comb_refs[l].dtype)
                comb_refs[l][pl.ds(pad_top, M), 0:hd] = hb  # hidden for t+1
                if l + 1 < num_layers:                      # input for layer l+1
                    hd_n = hidden_dims[l + 1]
                    comb_refs[l + 1][pl.ds(pad_top, M), hd_n:hd_n + hd] = hb
                if l == num_layers - 1:
                    h_last = h_new                          # keep f32 copy live
            return h_last

        h_T = lax.fori_loop(0, T, step,
                            jnp.zeros((M, hidden_dims[-1]), jnp.float32))

        # fused 1x1 output conv + bias + clamp (runs once per batch item)
        y = jnp.dot(h_T, w_out_ref[...], preferred_element_type=jnp.float32)
        out_ref[0] = jnp.clip(y + b_out_ref[...], 0.0, 1.0)

    return kernel


# -----------------------------------------------------------------------------
# Wrapper: layout plumbing + pallas_call
# -----------------------------------------------------------------------------
def convlstm_forward_pallas(x, params, hidden_dims, kernel_size):
    """x: (B, T, C, H, W) NCHW frames (PyTorch convention).

    Returns (B, 1, output_dim, H, W), matching the PyTorch module.
    """
    B, T, Cin, H, W = x.shape
    kh, kw = kernel_size
    num_layers = len(hidden_dims)

    Wp = W + (kw // 2)                      # gapped row width (zero gap cols)
    M = H * Wp                              # flat rows fed to the MXU
    halo = (kh // 2) * Wp + (kw // 2)       # rows of flat halo needed
    pad_top = _round_up(halo, 8)            # 8-aligned interior offset
    hrows = _round_up(pad_top + M + halo, 8)

    # channels-last, append zero gap columns, flatten spatial, cast to bf16
    x_cl = jnp.transpose(x, (0, 1, 3, 4, 2))                     # (B,T,H,W,C)
    x_g = jnp.pad(x_cl, ((0, 0), (0, 0), (0, 0), (0, Wp - W), (0, 0)))
    x_g = x_g.reshape(B, T, M, Cin).astype(jnp.bfloat16)

    inputs = [x_g]
    in_specs = [pl.BlockSpec((1, T, M, Cin), lambda b: (b, 0, 0, 0))]

    cin_l = Cin
    for l, hd in enumerate(hidden_dims):
        cell = params["cells"][l]
        # fuse [hidden | input] conv weights into one per-tap K dimension
        w = jnp.concatenate([cell["wh"], cell["wx"]], axis=2)
        w = w.reshape(kh * kw, hd + cin_l, 4 * hd).astype(jnp.bfloat16)
        inputs += [w, cell["b"]]
        in_specs += [
            pl.BlockSpec((kh * kw, hd + cin_l, 4 * hd), lambda b: (0, 0, 0)),
            pl.BlockSpec((1, 4 * hd), lambda b: (0, 0)),
        ]
        cin_l = hd

    w_out = params["out"]["w"]
    b_out = params["out"]["b"]
    Cout = w_out.shape[-1]
    inputs += [w_out, b_out]
    in_specs += [pl.BlockSpec((hidden_dims[-1], Cout), lambda b: (0, 0)),
                 pl.BlockSpec((1, Cout), lambda b: (0, 0))]

    scratch_shapes = []
    cin_l = Cin
    for hd in hidden_dims:
        scratch_shapes += [pltpu.VMEM((hrows, hd + cin_l), jnp.bfloat16),
                           pltpu.VMEM((M, hd), jnp.float32)]
        cin_l = hd

    kernel = _make_kernel(num_layers, Cin, W, Wp, tuple(hidden_dims),
                          pad_top, M, kh, kw, T)

    out_flat = pl.pallas_call(
        kernel,
        out_shape=jax.ShapeDtypeStruct((B, M, Cout), jnp.float32),
        grid_spec=pltpu.PrefetchScalarGridSpec(
            num_scalar_prefetch=0,
            grid=(B,),
            in_specs=in_specs,
            out_specs=pl.BlockSpec((1, M, Cout), lambda b: (b, 0, 0)),
            scratch_shapes=scratch_shapes,
        ),
        compiler_params=pltpu.CompilerParams(
            dimension_semantics=("parallel",)),   # shards batch across v7x TCs
    )(*inputs)

    out = out_flat.reshape(B, H, Wp, Cout)[:, :, :W, :]   # drop gap columns
    return jnp.transpose(out, (0, 3, 1, 2))[:, None]      # (B, 1, Cout, H, W)


@functools.partial(jax.jit, static_argnames=("hidden_dims", "kernel_size"))
def convlstm_forward(x, params, hidden_dims, kernel_size):
    return convlstm_forward_pallas(x, params, hidden_dims, kernel_size)


# -----------------------------------------------------------------------------
# Parameters
# -----------------------------------------------------------------------------
def init_params(key, input_dim, hidden_dims, output_dim, kernel_size):
    kh, kw = kernel_size
    params = {"cells": [], "out": None}
    cin = input_dim
    for hd in hidden_dims:
        key, k1, k2, k3 = jax.random.split(key, 4)
        scale = 1.0 / jnp.sqrt(jnp.float32(kh * kw * (cin + hd)))
        wx = jax.random.normal(k1, (kh, kw, cin, 4 * hd), jnp.float32) * scale
        wh = jax.random.normal(k2, (kh, kw, hd, 4 * hd), jnp.float32) * scale
        b = jax.random.normal(k3, (1, 4 * hd), jnp.float32) * 0.01
        params["cells"].append({"wx": wx, "wh": wh, "b": b})
        cin = hd
    key, k1, k2 = jax.random.split(key, 3)
    w_out = jax.random.normal(k1, (hidden_dims[-1], output_dim), jnp.float32)
    w_out = w_out / jnp.sqrt(jnp.float32(hidden_dims[-1]))
    b_out = jax.random.normal(k2, (1, output_dim), jnp.float32) * 0.01
    params["out"] = {"w": w_out, "b": b_out}
    return params


# -----------------------------------------------------------------------------
# Pure-JAX (XLA) reference for correctness checking
# -----------------------------------------------------------------------------
def convlstm_forward_reference(x, params, hidden_dims, kernel_size):
    B, T, Cin, H, W = x.shape
    xc = jnp.transpose(x, (0, 1, 3, 4, 2))           # (B,T,H,W,C)
    hs = [jnp.zeros((B, H, W, hd), jnp.float32) for hd in hidden_dims]
    cs = [jnp.zeros((B, H, W, hd), jnp.float32) for hd in hidden_dims]
    dn = ("NHWC", "HWIO", "NHWC")
    for t in range(T):
        inp = xc[:, t]
        for l, hd in enumerate(hidden_dims):
            cell = params["cells"][l]
            w = jnp.concatenate([cell["wx"], cell["wh"]], axis=2)  # HWIO
            comb = jnp.concatenate([inp, hs[l]], axis=-1)
            z = lax.conv_general_dilated(
                comb, w, (1, 1), "SAME", dimension_numbers=dn,
                precision=lax.Precision.HIGHEST)
            z = z + cell["b"].reshape(1, 1, 1, -1)
            i = jax.nn.sigmoid(z[..., 0 * hd:1 * hd])
            f = jax.nn.sigmoid(z[..., 1 * hd:2 * hd])
            o = jax.nn.sigmoid(z[..., 2 * hd:3 * hd])
            g = jnp.tanh(z[..., 3 * hd:4 * hd])
            cs[l] = f * cs[l] + i * g
            hs[l] = o * jnp.tanh(cs[l])
            inp = hs[l]
    y = jnp.einsum("bhwc,cd->bhwd", hs[-1], params["out"]["w"],
                   precision=lax.Precision.HIGHEST)
    y = jnp.clip(y + params["out"]["b"].reshape(1, 1, 1, -1), 0.0, 1.0)
    return jnp.transpose(y, (0, 3, 1, 2))[:, None]


# -----------------------------------------------------------------------------
# Main
# -----------------------------------------------------------------------------
if __name__ == "__main__":
    B, T, Cin, H, W = 2, 8, 4, 16, 16
    hidden_dims = (32, 32)
    output_dim = 4
    kernel_size = (3, 3)

    key = jax.random.PRNGKey(0)
    key, pkey, xkey = jax.random.split(key, 3)
    params = init_params(pkey, Cin, hidden_dims, output_dim, kernel_size)
    x = jax.random.normal(xkey, (B, T, Cin, H, W), jnp.float32)

    out = convlstm_forward(x, params, hidden_dims, kernel_size)
    out = jax.block_until_ready(out)

    assert out.shape == (B, 1, output_dim, H, W), out.shape
    assert bool(jnp.all(out >= 0.0)) and bool(jnp.all(out <= 1.0))

    ref = jax.block_until_ready(
        convlstm_forward_reference(x, params, hidden_dims, kernel_size))
    max_err = float(jnp.max(jnp.abs(out - ref)))
    # bf16 conv operands with f32 accumulation/state vs. an f32 HIGHEST-precision
    # reference; genuine layout/gate bugs produce O(0.3+) errors on these
    # random weights, so this still gates correctness tightly.
    assert max_err < 7.5e-2, f"max abs error vs reference: {max_err}"

    print("KERNEL_OK")
</pallas_src>

<mosaic_0001>
module attributes {stable_mosaic.version = 11 : i64} {
  func.func @kernel(%arg0: i32, %arg1: memref<1x8x272x4xbf16, #tpu.memory_space<vmem>>, %arg2: memref<9x36x128xbf16, #tpu.memory_space<vmem>>, %arg3: memref<1x128xf32, #tpu.memory_space<vmem>>, %arg4: memref<9x64x128xbf16, #tpu.memory_space<vmem>>, %arg5: memref<1x128xf32, #tpu.memory_space<vmem>>, %arg6: memref<32x4xf32, #tpu.memory_space<vmem>>, %arg7: memref<1x4xf32, #tpu.memory_space<vmem>>, %arg8: memref<1x272x4xf32, #tpu.memory_space<vmem>>, %arg9: memref<320x36xbf16, #tpu.memory_space<vmem>>, %arg10: memref<272x32xf32, #tpu.memory_space<vmem>>, %arg11: memref<320x64xbf16, #tpu.memory_space<vmem>>, %arg12: memref<272x32xf32, #tpu.memory_space<vmem>>) attributes {dimension_semantics = [#tpu.dimension_semantics<parallel>], iteration_bounds = array<i64: 2>, scalar_prefetch = 0 : i64, scratch_operands = 4 : i64, tpu.core_type = #tpu.core_type<tc>, window_params = [{transform_indices = @transform_0, window_bounds = array<i64: 1, 8, 272, 4>}, {pipeline_mode = #tpu.pipeline_mode<synchronous>, transform_indices = @transform_1, window_bounds = array<i64: 9, 36, 128>}, {pipeline_mode = #tpu.pipeline_mode<synchronous>, transform_indices = @transform_2, window_bounds = array<i64: 1, 128>}, {pipeline_mode = #tpu.pipeline_mode<synchronous>, transform_indices = @transform_3, window_bounds = array<i64: 9, 64, 128>}, {pipeline_mode = #tpu.pipeline_mode<synchronous>, transform_indices = @transform_4, window_bounds = array<i64: 1, 128>}, {pipeline_mode = #tpu.pipeline_mode<synchronous>, transform_indices = @transform_5, window_bounds = array<i64: 32, 4>}, {pipeline_mode = #tpu.pipeline_mode<synchronous>, transform_indices = @transform_6, window_bounds = array<i64: 1, 4>}, {transform_indices = @transform_7, window_bounds = array<i64: 1, 272, 4>}]} {
    %cst = arith.constant 0.000000e+00 : bf16
    %0 = vector.broadcast %cst : bf16 to vector<320x36xbf16>
    %c0 = arith.constant 0 : index
    %c0_0 = arith.constant 0 : index
    %1 = vector.load %arg9[%c0, %c0_0] : memref<320x36xbf16, #tpu.memory_space<vmem>>, vector<320x36xbf16>
    tpu.vector_store %arg9[%c0, %c0_0], %0 {strides = array<i32>} : memref<320x36xbf16, #tpu.memory_space<vmem>>, vector<320x36xbf16>,
    %cst_1 = arith.constant 0.000000e+00 : f32
    %2 = vector.broadcast %cst_1 : f32 to vector<272x32xf32>
    %c0_2 = arith.constant 0 : index
    %c0_3 = arith.constant 0 : index
    %3 = vector.load %arg10[%c0_2, %c0_3] : memref<272x32xf32, #tpu.memory_space<vmem>>, vector<272x32xf32>
    tpu.vector_store %arg10[%c0_2, %c0_3], %2 {strides = array<i32>} : memref<272x32xf32, #tpu.memory_space<vmem>>, vector<272x32xf32>,
    %cst_4 = arith.constant 0.000000e+00 : bf16
    %4 = vector.broadcast %cst_4 : bf16 to vector<320x64xbf16>
    %c0_5 = arith.constant 0 : index
    %c0_6 = arith.constant 0 : index
    %5 = vector.load %arg11[%c0_5, %c0_6] : memref<320x64xbf16, #tpu.memory_space<vmem>>, vector<320x64xbf16>
    tpu.vector_store %arg11[%c0_5, %c0_6], %4 {strides = array<i32>} : memref<320x64xbf16, #tpu.memory_space<vmem>>, vector<320x64xbf16>,
    %cst_7 = arith.constant 0.000000e+00 : f32
    %6 = vector.broadcast %cst_7 : f32 to vector<272x32xf32>
    %c0_8 = arith.constant 0 : index
    %c0_9 = arith.constant 0 : index
    %7 = vector.load %arg12[%c0_8, %c0_9] : memref<272x32xf32, #tpu.memory_space<vmem>>, vector<272x32xf32>
    tpu.vector_store %arg12[%c0_8, %c0_9], %6 {strides = array<i32>} : memref<272x32xf32, #tpu.memory_space<vmem>>, vector<272x32xf32>,
    %8 = tpu.iota {dimensions = array<i32: 0>} : vector<272x1xi32>
    %c17_i32 = arith.constant 17 : i32
    %c0_i32 = arith.constant 0 : i32
    %9 = arith.cmpi eq, %c17_i32, %c0_i32 : i32
    %c1_i32 = arith.constant 1 : i32
    %10 = arith.select %9, %c1_i32, %c17_i32 : i32
    %11 = vector.broadcast %10 : i32 to vector<272x1xi32>
    %12 = arith.remsi %8, %11 : vector<272x1xi32>
    %c0_i32_10 = arith.constant 0 : i32
    %13 = vector.broadcast %c0_i32_10 : i32 to vector<272x1xi32>
    %14 = arith.cmpi ne, %12, %13 : vector<272x1xi32>
    %c0_i32_11 = arith.constant 0 : i32
    %15 = vector.broadcast %c0_i32_11 : i32 to vector<272x1xi32>
    %16 = arith.cmpi slt, %12, %15 : vector<272x1xi32>
    %c0_i32_12 = arith.constant 0 : i32
    %17 = arith.cmpi slt, %10, %c0_i32_12 : i32
    %18 = vector.broadcast %17 : i1 to vector<272x1xi1>
    %19 = vector.broadcast %18 : vector<272x1xi1> to vector<272x1xi1>
    %20 = arith.xori %16, %19 : vector<272x1xi1>
    %21 = arith.andi %20, %14 : vector<272x1xi1>
    %22 = vector.broadcast %10 : i32 to vector<272x1xi32>
    %23 = arith.addi %12, %22 : vector<272x1xi32>
    %24 = arith.select %21, %23, %12 : vector<272x1xi1>, vector<272x1xi32>
    %c16_i32 = arith.constant 16 : i32
    %25 = vector.broadcast %c16_i32 : i32 to vector<272x1xi32>
    %26 = arith.cmpi slt, %24, %25 : vector<272x1xi32>
    %27 = arith.extui %26 : vector<272x1xi1> to vector<272x1xi32>
    %28 = arith.sitofp %27 : vector<272x1xi32> to vector<272x1xf32>
    %cst_13 = arith.constant 0.000000e+00 : f32
    %29 = vector.broadcast %cst_13 : f32 to vector<272x32xf32>
    %c0_i32_14 = arith.constant 0 : i32
    %c8_i32 = arith.constant 8 : i32
    %30 = arith.addi %c0_i32_14, %c8_i32 : i32
    %c1_i32_15 = arith.constant 1 : i32
    %31 = scf.for %arg13 = %c0_i32_14 to %30 step %c1_i32_15 iter_args(%arg14 = %29) -> (vector<272x32xf32>)  : i32 {
      %c0_27 = arith.constant 0 : index
      %44 = arith.index_cast %arg13 : i32 to index
      %c0_28 = arith.constant 0 : index
      %c0_29 = arith.constant 0 : index
      %45 = vector.load %arg1[%c0_27, %44, %c0_28, %c0_29] : memref<1x8x272x4xbf16, #tpu.memory_space<vmem>>, vector<1x1x272x4xbf16>
      %46 = vector.shape_cast %45 : vector<1x1x272x4xbf16> to vector<272x4xbf16>
      %c24 = arith.constant 24 : index
      %c32 = arith.constant 32 : index
      %47 = vector.load %arg9[%c24, %c32] : memref<320x36xbf16, #tpu.memory_space<vmem>>, vector<272x4xbf16>
      tpu.vector_store %arg9[%c24, %c32], %46 {strides = array<i32>} : memref<320x36xbf16, #tpu.memory_space<vmem>>, vector<272x4xbf16>,
      %c0_30 = arith.constant 0 : index
      %c0_31 = arith.constant 0 : index
      %48 = vector.load %arg3[%c0_30, %c0_31] : memref<1x128xf32, #tpu.memory_space<vmem>>, vector<1x128xf32>
      %49 = vector.shape_cast %48 : vector<1x128xf32> to vector<1x128xf32>
      %50 = vector.broadcast %49 : vector<1x128xf32> to vector<272x128xf32>
      %c6 = arith.constant 6 : index
      %c0_32 = arith.constant 0 : index
      %51 = vector.load %arg9[%c6, %c0_32] : memref<320x36xbf16, #tpu.memory_space<vmem>>, vector<272x36xbf16>
      %c0_33 = arith.constant 0 : index
      %c0_34 = arith.constant 0 : index
      %c0_35 = arith.constant 0 : index
      %52 = vector.load %arg2[%c0_33, %c0_34, %c0_35] : memref<9x36x128xbf16, #tpu.memory_space<vmem>>, vector<1x36x128xbf16>
      %53 = vector.shape_cast %52 : vector<1x36x128xbf16> to vector<36x128xbf16>
      %cst_36 = arith.constant dense<0.000000e+00> : vector<272x128xf32>
      %54 = tpu.matmul %51, %53, %cst_36 {dimension_numbers = #tpu.dot_dimension_numbers<[1], [0], [0], [1], [0, 0, 1, 1], [], []>} : vector<272x36xbf16>, vector<36x128xbf16>, vector<272x128xf32> -> vector<272x128xf32>
      %55 = arith.addf %50, %54 : vector<272x128xf32>
      %c7 = arith.constant 7 : index
      %c0_37 = arith.constant 0 : index
      %56 = vector.load %arg9[%c7, %c0_37] : memref<320x36xbf16, #tpu.memory_space<vmem>>, vector<272x36xbf16>
      %c1 = arith.constant 1 : index
      %c0_38 = arith.constant 0 : index
      %c0_39 = arith.constant 0 : index
      %57 = vector.load %arg2[%c1, %c0_38, %c0_39] : memref<9x36x128xbf16, #tpu.memory_space<vmem>>, vector<1x36x128xbf16>
      %58 = vector.shape_cast %57 : vector<1x36x128xbf16> to vector<36x128xbf16>
      %cst_40 = arith.constant dense<0.000000e+00> : vector<272x128xf32>
      %59 = tpu.matmul %56, %58, %cst_40 {dimension_numbers = #tpu.dot_dimension_numbers<[1], [0], [0], [1], [0, 0, 1, 1], [], []>} : vector<272x36xbf16>, vector<36x128xbf16>, vector<272x128xf32> -> vector<272x128xf32>
      %60 = arith.addf %55, %59 : vector<272x128xf32>
      %c8 = arith.constant 8 : index
      %c0_41 = arith.constant 0 : index
      %61 = vector.load %arg9[%c8, %c0_41] : memref<320x36xbf16, #tpu.memory_space<vmem>>, vector<272x36xbf16>
      %c2 = arith.constant 2 : index
      %c0_42 = arith.constant 0 : index
      %c0_43 = arith.constant 0 : index
      %62 = vector.load %arg2[%c2, %c0_42, %c0_43] : memref<9x36x128xbf16, #tpu.memory_space<vmem>>, vector<1x36x128xbf16>
      %63 = vector.shape_cast %62 : vector<1x36x128xbf16> to vector<36x128xbf16>
      %cst_44 = arith.constant dense<0.000000e+00> : vector<272x128xf32>
      %64 = tpu.matmul %61, %63, %cst_44 {dimension_numbers = #tpu.dot_dimension_numbers<[1], [0], [0], [1], [0, 0, 1, 1], [], []>} : vector<272x36xbf16>, vector<36x128xbf16>, vector<272x128xf32> -> vector<272x128xf32>
      %65 = arith.addf %60, %64 : vector<272x128xf32>
      %c23 = arith.constant 23 : index
      %c0_45 = arith.constant 0 : index
      %66 = vector.load %arg9[%c23, %c0_45] : memref<320x36xbf16, #tpu.memory_space<vmem>>, vector<272x36xbf16>
      %c3 = arith.constant 3 : index
      %c0_46 = arith.constant 0 : index
      %c0_47 = arith.constant 0 : index
      %67 = vector.load %arg2[%c3, %c0_46, %c0_47] : memref<9x36x128xbf16, #tpu.memory_space<vmem>>, vector<1x36x128xbf16>
      %68 = vector.shape_cast %67 : vector<1x36x128xbf16> to vector<36x128xbf16>
      %cst_48 = arith.constant dense<0.000000e+00> : vector<272x128xf32>
      %69 = tpu.matmul %66, %68, %cst_48 {dimension_numbers = #tpu.dot_dimension_numbers<[1], [0], [0], [1], [0, 0, 1, 1], [], []>} : vector<272x36xbf16>, vector<36x128xbf16>, vector<272x128xf32> -> vector<272x128xf32>
      %70 = arith.addf %65, %69 : vector<272x128xf32>
      %c24_49 = arith.constant 24 : index
      %c0_50 = arith.constant 0 : index
      %71 = vector.load %arg9[%c24_49, %c0_50] : memref<320x36xbf16, #tpu.memory_space<vmem>>, vector<272x36xbf16>
      %c4 = arith.constant 4 : index
      %c0_51 = arith.constant 0 : index
      %c0_52 = arith.constant 0 : index
      %72 = vector.load %arg2[%c4, %c0_51, %c0_52] : memref<9x36x128xbf16, #tpu.memory_space<vmem>>, vector<1x36x128xbf16>
      %73 = vector.shape_cast %72 : vector<1x36x128xbf16> to vector<36x128xbf16>
      %cst_53 = arith.constant dense<0.000000e+00> : vector<272x128xf32>
      %74 = tpu.matmul %71, %73, %cst_53 {dimension_numbers = #tpu.dot_dimension_numbers<[1], [0], [0], [1], [0, 0, 1, 1], [], []>} : vector<272x36xbf16>, vector<36x128xbf16>, vector<272x128xf32> -> vector<272x128xf32>
      %75 = arith.addf %70, %74 : vector<272x128xf32>
      %c25 = arith.constant 25 : index
      %c0_54 = arith.constant 0 : index
      %76 = vector.load %arg9[%c25, %c0_54] : memref<320x36xbf16, #tpu.memory_space<vmem>>, vector<272x36xbf16>
      %c5 = arith.constant 5 : index
      %c0_55 = arith.constant 0 : index
      %c0_56 = arith.constant 0 : index
      %77 = vector.load %arg2[%c5, %c0_55, %c0_56] : memref<9x36x128xbf16, #tpu.memory_space<vmem>>, vector<1x36x128xbf16>
      %78 = vector.shape_cast %77 : vector<1x36x128xbf16> to vector<36x128xbf16>
      %cst_57 = arith.constant dense<0.000000e+00> : vector<272x128xf32>
      %79 = tpu.matmul %76, %78, %cst_57 {dimension_numbers = #tpu.dot_dimension_numbers<[1], [0], [0], [1], [0, 0, 1, 1], [], []>} : vector<272x36xbf16>, vector<36x128xbf16>, vector<272x128xf32> -> vector<272x128xf32>
      %80 = arith.addf %75, %79 : vector<272x128xf32>
      %c40 = arith.constant 40 : index
      %c0_58 = arith.constant 0 : index
      %81 = vector.load %arg9[%c40, %c0_58] : memref<320x36xbf16, #tpu.memory_space<vmem>>, vector<272x36xbf16>
      %c6_59 = arith.constant 6 : index
      %c0_60 = arith.constant 0 : index
      %c0_61 = arith.constant 0 : index
      %82 = vector.load %arg2[%c6_59, %c0_60, %c0_61] : memref<9x36x128xbf16, #tpu.memory_space<vmem>>, vector<1x36x128xbf16>
      %83 = vector.shape_cast %82 : vector<1x36x128xbf16> to vector<36x128xbf16>
      %cst_62 = arith.constant dense<0.000000e+00> : vector<272x128xf32>
      %84 = tpu.matmul %81, %83, %cst_62 {dimension_numbers = #tpu.dot_dimension_numbers<[1], [0], [0], [1], [0, 0, 1, 1], [], []>} : vector<272x36xbf16>, vector<36x128xbf16>, vector<272x128xf32> -> vector<272x128xf32>
      %85 = arith.addf %80, %84 : vector<272x128xf32>
      %c41 = arith.constant 41 : index
      %c0_63 = arith.constant 0 : index
      %86 = vector.load %arg9[%c41, %c0_63] : memref<320x36xbf16, #tpu.memory_space<vmem>>, vector<272x36xbf16>
      %c7_64 = arith.constant 7 : index
      %c0_65 = arith.constant 0 : index
      %c0_66 = arith.constant 0 : index
      %87 = vector.load %arg2[%c7_64, %c0_65, %c0_66] : memref<9x36x128xbf16, #tpu.memory_space<vmem>>, vector<1x36x128xbf16>
      %88 = vector.shape_cast %87 : vector<1x36x128xbf16> to vector<36x128xbf16>
      %cst_67 = arith.constant dense<0.000000e+00> : vector<272x128xf32>
      %89 = tpu.matmul %86, %88, %cst_67 {dimension_numbers = #tpu.dot_dimension_numbers<[1], [0], [0], [1], [0, 0, 1, 1], [], []>} : vector<272x36xbf16>, vector<36x128xbf16>, vector<272x128xf32> -> vector<272x128xf32>
      %90 = arith.addf %85, %89 : vector<272x128xf32>
      %c42 = arith.constant 42 : index
      %c0_68 = arith.constant 0 : index
      %91 = vector.load %arg9[%c42, %c0_68] : memref<320x36xbf16, #tpu.memory_space<vmem>>, vector<272x36xbf16>
      %c8_69 = arith.constant 8 : index
      %c0_70 = arith.constant 0 : index
      %c0_71 = arith.constant 0 : index
      %92 = vector.load %arg2[%c8_69, %c0_70, %c0_71] : memref<9x36x128xbf16, #tpu.memory_space<vmem>>, vector<1x36x128xbf16>
      %93 = vector.shape_cast %92 : vector<1x36x128xbf16> to vector<36x128xbf16>
      %cst_72 = arith.constant dense<0.000000e+00> : vector<272x128xf32>
      %94 = tpu.matmul %91, %93, %cst_72 {dimension_numbers = #tpu.dot_dimension_numbers<[1], [0], [0], [1], [0, 0, 1, 1], [], []>} : vector<272x36xbf16>, vector<36x128xbf16>, vector<272x128xf32> -> vector<272x128xf32>
      %95 = arith.addf %90, %94 : vector<272x128xf32>
      %96 = vector.extract_strided_slice %95 {offsets = [0, 0], sizes = [272, 96], strides = [1, 1]} : vector<272x128xf32> to vector<272x96xf32>
      %97 = arith.negf %96 : vector<272x96xf32>
      %98 = math.exp %97 : vector<272x96xf32>
      %cst_73 = arith.constant 1.000000e+00 : f32
      %99 = vector.broadcast %cst_73 : f32 to vector<272x96xf32>
      %100 = arith.addf %99, %98 : vector<272x96xf32>
      %101 = arith.divf %99, %100 : vector<272x96xf32>
      %102 = vector.extract_strided_slice %95 {offsets = [0, 96], sizes = [272, 32], strides = [1, 1]} : vector<272x128xf32> to vector<272x32xf32>
      %103 = math.tanh %102 : vector<272x32xf32>
      %104 = vector.extract_strided_slice %101 {offsets = [0, 0], sizes = [272, 32], strides = [1, 1]} : vector<272x96xf32> to vector<272x32xf32>
      %105 = vector.extract_strided_slice %101 {offsets = [0, 32], sizes = [272, 32], strides = [1, 1]} : vector<272x96xf32> to vector<272x32xf32>
      %106 = vector.extract_strided_slice %101 {offsets = [0, 64], sizes = [272, 32], strides = [1, 1]} : vector<272x96xf32> to vector<272x32xf32>
      %c0_74 = arith.constant 0 : index
      %c0_75 = arith.constant 0 : index
      %107 = vector.load %arg10[%c0_74, %c0_75] : memref<272x32xf32, #tpu.memory_space<vmem>>, vector<272x32xf32>
      %108 = arith.mulf %105, %107 : vector<272x32xf32>
      %109 = arith.mulf %104, %103 : vector<272x32xf32>
      %110 = arith.addf %108, %109 : vector<272x32xf32>
      %111 = math.tanh %110 : vector<272x32xf32>
      %112 = arith.mulf %106, %111 : vector<272x32xf32>
      %113 = vector.broadcast %28 : vector<272x1xf32> to vector<272x32xf32>
      %114 = arith.mulf %112, %113 : vector<272x32xf32>
      %c0_76 = arith.constant 0 : index
      %c0_77 = arith.constant 0 : index
      %115 = vector.load %arg10[%c0_76, %c0_77] : memref<272x32xf32, #tpu.memory_space<vmem>>, vector<272x32xf32>
      tpu.vector_store %arg10[%c0_76, %c0_77], %110 {strides = array<i32>} : memref<272x32xf32, #tpu.memory_space<vmem>>, vector<272x32xf32>,
      %116 = arith.truncf %114 : vector<272x32xf32> to vector<272x32xbf16>
      %c24_78 = arith.constant 24 : index
      %c0_79 = arith.constant 0 : index
      %117 = vector.load %arg9[%c24_78, %c0_79] : memref<320x36xbf16, #tpu.memory_space<vmem>>, vector<272x32xbf16>
      tpu.vector_store %arg9[%c24_78, %c0_79], %116 {strides = array<i32>} : memref<320x36xbf16, #tpu.memory_space<vmem>>, vector<272x32xbf16>,
      %c24_80 = arith.constant 24 : index
      %c32_81 = arith.constant 32 : index
      %118 = vector.load %arg11[%c24_80, %c32_81] : memref<320x64xbf16, #tpu.memory_space<vmem>>, vector<272x32xbf16>
      tpu.vector_store %arg11[%c24_80, %c32_81], %116 {strides = array<i32>} : memref<320x64xbf16, #tpu.memory_space<vmem>>, vector<272x32xbf16>,
      %c0_82 = arith.constant 0 : index
      %c0_83 = arith.constant 0 : index
      %119 = vector.load %arg5[%c0_82, %c0_83] : memref<1x128xf32, #tpu.memory_space<vmem>>, vector<1x128xf32>
      %120 = vector.shape_cast %119 : vector<1x128xf32> to vector<1x128xf32>
      %121 = vector.broadcast %120 : vector<1x128xf32> to vector<272x128xf32>
      %c6_84 = arith.constant 6 : index
      %c0_85 = arith.constant 0 : index
      %122 = vector.load %arg11[%c6_84, %c0_85] : memref<320x64xbf16, #tpu.memory_space<vmem>>, vector<272x64xbf16>
      %c0_86 = arith.constant 0 : index
      %c0_87 = arith.constant 0 : index
      %c0_88 = arith.constant 0 : index
      %123 = vector.load %arg4[%c0_86, %c0_87, %c0_88] : memref<9x64x128xbf16, #tpu.memory_space<vmem>>, vector<1x64x128xbf16>
      %124 = vector.shape_cast %123 : vector<1x64x128xbf16> to vector<64x128xbf16>
      %cst_89 = arith.constant dense<0.000000e+00> : vector<272x128xf32>
      %125 = tpu.matmul %122, %124, %cst_89 {dimension_numbers = #tpu.dot_dimension_numbers<[1], [0], [0], [1], [0, 0, 1, 1], [], []>} : vector<272x64xbf16>, vector<64x128xbf16>, vector<272x128xf32> -> vector<272x128xf32>
      %126 = arith.addf %121, %125 : vector<272x128xf32>
      %c7_90 = arith.constant 7 : index
      %c0_91 = arith.constant 0 : index
      %127 = vector.load %arg11[%c7_90, %c0_91] : memref<320x64xbf16, #tpu.memory_space<vmem>>, vector<272x64xbf16>
      %c1_92 = arith.constant 1 : index
      %c0_93 = arith.constant 0 : index
      %c0_94 = arith.constant 0 : index
      %128 = vector.load %arg4[%c1_92, %c0_93, %c0_94] : memref<9x64x128xbf16, #tpu.memory_space<vmem>>, vector<1x64x128xbf16>
      %129 = vector.shape_cast %128 : vector<1x64x128xbf16> to vector<64x128xbf16>
      %cst_95 = arith.constant dense<0.000000e+00> : vector<272x128xf32>
      %130 = tpu.matmul %127, %129, %cst_95 {dimension_numbers = #tpu.dot_dimension_numbers<[1], [0], [0], [1], [0, 0, 1, 1], [], []>} : vector<272x64xbf16>, vector<64x128xbf16>, vector<272x128xf32> -> vector<272x128xf32>
      %131 = arith.addf %126, %130 : vector<272x128xf32>
      %c8_96 = arith.constant 8 : index
      %c0_97 = arith.constant 0 : index
      %132 = vector.load %arg11[%c8_96, %c0_97] : memref<320x64xbf16, #tpu.memory_space<vmem>>, vector<272x64xbf16>
      %c2_98 = arith.constant 2 : index
      %c0_99 = arith.constant 0 : index
      %c0_100 = arith.constant 0 : index
      %133 = vector.load %arg4[%c2_98, %c0_99, %c0_100] : memref<9x64x128xbf16, #tpu.memory_space<vmem>>, vector<1x64x128xbf16>
      %134 = vector.shape_cast %133 : vector<1x64x128xbf16> to vector<64x128xbf16>
      %cst_101 = arith.constant dense<0.000000e+00> : vector<272x128xf32>
      %135 = tpu.matmul %132, %134, %cst_101 {dimension_numbers = #tpu.dot_dimension_numbers<[1], [0], [0], [1], [0, 0, 1, 1], [], []>} : vector<272x64xbf16>, vector<64x128xbf16>, vector<272x128xf32> -> vector<272x128xf32>
      %136 = arith.addf %131, %135 : vector<272x128xf32>
      %c23_102 = arith.constant 23 : index
      %c0_103 = arith.constant 0 : index
      %137 = vector.load %arg11[%c23_102, %c0_103] : memref<320x64xbf16, #tpu.memory_space<vmem>>, vector<272x64xbf16>
      %c3_104 = arith.constant 3 : index
      %c0_105 = arith.constant 0 : index
      %c0_106 = arith.constant 0 : index
      %138 = vector.load %arg4[%c3_104, %c0_105, %c0_106] : memref<9x64x128xbf16, #tpu.memory_space<vmem>>, vector<1x64x128xbf16>
      %139 = vector.shape_cast %138 : vector<1x64x128xbf16> to vector<64x128xbf16>
      %cst_107 = arith.constant dense<0.000000e+00> : vector<272x128xf32>
      %140 = tpu.matmul %137, %139, %cst_107 {dimension_numbers = #tpu.dot_dimension_numbers<[1], [0], [0], [1], [0, 0, 1, 1], [], []>} : vector<272x64xbf16>, vector<64x128xbf16>, vector<272x128xf32> -> vector<272x128xf32>
      %141 = arith.addf %136, %140 : vector<272x128xf32>
      %c24_108 = arith.constant 24 : index
      %c0_109 = arith.constant 0 : index
      %142 = vector.load %arg11[%c24_108, %c0_109] : memref<320x64xbf16, #tpu.memory_space<vmem>>, vector<272x64xbf16>
      %c4_110 = arith.constant 4 : index
      %c0_111 = arith.constant 0 : index
      %c0_112 = arith.constant 0 : index
      %143 = vector.load %arg4[%c4_110, %c0_111, %c0_112] : memref<9x64x128xbf16, #tpu.memory_space<vmem>>, vector<1x64x128xbf16>
      %144 = vector.shape_cast %143 : vector<1x64x128xbf16> to vector<64x128xbf16>
      %cst_113 = arith.constant dense<0.000000e+00> : vector<272x128xf32>
      %145 = tpu.matmul %142, %144, %cst_113 {dimension_numbers = #tpu.dot_dimension_numbers<[1], [0], [0], [1], [0, 0, 1, 1], [], []>} : vector<272x64xbf16>, vector<64x128xbf16>, vector<272x128xf32> -> vector<272x128xf32>
      %146 = arith.addf %141, %145 : vector<272x128xf32>
      %c25_114 = arith.constant 25 : index
      %c0_115 = arith.constant 0 : index
      %147 = vector.load %arg11[%c25_114, %c0_115] : memref<320x64xbf16, #tpu.memory_space<vmem>>, vector<272x64xbf16>
      %c5_116 = arith.constant 5 : index
      %c0_117 = arith.constant 0 : index
      %c0_118 = arith.constant 0 : index
      %148 = vector.load %arg4[%c5_116, %c0_117, %c0_118] : memref<9x64x128xbf16, #tpu.memory_space<vmem>>, vector<1x64x128xbf16>
      %149 = vector.shape_cast %148 : vector<1x64x128xbf16> to vector<64x128xbf16>
      %cst_119 = arith.constant dense<0.000000e+00> : vector<272x128xf32>
      %150 = tpu.matmul %147, %149, %cst_119 {dimension_numbers = #tpu.dot_dimension_numbers<[1], [0], [0], [1], [0, 0, 1, 1], [], []>} : vector<272x64xbf16>, vector<64x128xbf16>, vector<272x128xf32> -> vector<272x128xf32>
      %151 = arith.addf %146, %150 : vector<272x128xf32>
      %c40_120 = arith.constant 40 : index
      %c0_121 = arith.constant 0 : index
      %152 = vector.load %arg11[%c40_120, %c0_121] : memref<320x64xbf16, #tpu.memory_space<vmem>>, vector<272x64xbf16>
      %c6_122 = arith.constant 6 : index
      %c0_123 = arith.constant 0 : index
      %c0_124 = arith.constant 0 : index
      %153 = vector.load %arg4[%c6_122, %c0_123, %c0_124] : memref<9x64x128xbf16, #tpu.memory_space<vmem>>, vector<1x64x128xbf16>
      %154 = vector.shape_cast %153 : vector<1x64x128xbf16> to vector<64x128xbf16>
      %cst_125 = arith.constant dense<0.000000e+00> : vector<272x128xf32>
      %155 = tpu.matmul %152, %154, %cst_125 {dimension_numbers = #tpu.dot_dimension_numbers<[1], [0], [0], [1], [0, 0, 1, 1], [], []>} : vector<272x64xbf16>, vector<64x128xbf16>, vector<272x128xf32> -> vector<272x128xf32>
      %156 = arith.addf %151, %155 : vector<272x128xf32>
      %c41_126 = arith.constant 41 : index
      %c0_127 = arith.constant 0 : index
      %157 = vector.load %arg11[%c41_126, %c0_127] : memref<320x64xbf16, #tpu.memory_space<vmem>>, vector<272x64xbf16>
      %c7_128 = arith.constant 7 : index
      %c0_129 = arith.constant 0 : index
      %c0_130 = arith.constant 0 : index
      %158 = vector.load %arg4[%c7_128, %c0_129, %c0_130] : memref<9x64x128xbf16, #tpu.memory_space<vmem>>, vector<1x64x128xbf16>
      %159 = vector.shape_cast %158 : vector<1x64x128xbf16> to vector<64x128xbf16>
      %cst_131 = arith.constant dense<0.000000e+00> : vector<272x128xf32>
      %160 = tpu.matmul %157, %159, %cst_131 {dimension_numbers = #tpu.dot_dimension_numbers<[1], [0], [0], [1], [0, 0, 1, 1], [], []>} : vector<272x64xbf16>, vector<64x128xbf16>, vector<272x128xf32> -> vector<272x128xf32>
      %161 = arith.addf %156, %160 : vector<272x128xf32>
      %c42_132 = arith.constant 42 : index
      %c0_133 = arith.constant 0 : index
      %162 = vector.load %arg11[%c42_132, %c0_133] : memref<320x64xbf16, #tpu.memory_space<vmem>>, vector<272x64xbf16>
      %c8_134 = arith.constant 8 : index
      %c0_135 = arith.constant 0 : index
      %c0_136 = arith.constant 0 : index
      %163 = vector.load %arg4[%c8_134, %c0_135, %c0_136] : memref<9x64x128xbf16, #tpu.memory_space<vmem>>, vector<1x64x128xbf16>
      %164 = vector.shape_cast %163 : vector<1x64x128xbf16> to vector<64x128xbf16>
      %cst_137 = arith.constant dense<0.000000e+00> : vector<272x128xf32>
      %165 = tpu.matmul %162, %164, %cst_137 {dimension_numbers = #tpu.dot_dimension_numbers<[1], [0], [0], [1], [0, 0, 1, 1], [], []>} : vector<272x64xbf16>, vector<64x128xbf16>, vector<272x128xf32> -> vector<272x128xf32>
      %166 = arith.addf %161, %165 : vector<272x128xf32>
      %167 = vector.extract_strided_slice %166 {offsets = [0, 0], sizes = [272, 96], strides = [1, 1]} : vector<272x128xf32> to vector<272x96xf32>
      %168 = arith.negf %167 : vector<272x96xf32>
      %169 = math.exp %168 : vector<272x96xf32>
      %cst_138 = arith.constant 1.000000e+00 : f32
      %170 = vector.broadcast %cst_138 : f32 to vector<272x96xf32>
      %171 = arith.addf %170, %169 : vector<272x96xf32>
      %172 = arith.divf %170, %171 : vector<272x96xf32>
      %173 = vector.extract_strided_slice %166 {offsets = [0, 96], sizes = [272, 32], strides = [1, 1]} : vector<272x128xf32> to vector<272x32xf32>
      %174 = math.tanh %173 : vector<272x32xf32>
      %175 = vector.extract_strided_slice %172 {offsets = [0, 0], sizes = [272, 32], strides = [1, 1]} : vector<272x96xf32> to vector<272x32xf32>
      %176 = vector.extract_strided_slice %172 {offsets = [0, 32], sizes = [272, 32], strides = [1, 1]} : vector<272x96xf32> to vector<272x32xf32>
      %177 = vector.extract_strided_slice %172 {offsets = [0, 64], sizes = [272, 32], strides = [1, 1]} : vector<272x96xf32> to vector<272x32xf32>
      %c0_139 = arith.constant 0 : index
      %c0_140 = arith.constant 0 : index
      %178 = vector.load %arg12[%c0_139, %c0_140] : memref<272x32xf32, #tpu.memory_space<vmem>>, vector<272x32xf32>
      %179 = arith.mulf %176, %178 : vector<272x32xf32>
      %180 = arith.mulf %175, %174 : vector<272x32xf32>
      %181 = arith.addf %179, %180 : vector<272x32xf32>
      %182 = math.tanh %181 : vector<272x32xf32>
      %183 = arith.mulf %177, %182 : vector<272x32xf32>
      %184 = vector.broadcast %28 : vector<272x1xf32> to vector<272x32xf32>
      %185 = arith.mulf %183, %184 : vector<272x32xf32>
      %c0_141 = arith.constant 0 : index
      %c0_142 = arith.constant 0 : index
      %186 = vector.load %arg12[%c0_141, %c0_142] : memref<272x32xf32, #tpu.memory_space<vmem>>, vector<272x32xf32>
      tpu.vector_store %arg12[%c0_141, %c0_142], %181 {strides = array<i32>} : memref<272x32xf32, #tpu.memory_space<vmem>>, vector<272x32xf32>,
      %187 = arith.truncf %185 : vector<272x32xf32> to vector<272x32xbf16>
      %c24_143 = arith.constant 24 : index
      %c0_144 = arith.constant 0 : index
      %188 = vector.load %arg11[%c24_143, %c0_144] : memref<320x64xbf16, #tpu.memory_space<vmem>>, vector<272x32xbf16>
      tpu.vector_store %arg11[%c24_143, %c0_144], %187 {strides = array<i32>} : memref<320x64xbf16, #tpu.memory_space<vmem>>, vector<272x32xbf16>,
      scf.yield %185 : vector<272x32xf32>
    }
    %c8_i32_16 = arith.constant 8 : i32
    %c0_17 = arith.constant 0 : index
    %c0_18 = arith.constant 0 : index
    %32 = vector.load %arg6[%c0_17, %c0_18] : memref<32x4xf32, #tpu.memory_space<vmem>>, vector<32x4xf32>
    %cst_19 = arith.constant dense<0.000000e+00> : vector<272x4xf32>
    %33 = tpu.matmul %31, %32, %cst_19 {dimension_numbers = #tpu.dot_dimension_numbers<[1], [0], [0], [1], [0, 0, 1, 1], [], []>} : vector<272x32xf32>, vector<32x4xf32>, vector<272x4xf32> -> vector<272x4xf32>
    %c0_20 = arith.constant 0 : index
    %c0_21 = arith.constant 0 : index
    %34 = vector.load %arg7[%c0_20, %c0_21] : memref<1x4xf32, #tpu.memory_space<vmem>>, vector<1x4xf32>
    %35 = vector.broadcast %34 : vector<1x4xf32> to vector<272x4xf32>
    %36 = arith.addf %33, %35 : vector<272x4xf32>
    %cst_22 = arith.constant 0.000000e+00 : f32
    %cst_23 = arith.constant 1.000000e+00 : f32
    %37 = vector.broadcast %cst_22 : f32 to vector<272x4xf32>
    %38 = arith.maximumf %37, %36 : vector<272x4xf32>
    %39 = vector.broadcast %cst_23 : f32 to vector<272x4xf32>
    %40 = arith.minimumf %39, %38 : vector<272x4xf32>
    %c0_24 = arith.constant 0 : index
    %c0_25 = arith.constant 0 : index
    %c0_26 = arith.constant 0 : index
    %41 = vector.load %arg8[%c0_24, %c0_25, %c0_26] : memref<1x272x4xf32, #tpu.memory_space<vmem>>, vector<1x272x4xf32>
    %42 = vector.shape_cast %41 : vector<1x272x4xf32> to vector<272x4xf32>
    %43 = vector.shape_cast %40 : vector<272x4xf32> to vector<1x272x4xf32>
    tpu.vector_store %arg8[%c0_24, %c0_25, %c0_26], %43 {strides = array<i32>} : memref<1x272x4xf32, #tpu.memory_space<vmem>>, vector<1x272x4xf32>,
    return
  }
  func.func @transform_0(%arg0: i32) -> (i32, i32, i32, i32) {
    %c0_i32 = arith.constant 0 : i32
    %c0_i32_0 = arith.constant 0 : i32
    %c0_i32_1 = arith.constant 0 : i32
    %c0_i32_2 = arith.constant 0 : i32
    return %arg0, %c0_i32, %c0_i32_0, %c0_i32_1 : i32, i32, i32, i32
  }
  func.func @transform_1(%arg0: i32) -> (i32, i32, i32) {
    %c0_i32 = arith.constant 0 : i32
    %c0_i32_0 = arith.constant 0 : i32
    %c0_i32_1 = arith.constant 0 : i32
    %c0_i32_2 = arith.constant 0 : i32
    return %c0_i32, %c0_i32_0, %c0_i32_1 : i32, i32, i32
  }
  func.func @transform_2(%arg0: i32) -> (i32, i32) {
    %c0_i32 = arith.constant 0 : i32
    %c0_i32_0 = arith.constant 0 : i32
    %c0_i32_1 = arith.constant 0 : i32
    return %c0_i32, %c0_i32_0 : i32, i32
  }
  func.func @transform_3(%arg0: i32) -> (i32, i32, i32) {
    %c0_i32 = arith.constant 0 : i32
    %c0_i32_0 = arith.constant 0 : i32
    %c0_i32_1 = arith.constant 0 : i32
    %c0_i32_2 = arith.constant 0 : i32
    return %c0_i32, %c0_i32_0, %c0_i32_1 : i32, i32, i32
  }
  func.func @transform_4(%arg0: i32) -> (i32, i32) {
    %c0_i32 = arith.constant 0 : i32
    %c0_i32_0 = arith.constant 0 : i32
    %c0_i32_1 = arith.constant 0 : i32
    return %c0_i32, %c0_i32_0 : i32, i32
  }
  func.func @transform_5(%arg0: i32) -> (i32, i32) {
    %c0_i32 = arith.constant 0 : i32
    %c0_i32_0 = arith.constant 0 : i32
    %c0_i32_1 = arith.constant 0 : i32
    return %c0_i32, %c0_i32_0 : i32, i32
  }
  func.func @transform_6(%arg0: i32) -> (i32, i32) {
    %c0_i32 = arith.constant 0 : i32
    %c0_i32_0 = arith.constant 0 : i32
    %c0_i32_1 = arith.constant 0 : i32
    return %c0_i32, %c0_i32_0 : i32, i32
  }
  func.func @transform_7(%arg0: i32) -> (i32, i32, i32) {
    %c0_i32 = arith.constant 0 : i32
    %c0_i32_0 = arith.constant 0 : i32
    %c0_i32_1 = arith.constant 0 : i32
    return %arg0, %c0_i32, %c0_i32_0 : i32, i32, i32
  }
}

</mosaic_0001>

<llo_original>
// kernel: convlstm_forward.1
$region0: #{convlstm_forward.1}
  #allocation0 [shape = 'u32[]', space=smem, size = 0x4, offset = 0x4, fixed_abs, tag = 'smem constant byte address 0x4 - core index']
  #allocation1 [shape = 'u32[72,128]{1,0:T(1,128)}', space=vmem, size = 0x9000, scoped, tag = 'internal scratch']
  #allocation2 [shape = 'bf16[320,36]{1,0:T(8,128)(2,1)}', space=vmem, size = 0x14000, scoped, tag = 'scratch operand']
  #allocation3 [shape = 'f32[272,32]{1,0:T(8,128)}', space=vmem, size = 0x22000, scoped, tag = 'scratch operand']
  #allocation4 [shape = 'bf16[320,64]{1,0:T(8,128)(2,1)}', space=vmem, size = 0x14000, scoped, tag = 'scratch operand']
  #allocation5 [shape = 'f32[272,32]{1,0:T(8,128)}', space=vmem, size = 0x22000, scoped, tag = 'scratch operand']
  %s0 = inlined_call_operand.vmem [shape: bf16[2,8,272,4], index: 0, kind: input, shape index: {}]
  %s1 = inlined_call_operand.vmem [shape: bf16[9,36,128], index: 1, kind: input, shape index: {}]
  %s2 = inlined_call_operand.vmem [shape: f32[1,128], index: 2, kind: input, shape index: {}]
  %s3 = inlined_call_operand.vmem [shape: bf16[9,64,128], index: 3, kind: input, shape index: {}]
  %s4 = inlined_call_operand.vmem [shape: f32[1,128], index: 4, kind: input, shape index: {}]
  %s5 = inlined_call_operand.vmem [shape: f32[32,4], index: 5, kind: input, shape index: {}]
  %s6 = inlined_call_operand.vmem [shape: f32[1,4], index: 6, kind: input, shape index: {}]
  %s7 = inlined_call_operand.vmem [shape: f32[2,272,4], index: 7, kind: output, shape index: {}]
  %s8 = sld [smem:[#allocation0]]
  $region68: #{convlstm_forward.1} parent=0
    _
  %s10 = ssub.s32 1, %s8
  %s11 = scalar_select 0, %s10, %s8
  loop: start=0, step=1, limit=4
  $region2: #{convlstm_forward.1} parent=0 // loop_pre_header
    _
  $region3: #{convlstm_forward.1} parent=0 // loop_header
    %s13 = sphi 0, %s17
    %p14 = scmp.ge.s32.totalorder %s13, 4
    %s23 = sphi 0, %s25
    %s26 = sphi 0, %s23
    %s27 = sphi 0, %s26
    %s43 = sphi 0, %s27
    %s47 = sphi 0, %s47
    %s49 = sphi 0, %s47
    %s50 = sphi 0, %s49
    %s64 = sphi 0, %s50
    %s68 = sphi 0, %s68
    %s70 = sphi 0, %s68
    %s71 = sphi 0, %s70
    %s85 = sphi 0, %s71
    %s89 = sphi 0, %s89
    %s91 = sphi 0, %s89
    %s92 = sphi 0, %s91
    %s106 = sphi 0, %s92
    %s110 = sphi 0, %s110
    %s112 = sphi 0, %s110
    %s113 = sphi 0, %s112
    %s127 = sphi 0, %s113
    %s131 = sphi 0, %s131
    %s133 = sphi 0, %s131
    %s134 = sphi 0, %s133
    %s148 = sphi 0, %s134
    %s152 = sphi 0, %s152
    %s154 = sphi 0, %s152
    %s155 = sphi 0, %s154
    %s169 = sphi 0, %s155
    %s175 = sphi 0, %s177
    %s178 = sphi 0, %s175
    %s179 = sphi 0, %s178
    %s195 = sphi 0, %s179
  $region4: #{convlstm_forward.1} parent=0 // loop_header_branch
    %16 = sbr.rel (%p14) target = $region8
  $region5: #{convlstm_forward.1} parent=0 // loop_body
    %s18 = ssub.s32 %s13, 1
    %s19 = ssub.s32 %s13, 2
    %s20 = sadd.s32 %s13, 1
    %s21 = ssub.s32 %s13, %s20
    %p22 = scmp.eq.s32.totalorder %s21, 0
    %s24 = sadd.s32 %s23, 1
    %s25 = scalar_select %p22, %s23, %s24
    %p28 = pneg %p22
    %p29 = scmp.eq.s32.totalorder %s13, 1
    %p30 = por %p28, %p29
    %p31 = scmp.ne.s32.totalorder %s23, %s26
    %p32 = scmp.eq.s32.totalorder %s13, 0
    %p33 = por %p31, %p32
    %p34 = scmp.ne.s32.totalorder %s23, %s26
    %p35 = scmp.eq.s32.totalorder %s18, 1
    %p36 = por %p34, %p35
    %p37 = scmp.ne.s32.totalorder %s26, %s27
    %p38 = scmp.eq.s32.totalorder %s18, 0
    %p39 = por %p37, %p38
    %p40 = scmp.ne.s32.totalorder %s26, %s27
    %p41 = scmp.eq.s32.totalorder %s19, 1
    %p42 = por %p40, %p41
    %p44 = scmp.ne.s32.totalorder %s27, %s43
    %p45 = scmp.eq.s32.totalorder %s19, 0
    %p46 = por %p44, %p45
    %s48 = sadd.s32 %s47, 1
    %p51 = scmp.eq.s32.totalorder %s13, 1
    %p52 = scmp.ne.s32.totalorder %s47, %s49
    %p53 = scmp.eq.s32.totalorder %s13, 0
    %p54 = por %p52, %p53
    %p55 = scmp.ne.s32.totalorder %s47, %s49
    %p56 = scmp.eq.s32.totalorder %s18, 1
    %p57 = por %p55, %p56
    %p58 = scmp.ne.s32.totalorder %s49, %s50
    %p59 = scmp.eq.s32.totalorder %s18, 0
    %p60 = por %p58, %p59
    %p61 = scmp.ne.s32.totalorder %s49, %s50
    %p62 = scmp.eq.s32.totalorder %s19, 1
    %p63 = por %p61, %p62
    %p65 = scmp.ne.s32.totalorder %s50, %s64
    %p66 = scmp.eq.s32.totalorder %s19, 0
    %p67 = por %p65, %p66
    %s69 = sadd.s32 %s68, 1
    %p72 = scmp.eq.s32.totalorder %s13, 1
    %p73 = scmp.ne.s32.totalorder %s68, %s70
    %p74 = scmp.eq.s32.totalorder %s13, 0
    %p75 = por %p73, %p74
    %p76 = scmp.ne.s32.totalorder %s68, %s70
    %p77 = scmp.eq.s32.totalorder %s18, 1
    %p78 = por %p76, %p77
    %p79 = scmp.ne.s32.totalorder %s70, %s71
    %p80 = scmp.eq.s32.totalorder %s18, 0
    %p81 = por %p79, %p80
    %p82 = scmp.ne.s32.totalorder %s70, %s71
    %p83 = scmp.eq.s32.totalorder %s19, 1
    %p84 = por %p82, %p83
    %p86 = scmp.ne.s32.totalorder %s71, %s85
    %p87 = scmp.eq.s32.totalorder %s19, 0
    %p88 = por %p86, %p87
    %s90 = sadd.s32 %s89, 1
    %p93 = scmp.eq.s32.totalorder %s13, 1
    %p94 = scmp.ne.s32.totalorder %s89, %s91
    %p95 = scmp.eq.s32.totalorder %s13, 0
    %p96 = por %p94, %p95
    %p97 = scmp.ne.s32.totalorder %s89, %s91
    %p98 = scmp.eq.s32.totalorder %s18, 1
    %p99 = por %p97, %p98
    %p100 = scmp.ne.s32.totalorder %s91, %s92
    %p101 = scmp.eq.s32.totalorder %s18, 0
    %p102 = por %p100, %p101
    %p103 = scmp.ne.s32.totalorder %s91, %s92
    %p104 = scmp.eq.s32.totalorder %s19, 1
    %p105 = por %p103, %p104
    %p107 = scmp.ne.s32.totalorder %s92, %s106
    %p108 = scmp.eq.s32.totalorder %s19, 0
    %p109 = por %p107, %p108
    %s111 = sadd.s32 %s110, 1
    %p114 = scmp.eq.s32.totalorder %s13, 1
    %p115 = scmp.ne.s32.totalorder %s110, %s112
    %p116 = scmp.eq.s32.totalorder %s13, 0
    %p117 = por %p115, %p116
    %p118 = scmp.ne.s32.totalorder %s110, %s112
    %p119 = scmp.eq.s32.totalorder %s18, 1
    %p120 = por %p118, %p119
    %p121 = scmp.ne.s32.totalorder %s112, %s113
    %p122 = scmp.eq.s32.totalorder %s18, 0
    %p123 = por %p121, %p122
    %p124 = scmp.ne.s32.totalorder %s112, %s113
    %p125 = scmp.eq.s32.totalorder %s19, 1
    %p126 = por %p124, %p125
    %p128 = scmp.ne.s32.totalorder %s113, %s127
    %p129 = scmp.eq.s32.totalorder %s19, 0
    %p130 = por %p128, %p129
    %s132 = sadd.s32 %s131, 1
    %p135 = scmp.eq.s32.totalorder %s13, 1
    %p136 = scmp.ne.s32.totalorder %s131, %s133
    %p137 = scmp.eq.s32.totalorder %s13, 0
    %p138 = por %p136, %p137
    %p139 = scmp.ne.s32.totalorder %s131, %s133
    %p140 = scmp.eq.s32.totalorder %s18, 1
    %p141 = por %p139, %p140
    %p142 = scmp.ne.s32.totalorder %s133, %s134
    %p143 = scmp.eq.s32.totalorder %s18, 0
    %p144 = por %p142, %p143
    %p145 = scmp.ne.s32.totalorder %s133, %s134
    %p146 = scmp.eq.s32.totalorder %s19, 1
    %p147 = por %p145, %p146
    %p149 = scmp.ne.s32.totalorder %s134, %s148
    %p150 = scmp.eq.s32.totalorder %s19, 0
    %p151 = por %p149, %p150
    %s153 = sadd.s32 %s152, 1
    %p156 = scmp.eq.s32.totalorder %s13, 1
    %p157 = scmp.ne.s32.totalorder %s152, %s154
    %p158 = scmp.eq.s32.totalorder %s13, 0
    %p159 = por %p157, %p158
    %p160 = scmp.ne.s32.totalorder %s152, %s154
    %p161 = scmp.eq.s32.totalorder %s18, 1
    %p162 = por %p160, %p161
    %p163 = scmp.ne.s32.totalorder %s154, %s155
    %p164 = scmp.eq.s32.totalorder %s18, 0
    %p165 = por %p163, %p164
    %p166 = scmp.ne.s32.totalorder %s154, %s155
    %p167 = scmp.eq.s32.totalorder %s19, 1
    %p168 = por %p166, %p167
    %p170 = scmp.ne.s32.totalorder %s155, %s169
    %p171 = scmp.eq.s32.totalorder %s19, 0
    %p172 = por %p170, %p171
    %s173 = ssub.s32 %s13, %s20
    %p174 = scmp.eq.s32.totalorder %s173, 0
    %s176 = sadd.s32 %s175, 1
    %s177 = scalar_select %p174, %s175, %s176
    %p180 = pneg %p174
    %p181 = scmp.eq.s32.totalorder %s13, 1
    %p182 = por %p180, %p181
    %p183 = scmp.ne.s32.totalorder %s175, %s178
    %p184 = scmp.eq.s32.totalorder %s13, 0
    %p185 = por %p183, %p184
    %p186 = scmp.ne.s32.totalorder %s175, %s178
    %p187 = scmp.eq.s32.totalorder %s18, 1
    %p188 = por %p186, %p187
    %p189 = scmp.ne.s32.totalorder %s178, %s179
    %p190 = scmp.eq.s32.totalorder %s18, 0
    %p191 = por %p189, %p190
    %p192 = scmp.ne.s32.totalorder %s178, %s179
    %p193 = scmp.eq.s32.totalorder %s19, 1
    %p194 = por %p192, %p193
    %p196 = scmp.ne.s32.totalorder %s179, %s195
    %p197 = scmp.eq.s32.totalorder %s19, 0
    %p198 = por %p196, %p197
    %p199 = scmp.le.s32.totalorder 1, %s13
    %p200 = scmp.lt.s32.totalorder %s13, 3
    %p201 = pnand %p199, %p200
    %p202 = pneg %p201
    // Predicated region
    $region9: #{convlstm_forward.1} parent=5 // pred_check
      _
    $region10: #{convlstm_forward.1} parent=5 // pred_check_branch
      %204 = sbr.rel (%p201) target = $region12
    $region11: #{convlstm_forward.1} parent=5 // pred_region
      %s205 = ssub.s32 %s13, 1
      // Predicated region
      $region13: #{convlstm_forward.1} parent=11 // pred_check
        %p206 = pneg %p60
      $region14: #{convlstm_forward.1} parent=11 // pred_check_branch
        %208 = sbr.rel (%p206) target = $region16
      $region15: #{convlstm_forward.1} parent=11 // pred_region
        _
      $region16: #{convlstm_forward.1} parent=11 // pred_fallthru
        _
      // Predicated region
      $region17: #{convlstm_forward.1} parent=11 // pred_check
        %p209 = pneg %p81
      $region18: #{convlstm_forward.1} parent=11 // pred_check_branch
        %211 = sbr.rel (%p209) target = $region20
      $region19: #{convlstm_forward.1} parent=11 // pred_region
        _
      $region20: #{convlstm_forward.1} parent=11 // pred_fallthru
        _
      // Predicated region
      $region21: #{convlstm_forward.1} parent=11 // pred_check
        %p212 = pneg %p102
      $region22: #{convlstm_forward.1} parent=11 // pred_check_branch
        %214 = sbr.rel (%p212) target = $region24
      $region23: #{convlstm_forward.1} parent=11 // pred_region
        _
      $region24: #{convlstm_forward.1} parent=11 // pred_fallthru
        _
      // Predicated region
      $region25: #{convlstm_forward.1} parent=11 // pred_check
        %p215 = pneg %p123
      $region26: #{convlstm_forward.1} parent=11 // pred_check_branch
        %217 = sbr.rel (%p215) target = $region28
      $region27: #{convlstm_forward.1} parent=11 // pred_region
        _
      $region28: #{convlstm_forward.1} parent=11 // pred_fallthru
        _
      // Predicated region
      $region29: #{convlstm_forward.1} parent=11 // pred_check
        %p218 = pneg %p144
      $region30: #{convlstm_forward.1} parent=11 // pred_check_branch
        %220 = sbr.rel (%p218) target = $region32
      $region31: #{convlstm_forward.1} parent=11 // pred_region
        _
      $region32: #{convlstm_forward.1} parent=11 // pred_fallthru
        _
      // Predicated region
      $region33: #{convlstm_forward.1} parent=11 // pred_check
        %p221 = pneg %p165
      $region34: #{convlstm_forward.1} parent=11 // pred_check_branch
        %223 = sbr.rel (%p221) target = $region36
      $region35: #{convlstm_forward.1} parent=11 // pred_region
        _
      $region36: #{convlstm_forward.1} parent=11 // pred_fallthru
        _
    $region12: #{convlstm_forward.1} parent=5 // pred_fallthru
      _
    %p224 = scmp.lt.s32.totalorder %s13, 2
    // Predicated region
    $region37: #{convlstm_forward.1} parent=5 // pred_check
      %p225 = pneg %p224
    $region38: #{convlstm_forward.1} parent=5 // pred_check_branch
      %227 = sbr.rel (%p225) target = $region40
    $region39: #{convlstm_forward.1} parent=5 // pred_region
      // Predicated region
      $region41: #{convlstm_forward.1} parent=39 // pred_check
        %p228 = pneg %p33
      $region42: #{convlstm_forward.1} parent=39 // pred_check_branch
        %230 = sbr.rel (%p228) target = $region44
      $region43: #{convlstm_forward.1} parent=39 // pred_region
        %p231 = scmp.lt.s32.totalorder %s13, 1
        %s232 = scalar_select %p231, %s13, 1
        %s233 = smul.addr %s232, 272
        %s234 = smul.addr %s233, 4
        %s235 = scalar_lea.vmem %s0, %s234
      $region44: #{convlstm_forward.1} parent=39 // pred_fallthru
        _
    $region40: #{convlstm_forward.1} parent=5 // pred_fallthru
      _
    %p236 = scmp.le.s32.totalorder 1, %s13
    %p237 = scmp.lt.s32.totalorder %s13, 3
    %p238 = pnand %p236, %p237
    %p239 = pneg %p238
    // Predicated region
    $region45: #{convlstm_forward.1} parent=5 // pred_check
      _
    $region46: #{convlstm_forward.1} parent=5 // pred_check_branch
      %241 = sbr.rel (%p238) target = $region48
    $region47: #{convlstm_forward.1} parent=5 // pred_region
      %s242 = ssub.s32 %s13, 1
      %p243 = scmp.lt.s32.totalorder %s18, 1
      %s244 = scalar_select %p243, %s18, 1
      %s245 = smul.addr %s244, 272
      %s246 = smul.addr %s245, 4
      %s247 = scalar_lea.vmem %s0, %s246
      %p248 = pneg %p39
      %p249 = pneg %p36
      %p250 = pneg %p60
      %p251 = pneg %p57
      %p252 = pneg %p81
      %p253 = pneg %p78
      %p254 = pneg %p102
      %p255 = pneg %p99
      %p256 = pneg %p123
      %p257 = pneg %p120
      %p258 = pneg %p144
      %p259 = pneg %p141
      %p260 = pneg %p165
      %p261 = pneg %p162
      %p262 = pneg %p191
      %p263 = pneg %p188
      %p264 = scmp.lt.s32.totalorder %s18, 1
      %s265 = scalar_select %p264, %s18, 1
      %s266 = smul.addr %s265, 34
      %s267 = smul.addr %s266, 8
      %s268 = scalar_lea.vmem %s7, %s267
      %p269 = scmp.lt.s32.totalorder %s18, 1
      %s270 = scalar_select %p269, %s18, 1
      %s271 = smul.addr %s270, 272
      %s272 = smul.addr %s271, 4
      %s273 = scalar_lea.vmem %s0, %s272
      %p274 = scmp.lt.s32.totalorder %s18, 1
      %s275 = scalar_select %p274, %s18, 1
      %s276 = smul.addr %s275, 34
      %s277 = smul.addr %s276, 8
      %s278 = scalar_lea.vmem %s7, %s277
      %vm280 = vcmask 289792
      %281 = vst.msk [vmem:[#allocation2] sm:$0xf] %vm280, 0
      %282 = vst.msk [vmem:[#allocation2 + $0x4] sm:$0xf] %vm280, 0
      %283 = vst.msk [vmem:[#allocation2 + $0x8] sm:$0xf] %vm280, 0
      %284 = vst.msk [vmem:[#allocation2 + $0xc] sm:$0xf] %vm280, 0
      %285 = vst.msk [vmem:[#allocation2 + $0x10] sm:$0xf] %vm280, 0
      %286 = vst.msk [vmem:[#allocation2 + $0x14] sm:$0xf] %vm280, 0
      %287 = vst.msk [vmem:[#allocation2 + $0x18] sm:$0xf] %vm280, 0
      %288 = vst.msk [vmem:[#allocation2 + $0x1c] sm:$0xf] %vm280, 0
      %289 = vst.msk [vmem:[#allocation2 + $0x20] sm:$0xf] %vm280, 0
      %290 = vst.msk [vmem:[#allocation2 + $0x24] sm:$0xf] %vm280, 0
      %291 = vst.msk [vmem:[#allocation2 + $0x28] sm:$0xf] %vm280, 0
      %292 = vst.msk [vmem:[#allocation2 + $0x2c] sm:$0xf] %vm280, 0
      %293 = vst.msk [vmem:[#allocation2 + $0x30] sm:$0xf] %vm280, 0
      %294 = vst.msk [vmem:[#allocation2 + $0x34] sm:$0xf] %vm280, 0
      %295 = vst.msk [vmem:[#allocation2 + $0x38] sm:$0xf] %vm280, 0
      %296 = vst.msk [vmem:[#allocation2 + $0x3c] sm:$0xf] %vm280, 0
      %297 = vst.msk [vmem:[#allocation2 + $0x40] sm:$0xf] %vm280, 0
      %298 = vst.msk [vmem:[#allocation2 + $0x44] sm:$0xf] %vm280, 0
      %299 = vst.msk [vmem:[#allocation2 + $0x48] sm:$0xf] %vm280, 0
      %300 = vst.msk [vmem:[#allocation2 + $0x4c] sm:$0xf] %vm280, 0
      %301 = vst.msk [vmem:[#allocation2 + $0x50] sm:$0xf] %vm280, 0
      %302 = vst.msk [vmem:[#allocation2 + $0x54] sm:$0xf] %vm280, 0
      %303 = vst.msk [vmem:[#allocation2 + $0x58] sm:$0xf] %vm280, 0
      %304 = vst.msk [vmem:[#allocation2 + $0x5c] sm:$0xf] %vm280, 0
      %305 = vst.msk [vmem:[#allocation2 + $0x60] sm:$0xf] %vm280, 0
      %306 = vst.msk [vmem:[#allocation2 + $0x64] sm:$0xf] %vm280, 0
      %307 = vst.msk [vmem:[#allocation2 + $0x68] sm:$0xf] %vm280, 0
      %308 = vst.msk [vmem:[#allocation2 + $0x6c] sm:$0xf] %vm280, 0
      %309 = vst.msk [vmem:[#allocation2 + $0x70] sm:$0xf] %vm280, 0
      %310 = vst.msk [vmem:[#allocation2 + $0x74] sm:$0xf] %vm280, 0
      %311 = vst.msk [vmem:[#allocation2 + $0x78] sm:$0xf] %vm280, 0
      %312 = vst.msk [vmem:[#allocation2 + $0x7c] sm:$0xf] %vm280, 0
      %313 = vst.msk [vmem:[#allocation2 + $0x80] sm:$0xf] %vm280, 0
      %314 = vst.msk [vmem:[#allocation2 + $0x84] sm:$0xf] %vm280, 0
      %315 = vst.msk [vmem:[#allocation2 + $0x88] sm:$0xf] %vm280, 0
      %316 = vst.msk [vmem:[#allocation2 + $0x8c] sm:$0xf] %vm280, 0
      %317 = vst.msk [vmem:[#allocation2 + $0x90] sm:$0xf] %vm280, 0
      %318 = vst.msk [vmem:[#allocation2 + $0x94] sm:$0xf] %vm280, 0
      %319 = vst.msk [vmem:[#allocation2 + $0x98] sm:$0xf] %vm280, 0
      %320 = vst.msk [vmem:[#allocation2 + $0x9c] sm:$0xf] %vm280, 0
      %vm321 = vcmask 261120
      %322 = vst.msk [vmem:[#allocation3] sm:$0xff] %vm321, 0.0
      %323 = vst.msk [vmem:[#allocation3 + $0x8] sm:$0xff] %vm321, 0.0
      %324 = vst.msk [vmem:[#allocation3 + $0x10] sm:$0xff] %vm321, 0.0
      %325 = vst.msk [vmem:[#allocation3 + $0x18] sm:$0xff] %vm321, 0.0
      %326 = vst.msk [vmem:[#allocation3 + $0x20] sm:$0xff] %vm321, 0.0
      %327 = vst.msk [vmem:[#allocation3 + $0x28] sm:$0xff] %vm321, 0.0
      %328 = vst.msk [vmem:[#allocation3 + $0x30] sm:$0xff] %vm321, 0.0
      %329 = vst.msk [vmem:[#allocation3 + $0x38] sm:$0xff] %vm321, 0.0
      %330 = vst.msk [vmem:[#allocation3 + $0x40] sm:$0xff] %vm321, 0.0
      %331 = vst.msk [vmem:[#allocation3 + $0x48] sm:$0xff] %vm321, 0.0
      %332 = vst.msk [vmem:[#allocation3 + $0x50] sm:$0xff] %vm321, 0.0
      %333 = vst.msk [vmem:[#allocation3 + $0x58] sm:$0xff] %vm321, 0.0
      %334 = vst.msk [vmem:[#allocation3 + $0x60] sm:$0xff] %vm321, 0.0
      %335 = vst.msk [vmem:[#allocation3 + $0x68] sm:$0xff] %vm321, 0.0
      %336 = vst.msk [vmem:[#allocation3 + $0x70] sm:$0xff] %vm321, 0.0
      %337 = vst.msk [vmem:[#allocation3 + $0x78] sm:$0xff] %vm321, 0.0
      %338 = vst.msk [vmem:[#allocation3 + $0x80] sm:$0xff] %vm321, 0.0
      %339 = vst.msk [vmem:[#allocation3 + $0x88] sm:$0xff] %vm321, 0.0
      %340 = vst.msk [vmem:[#allocation3 + $0x90] sm:$0xff] %vm321, 0.0
      %341 = vst.msk [vmem:[#allocation3 + $0x98] sm:$0xff] %vm321, 0.0
      %342 = vst.msk [vmem:[#allocation3 + $0xa0] sm:$0xff] %vm321, 0.0
      %343 = vst.msk [vmem:[#allocation3 + $0xa8] sm:$0xff] %vm321, 0.0
      %344 = vst.msk [vmem:[#allocation3 + $0xb0] sm:$0xff] %vm321, 0.0
      %345 = vst.msk [vmem:[#allocation3 + $0xb8] sm:$0xff] %vm321, 0.0
      %346 = vst.msk [vmem:[#allocation3 + $0xc0] sm:$0xff] %vm321, 0.0
      %347 = vst.msk [vmem:[#allocation3 + $0xc8] sm:$0xff] %vm321, 0.0
      %348 = vst.msk [vmem:[#allocation3 + $0xd0] sm:$0xff] %vm321, 0.0
      %349 = vst.msk [vmem:[#allocation3 + $0xd8] sm:$0xff] %vm321, 0.0
      %350 = vst.msk [vmem:[#allocation3 + $0xe0] sm:$0xff] %vm321, 0.0
      %351 = vst.msk [vmem:[#allocation3 + $0xe8] sm:$0xff] %vm321, 0.0
      %352 = vst.msk [vmem:[#allocation3 + $0xf0] sm:$0xff] %vm321, 0.0
      %353 = vst.msk [vmem:[#allocation3 + $0xf8] sm:$0xff] %vm321, 0.0
      %354 = vst.msk [vmem:[#allocation3 + $0x100] sm:$0xff] %vm321, 0.0
      %355 = vst.msk [vmem:[#allocation3 + $0x108] sm:$0xff] %vm321, 0.0
      %vm356 = vcmask 519168
      %357 = vst.msk [vmem:[#allocation4] sm:$0xf] %vm356, 0
      %358 = vst.msk [vmem:[#allocation4 + $0x4] sm:$0xf] %vm356, 0
      %359 = vst.msk [vmem:[#allocation4 + $0x8] sm:$0xf] %vm356, 0
      %360 = vst.msk [vmem:[#allocation4 + $0xc] sm:$0xf] %vm356, 0
      %361 = vst.msk [vmem:[#allocation4 + $0x10] sm:$0xf] %vm356, 0
      %362 = vst.msk [vmem:[#allocation4 + $0x14] sm:$0xf] %vm356, 0
      %363 = vst.msk [vmem:[#allocation4 + $0x18] sm:$0xf] %vm356, 0
      %364 = vst.msk [vmem:[#allocation4 + $0x1c] sm:$0xf] %vm356, 0
      %365 = vst.msk [vmem:[#allocation4 + $0x20] sm:$0xf] %vm356, 0
      %366 = vst.msk [vmem:[#allocation4 + $0x24] sm:$0xf] %vm356, 0
      %367 = vst.msk [vmem:[#allocation4 + $0x28] sm:$0xf] %vm356, 0
      %368 = vst.msk [vmem:[#allocation4 + $0x2c] sm:$0xf] %vm356, 0
      %369 = vst.msk [vmem:[#allocation4 + $0x30] sm:$0xf] %vm356, 0
      %370 = vst.msk [vmem:[#allocation4 + $0x34] sm:$0xf] %vm356, 0
      %371 = vst.msk [vmem:[#allocation4 + $0x38] sm:$0xf] %vm356, 0
      %372 = vst.msk [vmem:[#allocation4 + $0x3c] sm:$0xf] %vm356, 0
      %373 = vst.msk [vmem:[#allocation4 + $0x40] sm:$0xf] %vm356, 0
      %374 = vst.msk [vmem:[#allocation4 + $0x44] sm:$0xf] %vm356, 0
      %375 = vst.msk [vmem:[#allocation4 + $0x48] sm:$0xf] %vm356, 0
      %376 = vst.msk [vmem:[#allocation4 + $0x4c] sm:$0xf] %vm356, 0
      %377 = vst.msk [vmem:[#allocation4 + $0x50] sm:$0xf] %vm356, 0
      %378 = vst.msk [vmem:[#allocation4 + $0x54] sm:$0xf] %vm356, 0
      %379 = vst.msk [vmem:[#allocation4 + $0x58] sm:$0xf] %vm356, 0
      %380 = vst.msk [vmem:[#allocation4 + $0x5c] sm:$0xf] %vm356, 0
      %381 = vst.msk [vmem:[#allocation4 + $0x60] sm:$0xf] %vm356, 0
      %382 = vst.msk [vmem:[#allocation4 + $0x64] sm:$0xf] %vm356, 0
      %383 = vst.msk [vmem:[#allocation4 + $0x68] sm:$0xf] %vm356, 0
      %384 = vst.msk [vmem:[#allocation4 + $0x6c] sm:$0xf] %vm356, 0
      %385 = vst.msk [vmem:[#allocation4 + $0x70] sm:$0xf] %vm356, 0
      %386 = vst.msk [vmem:[#allocation4 + $0x74] sm:$0xf] %vm356, 0
      %387 = vst.msk [vmem:[#allocation4 + $0x78] sm:$0xf] %vm356, 0
      %388 = vst.msk [vmem:[#allocation4 + $0x7c] sm:$0xf] %vm356, 0
      %389 = vst.msk [vmem:[#allocation4 + $0x80] sm:$0xf] %vm356, 0
      %390 = vst.msk [vmem:[#allocation4 + $0x84] sm:$0xf] %vm356, 0
      %391 = vst.msk [vmem:[#allocation4 + $0x88] sm:$0xf] %vm356, 0
      %392 = vst.msk [vmem:[#allocation4 + $0x8c] sm:$0xf] %vm356, 0
      %393 = vst.msk [vmem:[#allocation4 + $0x90] sm:$0xf] %vm356, 0
      %394 = vst.msk [vmem:[#allocation4 + $0x94] sm:$0xf] %vm356, 0
      %395 = vst.msk [vmem:[#allocation4 + $0x98] sm:$0xf] %vm356, 0
      %396 = vst.msk [vmem:[#allocation4 + $0x9c] sm:$0xf] %vm356, 0
      %397 = vst.msk [vmem:[#allocation5] sm:$0xff] %vm321, 0.0
      %398 = vst.msk [vmem:[#allocation5 + $0x8] sm:$0xff] %vm321, 0.0
      %399 = vst.msk [vmem:[#allocation5 + $0x10] sm:$0xff] %vm321, 0.0
      %400 = vst.msk [vmem:[#allocation5 + $0x18] sm:$0xff] %vm321, 0.0
      %401 = vst.msk [vmem:[#allocation5 + $0x20] sm:$0xff] %vm321, 0.0
      %402 = vst.msk [vmem:[#allocation5 + $0x28] sm:$0xff] %vm321, 0.0
      %403 = vst.msk [vmem:[#allocation5 + $0x30] sm:$0xff] %vm321, 0.0
      %404 = vst.msk [vmem:[#allocation5 + $0x38] sm:$0xff] %vm321, 0.0
      %405 = vst.msk [vmem:[#allocation5 + $0x40] sm:$0xff] %vm321, 0.0
      %406 = vst.msk [vmem:[#allocation5 + $0x48] sm:$0xff] %vm321, 0.0
      %407 = vst.msk [vmem:[#allocation5 + $0x50] sm:$0xff] %vm321, 0.0
      %408 = vst.msk [vmem:[#allocation5 + $0x58] sm:$0xff] %vm321, 0.0
      %409 = vst.msk [vmem:[#allocation5 + $0x60] sm:$0xff] %vm321, 0.0
      %410 = vst.msk [vmem:[#allocation5 + $0x68] sm:$0xff] %vm321, 0.0
      %411 = vst.msk [vmem:[#allocation5 + $0x70] sm:$0xff] %vm321, 0.0
      %412 = vst.msk [vmem:[#allocation5 + $0x78] sm:$0xff] %vm321, 0.0
      %413 = vst.msk [vmem:[#allocation5 + $0x80] sm:$0xff] %vm321, 0.0
      %414 = vst.msk [vmem:[#allocation5 + $0x88] sm:$0xff] %vm321, 0.0
      %415 = vst.msk [vmem:[#allocation5 + $0x90] sm:$0xff] %vm321, 0.0
      %416 = vst.msk [vmem:[#allocation5 + $0x98] sm:$0xff] %vm321, 0.0
      %417 = vst.msk [vmem:[#allocation5 + $0xa0] sm:$0xff] %vm321, 0.0
      %418 = vst.msk [vmem:[#allocation5 + $0xa8] sm:$0xff] %vm321, 0.0
      %419 = vst.msk [vmem:[#allocation5 + $0xb0] sm:$0xff] %vm321, 0.0
      %420 = vst.msk [vmem:[#allocation5 + $0xb8] sm:$0xff] %vm321, 0.0
      %421 = vst.msk [vmem:[#allocation5 + $0xc0] sm:$0xff] %vm321, 0.0
      %422 = vst.msk [vmem:[#allocation5 + $0xc8] sm:$0xff] %vm321, 0.0
      %423 = vst.msk [vmem:[#allocation5 + $0xd0] sm:$0xff] %vm321, 0.0
      %424 = vst.msk [vmem:[#allocation5 + $0xd8] sm:$0xff] %vm321, 0.0
      %425 = vst.msk [vmem:[#allocation5 + $0xe0] sm:$0xff] %vm321, 0.0
      %426 = vst.msk [vmem:[#allocation5 + $0xe8] sm:$0xff] %vm321, 0.0
      %427 = vst.msk [vmem:[#allocation5 + $0xf0] sm:$0xff] %vm321, 0.0
      %428 = vst.msk [vmem:[#allocation5 + $0xf8] sm:$0xff] %vm321, 0.0
      %429 = vst.msk [vmem:[#allocation5 + $0x100] sm:$0xff] %vm321, 0.0
      %430 = vst.msk [vmem:[#allocation5 + $0x108] sm:$0xff] %vm321, 0.0
      %v431 = vlaneseq
      %v432 = vshrl.u32 %v431, 7
      %v433 = vadd.s32 %v432, 8
      %v434 = vadd.s32 %v432, 16
      %v435 = vadd.s32 %v432, 24
      %v436 = vadd.s32 %v432, 32
      %v437 = vadd.s32 %v432, 40
      %v438 = vadd.s32 %v432, 48
      %v439 = vadd.s32 %v432, 56
      %v440 = vadd.s32 %v432, 64
      %v441 = vadd.s32 %v432, 72
      %v442 = vadd.s32 %v432, 80
      %v443 = vadd.s32 %v432, 88
      %v444 = vadd.s32 %v432, 96
      %v445 = vadd.s32 %v432, 104
      %v446 = vadd.s32 %v432, 112
      %v447 = vadd.s32 %v432, 120
      %v448 = vadd.s32 %v432, 128
      %v449 = vadd.s32 %v432, 136
      %v450 = vadd.s32 %v432, 144
      %v451 = vadd.s32 %v432, 152
      %v452 = vadd.s32 %v432, 160
      %v453 = vadd.s32 %v432, 168
      %v454 = vadd.s32 %v432, 176
      %v455 = vadd.s32 %v432, 184
      %v456 = vadd.s32 %v432, 192
      %v457 = vadd.s32 %v432, 200
      %v458 = vadd.s32 %v432, 208
      %v459 = vadd.s32 %v432, 216
      %v460 = vadd.s32 %v432, 224
      %v461 = vadd.s32 %v432, 232
      %v462 = vadd.s32 %v432, 240
      %v463 = vadd.s32 %v432, 248
      %v464 = vadd.s32 %v432, 256
      %v465 = vadd.s32 %v432, 264
      %vm466 = vcmp.lt.s32.totalorder %v432, 0
      %v467 = vsub.s32 0, %v432
      %v468 = vsel %vm466, %v467, %v432
      %v469 = vand.u32 %v468, 65535
      %v470 = vshrl.u32 %v468, 16
      %v472 = vmul.u32 %v469, 61681
      %v473 = vmul.u32 %v469, 61680
      %v474 = vmul.u32 %v470, 61681
      %v475 = vmul.u32 %v470, 61680
      %v476 = vshll.u32 %v473, 16
      %v477 = vshrl.u32 %v473, 16
      %v478 = vshll.u32 %v474, 16
      %v479 = vshrl.u32 %v474, 16
      %vm480 = vc.u32 %v472, %v476
      %v481 = vsel %vm480, 1, 0
      %v482 = vadd.s32 %v472, %v476
      %v483 = vadd.s32 %v475, %v481
      %vm484 = vc.u32 %v482, %v478
      %v485 = vsel %vm484, 1, 0
      %v486 = vadd.s32 %v482, %v478
      %v487 = vadd.s32 %v483, %v485
      %v488 = vadd.s32 %v487, %v477
      %v489 = vadd.s32 %v488, %v479
      %v490 = vshrl.u32 %v489, 4
      %v491 = vmul.u32 %v490, 17
      %v492 = vsub.s32 %v468, %v491
      %v493 = vsub.s32 0, %v492
      %v494 = vsel %vm466, %v493, %v492
      %vm495 = vcmp.lt.s32.totalorder %v433, 0
      %v496 = vsub.s32 0, %v433
      %v497 = vsel %vm495, %v496, %v433
      %v498 = vand.u32 %v497, 65535
      %v499 = vshrl.u32 %v497, 16
      %v501 = vmul.u32 %v498, 61681
      %v502 = vmul.u32 %v498, 61680
      %v503 = vmul.u32 %v499, 61681
      %v504 = vmul.u32 %v499, 61680
      %v505 = vshll.u32 %v502, 16
      %v506 = vshrl.u32 %v502, 16
      %v507 = vshll.u32 %v503, 16
      %v508 = vshrl.u32 %v503, 16
      %vm509 = vc.u32 %v501, %v505
      %v510 = vsel %vm509, 1, 0
      %v511 = vadd.s32 %v501, %v505
      %v512 = vadd.s32 %v504, %v510
      %vm513 = vc.u32 %v511, %v507
      %v514 = vsel %vm513, 1, 0
      %v515 = vadd.s32 %v511, %v507
      %v516 = vadd.s32 %v512, %v514
      %v517 = vadd.s32 %v516, %v506
      %v518 = vadd.s32 %v517, %v508
      %v519 = vshrl.u32 %v518, 4
      %v520 = vmul.u32 %v519, 17
      %v521 = vsub.s32 %v497, %v520
      %v522 = vsub.s32 0, %v521
      %v523 = vsel %vm495, %v522, %v521
      %vm524 = vcmp.lt.s32.totalorder %v434, 0
      %v525 = vsub.s32 0, %v434
      %v526 = vsel %vm524, %v525, %v434
      %v527 = vand.u32 %v526, 65535
      %v528 = vshrl.u32 %v526, 16
      %v530 = vmul.u32 %v527, 61681
      %v531 = vmul.u32 %v527, 61680
      %v532 = vmul.u32 %v528, 61681
      %v533 = vmul.u32 %v528, 61680
      %v534 = vshll.u32 %v531, 16
      %v535 = vshrl.u32 %v531, 16
      %v536 = vshll.u32 %v532, 16
      %v537 = vshrl.u32 %v532, 16
      %vm538 = vc.u32 %v530, %v534
      %v539 = vsel %vm538, 1, 0
      %v540 = vadd.s32 %v530, %v534
      %v541 = vadd.s32 %v533, %v539
      %vm542 = vc.u32 %v540, %v536
      %v543 = vsel %vm542, 1, 0
      %v544 = vadd.s32 %v540, %v536
      %v545 = vadd.s32 %v541, %v543
      %v546 = vadd.s32 %v545, %v535
      %v547 = vadd.s32 %v546, %v537
      %v548 = vshrl.u32 %v547, 4
      %v549 = vmul.u32 %v548, 17
      %v550 = vsub.s32 %v526, %v549
      %v551 = vsub.s32 0, %v550
      %v552 = vsel %vm524, %v551, %v550
      %vm553 = vcmp.lt.s32.totalorder %v435, 0
      %v554 = vsub.s32 0, %v435
      %v555 = vsel %vm553, %v554, %v435
      %v556 = vand.u32 %v555, 65535
      %v557 = vshrl.u32 %v555, 16
      %v559 = vmul.u32 %v556, 61681
      %v560 = vmul.u32 %v556, 61680
      %v561 = vmul.u32 %v557, 61681
      %v562 = vmul.u32 %v557, 61680
      %v563 = vshll.u32 %v560, 16
      %v564 = vshrl.u32 %v560, 16
      %v565 = vshll.u32 %v561, 16
      %v566 = vshrl.u32 %v561, 16
      %vm567 = vc.u32 %v559, %v563
      %v568 = vsel %vm567, 1, 0
      %v569 = vadd.s32 %v559, %v563
      %v570 = vadd.s32 %v562, %v568
      %vm571 = vc.u32 %v569, %v565
      %v572 = vsel %vm571, 1, 0
      %v573 = vadd.s32 %v569, %v565
      %v574 = vadd.s32 %v570, %v572
      %v575 = vadd.s32 %v574, %v564
      %v576 = vadd.s32 %v575, %v566
      %v577 = vshrl.u32 %v576, 4
      %v578 = vmul.u32 %v577, 17
      %v579 = vsub.s32 %v555, %v578
      %v580 = vsub.s32 0, %v579
      %v581 = vsel %vm553, %v580, %v579
      %vm582 = vcmp.lt.s32.totalorder %v436, 0
      %v583 = vsub.s32 0, %v436
      %v584 = vsel %vm582, %v583, %v436
      %v585 = vand.u32 %v584, 65535
      %v586 = vshrl.u32 %v584, 16
      %v588 = vmul.u32 %v585, 61681
      %v589 = vmul.u32 %v585, 61680
      %v590 = vmul.u32 %v586, 61681
      %v591 = vmul.u32 %v586, 61680
      %v592 = vshll.u32 %v589, 16
      %v593 = vshrl.u32 %v589, 16
      %v594 = vshll.u32 %v590, 16
      %v595 = vshrl.u32 %v590, 16
      %vm596 = vc.u32 %v588, %v592
      %v597 = vsel %vm596, 1, 0
      %v598 = vadd.s32 %v588, %v592
      %v599 = vadd.s32 %v591, %v597
      %vm600 = vc.u32 %v598, %v594
      %v601 = vsel %vm600, 1, 0
      %v602 = vadd.s32 %v598, %v594
      %v603 = vadd.s32 %v599, %v601
      %v604 = vadd.s32 %v603, %v593
      %v605 = vadd.s32 %v604, %v595
      %v606 = vshrl.u32 %v605, 4
      %v607 = vmul.u32 %v606, 17
      %v608 = vsub.s32 %v584, %v607
      %v609 = vsub.s32 0, %v608
      %v610 = vsel %vm582, %v609, %v608
      %vm611 = vcmp.lt.s32.totalorder %v437, 0
      %v612 = vsub.s32 0, %v437
      %v613 = vsel %vm611, %v612, %v437
      %v614 = vand.u32 %v613, 65535
      %v615 = vshrl.u32 %v613, 16
      %v617 = vmul.u32 %v614, 61681
      %v618 = vmul.u32 %v614, 61680
      %v619 = vmul.u32 %v615, 61681
      %v620 = vmul.u32 %v615, 61680
      %v621 = vshll.u32 %v618, 16
      %v622 = vshrl.u32 %v618, 16
      %v623 = vshll.u32 %v619, 16
      %v624 = vshrl.u32 %v619, 16
      %vm625 = vc.u32 %v617, %v621
      %v626 = vsel %vm625, 1, 0
      %v627 = vadd.s32 %v617, %v621
      %v628 = vadd.s32 %v620, %v626
      %vm629 = vc.u32 %v627, %v623
      %v630 = vsel %vm629, 1, 0
      %v631 = vadd.s32 %v627, %v623
      %v632 = vadd.s32 %v628, %v630
      %v633 = vadd.s32 %v632, %v622
      %v634 = vadd.s32 %v633, %v624
      %v635 = vshrl.u32 %v634, 4
      %v636 = vmul.u32 %v635, 17
      %v637 = vsub.s32 %v613, %v636
      %v638 = vsub.s32 0, %v637
      %v639 = vsel %vm611, %v638, %v637
      %vm640 = vcmp.lt.s32.totalorder %v438, 0
      %v641 = vsub.s32 0, %v438
      %v642 = vsel %vm640, %v641, %v438
      %v643 = vand.u32 %v642, 65535
      %v644 = vshrl.u32 %v642, 16
      %v646 = vmul.u32 %v643, 61681
      %v647 = vmul.u32 %v643, 61680
      %v648 = vmul.u32 %v644, 61681
      %v649 = vmul.u32 %v644, 61680
      %v650 = vshll.u32 %v647, 16
      %v651 = vshrl.u32 %v647, 16
      %v652 = vshll.u32 %v648, 16
      %v653 = vshrl.u32 %v648, 16
      %vm654 = vc.u32 %v646, %v650
      %v655 = vsel %vm654, 1, 0
      %v656 = vadd.s32 %v646, %v650
      %v657 = vadd.s32 %v649, %v655
      %vm658 = vc.u32 %v656, %v652
      %v659 = vsel %vm658, 1, 0
      %v660 = vadd.s32 %v656, %v652
      %v661 = vadd.s32 %v657, %v659
      %v662 = vadd.s32 %v661, %v651
      %v663 = vadd.s32 %v662, %v653
      %v664 = vshrl.u32 %v663, 4
      %v665 = vmul.u32 %v664, 17
      %v666 = vsub.s32 %v642, %v665
      %v667 = vsub.s32 0, %v666
      %v668 = vsel %vm640, %v667, %v666
      %vm669 = vcmp.lt.s32.totalorder %v439, 0
      %v670 = vsub.s32 0, %v439
      %v671 = vsel %vm669, %v670, %v439
      %v672 = vand.u32 %v671, 65535
      %v673 = vshrl.u32 %v671, 16
      %v675 = vmul.u32 %v672, 61681
      %v676 = vmul.u32 %v672, 61680
      %v677 = vmul.u32 %v673, 61681
      %v678 = vmul.u32 %v673, 61680
      %v679 = vshll.u32 %v676, 16
      %v680 = vshrl.u32 %v676, 16
      %v681 = vshll.u32 %v677, 16
      %v682 = vshrl.u32 %v677, 16
      %vm683 = vc.u32 %v675, %v679
      %v684 = vsel %vm683, 1, 0
      %v685 = vadd.s32 %v675, %v679
      %v686 = vadd.s32 %v678, %v684
      %vm687 = vc.u32 %v685, %v681
      %v688 = vsel %vm687, 1, 0
      %v689 = vadd.s32 %v685, %v681
      %v690 = vadd.s32 %v686, %v688
      %v691 = vadd.s32 %v690, %v680
      %v692 = vadd.s32 %v691, %v682
      %v693 = vshrl.u32 %v692, 4
      %v694 = vmul.u32 %v693, 17
      %v695 = vsub.s32 %v671, %v694
      %v696 = vsub.s32 0, %v695
      %v697 = vsel %vm669, %v696, %v695
      %vm698 = vcmp.lt.s32.totalorder %v440, 0
      %v699 = vsub.s32 0, %v440
      %v700 = vsel %vm698, %v699, %v440
      %v701 = vand.u32 %v700, 65535
      %v702 = vshrl.u32 %v700, 16
      %v704 = vmul.u32 %v701, 61681
      %v705 = vmul.u32 %v701, 61680
      %v706 = vmul.u32 %v702, 61681
      %v707 = vmul.u32 %v702, 61680
      %v708 = vshll.u32 %v705, 16
      %v709 = vshrl.u32 %v705, 16
      %v710 = vshll.u32 %v706, 16
      %v711 = vshrl.u32 %v706, 16
      %vm712 = vc.u32 %v704, %v708
      %v713 = vsel %vm712, 1, 0
      %v714 = vadd.s32 %v704, %v708
      %v715 = vadd.s32 %v707, %v713
      %vm716 = vc.u32 %v714, %v710
      %v717 = vsel %vm716, 1, 0
      %v718 = vadd.s32 %v714, %v710
      %v719 = vadd.s32 %v715, %v717
      %v720 = vadd.s32 %v719, %v709
      %v721 = vadd.s32 %v720, %v711
      %v722 = vshrl.u32 %v721, 4
      %v723 = vmul.u32 %v722, 17
      %v724 = vsub.s32 %v700, %v723
      %v725 = vsub.s32 0, %v724
      %v726 = vsel %vm698, %v725, %v724
      %vm727 = vcmp.lt.s32.totalorder %v441, 0
      %v728 = vsub.s32 0, %v441
      %v729 = vsel %vm727, %v728, %v441
      %v730 = vand.u32 %v729, 65535
      %v731 = vshrl.u32 %v729, 16
      %v733 = vmul.u32 %v730, 61681
      %v734 = vmul.u32 %v730, 61680
      %v735 = vmul.u32 %v731, 61681
      %v736 = vmul.u32 %v731, 61680
      %v737 = vshll.u32 %v734, 16
      %v738 = vshrl.u32 %v734, 16
      %v739 = vshll.u32 %v735, 16
      %v740 = vshrl.u32 %v735, 16
      %vm741 = vc.u32 %v733, %v737
      %v742 = vsel %vm741, 1, 0
      %v743 = vadd.s32 %v733, %v737
      %v744 = vadd.s32 %v736, %v742
      %vm745 = vc.u32 %v743, %v739
      %v746 = vsel %vm745, 1, 0
      %v747 = vadd.s32 %v743, %v739
      %v748 = vadd.s32 %v744, %v746
      %v749 = vadd.s32 %v748, %v738
      %v750 = vadd.s32 %v749, %v740
      %v751 = vshrl.u32 %v750, 4
      %v752 = vmul.u32 %v751, 17
      %v753 = vsub.s32 %v729, %v752
      %v754 = vsub.s32 0, %v753
      %v755 = vsel %vm727, %v754, %v753
      %vm756 = vcmp.lt.s32.totalorder %v442, 0
      %v757 = vsub.s32 0, %v442
      %v758 = vsel %vm756, %v757, %v442
      %v759 = vand.u32 %v758, 65535
      %v760 = vshrl.u32 %v758, 16
      %v762 = vmul.u32 %v759, 61681
      %v763 = vmul.u32 %v759, 61680
      %v764 = vmul.u32 %v760, 61681
      %v765 = vmul.u32 %v760, 61680
      %v766 = vshll.u32 %v763, 16
      %v767 = vshrl.u32 %v763, 16
      %v768 = vshll.u32 %v764, 16
      %v769 = vshrl.u32 %v764, 16
      %vm770 = vc.u32 %v762, %v766
      %v771 = vsel %vm770, 1, 0
      %v772 = vadd.s32 %v762, %v766
      %v773 = vadd.s32 %v765, %v771
      %vm774 = vc.u32 %v772, %v768
      %v775 = vsel %vm774, 1, 0
      %v776 = vadd.s32 %v772, %v768
      %v777 = vadd.s32 %v773, %v775
      %v778 = vadd.s32 %v777, %v767
      %v779 = vadd.s32 %v778, %v769
      %v780 = vshrl.u32 %v779, 4
      %v781 = vmul.u32 %v780, 17
      %v782 = vsub.s32 %v758, %v781
      %v783 = vsub.s32 0, %v782
      %v784 = vsel %vm756, %v783, %v782
      %vm785 = vcmp.lt.s32.totalorder %v443, 0
      %v786 = vsub.s32 0, %v443
      %v787 = vsel %vm785, %v786, %v443
      %v788 = vand.u32 %v787, 65535
      %v789 = vshrl.u32 %v787, 16
      %v791 = vmul.u32 %v788, 61681
      %v792 = vmul.u32 %v788, 61680
      %v793 = vmul.u32 %v789, 61681
      %v794 = vmul.u32 %v789, 61680
      %v795 = vshll.u32 %v792, 16
      %v796 = vshrl.u32 %v792, 16
      %v797 = vshll.u32 %v793, 16
      %v798 = vshrl.u32 %v793, 16
      %vm799 = vc.u32 %v791, %v795
      %v800 = vsel %vm799, 1, 0
      %v801 = vadd.s32 %v791, %v795
      %v802 = vadd.s32 %v794, %v800
      %vm803 = vc.u32 %v801, %v797
      %v804 = vsel %vm803, 1, 0
      %v805 = vadd.s32 %v801, %v797
      %v806 = vadd.s32 %v802, %v804
      %v807 = vadd.s32 %v806, %v796
      %v808 = vadd.s32 %v807, %v798
      %v809 = vshrl.u32 %v808, 4
      %v810 = vmul.u32 %v809, 17
      %v811 = vsub.s32 %v787, %v810
      %v812 = vsub.s32 0, %v811
      %v813 = vsel %vm785, %v812, %v811
      %vm814 = vcmp.lt.s32.totalorder %v444, 0
      %v815 = vsub.s32 0, %v444
      %v816 = vsel %vm814, %v815, %v444
      %v817 = vand.u32 %v816, 65535
      %v818 = vshrl.u32 %v816, 16
      %v820 = vmul.u32 %v817, 61681
      %v821 = vmul.u32 %v817, 61680
      %v822 = vmul.u32 %v818, 61681
      %v823 = vmul.u32 %v818, 61680
      %v824 = vshll.u32 %v821, 16
      %v825 = vshrl.u32 %v821, 16
      %v826 = vshll.u32 %v822, 16
      %v827 = vshrl.u32 %v822, 16
      %vm828 = vc.u32 %v820, %v824
      %v829 = vsel %vm828, 1, 0
      %v830 = vadd.s32 %v820, %v824
      %v831 = vadd.s32 %v823, %v829
      %vm832 = vc.u32 %v830, %v826
      %v833 = vsel %vm832, 1, 0
      %v834 = vadd.s32 %v830, %v826
      %v835 = vadd.s32 %v831, %v833
      %v836 = vadd.s32 %v835, %v825
      %v837 = vadd.s32 %v836, %v827
      %v838 = vshrl.u32 %v837, 4
      %v839 = vmul.u32 %v838, 17
      %v840 = vsub.s32 %v816, %v839
      %v841 = vsub.s32 0, %v840
      %v842 = vsel %vm814, %v841, %v840
      %vm843 = vcmp.lt.s32.totalorder %v445, 0
      %v844 = vsub.s32 0, %v445
      %v845 = vsel %vm843, %v844, %v445
      %v846 = vand.u32 %v845, 65535
      %v847 = vshrl.u32 %v845, 16
      %v849 = vmul.u32 %v846, 61681
      %v850 = vmul.u32 %v846, 61680
      %v851 = vmul.u32 %v847, 61681
      %v852 = vmul.u32 %v847, 61680
      %v853 = vshll.u32 %v850, 16
      %v854 = vshrl.u32 %v850, 16
      %v855 = vshll.u32 %v851, 16
      %v856 = vshrl.u32 %v851, 16
      %vm857 = vc.u32 %v849, %v853
      %v858 = vsel %vm857, 1, 0
      %v859 = vadd.s32 %v849, %v853
      %v860 = vadd.s32 %v852, %v858
      %vm861 = vc.u32 %v859, %v855
      %v862 = vsel %vm861, 1, 0
      %v863 = vadd.s32 %v859, %v855
      %v864 = vadd.s32 %v860, %v862
      %v865 = vadd.s32 %v864, %v854
      %v866 = vadd.s32 %v865, %v856
      %v867 = vshrl.u32 %v866, 4
      %v868 = vmul.u32 %v867, 17
      %v869 = vsub.s32 %v845, %v868
      %v870 = vsub.s32 0, %v869
      %v871 = vsel %vm843, %v870, %v869
      %vm872 = vcmp.lt.s32.totalorder %v446, 0
      %v873 = vsub.s32 0, %v446
      %v874 = vsel %vm872, %v873, %v446
      %v875 = vand.u32 %v874, 65535
      %v876 = vshrl.u32 %v874, 16
      %v878 = vmul.u32 %v875, 61681
      %v879 = vmul.u32 %v875, 61680
      %v880 = vmul.u32 %v876, 61681
      %v881 = vmul.u32 %v876, 61680
      %v882 = vshll.u32 %v879, 16
      %v883 = vshrl.u32 %v879, 16
      %v884 = vshll.u32 %v880, 16
      %v885 = vshrl.u32 %v880, 16
      %vm886 = vc.u32 %v878, %v882
      %v887 = vsel %vm886, 1, 0
      %v888 = vadd.s32 %v878, %v882
      %v889 = vadd.s32 %v881, %v887
      %vm890 = vc.u32 %v888, %v884
      %v891 = vsel %vm890, 1, 0
      %v892 = vadd.s32 %v888, %v884
      %v893 = vadd.s32 %v889, %v891
      %v894 = vadd.s32 %v893, %v883
      %v895 = vadd.s32 %v894, %v885
      %v896 = vshrl.u32 %v895, 4
      %v897 = vmul.u32 %v896, 17
      %v898 = vsub.s32 %v874, %v897
      %v899 = vsub.s32 0, %v898
      %v900 = vsel %vm872, %v899, %v898
      %vm901 = vcmp.lt.s32.totalorder %v447, 0
      %v902 = vsub.s32 0, %v447
      %v903 = vsel %vm901, %v902, %v447
      %v904 = vand.u32 %v903, 65535
      %v905 = vshrl.u32 %v903, 16
      %v907 = vmul.u32 %v904, 61681
      %v908 = vmul.u32 %v904, 61680
      %v909 = vmul.u32 %v905, 61681
      %v910 = vmul.u32 %v905, 61680
      %v911 = vshll.u32 %v908, 16
      %v912 = vshrl.u32 %v908, 16
      %v913 = vshll.u32 %v909, 16
      %v914 = vshrl.u32 %v909, 16
      %vm915 = vc.u32 %v907, %v911
      %v916 = vsel %vm915, 1, 0
      %v917 = vadd.s32 %v907, %v911
      %v918 = vadd.s32 %v910, %v916
      %vm919 = vc.u32 %v917, %v913
      %v920 = vsel %vm919, 1, 0
      %v921 = vadd.s32 %v917, %v913
      %v922 = vadd.s32 %v918, %v920
      %v923 = vadd.s32 %v922, %v912
      %v924 = vadd.s32 %v923, %v914
      %v925 = vshrl.u32 %v924, 4
      %v926 = vmul.u32 %v925, 17
      %v927 = vsub.s32 %v903, %v926
      %v928 = vsub.s32 0, %v927
      %v929 = vsel %vm901, %v928, %v927
      %vm930 = vcmp.lt.s32.totalorder %v448, 0
      %v931 = vsub.s32 0, %v448
      %v932 = vsel %vm930, %v931, %v448
      %v933 = vand.u32 %v932, 65535
      %v934 = vshrl.u32 %v932, 16
      %v936 = vmul.u32 %v933, 61681
      %v937 = vmul.u32 %v933, 61680
      %v938 = vmul.u32 %v934, 61681
      %v939 = vmul.u32 %v934, 61680
      %v940 = vshll.u32 %v937, 16
      %v941 = vshrl.u32 %v937, 16
      %v942 = vshll.u32 %v938, 16
      %v943 = vshrl.u32 %v938, 16
      %vm944 = vc.u32 %v936, %v940
      %v945 = vsel %vm944, 1, 0
      %v946 = vadd.s32 %v936, %v940
      %v947 = vadd.s32 %v939, %v945
      %vm948 = vc.u32 %v946, %v942
      %v949 = vsel %vm948, 1, 0
      %v950 = vadd.s32 %v946, %v942
      %v951 = vadd.s32 %v947, %v949
      %v952 = vadd.s32 %v951, %v941
      %v953 = vadd.s32 %v952, %v943
      %v954 = vshrl.u32 %v953, 4
      %v955 = vmul.u32 %v954, 17
      %v956 = vsub.s32 %v932, %v955
      %v957 = vsub.s32 0, %v956
      %v958 = vsel %vm930, %v957, %v956
      %vm959 = vcmp.lt.s32.totalorder %v449, 0
      %v960 = vsub.s32 0, %v449
      %v961 = vsel %vm959, %v960, %v449
      %v962 = vand.u32 %v961, 65535
      %v963 = vshrl.u32 %v961, 16
      %v965 = vmul.u32 %v962, 61681
      %v966 = vmul.u32 %v962, 61680
      %v967 = vmul.u32 %v963, 61681
      %v968 = vmul.u32 %v963, 61680
      %v969 = vshll.u32 %v966, 16
      %v970 = vshrl.u32 %v966, 16
      %v971 = vshll.u32 %v967, 16
      %v972 = vshrl.u32 %v967, 16
      %vm973 = vc.u32 %v965, %v969
      %v974 = vsel %vm973, 1, 0
      %v975 = vadd.s32 %v965, %v969
      %v976 = vadd.s32 %v968, %v974
      %vm977 = vc.u32 %v975, %v971
      %v978 = vsel %vm977, 1, 0
      %v979 = vadd.s32 %v975, %v971
      %v980 = vadd.s32 %v976, %v978
      %v981 = vadd.s32 %v980, %v970
      %v982 = vadd.s32 %v981, %v972
      %v983 = vshrl.u32 %v982, 4
      %v984 = vmul.u32 %v983, 17
      %v985 = vsub.s32 %v961, %v984
      %v986 = vsub.s32 0, %v985
      %v987 = vsel %vm959, %v986, %v985
      %vm988 = vcmp.lt.s32.totalorder %v450, 0
      %v989 = vsub.s32 0, %v450
      %v990 = vsel %vm988, %v989, %v450
      %v991 = vand.u32 %v990, 65535
      %v992 = vshrl.u32 %v990, 16
      %v994 = vmul.u32 %v991, 61681
      %v995 = vmul.u32 %v991, 61680
      %v996 = vmul.u32 %v992, 61681
      %v997 = vmul.u32 %v992, 61680
      %v998 = vshll.u32 %v995, 16
      %v999 = vshrl.u32 %v995, 16
      %v1000 = vshll.u32 %v996, 16
      %v1001 = vshrl.u32 %v996, 16
      %vm1002 = vc.u32 %v994, %v998
      %v1003 = vsel %vm1002, 1, 0
      %v1004 = vadd.s32 %v994, %v998
      %v1005 = vadd.s32 %v997, %v1003
      %vm1006 = vc.u32 %v1004, %v1000
      %v1007 = vsel %vm1006, 1, 0
      %v1008 = vadd.s32 %v1004, %v1000
      %v1009 = vadd.s32 %v1005, %v1007
      %v1010 = vadd.s32 %v1009, %v999
      %v1011 = vadd.s32 %v1010, %v1001
      %v1012 = vshrl.u32 %v1011, 4
      %v1013 = vmul.u32 %v1012, 17
      %v1014 = vsub.s32 %v990, %v1013
      %v1015 = vsub.s32 0, %v1014
      %v1016 = vsel %vm988, %v1015, %v1014
      %vm1017 = vcmp.lt.s32.totalorder %v451, 0
      %v1018 = vsub.s32 0, %v451
      %v1019 = vsel %vm1017, %v1018, %v451
      %v1020 = vand.u32 %v1019, 65535
      %v1021 = vshrl.u32 %v1019, 16
      %v1023 = vmul.u32 %v1020, 61681
      %v1024 = vmul.u32 %v1020, 61680
      %v1025 = vmul.u32 %v1021, 61681
      %v1026 = vmul.u32 %v1021, 61680
      %v1027 = vshll.u32 %v1024, 16
      %v1028 = vshrl.u32 %v1024, 16
      %v1029 = vshll.u32 %v1025, 16
      %v1030 = vshrl.u32 %v1025, 16
      %vm1031 = vc.u32 %v1023, %v1027
      %v1032 = vsel %vm1031, 1, 0
      %v1033 = vadd.s32 %v1023, %v1027
      %v1034 = vadd.s32 %v1026, %v1032
      %vm1035 = vc.u32 %v1033, %v1029
      %v1036 = vsel %vm1035, 1, 0
      %v1037 = vadd.s32 %v1033, %v1029
      %v1038 = vadd.s32 %v1034, %v1036
      %v1039 = vadd.s32 %v1038, %v1028
      %v1040 = vadd.s32 %v1039, %v1030
      %v1041 = vshrl.u32 %v1040, 4
      %v1042 = vmul.u32 %v1041, 17
      %v1043 = vsub.s32 %v1019, %v1042
      %v1044 = vsub.s32 0, %v1043
      %v1045 = vsel %vm1017, %v1044, %v1043
      %vm1046 = vcmp.lt.s32.totalorder %v452, 0
      %v1047 = vsub.s32 0, %v452
      %v1048 = vsel %vm1046, %v1047, %v452
      %v1049 = vand.u32 %v1048, 65535
      %v1050 = vshrl.u32 %v1048, 16
      %v1052 = vmul.u32 %v1049, 61681
      %v1053 = vmul.u32 %v1049, 61680
      %v1054 = vmul.u32 %v1050, 61681
      %v1055 = vmul.u32 %v1050, 61680
      %v1056 = vshll.u32 %v1053, 16
      %v1057 = vshrl.u32 %v1053, 16
      %v1058 = vshll.u32 %v1054, 16
      %v1059 = vshrl.u32 %v1054, 16
      %vm1060 = vc.u32 %v1052, %v1056
      %v1061 = vsel %vm1060, 1, 0
      %v1062 = vadd.s32 %v1052, %v1056
      %v1063 = vadd.s32 %v1055, %v1061
      %vm1064 = vc.u32 %v1062, %v1058
      %v1065 = vsel %vm1064, 1, 0
      %v1066 = vadd.s32 %v1062, %v1058
      %v1067 = vadd.s32 %v1063, %v1065
      %v1068 = vadd.s32 %v1067, %v1057
      %v1069 = vadd.s32 %v1068, %v1059
      %v1070 = vshrl.u32 %v1069, 4
      %v1071 = vmul.u32 %v1070, 17
      %v1072 = vsub.s32 %v1048, %v1071
      %v1073 = vsub.s32 0, %v1072
      %v1074 = vsel %vm1046, %v1073, %v1072
      %vm1075 = vcmp.lt.s32.totalorder %v453, 0
      %v1076 = vsub.s32 0, %v453
      %v1077 = vsel %vm1075, %v1076, %v453
      %v1078 = vand.u32 %v1077, 65535
      %v1079 = vshrl.u32 %v1077, 16
      %v1081 = vmul.u32 %v1078, 61681
      %v1082 = vmul.u32 %v1078, 61680
      %v1083 = vmul.u32 %v1079, 61681
      %v1084 = vmul.u32 %v1079, 61680
      %v1085 = vshll.u32 %v1082, 16
      %v1086 = vshrl.u32 %v1082, 16
      %v1087 = vshll.u32 %v1083, 16
      %v1088 = vshrl.u32 %v1083, 16
      %vm1089 = vc.u32 %v1081, %v1085
      %v1090 = vsel %vm1089, 1, 0
      %v1091 = vadd.s32 %v1081, %v1085
      %v1092 = vadd.s32 %v1084, %v1090
      %vm1093 = vc.u32 %v1091, %v1087
      %v1094 = vsel %vm1093, 1, 0
      %v1095 = vadd.s32 %v1091, %v1087
      %v1096 = vadd.s32 %v1092, %v1094
      %v1097 = vadd.s32 %v1096, %v1086
      %v1098 = vadd.s32 %v1097, %v1088
      %v1099 = vshrl.u32 %v1098, 4
      %v1100 = vmul.u32 %v1099, 17
      %v1101 = vsub.s32 %v1077, %v1100
      %v1102 = vsub.s32 0, %v1101
      %v1103 = vsel %vm1075, %v1102, %v1101
      %vm1104 = vcmp.lt.s32.totalorder %v454, 0
      %v1105 = vsub.s32 0, %v454
      %v1106 = vsel %vm1104, %v1105, %v454
      %v1107 = vand.u32 %v1106, 65535
      %v1108 = vshrl.u32 %v1106, 16
      %v1110 = vmul.u32 %v1107, 61681
      %v1111 = vmul.u32 %v1107, 61680
      %v1112 = vmul.u32 %v1108, 61681
      %v1113 = vmul.u32 %v1108, 61680
      %v1114 = vshll.u32 %v1111, 16
      %v1115 = vshrl.u32 %v1111, 16
      %v1116 = vshll.u32 %v1112, 16
      %v1117 = vshrl.u32 %v1112, 16
      %vm1118 = vc.u32 %v1110, %v1114
      %v1119 = vsel %vm1118, 1, 0
      %v1120 = vadd.s32 %v1110, %v1114
      %v1121 = vadd.s32 %v1113, %v1119
      %vm1122 = vc.u32 %v1120, %v1116
      %v1123 = vsel %vm1122, 1, 0
      %v1124 = vadd.s32 %v1120, %v1116
      %v1125 = vadd.s32 %v1121, %v1123
      %v1126 = vadd.s32 %v1125, %v1115
      %v1127 = vadd.s32 %v1126, %v1117
      %v1128 = vshrl.u32 %v1127, 4
      %v1129 = vmul.u32 %v1128, 17
      %v1130 = vsub.s32 %v1106, %v1129
      %v1131 = vsub.s32 0, %v1130
      %v1132 = vsel %vm1104, %v1131, %v1130
      %vm1133 = vcmp.lt.s32.totalorder %v455, 0
      %v1134 = vsub.s32 0, %v455
      %v1135 = vsel %vm1133, %v1134, %v455
      %v1136 = vand.u32 %v1135, 65535
      %v1137 = vshrl.u32 %v1135, 16
      %v1139 = vmul.u32 %v1136, 61681
      %v1140 = vmul.u32 %v1136, 61680
      %v1141 = vmul.u32 %v1137, 61681
      %v1142 = vmul.u32 %v1137, 61680
      %v1143 = vshll.u32 %v1140, 16
      %v1144 = vshrl.u32 %v1140, 16
      %v1145 = vshll.u32 %v1141, 16
      %v1146 = vshrl.u32 %v1141, 16
      %vm1147 = vc.u32 %v1139, %v1143
      %v1148 = vsel %vm1147, 1, 0
      %v1149 = vadd.s32 %v1139, %v1143
      %v1150 = vadd.s32 %v1142, %v1148
      %vm1151 = vc.u32 %v1149, %v1145
      %v1152 = vsel %vm1151, 1, 0
      %v1153 = vadd.s32 %v1149, %v1145
      %v1154 = vadd.s32 %v1150, %v1152
      %v1155 = vadd.s32 %v1154, %v1144
      %v1156 = vadd.s32 %v1155, %v1146
      %v1157 = vshrl.u32 %v1156, 4
      %v1158 = vmul.u32 %v1157, 17
      %v1159 = vsub.s32 %v1135, %v1158
      %v1160 = vsub.s32 0, %v1159
      %v1161 = vsel %vm1133, %v1160, %v1159
      %vm1162 = vcmp.lt.s32.totalorder %v456, 0
      %v1163 = vsub.s32 0, %v456
      %v1164 = vsel %vm1162, %v1163, %v456
      %v1165 = vand.u32 %v1164, 65535
      %v1166 = vshrl.u32 %v1164, 16
      %v1168 = vmul.u32 %v1165, 61681
      %v1169 = vmul.u32 %v1165, 61680
      %v1170 = vmul.u32 %v1166, 61681
      %v1171 = vmul.u32 %v1166, 61680
      %v1172 = vshll.u32 %v1169, 16
      %v1173 = vshrl.u32 %v1169, 16
      %v1174 = vshll.u32 %v1170, 16
      %v1175 = vshrl.u32 %v1170, 16
      %vm1176 = vc.u32 %v1168, %v1172
      %v1177 = vsel %vm1176, 1, 0
      %v1178 = vadd.s32 %v1168, %v1172
      %v1179 = vadd.s32 %v1171, %v1177
      %vm1180 = vc.u32 %v1178, %v1174
      %v1181 = vsel %vm1180, 1, 0
      %v1182 = vadd.s32 %v1178, %v1174
      %v1183 = vadd.s32 %v1179, %v1181
      %v1184 = vadd.s32 %v1183, %v1173
      %v1185 = vadd.s32 %v1184, %v1175
      %v1186 = vshrl.u32 %v1185, 4
      %v1187 = vmul.u32 %v1186, 17
      %v1188 = vsub.s32 %v1164, %v1187
      %v1189 = vsub.s32 0, %v1188
      %v1190 = vsel %vm1162, %v1189, %v1188
      %vm1191 = vcmp.lt.s32.totalorder %v457, 0
      %v1192 = vsub.s32 0, %v457
      %v1193 = vsel %vm1191, %v1192, %v457
      %v1194 = vand.u32 %v1193, 65535
      %v1195 = vshrl.u32 %v1193, 16
      %v1197 = vmul.u32 %v1194, 61681
      %v1198 = vmul.u32 %v1194, 61680
      %v1199 = vmul.u32 %v1195, 61681
      %v1200 = vmul.u32 %v1195, 61680
      %v1201 = vshll.u32 %v1198, 16
      %v1202 = vshrl.u32 %v1198, 16
      %v1203 = vshll.u32 %v1199, 16
      %v1204 = vshrl.u32 %v1199, 16
      %vm1205 = vc.u32 %v1197, %v1201
      %v1206 = vsel %vm1205, 1, 0
      %v1207 = vadd.s32 %v1197, %v1201
      %v1208 = vadd.s32 %v1200, %v1206
      %vm1209 = vc.u32 %v1207, %v1203
      %v1210 = vsel %vm1209, 1, 0
      %v1211 = vadd.s32 %v1207, %v1203
      %v1212 = vadd.s32 %v1208, %v1210
      %v1213 = vadd.s32 %v1212, %v1202
      %v1214 = vadd.s32 %v1213, %v1204
      %v1215 = vshrl.u32 %v1214, 4
      %v1216 = vmul.u32 %v1215, 17
      %v1217 = vsub.s32 %v1193, %v1216
      %v1218 = vsub.s32 0, %v1217
      %v1219 = vsel %vm1191, %v1218, %v1217
      %vm1220 = vcmp.lt.s32.totalorder %v458, 0
      %v1221 = vsub.s32 0, %v458
      %v1222 = vsel %vm1220, %v1221, %v458
      %v1223 = vand.u32 %v1222, 65535
      %v1224 = vshrl.u32 %v1222, 16
      %v1226 = vmul.u32 %v1223, 61681
      %v1227 = vmul.u32 %v1223, 61680
      %v1228 = vmul.u32 %v1224, 61681
      %v1229 = vmul.u32 %v1224, 61680
      %v1230 = vshll.u32 %v1227, 16
      %v1231 = vshrl.u32 %v1227, 16
      %v1232 = vshll.u32 %v1228, 16
      %v1233 = vshrl.u32 %v1228, 16
      %vm1234 = vc.u32 %v1226, %v1230
      %v1235 = vsel %vm1234, 1, 0
      %v1236 = vadd.s32 %v1226, %v1230
      %v1237 = vadd.s32 %v1229, %v1235
      %vm1238 = vc.u32 %v1236, %v1232
      %v1239 = vsel %vm1238, 1, 0
      %v1240 = vadd.s32 %v1236, %v1232
      %v1241 = vadd.s32 %v1237, %v1239
      %v1242 = vadd.s32 %v1241, %v1231
      %v1243 = vadd.s32 %v1242, %v1233
      %v1244 = vshrl.u32 %v1243, 4
      %v1245 = vmul.u32 %v1244, 17
      %v1246 = vsub.s32 %v1222, %v1245
      %v1247 = vsub.s32 0, %v1246
      %v1248 = vsel %vm1220, %v1247, %v1246
      %vm1249 = vcmp.lt.s32.totalorder %v459, 0
      %v1250 = vsub.s32 0, %v459
      %v1251 = vsel %vm1249, %v1250, %v459
      %v1252 = vand.u32 %v1251, 65535
      %v1253 = vshrl.u32 %v1251, 16
      %v1255 = vmul.u32 %v1252, 61681
      %v1256 = vmul.u32 %v1252, 61680
      %v1257 = vmul.u32 %v1253, 61681
      %v1258 = vmul.u32 %v1253, 61680
      %v1259 = vshll.u32 %v1256, 16
      %v1260 = vshrl.u32 %v1256, 16
      %v1261 = vshll.u32 %v1257, 16
      %v1262 = vshrl.u32 %v1257, 16
      %vm1263 = vc.u32 %v1255, %v1259
      %v1264 = vsel %vm1263, 1, 0
      %v1265 = vadd.s32 %v1255, %v1259
      %v1266 = vadd.s32 %v1258, %v1264
      %vm1267 = vc.u32 %v1265, %v1261
      %v1268 = vsel %vm1267, 1, 0
      %v1269 = vadd.s32 %v1265, %v1261
      %v1270 = vadd.s32 %v1266, %v1268
      %v1271 = vadd.s32 %v1270, %v1260
      %v1272 = vadd.s32 %v1271, %v1262
      %v1273 = vshrl.u32 %v1272, 4
      %v1274 = vmul.u32 %v1273, 17
      %v1275 = vsub.s32 %v1251, %v1274
      %v1276 = vsub.s32 0, %v1275
      %v1277 = vsel %vm1249, %v1276, %v1275
      %vm1278 = vcmp.lt.s32.totalorder %v460, 0
      %v1279 = vsub.s32 0, %v460
      %v1280 = vsel %vm1278, %v1279, %v460
      %v1281 = vand.u32 %v1280, 65535
      %v1282 = vshrl.u32 %v1280, 16
      %v1284 = vmul.u32 %v1281, 61681
      %v1285 = vmul.u32 %v1281, 61680
      %v1286 = vmul.u32 %v1282, 61681
      %v1287 = vmul.u32 %v1282, 61680
      %v1288 = vshll.u32 %v1285, 16
      %v1289 = vshrl.u32 %v1285, 16
      %v1290 = vshll.u32 %v1286, 16
      %v1291 = vshrl.u32 %v1286, 16
      %vm1292 = vc.u32 %v1284, %v1288
      %v1293 = vsel %vm1292, 1, 0
      %v1294 = vadd.s32 %v1284, %v1288
      %v1295 = vadd.s32 %v1287, %v1293
      %vm1296 = vc.u32 %v1294, %v1290
      %v1297 = vsel %vm1296, 1, 0
      %v1298 = vadd.s32 %v1294, %v1290
      %v1299 = vadd.s32 %v1295, %v1297
      %v1300 = vadd.s32 %v1299, %v1289
      %v1301 = vadd.s32 %v1300, %v1291
      %v1302 = vshrl.u32 %v1301, 4
      %v1303 = vmul.u32 %v1302, 17
      %v1304 = vsub.s32 %v1280, %v1303
      %v1305 = vsub.s32 0, %v1304
      %v1306 = vsel %vm1278, %v1305, %v1304
      %vm1307 = vcmp.lt.s32.totalorder %v461, 0
      %v1308 = vsub.s32 0, %v461
      %v1309 = vsel %vm1307, %v1308, %v461
      %v1310 = vand.u32 %v1309, 65535
      %v1311 = vshrl.u32 %v1309, 16
      %v1313 = vmul.u32 %v1310, 61681
      %v1314 = vmul.u32 %v1310, 61680
      %v1315 = vmul.u32 %v1311, 61681
      %v1316 = vmul.u32 %v1311, 61680
      %v1317 = vshll.u32 %v1314, 16
      %v1318 = vshrl.u32 %v1314, 16
      %v1319 = vshll.u32 %v1315, 16
      %v1320 = vshrl.u32 %v1315, 16
      %vm1321 = vc.u32 %v1313, %v1317
      %v1322 = vsel %vm1321, 1, 0
      %v1323 = vadd.s32 %v1313, %v1317
      %v1324 = vadd.s32 %v1316, %v1322
      %vm1325 = vc.u32 %v1323, %v1319
      %v1326 = vsel %vm1325, 1, 0
      %v1327 = vadd.s32 %v1323, %v1319
      %v1328 = vadd.s32 %v1324, %v1326
      %v1329 = vadd.s32 %v1328, %v1318
      %v1330 = vadd.s32 %v1329, %v1320
      %v1331 = vshrl.u32 %v1330, 4
      %v1332 = vmul.u32 %v1331, 17
      %v1333 = vsub.s32 %v1309, %v1332
      %v1334 = vsub.s32 0, %v1333
      %v1335 = vsel %vm1307, %v1334, %v1333
      %vm1336 = vcmp.lt.s32.totalorder %v462, 0
      %v1337 = vsub.s32 0, %v462
      %v1338 = vsel %vm1336, %v1337, %v462
      %v1339 = vand.u32 %v1338, 65535
      %v1340 = vshrl.u32 %v1338, 16
      %v1342 = vmul.u32 %v1339, 61681
      %v1343 = vmul.u32 %v1339, 61680
      %v1344 = vmul.u32 %v1340, 61681
      %v1345 = vmul.u32 %v1340, 61680
      %v1346 = vshll.u32 %v1343, 16
      %v1347 = vshrl.u32 %v1343, 16
      %v1348 = vshll.u32 %v1344, 16
      %v1349 = vshrl.u32 %v1344, 16
      %vm1350 = vc.u32 %v1342, %v1346
      %v1351 = vsel %vm1350, 1, 0
      %v1352 = vadd.s32 %v1342, %v1346
      %v1353 = vadd.s32 %v1345, %v1351
      %vm1354 = vc.u32 %v1352, %v1348
      %v1355 = vsel %vm1354, 1, 0
      %v1356 = vadd.s32 %v1352, %v1348
      %v1357 = vadd.s32 %v1353, %v1355
      %v1358 = vadd.s32 %v1357, %v1347
      %v1359 = vadd.s32 %v1358, %v1349
      %v1360 = vshrl.u32 %v1359, 4
      %v1361 = vmul.u32 %v1360, 17
      %v1362 = vsub.s32 %v1338, %v1361
      %v1363 = vsub.s32 0, %v1362
      %v1364 = vsel %vm1336, %v1363, %v1362
      %vm1365 = vcmp.lt.s32.totalorder %v463, 0
      %v1366 = vsub.s32 0, %v463
      %v1367 = vsel %vm1365, %v1366, %v463
      %v1368 = vand.u32 %v1367, 65535
      %v1369 = vshrl.u32 %v1367, 16
      %v1371 = vmul.u32 %v1368, 61681
      %v1372 = vmul.u32 %v1368, 61680
      %v1373 = vmul.u32 %v1369, 61681
      %v1374 = vmul.u32 %v1369, 61680
      %v1375 = vshll.u32 %v1372, 16
      %v1376 = vshrl.u32 %v1372, 16
      %v1377 = vshll.u32 %v1373, 16
      %v1378 = vshrl.u32 %v1373, 16
      %vm1379 = vc.u32 %v1371, %v1375
      %v1380 = vsel %vm1379, 1, 0
      %v1381 = vadd.s32 %v1371, %v1375
      %v1382 = vadd.s32 %v1374, %v1380
      %vm1383 = vc.u32 %v1381, %v1377
      %v1384 = vsel %vm1383, 1, 0
      %v1385 = vadd.s32 %v1381, %v1377
      %v1386 = vadd.s32 %v1382, %v1384
      %v1387 = vadd.s32 %v1386, %v1376
      %v1388 = vadd.s32 %v1387, %v1378
      %v1389 = vshrl.u32 %v1388, 4
      %v1390 = vmul.u32 %v1389, 17
      %v1391 = vsub.s32 %v1367, %v1390
      %v1392 = vsub.s32 0, %v1391
      %v1393 = vsel %vm1365, %v1392, %v1391
      %vm1394 = vcmp.lt.s32.totalorder %v464, 0
      %v1395 = vsub.s32 0, %v464
      %v1396 = vsel %vm1394, %v1395, %v464
      %v1397 = vand.u32 %v1396, 65535
      %v1398 = vshrl.u32 %v1396, 16
      %v1400 = vmul.u32 %v1397, 61681
      %v1401 = vmul.u32 %v1397, 61680
      %v1402 = vmul.u32 %v1398, 61681
      %v1403 = vmul.u32 %v1398, 61680
      %v1404 = vshll.u32 %v1401, 16
      %v1405 = vshrl.u32 %v1401, 16
      %v1406 = vshll.u32 %v1402, 16
      %v1407 = vshrl.u32 %v1402, 16
      %vm1408 = vc.u32 %v1400, %v1404
      %v1409 = vsel %vm1408, 1, 0
      %v1410 = vadd.s32 %v1400, %v1404
      %v1411 = vadd.s32 %v1403, %v1409
      %vm1412 = vc.u32 %v1410, %v1406
      %v1413 = vsel %vm1412, 1, 0
      %v1414 = vadd.s32 %v1410, %v1406
      %v1415 = vadd.s32 %v1411, %v1413
      %v1416 = vadd.s32 %v1415, %v1405
      %v1417 = vadd.s32 %v1416, %v1407
      %v1418 = vshrl.u32 %v1417, 4
      %v1419 = vmul.u32 %v1418, 17
      %v1420 = vsub.s32 %v1396, %v1419
      %v1421 = vsub.s32 0, %v1420
      %v1422 = vsel %vm1394, %v1421, %v1420
      %vm1423 = vcmp.lt.s32.totalorder %v465, 0
      %v1424 = vsub.s32 0, %v465
      %v1425 = vsel %vm1423, %v1424, %v465
      %v1426 = vand.u32 %v1425, 65535
      %v1427 = vshrl.u32 %v1425, 16
      %v1429 = vmul.u32 %v1426, 61681
      %v1430 = vmul.u32 %v1426, 61680
      %v1431 = vmul.u32 %v1427, 61681
      %v1432 = vmul.u32 %v1427, 61680
      %v1433 = vshll.u32 %v1430, 16
      %v1434 = vshrl.u32 %v1430, 16
      %v1435 = vshll.u32 %v1431, 16
      %v1436 = vshrl.u32 %v1431, 16
      %vm1437 = vc.u32 %v1429, %v1433
      %v1438 = vsel %vm1437, 1, 0
      %v1439 = vadd.s32 %v1429, %v1433
      %v1440 = vadd.s32 %v1432, %v1438
      %vm1441 = vc.u32 %v1439, %v1435
      %v1442 = vsel %vm1441, 1, 0
      %v1443 = vadd.s32 %v1439, %v1435
      %v1444 = vadd.s32 %v1440, %v1442
      %v1445 = vadd.s32 %v1444, %v1434
      %v1446 = vadd.s32 %v1445, %v1436
      %v1447 = vshrl.u32 %v1446, 4
      %v1448 = vmul.u32 %v1447, 17
      %v1449 = vsub.s32 %v1425, %v1448
      %v1450 = vsub.s32 0, %v1449
      %v1451 = vsel %vm1423, %v1450, %v1449
      %vm1452 = vcmp.ne.s32.totalorder %v494, 0
      %vm1453 = vcmp.ne.s32.totalorder %v523, 0
      %vm1454 = vcmp.ne.s32.totalorder %v552, 0
      %vm1455 = vcmp.ne.s32.totalorder %v581, 0
      %vm1456 = vcmp.ne.s32.totalorder %v610, 0
      %vm1457 = vcmp.ne.s32.totalorder %v639, 0
      %vm1458 = vcmp.ne.s32.totalorder %v668, 0
      %vm1459 = vcmp.ne.s32.totalorder %v697, 0
      %vm1460 = vcmp.ne.s32.totalorder %v726, 0
      %vm1461 = vcmp.ne.s32.totalorder %v755, 0
      %vm1462 = vcmp.ne.s32.totalorder %v784, 0
      %vm1463 = vcmp.ne.s32.totalorder %v813, 0
      %vm1464 = vcmp.ne.s32.totalorder %v842, 0
      %vm1465 = vcmp.ne.s32.totalorder %v871, 0
      %vm1466 = vcmp.ne.s32.totalorder %v900, 0
      %vm1467 = vcmp.ne.s32.totalorder %v929, 0
      %vm1468 = vcmp.ne.s32.totalorder %v958, 0
      %vm1469 = vcmp.ne.s32.totalorder %v987, 0
      %vm1470 = vcmp.ne.s32.totalorder %v1016, 0
      %vm1471 = vcmp.ne.s32.totalorder %v1045, 0
      %vm1472 = vcmp.ne.s32.totalorder %v1074, 0
      %vm1473 = vcmp.ne.s32.totalorder %v1103, 0
      %vm1474 = vcmp.ne.s32.totalorder %v1132, 0
      %vm1475 = vcmp.ne.s32.totalorder %v1161, 0
      %vm1476 = vcmp.ne.s32.totalorder %v1190, 0
      %vm1477 = vcmp.ne.s32.totalorder %v1219, 0
      %vm1478 = vcmp.ne.s32.totalorder %v1248, 0
      %vm1479 = vcmp.ne.s32.totalorder %v1277, 0
      %vm1480 = vcmp.ne.s32.totalorder %v1306, 0
      %vm1481 = vcmp.ne.s32.totalorder %v1335, 0
      %vm1482 = vcmp.ne.s32.totalorder %v1364, 0
      %vm1483 = vcmp.ne.s32.totalorder %v1393, 0
      %vm1484 = vcmp.ne.s32.totalorder %v1422, 0
      %vm1485 = vcmp.ne.s32.totalorder %v1451, 0
      %vm1486 = vcmp.lt.s32.totalorder %v494, 0
      %vm1487 = vcmp.lt.s32.totalorder %v523, 0
      %vm1488 = vcmp.lt.s32.totalorder %v552, 0
      %vm1489 = vcmp.lt.s32.totalorder %v581, 0
      %vm1490 = vcmp.lt.s32.totalorder %v610, 0
      %vm1491 = vcmp.lt.s32.totalorder %v639, 0
      %vm1492 = vcmp.lt.s32.totalorder %v668, 0
      %vm1493 = vcmp.lt.s32.totalorder %v697, 0
      %vm1494 = vcmp.lt.s32.totalorder %v726, 0
      %vm1495 = vcmp.lt.s32.totalorder %v755, 0
      %vm1496 = vcmp.lt.s32.totalorder %v784, 0
      %vm1497 = vcmp.lt.s32.totalorder %v813, 0
      %vm1498 = vcmp.lt.s32.totalorder %v842, 0
      %vm1499 = vcmp.lt.s32.totalorder %v871, 0
      %vm1500 = vcmp.lt.s32.totalorder %v900, 0
      %vm1501 = vcmp.lt.s32.totalorder %v929, 0
      %vm1502 = vcmp.lt.s32.totalorder %v958, 0
      %vm1503 = vcmp.lt.s32.totalorder %v987, 0
      %vm1504 = vcmp.lt.s32.totalorder %v1016, 0
      %vm1505 = vcmp.lt.s32.totalorder %v1045, 0
      %vm1506 = vcmp.lt.s32.totalorder %v1074, 0
      %vm1507 = vcmp.lt.s32.totalorder %v1103, 0
      %vm1508 = vcmp.lt.s32.totalorder %v1132, 0
      %vm1509 = vcmp.lt.s32.totalorder %v1161, 0
      %vm1510 = vcmp.lt.s32.totalorder %v1190, 0
      %vm1511 = vcmp.lt.s32.totalorder %v1219, 0
      %vm1512 = vcmp.lt.s32.totalorder %v1248, 0
      %vm1513 = vcmp.lt.s32.totalorder %v1277, 0
      %vm1514 = vcmp.lt.s32.totalorder %v1306, 0
      %vm1515 = vcmp.lt.s32.totalorder %v1335, 0
      %vm1516 = vcmp.lt.s32.totalorder %v1364, 0
      %vm1517 = vcmp.lt.s32.totalorder %v1393, 0
      %vm1518 = vcmp.lt.s32.totalorder %v1422, 0
      %vm1519 = vcmp.lt.s32.totalorder %v1451, 0
      %vm1520 = vmand %vm1486, %vm1452
      %vm1521 = vmand %vm1487, %vm1453
      %vm1522 = vmand %vm1488, %vm1454
      %vm1523 = vmand %vm1489, %vm1455
      %vm1524 = vmand %vm1490, %vm1456
      %vm1525 = vmand %vm1491, %vm1457
      %vm1526 = vmand %vm1492, %vm1458
      %vm1527 = vmand %vm1493, %vm1459
      %vm1528 = vmand %vm1494, %vm1460
      %vm1529 = vmand %vm1495, %vm1461
      %vm1530 = vmand %vm1496, %vm1462
      %vm1531 = vmand %vm1497, %vm1463
      %vm1532 = vmand %vm1498, %vm1464
      %vm1533 = vmand %vm1499, %vm1465
      %vm1534 = vmand %vm1500, %vm1466
      %vm1535 = vmand %vm1501, %vm1467
      %vm1536 = vmand %vm1502, %vm1468
      %vm1537 = vmand %vm1503, %vm1469
      %vm1538 = vmand %vm1504, %vm1470
      %vm1539 = vmand %vm1505, %vm1471
      %vm1540 = vmand %vm1506, %vm1472
      %vm1541 = vmand %vm1507, %vm1473
      %vm1542 = vmand %vm1508, %vm1474
      %vm1543 = vmand %vm1509, %vm1475
      %vm1544 = vmand %vm1510, %vm1476
      %vm1545 = vmand %vm1511, %vm1477
      %vm1546 = vmand %vm1512, %vm1478
      %vm1547 = vmand %vm1513, %vm1479
      %vm1548 = vmand %vm1514, %vm1480
      %vm1549 = vmand %vm1515, %vm1481
      %vm1550 = vmand %vm1516, %vm1482
      %vm1551 = vmand %vm1517, %vm1483
      %vm1552 = vmand %vm1518, %vm1484
      %vm1553 = vmand %vm1519, %vm1485
      %v1554 = vadd.s32 %v494, 17
      %v1555 = vadd.s32 %v523, 17
      %v1556 = vadd.s32 %v552, 17
      %v1557 = vadd.s32 %v581, 17
      %v1558 = vadd.s32 %v610, 17
      %v1559 = vadd.s32 %v639, 17
      %v1560 = vadd.s32 %v668, 17
      %v1561 = vadd.s32 %v697, 17
      %v1562 = vadd.s32 %v726, 17
      %v1563 = vadd.s32 %v755, 17
      %v1564 = vadd.s32 %v784, 17
      %v1565 = vadd.s32 %v813, 17
      %v1566 = vadd.s32 %v842, 17
      %v1567 = vadd.s32 %v871, 17
      %v1568 = vadd.s32 %v900, 17
      %v1569 = vadd.s32 %v929, 17
      %v1570 = vadd.s32 %v958, 17
      %v1571 = vadd.s32 %v987, 17
      %v1572 = vadd.s32 %v1016, 17
      %v1573 = vadd.s32 %v1045, 17
      %v1574 = vadd.s32 %v1074, 17
      %v1575 = vadd.s32 %v1103, 17
      %v1576 = vadd.s32 %v1132, 17
      %v1577 = vadd.s32 %v1161, 17
      %v1578 = vadd.s32 %v1190, 17
      %v1579 = vadd.s32 %v1219, 17
      %v1580 = vadd.s32 %v1248, 17
      %v1581 = vadd.s32 %v1277, 17
      %v1582 = vadd.s32 %v1306, 17
      %v1583 = vadd.s32 %v1335, 17
      %v1584 = vadd.s32 %v1364, 17
      %v1585 = vadd.s32 %v1393, 17
      %v1586 = vadd.s32 %v1422, 17
      %v1587 = vadd.s32 %v1451, 17
      %v1588 = vsel %vm1520, %v1554, %v494
      %v1589 = vsel %vm1521, %v1555, %v523
      %v1590 = vsel %vm1522, %v1556, %v552
      %v1591 = vsel %vm1523, %v1557, %v581
      %v1592 = vsel %vm1524, %v1558, %v610
      %v1593 = vsel %vm1525, %v1559, %v639
      %v1594 = vsel %vm1526, %v1560, %v668
      %v1595 = vsel %vm1527, %v1561, %v697
      %v1596 = vsel %vm1528, %v1562, %v726
      %v1597 = vsel %vm1529, %v1563, %v755
      %v1598 = vsel %vm1530, %v1564, %v784
      %v1599 = vsel %vm1531, %v1565, %v813
      %v1600 = vsel %vm1532, %v1566, %v842
      %v1601 = vsel %vm1533, %v1567, %v871
      %v1602 = vsel %vm1534, %v1568, %v900
      %v1603 = vsel %vm1535, %v1569, %v929
      %v1604 = vsel %vm1536, %v1570, %v958
      %v1605 = vsel %vm1537, %v1571, %v987
      %v1606 = vsel %vm1538, %v1572, %v1016
      %v1607 = vsel %vm1539, %v1573, %v1045
      %v1608 = vsel %vm1540, %v1574, %v1074
      %v1609 = vsel %vm1541, %v1575, %v1103
      %v1610 = vsel %vm1542, %v1576, %v1132
      %v1611 = vsel %vm1543, %v1577, %v1161
      %v1612 = vsel %vm1544, %v1578, %v1190
      %v1613 = vsel %vm1545, %v1579, %v1219
      %v1614 = vsel %vm1546, %v1580, %v1248
      %v1615 = vsel %vm1547, %v1581, %v1277
      %v1616 = vsel %vm1548, %v1582, %v1306
      %v1617 = vsel %vm1549, %v1583, %v1335
      %v1618 = vsel %vm1550, %v1584, %v1364
      %v1619 = vsel %vm1551, %v1585, %v1393
      %v1620 = vsel %vm1552, %v1586, %v1422
      %v1621 = vsel %vm1553, %v1587, %v1451
      %vm1622 = vcmp.lt.s32.totalorder %v1588, 16
      %vm1623 = vcmp.lt.s32.totalorder %v1589, 16
      %vm1624 = vcmp.lt.s32.totalorder %v1590, 16
      %vm1625 = vcmp.lt.s32.totalorder %v1591, 16
      %vm1626 = vcmp.lt.s32.totalorder %v1592, 16
      %vm1627 = vcmp.lt.s32.totalorder %v1593, 16
      %vm1628 = vcmp.lt.s32.totalorder %v1594, 16
      %vm1629 = vcmp.lt.s32.totalorder %v1595, 16
      %vm1630 = vcmp.lt.s32.totalorder %v1596, 16
      %vm1631 = vcmp.lt.s32.totalorder %v1597, 16
      %vm1632 = vcmp.lt.s32.totalorder %v1598, 16
      %vm1633 = vcmp.lt.s32.totalorder %v1599, 16
      %vm1634 = vcmp.lt.s32.totalorder %v1600, 16
      %vm1635 = vcmp.lt.s32.totalorder %v1601, 16
      %vm1636 = vcmp.lt.s32.totalorder %v1602, 16
      %vm1637 = vcmp.lt.s32.totalorder %v1603, 16
      %vm1638 = vcmp.lt.s32.totalorder %v1604, 16
      %vm1639 = vcmp.lt.s32.totalorder %v1605, 16
      %vm1640 = vcmp.lt.s32.totalorder %v1606, 16
      %vm1641 = vcmp.lt.s32.totalorder %v1607, 16
      %vm1642 = vcmp.lt.s32.totalorder %v1608, 16
      %vm1643 = vcmp.lt.s32.totalorder %v1609, 16
      %vm1644 = vcmp.lt.s32.totalorder %v1610, 16
      %vm1645 = vcmp.lt.s32.totalorder %v1611, 16
      %vm1646 = vcmp.lt.s32.totalorder %v1612, 16
      %vm1647 = vcmp.lt.s32.totalorder %v1613, 16
      %vm1648 = vcmp.lt.s32.totalorder %v1614, 16
      %vm1649 = vcmp.lt.s32.totalorder %v1615, 16
      %vm1650 = vcmp.lt.s32.totalorder %v1616, 16
      %vm1651 = vcmp.lt.s32.totalorder %v1617, 16
      %vm1652 = vcmp.lt.s32.totalorder %v1618, 16
      %vm1653 = vcmp.lt.s32.totalorder %v1619, 16
      %vm1654 = vcmp.lt.s32.totalorder %v1620, 16
      %vm1655 = vcmp.lt.s32.totalorder %v1621, 16
      %v1656 = vsel %vm1622, 1, 0
      %v1657 = vsel %vm1623, 1, 0
      %v1658 = vsel %vm1624, 1, 0
      %v1659 = vsel %vm1625, 1, 0
      %v1660 = vsel %vm1626, 1, 0
      %v1661 = vsel %vm1627, 1, 0
      %v1662 = vsel %vm1628, 1, 0
      %v1663 = vsel %vm1629, 1, 0
      %v1664 = vsel %vm1630, 1, 0
      %v1665 = vsel %vm1631, 1, 0
      %v1666 = vsel %vm1632, 1, 0
      %v1667 = vsel %vm1633, 1, 0
      %v1668 = vsel %vm1634, 1, 0
      %v1669 = vsel %vm1635, 1, 0
      %v1670 = vsel %vm1636, 1, 0
      %v1671 = vsel %vm1637, 1, 0
      %v1672 = vsel %vm1638, 1, 0
      %v1673 = vsel %vm1639, 1, 0
      %v1674 = vsel %vm1640, 1, 0
      %v1675 = vsel %vm1641, 1, 0
      %v1676 = vsel %vm1642, 1, 0
      %v1677 = vsel %vm1643, 1, 0
      %v1678 = vsel %vm1644, 1, 0
      %v1679 = vsel %vm1645, 1, 0
      %v1680 = vsel %vm1646, 1, 0
      %v1681 = vsel %vm1647, 1, 0
      %v1682 = vsel %vm1648, 1, 0
      %v1683 = vsel %vm1649, 1, 0
      %v1684 = vsel %vm1650, 1, 0
      %v1685 = vsel %vm1651, 1, 0
      %v1686 = vsel %vm1652, 1, 0
      %v1687 = vsel %vm1653, 1, 0
      %v1688 = vsel %vm1654, 1, 0
      %v1689 = vsel %vm1655, 1, 0
      %v1690 = vcvt.s32.f32 %v1656
      %v1691 = vcvt.s32.f32 %v1657
      %v1692 = vcvt.s32.f32 %v1658
      %v1693 = vcvt.s32.f32 %v1659
      %v1694 = vcvt.s32.f32 %v1660
      %v1695 = vcvt.s32.f32 %v1661
      %v1696 = vcvt.s32.f32 %v1662
      %v1697 = vcvt.s32.f32 %v1663
      %v1698 = vcvt.s32.f32 %v1664
      %v1699 = vcvt.s32.f32 %v1665
      %v1700 = vcvt.s32.f32 %v1666
      %v1701 = vcvt.s32.f32 %v1667
      %v1702 = vcvt.s32.f32 %v1668
      %v1703 = vcvt.s32.f32 %v1669
      %v1704 = vcvt.s32.f32 %v1670
      %v1705 = vcvt.s32.f32 %v1671
      %v1706 = vcvt.s32.f32 %v1672
      %v1707 = vcvt.s32.f32 %v1673
      %v1708 = vcvt.s32.f32 %v1674
      %v1709 = vcvt.s32.f32 %v1675
      %v1710 = vcvt.s32.f32 %v1676
      %v1711 = vcvt.s32.f32 %v1677
      %v1712 = vcvt.s32.f32 %v1678
      %v1713 = vcvt.s32.f32 %v1679
      %v1714 = vcvt.s32.f32 %v1680
      %v1715 = vcvt.s32.f32 %v1681
      %v1716 = vcvt.s32.f32 %v1682
      %v1717 = vcvt.s32.f32 %v1683
      %v1718 = vcvt.s32.f32 %v1684
      %v1719 = vcvt.s32.f32 %v1685
      %v1720 = vcvt.s32.f32 %v1686
      %v1721 = vcvt.s32.f32 %v1687
      %v1722 = vcvt.s32.f32 %v1688
      %v1723 = vcvt.s32.f32 %v1689
      loop: start=0, step=1, limit=8
      $region49: #{convlstm_forward.1} parent=47 // loop_pre_header
        _
      $region50: #{convlstm_forward.1} parent=47 // loop_header
        %s1725 = sphi 0, %s1729
        %p1726 = scmp.ge.s32.totalorder %s1725, 8
        %v1730 = vphi 0.0, %v11772
        %v1731 = vphi 0.0, %v11773
        %v1732 = vphi 0.0, %v11774
        %v1733 = vphi 0.0, %v11775
        %v1734 = vphi 0.0, %v11776
        %v1735 = vphi 0.0, %v11777
        %v1736 = vphi 0.0, %v11778
        %v1737 = vphi 0.0, %v11779
        %v1738 = vphi 0.0, %v11780
        %v1739 = vphi 0.0, %v11781
        %v1740 = vphi 0.0, %v11782
        %v1741 = vphi 0.0, %v11783
        %v1742 = vphi 0.0, %v11784
        %v1743 = vphi 0.0, %v11785
        %v1744 = vphi 0.0, %v11786
        %v1745 = vphi 0.0, %v11787
        %v1746 = vphi 0.0, %v11788
        %v1747 = vphi 0.0, %v11789
        %v1748 = vphi 0.0, %v11790
        %v1749 = vphi 0.0, %v11791
        %v1750 = vphi 0.0, %v11792
        %v1751 = vphi 0.0, %v11793
        %v1752 = vphi 0.0, %v11794
        %v1753 = vphi 0.0, %v11795
        %v1754 = vphi 0.0, %v11796
        %v1755 = vphi 0.0, %v11797
        %v1756 = vphi 0.0, %v11798
        %v1757 = vphi 0.0, %v11799
        %v1758 = vphi 0.0, %v11800
        %v1759 = vphi 0.0, %v11801
        %v1760 = vphi 0.0, %v11802
        %v1761 = vphi 0.0, %v11803
        %v1762 = vphi 0.0, %v11804
        %v1763 = vphi 0.0, %v11805
      $region51: #{convlstm_forward.1} parent=47 // loop_header_branch
        %1728 = sbr.rel (%p1726) target = $region55
      $region52: #{convlstm_forward.1} parent=47 // loop_body
        %s1764 = smul.u32 %s1725, 34
        %s1765 = smul.addr %s1764, 4
        %s1766 = scalar_lea.vmem %s273, %s1765
        %v1767 = vld [vmem:[%s1766] sm:$0xf]
        %v1768 = vld [vmem:[%s1766 + $0x4] sm:$0xf]
        %v1769 = vld [vmem:[%s1766 + $0x8] sm:$0xf]
        %v1770 = vld [vmem:[%s1766 + $0xc] sm:$0xf]
        %v1771 = vld [vmem:[%s1766 + $0x10] sm:$0xf]
        %v1772 = vld [vmem:[%s1766 + $0x14] sm:$0xf]
        %v1773 = vld [vmem:[%s1766 + $0x18] sm:$0xf]
        %v1774 = vld [vmem:[%s1766 + $0x1c] sm:$0xf]
        %v1775 = vld [vmem:[%s1766 + $0x20] sm:$0xf]
        %v1776 = vld [vmem:[%s1766 + $0x24] sm:$0xf]
        %v1777 = vld [vmem:[%s1766 + $0x28] sm:$0xf]
        %v1778 = vld [vmem:[%s1766 + $0x2c] sm:$0xf]
        %v1779 = vld [vmem:[%s1766 + $0x30] sm:$0xf]
        %v1780 = vld [vmem:[%s1766 + $0x34] sm:$0xf]
        %v1781 = vld [vmem:[%s1766 + $0x38] sm:$0xf]
        %v1782 = vld [vmem:[%s1766 + $0x3c] sm:$0xf]
        %v1783 = vld [vmem:[%s1766 + $0x40] sm:$0xf]
        %v1784 = vld [vmem:[%s1766 + $0x44] sm:$0xf]
        %v1785 = vld [vmem:[%s1766 + $0x48] sm:$0xf]
        %v1786 = vld [vmem:[%s1766 + $0x4c] sm:$0xf]
        %v1787 = vld [vmem:[%s1766 + $0x50] sm:$0xf]
        %v1788 = vld [vmem:[%s1766 + $0x54] sm:$0xf]
        %v1789 = vld [vmem:[%s1766 + $0x58] sm:$0xf]
        %v1790 = vld [vmem:[%s1766 + $0x5c] sm:$0xf]
        %v1791 = vld [vmem:[%s1766 + $0x60] sm:$0xf]
        %v1792 = vld [vmem:[%s1766 + $0x64] sm:$0xf]
        %v1793 = vld [vmem:[%s1766 + $0x68] sm:$0xf]
        %v1794 = vld [vmem:[%s1766 + $0x6c] sm:$0xf]
        %v1795 = vld [vmem:[%s1766 + $0x70] sm:$0xf]
        %v1796 = vld [vmem:[%s1766 + $0x74] sm:$0xf]
        %v1797 = vld [vmem:[%s1766 + $0x78] sm:$0xf]
        %v1798 = vld [vmem:[%s1766 + $0x7c] sm:$0xf]
        %v1799 = vld [vmem:[%s1766 + $0x80] sm:$0xf]
        %v1800 = vld [vmem:[%s1766 + $0x84] sm:$0xf]
        %1835 = vrot.lane.b32.xlu0 %v1767, 32
        %v1836 = vpop.permute.xlu0 %1835
        %1837 = vrot.lane.b32.xlu0 %v1768, 32
        %v1838 = vpop.permute.xlu0 %1837
        %1839 = vrot.lane.b32.xlu0 %v1769, 32
        %v1840 = vpop.permute.xlu0 %1839
        %1841 = vrot.lane.b32.xlu0 %v1770, 32
        %v1842 = vpop.permute.xlu0 %1841
        %1843 = vrot.lane.b32.xlu0 %v1771, 32
        %v1844 = vpop.permute.xlu0 %1843
        %1845 = vrot.lane.b32.xlu0 %v1772, 32
        %v1846 = vpop.permute.xlu0 %1845
        %1847 = vrot.lane.b32.xlu0 %v1773, 32
        %v1848 = vpop.permute.xlu0 %1847
        %1849 = vrot.lane.b32.xlu0 %v1774, 32
        %v1850 = vpop.permute.xlu0 %1849
        %1851 = vrot.lane.b32.xlu0 %v1775, 32
        %v1852 = vpop.permute.xlu0 %1851
        %1853 = vrot.lane.b32.xlu0 %v1776, 32
        %v1854 = vpop.permute.xlu0 %1853
        %1855 = vrot.lane.b32.xlu0 %v1777, 32
        %v1856 = vpop.permute.xlu0 %1855
        %1857 = vrot.lane.b32.xlu0 %v1778, 32
        %v1858 = vpop.permute.xlu0 %1857
        %1859 = vrot.lane.b32.xlu0 %v1779, 32
        %v1860 = vpop.permute.xlu0 %1859
        %1861 = vrot.lane.b32.xlu0 %v1780, 32
        %v1862 = vpop.permute.xlu0 %1861
        %1863 = vrot.lane.b32.xlu0 %v1781, 32
        %v1864 = vpop.permute.xlu0 %1863
        %1865 = vrot.lane.b32.xlu0 %v1782, 32
        %v1866 = vpop.permute.xlu0 %1865
        %1867 = vrot.lane.b32.xlu0 %v1783, 32
        %v1868 = vpop.permute.xlu0 %1867
        %1869 = vrot.lane.b32.xlu0 %v1784, 32
        %v1870 = vpop.permute.xlu0 %1869
        %1871 = vrot.lane.b32.xlu0 %v1785, 32
        %v1872 = vpop.permute.xlu0 %1871
        %1873 = vrot.lane.b32.xlu0 %v1786, 32
        %v1874 = vpop.permute.xlu0 %1873
        %1875 = vrot.lane.b32.xlu0 %v1787, 32
        %v1876 = vpop.permute.xlu0 %1875
        %1877 = vrot.lane.b32.xlu0 %v1788, 32
        %v1878 = vpop.permute.xlu0 %1877
        %1879 = vrot.lane.b32.xlu0 %v1789, 32
        %v1880 = vpop.permute.xlu0 %1879
        %1881 = vrot.lane.b32.xlu0 %v1790, 32
        %v1882 = vpop.permute.xlu0 %1881
        %1883 = vrot.lane.b32.xlu0 %v1791, 32
        %v1884 = vpop.permute.xlu0 %1883
        %1885 = vrot.lane.b32.xlu0 %v1792, 32
        %v1886 = vpop.permute.xlu0 %1885
        %1887 = vrot.lane.b32.xlu0 %v1793, 32
        %v1888 = vpop.permute.xlu0 %1887
        %1889 = vrot.lane.b32.xlu0 %v1794, 32
        %v1890 = vpop.permute.xlu0 %1889
        %1891 = vrot.lane.b32.xlu0 %v1795, 32
        %v1892 = vpop.permute.xlu0 %1891
        %1893 = vrot.lane.b32.xlu0 %v1796, 32
        %v1894 = vpop.permute.xlu0 %1893
        %1895 = vrot.lane.b32.xlu0 %v1797, 32
        %v1896 = vpop.permute.xlu0 %1895
        %1897 = vrot.lane.b32.xlu0 %v1798, 32
        %v1898 = vpop.permute.xlu0 %1897
        %1899 = vrot.lane.b32.xlu0 %v1799, 32
        %v1900 = vpop.permute.xlu0 %1899
        %1901 = vrot.lane.b32.xlu0 %v1800, 32
        %v1902 = vpop.permute.xlu0 %1901
        %vm1937 = vcmask 290048
        %1938 = vst.msk [vmem:[#allocation2 + $0xc] sm:$0xf] %vm1937, %v1836
        %1939 = vst.msk [vmem:[#allocation2 + $0x10] sm:$0xf] %vm1937, %v1838
        %1940 = vst.msk [vmem:[#allocation2 + $0x14] sm:$0xf] %vm1937, %v1840
        %1941 = vst.msk [vmem:[#allocation2 + $0x18] sm:$0xf] %vm1937, %v1842
        %1942 = vst.msk [vmem:[#allocation2 + $0x1c] sm:$0xf] %vm1937, %v1844
        %1943 = vst.msk [vmem:[#allocation2 + $0x20] sm:$0xf] %vm1937, %v1846
        %1944 = vst.msk [vmem:[#allocation2 + $0x24] sm:$0xf] %vm1937, %v1848
        %1945 = vst.msk [vmem:[#allocation2 + $0x28] sm:$0xf] %vm1937, %v1850
        %1946 = vst.msk [vmem:[#allocation2 + $0x2c] sm:$0xf] %vm1937, %v1852
        %1947 = vst.msk [vmem:[#allocation2 + $0x30] sm:$0xf] %vm1937, %v1854
        %1948 = vst.msk [vmem:[#allocation2 + $0x34] sm:$0xf] %vm1937, %v1856
        %1949 = vst.msk [vmem:[#allocation2 + $0x38] sm:$0xf] %vm1937, %v1858
        %1950 = vst.msk [vmem:[#allocation2 + $0x3c] sm:$0xf] %vm1937, %v1860
        %1951 = vst.msk [vmem:[#allocation2 + $0x40] sm:$0xf] %vm1937, %v1862
        %1952 = vst.msk [vmem:[#allocation2 + $0x44] sm:$0xf] %vm1937, %v1864
        %1953 = vst.msk [vmem:[#allocation2 + $0x48] sm:$0xf] %vm1937, %v1866
        %1954 = vst.msk [vmem:[#allocation2 + $0x4c] sm:$0xf] %vm1937, %v1868
        %1955 = vst.msk [vmem:[#allocation2 + $0x50] sm:$0xf] %vm1937, %v1870
        %1956 = vst.msk [vmem:[#allocation2 + $0x54] sm:$0xf] %vm1937, %v1872
        %1957 = vst.msk [vmem:[#allocation2 + $0x58] sm:$0xf] %vm1937, %v1874
        %1958 = vst.msk [vmem:[#allocation2 + $0x5c] sm:$0xf] %vm1937, %v1876
        %1959 = vst.msk [vmem:[#allocation2 + $0x60] sm:$0xf] %vm1937, %v1878
        %1960 = vst.msk [vmem:[#allocation2 + $0x64] sm:$0xf] %vm1937, %v1880
        %1961 = vst.msk [vmem:[#allocation2 + $0x68] sm:$0xf] %vm1937, %v1882
        %1962 = vst.msk [vmem:[#allocation2 + $0x6c] sm:$0xf] %vm1937, %v1884
        %1963 = vst.msk [vmem:[#allocation2 + $0x70] sm:$0xf] %vm1937, %v1886
        %1964 = vst.msk [vmem:[#allocation2 + $0x74] sm:$0xf] %vm1937, %v1888
        %1965 = vst.msk [vmem:[#allocation2 + $0x78] sm:$0xf] %vm1937, %v1890
        %1966 = vst.msk [vmem:[#allocation2 + $0x7c] sm:$0xf] %vm1937, %v1892
        %1967 = vst.msk [vmem:[#allocation2 + $0x80] sm:$0xf] %vm1937, %v1894
        %1968 = vst.msk [vmem:[#allocation2 + $0x84] sm:$0xf] %vm1937, %v1896
        %1969 = vst.msk [vmem:[#allocation2 + $0x88] sm:$0xf] %vm1937, %v1898
        %1970 = vst.msk [vmem:[#allocation2 + $0x8c] sm:$0xf] %vm1937, %v1900
        %1971 = vst.msk [vmem:[#allocation2 + $0x90] sm:$0xf] %vm1937, %v1902
        %v1972 = vld [vmem:[%s2] sm:$0x1]
        %v1974 = vperm.slane %v1972, 0
        %v1976 = vld [vmem:[#allocation2] sm:$0x8]
        %v1977 = vld [vmem:[#allocation2 + $0x4] sm:$0xf]
        %v1978 = vld [vmem:[#allocation2 + $0x8] sm:$0xf]
        %v1979 = vld [vmem:[#allocation2 + $0xc] sm:$0xf]
        %v1980 = vld [vmem:[#allocation2 + $0x10] sm:$0xf]
        %v1981 = vld [vmem:[#allocation2 + $0x14] sm:$0xf]
        %v1982 = vld [vmem:[#allocation2 + $0x18] sm:$0xf]
        %v1983 = vld [vmem:[#allocation2 + $0x1c] sm:$0xf]
        %v1984 = vld [vmem:[#allocation2 + $0x20] sm:$0xf]
        %v1985 = vld [vmem:[#allocation2 + $0x24] sm:$0xf]
        %v1986 = vld [vmem:[#allocation2 + $0x28] sm:$0xf]
        %v1987 = vld [vmem:[#allocation2 + $0x2c] sm:$0xf]
        %v1988 = vld [vmem:[#allocation2 + $0x30] sm:$0xf]
        %v1989 = vld [vmem:[#allocation2 + $0x34] sm:$0xf]
        %v1990 = vld [vmem:[#allocation2 + $0x38] sm:$0xf]
        %v1991 = vld [vmem:[#allocation2 + $0x3c] sm:$0xf]
        %v1992 = vld [vmem:[#allocation2 + $0x40] sm:$0xf]
        %v1993 = vld [vmem:[#allocation2 + $0x44] sm:$0xf]
        %v1994 = vld [vmem:[#allocation2 + $0x48] sm:$0xf]
        %v1995 = vld [vmem:[#allocation2 + $0x4c] sm:$0xf]
        %v1996 = vld [vmem:[#allocation2 + $0x50] sm:$0xf]
        %v1997 = vld [vmem:[#allocation2 + $0x54] sm:$0xf]
        %v1998 = vld [vmem:[#allocation2 + $0x58] sm:$0xf]
        %v1999 = vld [vmem:[#allocation2 + $0x5c] sm:$0xf]
        %v2000 = vld [vmem:[#allocation2 + $0x60] sm:$0xf]
        %v2001 = vld [vmem:[#allocation2 + $0x64] sm:$0xf]
        %v2002 = vld [vmem:[#allocation2 + $0x68] sm:$0xf]
        %v2003 = vld [vmem:[#allocation2 + $0x6c] sm:$0xf]
        %v2004 = vld [vmem:[#allocation2 + $0x70] sm:$0xf]
        %v2005 = vld [vmem:[#allocation2 + $0x74] sm:$0xf]
        %v2006 = vld [vmem:[#allocation2 + $0x78] sm:$0xf]
        %v2007 = vld [vmem:[#allocation2 + $0x7c] sm:$0xf]
        %v2008 = vld [vmem:[#allocation2 + $0x80] sm:$0xf]
        %v2009 = vld [vmem:[#allocation2 + $0x84] sm:$0xf]
        %v2010 = vld [vmem:[#allocation2 + $0x88] sm:$0x7]
        %v2011 = vld [vmem:[%s1] sm:$0xf]
        %v2012 = vld [vmem:[%s1 + $0x4] sm:$0xf]
        %v2013 = vld [vmem:[%s1 + $0x8] sm:$0xf]
        %v2014 = vld [vmem:[%s1 + $0xc] sm:$0xf]
        %v2015 = vld [vmem:[%s1 + $0x10] sm:$0x3]
        %v2051 = vunpack.c.l.b16 %v1976
        %v2052 = vunpack.c.l.b16 %v1977
        %v2053 = vunpack.c.l.b16 %v1978
        %v2054 = vunpack.c.l.b16 %v1979
        %v2055 = vunpack.c.l.b16 %v1980
        %v2056 = vunpack.c.l.b16 %v1981
        %v2057 = vunpack.c.l.b16 %v1982
        %v2058 = vunpack.c.l.b16 %v1983
        %v2059 = vunpack.c.l.b16 %v1984
        %v2060 = vunpack.c.l.b16 %v1985
        %v2061 = vunpack.c.l.b16 %v1986
        %v2062 = vunpack.c.l.b16 %v1987
        %v2063 = vunpack.c.l.b16 %v1988
        %v2064 = vunpack.c.l.b16 %v1989
        %v2065 = vunpack.c.l.b16 %v1990
        %v2066 = vunpack.c.l.b16 %v1991
        %v2067 = vunpack.c.l.b16 %v1992
        %v2068 = vunpack.c.l.b16 %v1993
        %v2069 = vunpack.c.l.b16 %v1994
        %v2070 = vunpack.c.l.b16 %v1995
        %v2071 = vunpack.c.l.b16 %v1996
        %v2072 = vunpack.c.l.b16 %v1997
        %v2073 = vunpack.c.l.b16 %v1998
        %v2074 = vunpack.c.l.b16 %v1999
        %v2075 = vunpack.c.l.b16 %v2000
        %v2076 = vunpack.c.l.b16 %v2001
        %v2077 = vunpack.c.l.b16 %v2002
        %v2078 = vunpack.c.l.b16 %v2003
        %v2079 = vunpack.c.l.b16 %v2004
        %v2080 = vunpack.c.l.b16 %v2005
        %v2081 = vunpack.c.l.b16 %v2006
        %v2082 = vunpack.c.l.b16 %v2007
        %v2083 = vunpack.c.l.b16 %v2008
        %v2084 = vunpack.c.l.b16 %v2009
        %v2085 = vunpack.c.l.b16 %v2010
        %v2086 = vpack.c.b16 %v2052, %v2051
        %v2087 = vpack.c.b16 %v2054, %v2053
        %v2088 = vpack.c.b16 %v2056, %v2055
        %v2089 = vpack.c.b16 %v2058, %v2057
        %v2090 = vpack.c.b16 %v2060, %v2059
        %v2091 = vpack.c.b16 %v2062, %v2061
        %v2092 = vpack.c.b16 %v2064, %v2063
        %v2093 = vpack.c.b16 %v2066, %v2065
        %v2094 = vpack.c.b16 %v2068, %v2067
        %v2095 = vpack.c.b16 %v2070, %v2069
        %v2096 = vpack.c.b16 %v2072, %v2071
        %v2097 = vpack.c.b16 %v2074, %v2073
        %v2098 = vpack.c.b16 %v2076, %v2075
        %v2099 = vpack.c.b16 %v2078, %v2077
        %v2100 = vpack.c.b16 %v2080, %v2079
        %v2101 = vpack.c.b16 %v2082, %v2081
        %v2102 = vpack.c.b16 %v2084, %v2083
        %v2103 = vpack.c.b16 %v2085, %v2085
        %vm2104 = vcmask 1044480
        %v2105 = vrot.slane %v2086, 3
        %v2106 = vrot.slane %v2087, 3
        %v2107 = vsel %vm2104, %v2105, %v2106
        %v2108 = vrot.slane %v2088, 3
        %v2109 = vsel %vm2104, %v2106, %v2108
        %v2110 = vrot.slane %v2089, 3
        %v2111 = vsel %vm2104, %v2108, %v2110
        %v2112 = vrot.slane %v2090, 3
        %v2113 = vsel %vm2104, %v2110, %v2112
        %v2114 = vrot.slane %v2091, 3
        %v2115 = vsel %vm2104, %v2112, %v2114
        %v2116 = vrot.slane %v2092, 3
        %v2117 = vsel %vm2104, %v2114, %v2116
        %v2118 = vrot.slane %v2093, 3
        %v2119 = vsel %vm2104, %v2116, %v2118
        %v2120 = vrot.slane %v2094, 3
        %v2121 = vsel %vm2104, %v2118, %v2120
        %v2122 = vrot.slane %v2095, 3
        %v2123 = vsel %vm2104, %v2120, %v2122
        %v2124 = vrot.slane %v2096, 3
        %v2125 = vsel %vm2104, %v2122, %v2124
        %v2126 = vrot.slane %v2097, 3
        %v2127 = vsel %vm2104, %v2124, %v2126
        %v2128 = vrot.slane %v2098, 3
        %v2129 = vsel %vm2104, %v2126, %v2128
        %v2130 = vrot.slane %v2099, 3
        %v2131 = vsel %vm2104, %v2128, %v2130
        %v2132 = vrot.slane %v2100, 3
        %v2133 = vsel %vm2104, %v2130, %v2132
        %v2134 = vrot.slane %v2101, 3
        %v2135 = vsel %vm2104, %v2132, %v2134
        %v2136 = vrot.slane %v2102, 3
        %v2137 = vsel %vm2104, %v2134, %v2136
        %v2138 = vrot.slane %v2103, 3
        %v2139 = vsel %vm2104, %v2136, %v2138
        %v2145 = vunpack.c.l.b16 %v2011
        %v2146 = vunpack.c.l.b16 %v2012
        %v2147 = vunpack.c.l.b16 %v2013
        %v2148 = vunpack.c.l.b16 %v2014
        %v2149 = vunpack.c.l.b16 %v2015
        %v2150 = vpack.c.b16 %v2146, %v2145
        %v2151 = vpack.c.b16 %v2148, %v2147
        %v2152 = vpack.c.b16 %v2149, %v2149
        %vm2155 = vcmask 293888
        %v2157 = vsel %vm2155, %v2107, 0
        %v2160 = vsel %vm2155, %v2109, 0
        %v2163 = vsel %vm2155, %v2111, 0
        %v2166 = vsel %vm2155, %v2113, 0
        %v2169 = vsel %vm2155, %v2115, 0
        %v2172 = vsel %vm2155, %v2117, 0
        %v2175 = vsel %vm2155, %v2119, 0
        %v2178 = vsel %vm2155, %v2121, 0
        %v2181 = vsel %vm2155, %v2123, 0
        %v2184 = vsel %vm2155, %v2125, 0
        %v2187 = vsel %vm2155, %v2127, 0
        %v2190 = vsel %vm2155, %v2129, 0
        %v2193 = vsel %vm2155, %v2131, 0
        %v2196 = vsel %vm2155, %v2133, 0
        %v2199 = vsel %vm2155, %v2135, 0
        %v2202 = vsel %vm2155, %v2137, 0
        %v2205 = vsel %vm2155, %v2139, 0
        %vm2207 = vcmask 1041408
        %v2209 = vsel %vm2207, %v2152, 0
        %2211 = vmatpush.bf16.msra.mxu0 0
        %2212 = vmatpush.bf16.msra.mxu0 0
        %2213 = vmatpush.bf16.msra.mxu0 0
        %2214 = vmatpush.bf16.msra.mxu0 0
        %2215 = vmatpush.bf16.msra.mxu0 0
        %2216 = vmatpush.bf16.msra.mxu0 %v2209
        %2217 = vmatpush.bf16.msra.mxu0 %v2151
        %2218 = vmatpush.bf16.msra.mxu0 %v2150
        %2219 = vmatmul.bf16.gmra.mxu0 %v2157
        %v2220 = vpop.f32.mrf.mxu0
        %v2221 = vadd.f32 0.0, %v2220
        %v2222 = vpop.f32.mrf.mxu0
        %v2223 = vadd.f32 0.0, %v2222
        %2224 = vmatmul.bf16.gmra.mxu0 %v2160
        %v2225 = vpop.f32.mrf.mxu0
        %v2226 = vadd.f32 0.0, %v2225
        %v2227 = vpop.f32.mrf.mxu0
        %v2228 = vadd.f32 0.0, %v2227
        %2229 = vmatmul.bf16.gmra.mxu0 %v2163
        %v2230 = vpop.f32.mrf.mxu0
        %v2231 = vadd.f32 0.0, %v2230
        %v2232 = vpop.f32.mrf.mxu0
        %v2233 = vadd.f32 0.0, %v2232
        %2234 = vmatmul.bf16.gmra.mxu0 %v2166
        %v2235 = vpop.f32.mrf.mxu0
        %v2236 = vadd.f32 0.0, %v2235
        %v2237 = vpop.f32.mrf.mxu0
        %v2238 = vadd.f32 0.0, %v2237
        %2239 = vmatmul.bf16.gmra.mxu0 %v2169
        %v2240 = vpop.f32.mrf.mxu0
        %v2241 = vadd.f32 0.0, %v2240
        %v2242 = vpop.f32.mrf.mxu0
        %v2243 = vadd.f32 0.0, %v2242
        %2244 = vmatmul.bf16.gmra.mxu0 %v2172
        %v2245 = vpop.f32.mrf.mxu0
        %v2246 = vadd.f32 0.0, %v2245
        %v2247 = vpop.f32.mrf.mxu0
        %v2248 = vadd.f32 0.0, %v2247
        %2249 = vmatmul.bf16.gmra.mxu0 %v2175
        %v2250 = vpop.f32.mrf.mxu0
        %v2251 = vadd.f32 0.0, %v2250
        %v2252 = vpop.f32.mrf.mxu0
        %v2253 = vadd.f32 0.0, %v2252
        %2254 = vmatmul.bf16.gmra.mxu0 %v2178
        %v2255 = vpop.f32.mrf.mxu0
        %v2256 = vadd.f32 0.0, %v2255
        %v2257 = vpop.f32.mrf.mxu0
        %v2258 = vadd.f32 0.0, %v2257
        %2259 = vmatmul.bf16.gmra.mxu0 %v2181
        %v2260 = vpop.f32.mrf.mxu0
        %v2261 = vadd.f32 0.0, %v2260
        %v2262 = vpop.f32.mrf.mxu0
        %v2263 = vadd.f32 0.0, %v2262
        %2264 = vmatmul.bf16.gmra.mxu0 %v2184
        %v2265 = vpop.f32.mrf.mxu0
        %v2266 = vadd.f32 0.0, %v2265
        %v2267 = vpop.f32.mrf.mxu0
        %v2268 = vadd.f32 0.0, %v2267
        %2269 = vmatmul.bf16.gmra.mxu0 %v2187
        %v2270 = vpop.f32.mrf.mxu0
        %v2271 = vadd.f32 0.0, %v2270
        %v2272 = vpop.f32.mrf.mxu0
        %v2273 = vadd.f32 0.0, %v2272
        %2274 = vmatmul.bf16.gmra.mxu0 %v2190
        %v2275 = vpop.f32.mrf.mxu0
        %v2276 = vadd.f32 0.0, %v2275
        %v2277 = vpop.f32.mrf.mxu0
        %v2278 = vadd.f32 0.0, %v2277
        %2279 = vmatmul.bf16.gmra.mxu0 %v2193
        %v2280 = vpop.f32.mrf.mxu0
        %v2281 = vadd.f32 0.0, %v2280
        %v2282 = vpop.f32.mrf.mxu0
        %v2283 = vadd.f32 0.0, %v2282
        %2284 = vmatmul.bf16.gmra.mxu0 %v2196
        %v2285 = vpop.f32.mrf.mxu0
        %v2286 = vadd.f32 0.0, %v2285
        %v2287 = vpop.f32.mrf.mxu0
        %v2288 = vadd.f32 0.0, %v2287
        %2289 = vmatmul.bf16.gmra.mxu0 %v2199
        %v2290 = vpop.f32.mrf.mxu0
        %v2291 = vadd.f32 0.0, %v2290
        %v2292 = vpop.f32.mrf.mxu0
        %v2293 = vadd.f32 0.0, %v2292
        %2294 = vmatmul.bf16.gmra.mxu0 %v2202
        %v2295 = vpop.f32.mrf.mxu0
        %v2296 = vadd.f32 0.0, %v2295
        %v2297 = vpop.f32.mrf.mxu0
        %v2298 = vadd.f32 0.0, %v2297
        %2299 = vmatmul.bf16.gmra.mxu0 %v2205
        %v2300 = vpop.f32.mrf.mxu0
        %v2301 = vadd.f32 0.0, %v2300
        %v2302 = vpop.f32.mrf.mxu0
        %v2303 = vadd.f32 0.0, %v2302
        %2304 = vdwg.mxu0
        %v2305 = vadd.f32 %v1974, %v2221
        %v2306 = vadd.f32 %v1974, %v2223
        %v2307 = vadd.f32 %v1974, %v2226
        %v2308 = vadd.f32 %v1974, %v2228
        %v2309 = vadd.f32 %v1974, %v2231
        %v2310 = vadd.f32 %v1974, %v2233
        %v2311 = vadd.f32 %v1974, %v2236
        %v2312 = vadd.f32 %v1974, %v2238
        %v2313 = vadd.f32 %v1974, %v2241
        %v2314 = vadd.f32 %v1974, %v2243
        %v2315 = vadd.f32 %v1974, %v2246
        %v2316 = vadd.f32 %v1974, %v2248
        %v2317 = vadd.f32 %v1974, %v2251
        %v2318 = vadd.f32 %v1974, %v2253
        %v2319 = vadd.f32 %v1974, %v2256
        %v2320 = vadd.f32 %v1974, %v2258
        %v2321 = vadd.f32 %v1974, %v2261
        %v2322 = vadd.f32 %v1974, %v2263
        %v2323 = vadd.f32 %v1974, %v2266
        %v2324 = vadd.f32 %v1974, %v2268
        %v2325 = vadd.f32 %v1974, %v2271
        %v2326 = vadd.f32 %v1974, %v2273
        %v2327 = vadd.f32 %v1974, %v2276
        %v2328 = vadd.f32 %v1974, %v2278
        %v2329 = vadd.f32 %v1974, %v2281
        %v2330 = vadd.f32 %v1974, %v2283
        %v2331 = vadd.f32 %v1974, %v2286
        %v2332 = vadd.f32 %v1974, %v2288
        %v2333 = vadd.f32 %v1974, %v2291
        %v2334 = vadd.f32 %v1974, %v2293
        %v2335 = vadd.f32 %v1974, %v2296
        %v2336 = vadd.f32 %v1974, %v2298
        %v2337 = vadd.f32 %v1974, %v2301
        %v2338 = vadd.f32 %v1974, %v2303
        %v2339 = vld [vmem:[#allocation2 + $0x88] sm:$0xf]
        %s2340 = scalar_lea.vmem %s1, 20
        %v2341 = vld [vmem:[%s2340] sm:$0xf]
        %v2342 = vld [vmem:[%s2340 + $0x4] sm:$0xf]
        %v2343 = vld [vmem:[%s2340 + $0x8] sm:$0xf]
        %v2344 = vld [vmem:[%s2340 + $0xc] sm:$0xf]
        %v2345 = vld [vmem:[%s2340 + $0x10] sm:$0x3]
        %v2347 = vunpack.c.l.b16 %v2339
        %v2348 = vpack.c.b16 %v2347, %v2347
        %vm2349 = vsmask.f32 4352
        %v2351 = vshrl.u32 %v2086, 16
        %v2353 = vrot.slane %v2351, 3
        %v2354 = vshll.u32 %v2086, 16
        %v2356 = vrot.slane %v2354, 4
        %v2357 = vor.u32 %v2353, %v2356
        %v2359 = vshrl.u32 %v2087, 16
        %v2361 = vrot.slane %v2359, 3
        %v2362 = vshll.u32 %v2087, 16
        %v2364 = vrot.slane %v2362, 4
        %v2365 = vor.u32 %v2361, %v2364
        %v2366 = vsel %vm2349, %v2357, %v2365
        %v2368 = vshrl.u32 %v2088, 16
        %v2370 = vrot.slane %v2368, 3
        %v2371 = vshll.u32 %v2088, 16
        %v2373 = vrot.slane %v2371, 4
        %v2374 = vor.u32 %v2370, %v2373
        %v2375 = vsel %vm2349, %v2365, %v2374
        %v2377 = vshrl.u32 %v2089, 16
        %v2379 = vrot.slane %v2377, 3
        %v2380 = vshll.u32 %v2089, 16
        %v2382 = vrot.slane %v2380, 4
        %v2383 = vor.u32 %v2379, %v2382
        %v2384 = vsel %vm2349, %v2374, %v2383
        %v2386 = vshrl.u32 %v2090, 16
        %v2388 = vrot.slane %v2386, 3
        %v2389 = vshll.u32 %v2090, 16
        %v2391 = vrot.slane %v2389, 4
        %v2392 = vor.u32 %v2388, %v2391
        %v2393 = vsel %vm2349, %v2383, %v2392
        %v2395 = vshrl.u32 %v2091, 16
        %v2397 = vrot.slane %v2395, 3
        %v2398 = vshll.u32 %v2091, 16
        %v2400 = vrot.slane %v2398, 4
        %v2401 = vor.u32 %v2397, %v2400
        %v2402 = vsel %vm2349, %v2392, %v2401
        %v2404 = vshrl.u32 %v2092, 16
        %v2406 = vrot.slane %v2404, 3
        %v2407 = vshll.u32 %v2092, 16
        %v2409 = vrot.slane %v2407, 4
        %v2410 = vor.u32 %v2406, %v2409
        %v2411 = vsel %vm2349, %v2401, %v2410
        %v2413 = vshrl.u32 %v2093, 16
        %v2415 = vrot.slane %v2413, 3
        %v2416 = vshll.u32 %v2093, 16
        %v2418 = vrot.slane %v2416, 4
        %v2419 = vor.u32 %v2415, %v2418
        %v2420 = vsel %vm2349, %v2410, %v2419
        %v2422 = vshrl.u32 %v2094, 16
        %v2424 = vrot.slane %v2422, 3
        %v2425 = vshll.u32 %v2094, 16
        %v2427 = vrot.slane %v2425, 4
        %v2428 = vor.u32 %v2424, %v2427
        %v2429 = vsel %vm2349, %v2419, %v2428
        %v2431 = vshrl.u32 %v2095, 16
        %v2433 = vrot.slane %v2431, 3
        %v2434 = vshll.u32 %v2095, 16
        %v2436 = vrot.slane %v2434, 4
        %v2437 = vor.u32 %v2433, %v2436
        %v2438 = vsel %vm2349, %v2428, %v2437
        %v2440 = vshrl.u32 %v2096, 16
        %v2442 = vrot.slane %v2440, 3
        %v2443 = vshll.u32 %v2096, 16
        %v2445 = vrot.slane %v2443, 4
        %v2446 = vor.u32 %v2442, %v2445
        %v2447 = vsel %vm2349, %v2437, %v2446
        %v2449 = vshrl.u32 %v2097, 16
        %v2451 = vrot.slane %v2449, 3
        %v2452 = vshll.u32 %v2097, 16
        %v2454 = vrot.slane %v2452, 4
        %v2455 = vor.u32 %v2451, %v2454
        %v2456 = vsel %vm2349, %v2446, %v2455
        %v2458 = vshrl.u32 %v2098, 16
        %v2460 = vrot.slane %v2458, 3
        %v2461 = vshll.u32 %v2098, 16
        %v2463 = vrot.slane %v2461, 4
        %v2464 = vor.u32 %v2460, %v2463
        %v2465 = vsel %vm2349, %v2455, %v2464
        %v2467 = vshrl.u32 %v2099, 16
        %v2469 = vrot.slane %v2467, 3
        %v2470 = vshll.u32 %v2099, 16
        %v2472 = vrot.slane %v2470, 4
        %v2473 = vor.u32 %v2469, %v2472
        %v2474 = vsel %vm2349, %v2464, %v2473
        %v2476 = vshrl.u32 %v2100, 16
        %v2478 = vrot.slane %v2476, 3
        %v2479 = vshll.u32 %v2100, 16
        %v2481 = vrot.slane %v2479, 4
        %v2482 = vor.u32 %v2478, %v2481
        %v2483 = vsel %vm2349, %v2473, %v2482
        %v2485 = vshrl.u32 %v2101, 16
        %v2487 = vrot.slane %v2485, 3
        %v2488 = vshll.u32 %v2101, 16
        %v2490 = vrot.slane %v2488, 4
        %v2491 = vor.u32 %v2487, %v2490
        %v2492 = vsel %vm2349, %v2482, %v2491
        %v2494 = vshrl.u32 %v2102, 16
        %v2496 = vrot.slane %v2494, 3
        %v2497 = vshll.u32 %v2102, 16
        %v2499 = vrot.slane %v2497, 4
        %v2500 = vor.u32 %v2496, %v2499
        %v2501 = vsel %vm2349, %v2491, %v2500
        %v2503 = vshrl.u32 %v2348, 16
        %v2505 = vrot.slane %v2503, 3
        %v2506 = vshll.u32 %v2348, 16
        %v2508 = vrot.slane %v2506, 4
        %v2509 = vor.u32 %v2505, %v2508
        %v2510 = vsel %vm2349, %v2500, %v2509
        %v2516 = vunpack.c.l.b16 %v2341
        %v2517 = vunpack.c.l.b16 %v2342
        %v2518 = vunpack.c.l.b16 %v2343
        %v2519 = vunpack.c.l.b16 %v2344
        %v2520 = vunpack.c.l.b16 %v2345
        %v2521 = vpack.c.b16 %v2517, %v2516
        %v2522 = vpack.c.b16 %v2519, %v2518
        %v2523 = vpack.c.b16 %v2520, %v2520
        %v2527 = vsel %vm2155, %v2366, 0
        %v2530 = vsel %vm2155, %v2375, 0
        %v2533 = vsel %vm2155, %v2384, 0
        %v2536 = vsel %vm2155, %v2393, 0
        %v2539 = vsel %vm2155, %v2402, 0
        %v2542 = vsel %vm2155, %v2411, 0
        %v2545 = vsel %vm2155, %v2420, 0
        %v2548 = vsel %vm2155, %v2429, 0
        %v2551 = vsel %vm2155, %v2438, 0
        %v2554 = vsel %vm2155, %v2447, 0
        %v2557 = vsel %vm2155, %v2456, 0
        %v2560 = vsel %vm2155, %v2465, 0
        %v2563 = vsel %vm2155, %v2474, 0
        %v2566 = vsel %vm2155, %v2483, 0
        %v2569 = vsel %vm2155, %v2492, 0
        %v2572 = vsel %vm2155, %v2501, 0
        %v2575 = vsel %vm2155, %v2510, 0
        %v2578 = vsel %vm2207, %v2523, 0
        %2580 = vmatpush.bf16.msra.mxu0 0
        %2581 = vmatpush.bf16.msra.mxu0 0
        %2582 = vmatpush.bf16.msra.mxu0 0
        %2583 = vmatpush.bf16.msra.mxu0 0
        %2584 = vmatpush.bf16.msra.mxu0 0
        %2585 = vmatpush.bf16.msra.mxu0 %v2578
        %2586 = vmatpush.bf16.msra.mxu0 %v2522
        %2587 = vmatpush.bf16.msra.mxu0 %v2521
        %2588 = vmatmul.bf16.gmra.mxu0 %v2527
        %v2589 = vpop.f32.mrf.mxu0
        %v2590 = vadd.f32 0.0, %v2589
        %v2591 = vpop.f32.mrf.mxu0
        %v2592 = vadd.f32 0.0, %v2591
        %2593 = vmatmul.bf16.gmra.mxu0 %v2530
        %v2594 = vpop.f32.mrf.mxu0
        %v2595 = vadd.f32 0.0, %v2594
        %v2596 = vpop.f32.mrf.mxu0
        %v2597 = vadd.f32 0.0, %v2596
        %2598 = vmatmul.bf16.gmra.mxu0 %v2533
        %v2599 = vpop.f32.mrf.mxu0
        %v2600 = vadd.f32 0.0, %v2599
        %v2601 = vpop.f32.mrf.mxu0
        %v2602 = vadd.f32 0.0, %v2601
        %2603 = vmatmul.bf16.gmra.mxu0 %v2536
        %v2604 = vpop.f32.mrf.mxu0
        %v2605 = vadd.f32 0.0, %v2604
        %v2606 = vpop.f32.mrf.mxu0
        %v2607 = vadd.f32 0.0, %v2606
        %2608 = vmatmul.bf16.gmra.mxu0 %v2539
        %v2609 = vpop.f32.mrf.mxu0
        %v2610 = vadd.f32 0.0, %v2609
        %v2611 = vpop.f32.mrf.mxu0
        %v2612 = vadd.f32 0.0, %v2611
        %2613 = vmatmul.bf16.gmra.mxu0 %v2542
        %v2614 = vpop.f32.mrf.mxu0
        %v2615 = vadd.f32 0.0, %v2614
        %v2616 = vpop.f32.mrf.mxu0
        %v2617 = vadd.f32 0.0, %v2616
        %2618 = vmatmul.bf16.gmra.mxu0 %v2545
        %v2619 = vpop.f32.mrf.mxu0
        %v2620 = vadd.f32 0.0, %v2619
        %v2621 = vpop.f32.mrf.mxu0
        %v2622 = vadd.f32 0.0, %v2621
        %2623 = vmatmul.bf16.gmra.mxu0 %v2548
        %v2624 = vpop.f32.mrf.mxu0
        %v2625 = vadd.f32 0.0, %v2624
        %v2626 = vpop.f32.mrf.mxu0
        %v2627 = vadd.f32 0.0, %v2626
        %2628 = vmatmul.bf16.gmra.mxu0 %v2551
        %v2629 = vpop.f32.mrf.mxu0
        %v2630 = vadd.f32 0.0, %v2629
        %v2631 = vpop.f32.mrf.mxu0
        %v2632 = vadd.f32 0.0, %v2631
        %2633 = vmatmul.bf16.gmra.mxu0 %v2554
        %v2634 = vpop.f32.mrf.mxu0
        %v2635 = vadd.f32 0.0, %v2634
        %v2636 = vpop.f32.mrf.mxu0
        %v2637 = vadd.f32 0.0, %v2636
        %2638 = vmatmul.bf16.gmra.mxu0 %v2557
        %v2639 = vpop.f32.mrf.mxu0
        %v2640 = vadd.f32 0.0, %v2639
        %v2641 = vpop.f32.mrf.mxu0
        %v2642 = vadd.f32 0.0, %v2641
        %2643 = vmatmul.bf16.gmra.mxu0 %v2560
        %v2644 = vpop.f32.mrf.mxu0
        %v2645 = vadd.f32 0.0, %v2644
        %v2646 = vpop.f32.mrf.mxu0
        %v2647 = vadd.f32 0.0, %v2646
        %2648 = vmatmul.bf16.gmra.mxu0 %v2563
        %v2649 = vpop.f32.mrf.mxu0
        %v2650 = vadd.f32 0.0, %v2649
        %v2651 = vpop.f32.mrf.mxu0
        %v2652 = vadd.f32 0.0, %v2651
        %2653 = vmatmul.bf16.gmra.mxu0 %v2566
        %v2654 = vpop.f32.mrf.mxu0
        %v2655 = vadd.f32 0.0, %v2654
        %v2656 = vpop.f32.mrf.mxu0
        %v2657 = vadd.f32 0.0, %v2656
        %2658 = vmatmul.bf16.gmra.mxu0 %v2569
        %v2659 = vpop.f32.mrf.mxu0
        %v2660 = vadd.f32 0.0, %v2659
        %v2661 = vpop.f32.mrf.mxu0
        %v2662 = vadd.f32 0.0, %v2661
        %2663 = vmatmul.bf16.gmra.mxu0 %v2572
        %v2664 = vpop.f32.mrf.mxu0
        %v2665 = vadd.f32 0.0, %v2664
        %v2666 = vpop.f32.mrf.mxu0
        %v2667 = vadd.f32 0.0, %v2666
        %2668 = vmatmul.bf16.gmra.mxu0 %v2575
        %v2669 = vpop.f32.mrf.mxu0
        %v2670 = vadd.f32 0.0, %v2669
        %v2671 = vpop.f32.mrf.mxu0
        %v2672 = vadd.f32 0.0, %v2671
        %2673 = vdwg.mxu0
        %v2674 = vadd.f32 %v2305, %v2590
        %v2675 = vadd.f32 %v2306, %v2592
        %v2676 = vadd.f32 %v2307, %v2595
        %v2677 = vadd.f32 %v2308, %v2597
        %v2678 = vadd.f32 %v2309, %v2600
        %v2679 = vadd.f32 %v2310, %v2602
        %v2680 = vadd.f32 %v2311, %v2605
        %v2681 = vadd.f32 %v2312, %v2607
        %v2682 = vadd.f32 %v2313, %v2610
        %v2683 = vadd.f32 %v2314, %v2612
        %v2684 = vadd.f32 %v2315, %v2615
        %v2685 = vadd.f32 %v2316, %v2617
        %v2686 = vadd.f32 %v2317, %v2620
        %v2687 = vadd.f32 %v2318, %v2622
        %v2688 = vadd.f32 %v2319, %v2625
        %v2689 = vadd.f32 %v2320, %v2627
        %v2690 = vadd.f32 %v2321, %v2630
        %v2691 = vadd.f32 %v2322, %v2632
        %v2692 = vadd.f32 %v2323, %v2635
        %v2693 = vadd.f32 %v2324, %v2637
        %v2694 = vadd.f32 %v2325, %v2640
        %v2695 = vadd.f32 %v2326, %v2642
        %v2696 = vadd.f32 %v2327, %v2645
        %v2697 = vadd.f32 %v2328, %v2647
        %v2698 = vadd.f32 %v2329, %v2650
        %v2699 = vadd.f32 %v2330, %v2652
        %v2700 = vadd.f32 %v2331, %v2655
        %v2701 = vadd.f32 %v2332, %v2657
        %v2702 = vadd.f32 %v2333, %v2660
        %v2703 = vadd.f32 %v2334, %v2662
        %v2704 = vadd.f32 %v2335, %v2665
        %v2705 = vadd.f32 %v2336, %v2667
        %v2706 = vadd.f32 %v2337, %v2670
        %v2707 = vadd.f32 %v2338, %v2672
        %s2708 = scalar_lea.vmem %s1, 40
        %v2709 = vld [vmem:[%s2708] sm:$0xf]
        %v2710 = vld [vmem:[%s2708 + $0x4] sm:$0xf]
        %v2711 = vld [vmem:[%s2708 + $0x8] sm:$0xf]
        %v2712 = vld [vmem:[%s2708 + $0xc] sm:$0xf]
        %v2713 = vld [vmem:[%s2708 + $0x10] sm:$0x3]
        %v2714 = vpack.c.b16 %v2053, %v2052
        %v2715 = vpack.c.b16 %v2055, %v2054
        %v2716 = vpack.c.b16 %v2057, %v2056
        %v2717 = vpack.c.b16 %v2059, %v2058
        %v2718 = vpack.c.b16 %v2061, %v2060
        %v2719 = vpack.c.b16 %v2063, %v2062
        %v2720 = vpack.c.b16 %v2065, %v2064
        %v2721 = vpack.c.b16 %v2067, %v2066
        %v2722 = vpack.c.b16 %v2069, %v2068
        %v2723 = vpack.c.b16 %v2071, %v2070
        %v2724 = vpack.c.b16 %v2073, %v2072
        %v2725 = vpack.c.b16 %v2075, %v2074
        %v2726 = vpack.c.b16 %v2077, %v2076
        %v2727 = vpack.c.b16 %v2079, %v2078
        %v2728 = vpack.c.b16 %v2081, %v2080
        %v2729 = vpack.c.b16 %v2083, %v2082
        %v2730 = vpack.c.b16 %v2347, %v2084
        %v2736 = vunpack.c.l.b16 %v2709
        %v2737 = vunpack.c.l.b16 %v2710
        %v2738 = vunpack.c.l.b16 %v2711
        %v2739 = vunpack.c.l.b16 %v2712
        %v2740 = vunpack.c.l.b16 %v2713
        %v2741 = vpack.c.b16 %v2737, %v2736
        %v2742 = vpack.c.b16 %v2739, %v2738
        %v2743 = vpack.c.b16 %v2740, %v2740
        %v2747 = vsel %vm2155, %v2714, 0
        %v2750 = vsel %vm2155, %v2715, 0
        %v2753 = vsel %vm2155, %v2716, 0
        %v2756 = vsel %vm2155, %v2717, 0
        %v2759 = vsel %vm2155, %v2718, 0
        %v2762 = vsel %vm2155, %v2719, 0
        %v2765 = vsel %vm2155, %v2720, 0
        %v2768 = vsel %vm2155, %v2721, 0
        %v2771 = vsel %vm2155, %v2722, 0
        %v2774 = vsel %vm2155, %v2723, 0
        %v2777 = vsel %vm2155, %v2724, 0
        %v2780 = vsel %vm2155, %v2725, 0
        %v2783 = vsel %vm2155, %v2726, 0
        %v2786 = vsel %vm2155, %v2727, 0
        %v2789 = vsel %vm2155, %v2728, 0
        %v2792 = vsel %vm2155, %v2729, 0
        %v2795 = vsel %vm2155, %v2730, 0
        %v2798 = vsel %vm2207, %v2743, 0
        %2800 = vmatpush.bf16.msra.mxu0 0
        %2801 = vmatpush.bf16.msra.mxu0 0
        %2802 = vmatpush.bf16.msra.mxu0 0
        %2803 = vmatpush.bf16.msra.mxu0 0
        %2804 = vmatpush.bf16.msra.mxu0 0
        %2805 = vmatpush.bf16.msra.mxu0 %v2798
        %2806 = vmatpush.bf16.msra.mxu0 %v2742
        %2807 = vmatpush.bf16.msra.mxu0 %v2741
        %2808 = vmatmul.bf16.gmra.mxu0 %v2747
        %v2809 = vpop.f32.mrf.mxu0
        %v2810 = vadd.f32 0.0, %v2809
        %v2811 = vpop.f32.mrf.mxu0
        %v2812 = vadd.f32 0.0, %v2811
        %2813 = vmatmul.bf16.gmra.mxu0 %v2750
        %v2814 = vpop.f32.mrf.mxu0
        %v2815 = vadd.f32 0.0, %v2814
        %v2816 = vpop.f32.mrf.mxu0
        %v2817 = vadd.f32 0.0, %v2816
        %2818 = vmatmul.bf16.gmra.mxu0 %v2753
        %v2819 = vpop.f32.mrf.mxu0
        %v2820 = vadd.f32 0.0, %v2819
        %v2821 = vpop.f32.mrf.mxu0
        %v2822 = vadd.f32 0.0, %v2821
        %2823 = vmatmul.bf16.gmra.mxu0 %v2756
        %v2824 = vpop.f32.mrf.mxu0
        %v2825 = vadd.f32 0.0, %v2824
        %v2826 = vpop.f32.mrf.mxu0
        %v2827 = vadd.f32 0.0, %v2826
        %2828 = vmatmul.bf16.gmra.mxu0 %v2759
        %v2829 = vpop.f32.mrf.mxu0
        %v2830 = vadd.f32 0.0, %v2829
        %v2831 = vpop.f32.mrf.mxu0
        %v2832 = vadd.f32 0.0, %v2831
        %2833 = vmatmul.bf16.gmra.mxu0 %v2762
        %v2834 = vpop.f32.mrf.mxu0
        %v2835 = vadd.f32 0.0, %v2834
        %v2836 = vpop.f32.mrf.mxu0
        %v2837 = vadd.f32 0.0, %v2836
        %2838 = vmatmul.bf16.gmra.mxu0 %v2765
        %v2839 = vpop.f32.mrf.mxu0
        %v2840 = vadd.f32 0.0, %v2839
        %v2841 = vpop.f32.mrf.mxu0
        %v2842 = vadd.f32 0.0, %v2841
        %2843 = vmatmul.bf16.gmra.mxu0 %v2768
        %v2844 = vpop.f32.mrf.mxu0
        %v2845 = vadd.f32 0.0, %v2844
        %v2846 = vpop.f32.mrf.mxu0
        %v2847 = vadd.f32 0.0, %v2846
        %2848 = vmatmul.bf16.gmra.mxu0 %v2771
        %v2849 = vpop.f32.mrf.mxu0
        %v2850 = vadd.f32 0.0, %v2849
        %v2851 = vpop.f32.mrf.mxu0
        %v2852 = vadd.f32 0.0, %v2851
        %2853 = vmatmul.bf16.gmra.mxu0 %v2774
        %v2854 = vpop.f32.mrf.mxu0
        %v2855 = vadd.f32 0.0, %v2854
        %v2856 = vpop.f32.mrf.mxu0
        %v2857 = vadd.f32 0.0, %v2856
        %2858 = vmatmul.bf16.gmra.mxu0 %v2777
        %v2859 = vpop.f32.mrf.mxu0
        %v2860 = vadd.f32 0.0, %v2859
        %v2861 = vpop.f32.mrf.mxu0
        %v2862 = vadd.f32 0.0, %v2861
        %2863 = vmatmul.bf16.gmra.mxu0 %v2780
        %v2864 = vpop.f32.mrf.mxu0
        %v2865 = vadd.f32 0.0, %v2864
        %v2866 = vpop.f32.mrf.mxu0
        %v2867 = vadd.f32 0.0, %v2866
        %2868 = vmatmul.bf16.gmra.mxu0 %v2783
        %v2869 = vpop.f32.mrf.mxu0
        %v2870 = vadd.f32 0.0, %v2869
        %v2871 = vpop.f32.mrf.mxu0
        %v2872 = vadd.f32 0.0, %v2871
        %2873 = vmatmul.bf16.gmra.mxu0 %v2786
        %v2874 = vpop.f32.mrf.mxu0
        %v2875 = vadd.f32 0.0, %v2874
        %v2876 = vpop.f32.mrf.mxu0
        %v2877 = vadd.f32 0.0, %v2876
        %2878 = vmatmul.bf16.gmra.mxu0 %v2789
        %v2879 = vpop.f32.mrf.mxu0
        %v2880 = vadd.f32 0.0, %v2879
        %v2881 = vpop.f32.mrf.mxu0
        %v2882 = vadd.f32 0.0, %v2881
        %2883 = vmatmul.bf16.gmra.mxu0 %v2792
        %v2884 = vpop.f32.mrf.mxu0
        %v2885 = vadd.f32 0.0, %v2884
        %v2886 = vpop.f32.mrf.mxu0
        %v2887 = vadd.f32 0.0, %v2886
        %2888 = vmatmul.bf16.gmra.mxu0 %v2795
        %v2889 = vpop.f32.mrf.mxu0
        %v2890 = vadd.f32 0.0, %v2889
        %v2891 = vpop.f32.mrf.mxu0
        %v2892 = vadd.f32 0.0, %v2891
        %2893 = vdwg.mxu0
        %v2894 = vadd.f32 %v2674, %v2810
        %v2895 = vadd.f32 %v2675, %v2812
        %v2896 = vadd.f32 %v2676, %v2815
        %v2897 = vadd.f32 %v2677, %v2817
        %v2898 = vadd.f32 %v2678, %v2820
        %v2899 = vadd.f32 %v2679, %v2822
        %v2900 = vadd.f32 %v2680, %v2825
        %v2901 = vadd.f32 %v2681, %v2827
        %v2902 = vadd.f32 %v2682, %v2830
        %v2903 = vadd.f32 %v2683, %v2832
        %v2904 = vadd.f32 %v2684, %v2835
        %v2905 = vadd.f32 %v2685, %v2837
        %v2906 = vadd.f32 %v2686, %v2840
        %v2907 = vadd.f32 %v2687, %v2842
        %v2908 = vadd.f32 %v2688, %v2845
        %v2909 = vadd.f32 %v2689, %v2847
        %v2910 = vadd.f32 %v2690, %v2850
        %v2911 = vadd.f32 %v2691, %v2852
        %v2912 = vadd.f32 %v2692, %v2855
        %v2913 = vadd.f32 %v2693, %v2857
        %v2914 = vadd.f32 %v2694, %v2860
        %v2915 = vadd.f32 %v2695, %v2862
        %v2916 = vadd.f32 %v2696, %v2865
        %v2917 = vadd.f32 %v2697, %v2867
        %v2918 = vadd.f32 %v2698, %v2870
        %v2919 = vadd.f32 %v2699, %v2872
        %v2920 = vadd.f32 %v2700, %v2875
        %v2921 = vadd.f32 %v2701, %v2877
        %v2922 = vadd.f32 %v2702, %v2880
        %v2923 = vadd.f32 %v2703, %v2882
        %v2924 = vadd.f32 %v2704, %v2885
        %v2925 = vadd.f32 %v2705, %v2887
        %v2926 = vadd.f32 %v2706, %v2890
        %v2927 = vadd.f32 %v2707, %v2892
        %v2928 = vld [vmem:[#allocation2 + $0x8] sm:$0x8]
        %v2929 = vld [vmem:[#allocation2 + $0xc] sm:$0xf]
        %v2930 = vld [vmem:[#allocation2 + $0x10] sm:$0xf]
        %v2931 = vld [vmem:[#allocation2 + $0x14] sm:$0xf]
        %v2932 = vld [vmem:[#allocation2 + $0x18] sm:$0xf]
        %v2933 = vld [vmem:[#allocation2 + $0x1c] sm:$0xf]
        %v2934 = vld [vmem:[#allocation2 + $0x20] sm:$0xf]
        %v2935 = vld [vmem:[#allocation2 + $0x24] sm:$0xf]
        %v2936 = vld [vmem:[#allocation2 + $0x28] sm:$0xf]
        %v2937 = vld [vmem:[#allocation2 + $0x2c] sm:$0xf]
        %v2938 = vld [vmem:[#allocation2 + $0x30] sm:$0xf]
        %v2939 = vld [vmem:[#allocation2 + $0x34] sm:$0xf]
        %v2940 = vld [vmem:[#allocation2 + $0x38] sm:$0xf]
        %v2941 = vld [vmem:[#allocation2 + $0x3c] sm:$0xf]
        %v2942 = vld [vmem:[#allocation2 + $0x40] sm:$0xf]
        %v2943 = vld [vmem:[#allocation2 + $0x44] sm:$0xf]
        %v2944 = vld [vmem:[#allocation2 + $0x48] sm:$0xf]
        %v2945 = vld [vmem:[#allocation2 + $0x4c] sm:$0xf]
        %v2946 = vld [vmem:[#allocation2 + $0x50] sm:$0xf]
        %v2947 = vld [vmem:[#allocation2 + $0x54] sm:$0xf]
        %v2948 = vld [vmem:[#allocation2 + $0x58] sm:$0xf]
        %v2949 = vld [vmem:[#allocation2 + $0x5c] sm:$0xf]
        %v2950 = vld [vmem:[#allocation2 + $0x60] sm:$0xf]
        %v2951 = vld [vmem:[#allocation2 + $0x64] sm:$0xf]
        %v2952 = vld [vmem:[#allocation2 + $0x68] sm:$0xf]
        %v2953 = vld [vmem:[#allocation2 + $0x6c] sm:$0xf]
        %v2954 = vld [vmem:[#allocation2 + $0x70] sm:$0xf]
        %v2955 = vld [vmem:[#allocation2 + $0x74] sm:$0xf]
        %v2956 = vld [vmem:[#allocation2 + $0x78] sm:$0xf]
        %v2957 = vld [vmem:[#allocation2 + $0x7c] sm:$0xf]
        %v2958 = vld [vmem:[#allocation2 + $0x80] sm:$0xf]
        %v2959 = vld [vmem:[#allocation2 + $0x84] sm:$0xf]
        %v2960 = vld [vmem:[#allocation2 + $0x88] sm:$0xf]
        %v2961 = vld [vmem:[#allocation2 + $0x8c] sm:$0xf]
        %v2962 = vld [vmem:[#allocation2 + $0x90] sm:$0xf]
        %s2963 = scalar_lea.vmem %s1, 60
        %v2964 = vld [vmem:[%s2963] sm:$0xf]
        %v2965 = vld [vmem:[%s2963 + $0x4] sm:$0xf]
        %v2966 = vld [vmem:[%s2963 + $0x8] sm:$0xf]
        %v2967 = vld [vmem:[%s2963 + $0xc] sm:$0xf]
        %v2968 = vld [vmem:[%s2963 + $0x10] sm:$0x3]
        %v3004 = vunpack.c.l.b16 %v2928
        %v3005 = vunpack.c.l.b16 %v2929
        %v3006 = vunpack.c.l.b16 %v2930
        %v3007 = vunpack.c.l.b16 %v2931
        %v3008 = vunpack.c.l.b16 %v2932
        %v3009 = vunpack.c.l.b16 %v2933
        %v3010 = vunpack.c.l.b16 %v2934
        %v3011 = vunpack.c.l.b16 %v2935
        %v3012 = vunpack.c.l.b16 %v2936
        %v3013 = vunpack.c.l.b16 %v2937
        %v3014 = vunpack.c.l.b16 %v2938
        %v3015 = vunpack.c.l.b16 %v2939
        %v3016 = vunpack.c.l.b16 %v2940
        %v3017 = vunpack.c.l.b16 %v2941
        %v3018 = vunpack.c.l.b16 %v2942
        %v3019 = vunpack.c.l.b16 %v2943
        %v3020 = vunpack.c.l.b16 %v2944
        %v3021 = vunpack.c.l.b16 %v2945
        %v3022 = vunpack.c.l.b16 %v2946
        %v3023 = vunpack.c.l.b16 %v2947
        %v3024 = vunpack.c.l.b16 %v2948
        %v3025 = vunpack.c.l.b16 %v2949
        %v3026 = vunpack.c.l.b16 %v2950
        %v3027 = vunpack.c.l.b16 %v2951
        %v3028 = vunpack.c.l.b16 %v2952
        %v3029 = vunpack.c.l.b16 %v2953
        %v3030 = vunpack.c.l.b16 %v2954
        %v3031 = vunpack.c.l.b16 %v2955
        %v3032 = vunpack.c.l.b16 %v2956
        %v3033 = vunpack.c.l.b16 %v2957
        %v3034 = vunpack.c.l.b16 %v2958
        %v3035 = vunpack.c.l.b16 %v2959
        %v3036 = vunpack.c.l.b16 %v2960
        %v3037 = vunpack.c.l.b16 %v2961
        %v3038 = vunpack.c.l.b16 %v2962
        %v3039 = vpack.c.b16 %v3005, %v3004
        %v3040 = vpack.c.b16 %v3007, %v3006
        %v3041 = vpack.c.b16 %v3009, %v3008
        %v3042 = vpack.c.b16 %v3011, %v3010
        %v3043 = vpack.c.b16 %v3013, %v3012
        %v3044 = vpack.c.b16 %v3015, %v3014
        %v3045 = vpack.c.b16 %v3017, %v3016
        %v3046 = vpack.c.b16 %v3019, %v3018
        %v3047 = vpack.c.b16 %v3021, %v3020
        %v3048 = vpack.c.b16 %v3023, %v3022
        %v3049 = vpack.c.b16 %v3025, %v3024
        %v3050 = vpack.c.b16 %v3027, %v3026
        %v3051 = vpack.c.b16 %v3029, %v3028
        %v3052 = vpack.c.b16 %v3031, %v3030
        %v3053 = vpack.c.b16 %v3033, %v3032
        %v3054 = vpack.c.b16 %v3035, %v3034
        %v3055 = vpack.c.b16 %v3037, %v3036
        %v3056 = vpack.c.b16 %v3038, %v3038
        %v3058 = vshrl.u32 %v3039, 16
        %v3060 = vrot.slane %v3058, 3
        %v3061 = vshll.u32 %v3039, 16
        %v3063 = vrot.slane %v3061, 4
        %v3064 = vor.u32 %v3060, %v3063
        %v3066 = vshrl.u32 %v3040, 16
        %v3068 = vrot.slane %v3066, 3
        %v3069 = vshll.u32 %v3040, 16
        %v3071 = vrot.slane %v3069, 4
        %v3072 = vor.u32 %v3068, %v3071
        %v3073 = vsel %vm2349, %v3064, %v3072
        %v3075 = vshrl.u32 %v3041, 16
        %v3077 = vrot.slane %v3075, 3
        %v3078 = vshll.u32 %v3041, 16
        %v3080 = vrot.slane %v3078, 4
        %v3081 = vor.u32 %v3077, %v3080
        %v3082 = vsel %vm2349, %v3072, %v3081
        %v3084 = vshrl.u32 %v3042, 16
        %v3086 = vrot.slane %v3084, 3
        %v3087 = vshll.u32 %v3042, 16
        %v3089 = vrot.slane %v3087, 4
        %v3090 = vor.u32 %v3086, %v3089
        %v3091 = vsel %vm2349, %v3081, %v3090
        %v3093 = vshrl.u32 %v3043, 16
        %v3095 = vrot.slane %v3093, 3
        %v3096 = vshll.u32 %v3043, 16
        %v3098 = vrot.slane %v3096, 4
        %v3099 = vor.u32 %v3095, %v3098
        %v3100 = vsel %vm2349, %v3090, %v3099
        %v3102 = vshrl.u32 %v3044, 16
        %v3104 = vrot.slane %v3102, 3
        %v3105 = vshll.u32 %v3044, 16
        %v3107 = vrot.slane %v3105, 4
        %v3108 = vor.u32 %v3104, %v3107
        %v3109 = vsel %vm2349, %v3099, %v3108
        %v3111 = vshrl.u32 %v3045, 16
        %v3113 = vrot.slane %v3111, 3
        %v3114 = vshll.u32 %v3045, 16
        %v3116 = vrot.slane %v3114, 4
        %v3117 = vor.u32 %v3113, %v3116
        %v3118 = vsel %vm2349, %v3108, %v3117
        %v3120 = vshrl.u32 %v3046, 16
        %v3122 = vrot.slane %v3120, 3
        %v3123 = vshll.u32 %v3046, 16
        %v3125 = vrot.slane %v3123, 4
        %v3126 = vor.u32 %v3122, %v3125
        %v3127 = vsel %vm2349, %v3117, %v3126
        %v3129 = vshrl.u32 %v3047, 16
        %v3131 = vrot.slane %v3129, 3
        %v3132 = vshll.u32 %v3047, 16
        %v3134 = vrot.slane %v3132, 4
        %v3135 = vor.u32 %v3131, %v3134
        %v3136 = vsel %vm2349, %v3126, %v3135
        %v3138 = vshrl.u32 %v3048, 16
        %v3140 = vrot.slane %v3138, 3
        %v3141 = vshll.u32 %v3048, 16
        %v3143 = vrot.slane %v3141, 4
        %v3144 = vor.u32 %v3140, %v3143
        %v3145 = vsel %vm2349, %v3135, %v3144
        %v3147 = vshrl.u32 %v3049, 16
        %v3149 = vrot.slane %v3147, 3
        %v3150 = vshll.u32 %v3049, 16
        %v3152 = vrot.slane %v3150, 4
        %v3153 = vor.u32 %v3149, %v3152
        %v3154 = vsel %vm2349, %v3144, %v3153
        %v3156 = vshrl.u32 %v3050, 16
        %v3158 = vrot.slane %v3156, 3
        %v3159 = vshll.u32 %v3050, 16
        %v3161 = vrot.slane %v3159, 4
        %v3162 = vor.u32 %v3158, %v3161
        %v3163 = vsel %vm2349, %v3153, %v3162
        %v3165 = vshrl.u32 %v3051, 16
        %v3167 = vrot.slane %v3165, 3
        %v3168 = vshll.u32 %v3051, 16
        %v3170 = vrot.slane %v3168, 4
        %v3171 = vor.u32 %v3167, %v3170
        %v3172 = vsel %vm2349, %v3162, %v3171
        %v3174 = vshrl.u32 %v3052, 16
        %v3176 = vrot.slane %v3174, 3
        %v3177 = vshll.u32 %v3052, 16
        %v3179 = vrot.slane %v3177, 4
        %v3180 = vor.u32 %v3176, %v3179
        %v3181 = vsel %vm2349, %v3171, %v3180
        %v3183 = vshrl.u32 %v3053, 16
        %v3185 = vrot.slane %v3183, 3
        %v3186 = vshll.u32 %v3053, 16
        %v3188 = vrot.slane %v3186, 4
        %v3189 = vor.u32 %v3185, %v3188
        %v3190 = vsel %vm2349, %v3180, %v3189
        %v3192 = vshrl.u32 %v3054, 16
        %v3194 = vrot.slane %v3192, 3
        %v3195 = vshll.u32 %v3054, 16
        %v3197 = vrot.slane %v3195, 4
        %v3198 = vor.u32 %v3194, %v3197
        %v3199 = vsel %vm2349, %v3189, %v3198
        %v3201 = vshrl.u32 %v3055, 16
        %v3203 = vrot.slane %v3201, 3
        %v3204 = vshll.u32 %v3055, 16
        %v3206 = vrot.slane %v3204, 4
        %v3207 = vor.u32 %v3203, %v3206
        %v3208 = vsel %vm2349, %v3198, %v3207
        %v3210 = vshrl.u32 %v3056, 16
        %v3212 = vrot.slane %v3210, 3
        %v3213 = vshll.u32 %v3056, 16
        %v3215 = vrot.slane %v3213, 4
        %v3216 = vor.u32 %v3212, %v3215
        %v3217 = vsel %vm2349, %v3207, %v3216
        %v3223 = vunpack.c.l.b16 %v2964
        %v3224 = vunpack.c.l.b16 %v2965
        %v3225 = vunpack.c.l.b16 %v2966
        %v3226 = vunpack.c.l.b16 %v2967
        %v3227 = vunpack.c.l.b16 %v2968
        %v3228 = vpack.c.b16 %v3224, %v3223
        %v3229 = vpack.c.b16 %v3226, %v3225
        %v3230 = vpack.c.b16 %v3227, %v3227
        %v3234 = vsel %vm2155, %v3073, 0
        %v3237 = vsel %vm2155, %v3082, 0
        %v3240 = vsel %vm2155, %v3091, 0
        %v3243 = vsel %vm2155, %v3100, 0
        %v3246 = vsel %vm2155, %v3109, 0
        %v3249 = vsel %vm2155, %v3118, 0
        %v3252 = vsel %vm2155, %v3127, 0
        %v3255 = vsel %vm2155, %v3136, 0
        %v3258 = vsel %vm2155, %v3145, 0
        %v3261 = vsel %vm2155, %v3154, 0
        %v3264 = vsel %vm2155, %v3163, 0
        %v3267 = vsel %vm2155, %v3172, 0
        %v3270 = vsel %vm2155, %v3181, 0
        %v3273 = vsel %vm2155, %v3190, 0
        %v3276 = vsel %vm2155, %v3199, 0
        %v3279 = vsel %vm2155, %v3208, 0
        %v3282 = vsel %vm2155, %v3217, 0
        %v3285 = vsel %vm2207, %v3230, 0
        %3287 = vmatpush.bf16.msra.mxu0 0
        %3288 = vmatpush.bf16.msra.mxu0 0
        %3289 = vmatpush.bf16.msra.mxu0 0
        %3290 = vmatpush.bf16.msra.mxu0 0
        %3291 = vmatpush.bf16.msra.mxu0 0
        %3292 = vmatpush.bf16.msra.mxu0 %v3285
        %3293 = vmatpush.bf16.msra.mxu0 %v3229
        %3294 = vmatpush.bf16.msra.mxu0 %v3228
        %3295 = vmatmul.bf16.gmra.mxu0 %v3234
        %v3296 = vpop.f32.mrf.mxu0
        %v3297 = vadd.f32 0.0, %v3296
        %v3298 = vpop.f32.mrf.mxu0
        %v3299 = vadd.f32 0.0, %v3298
        %3300 = vmatmul.bf16.gmra.mxu0 %v3237
        %v3301 = vpop.f32.mrf.mxu0
        %v3302 = vadd.f32 0.0, %v3301
        %v3303 = vpop.f32.mrf.mxu0
        %v3304 = vadd.f32 0.0, %v3303
        %3305 = vmatmul.bf16.gmra.mxu0 %v3240
        %v3306 = vpop.f32.mrf.mxu0
        %v3307 = vadd.f32 0.0, %v3306
        %v3308 = vpop.f32.mrf.mxu0
        %v3309 = vadd.f32 0.0, %v3308
        %3310 = vmatmul.bf16.gmra.mxu0 %v3243
        %v3311 = vpop.f32.mrf.mxu0
        %v3312 = vadd.f32 0.0, %v3311
        %v3313 = vpop.f32.mrf.mxu0
        %v3314 = vadd.f32 0.0, %v3313
        %3315 = vmatmul.bf16.gmra.mxu0 %v3246
        %v3316 = vpop.f32.mrf.mxu0
        %v3317 = vadd.f32 0.0, %v3316
        %v3318 = vpop.f32.mrf.mxu0
        %v3319 = vadd.f32 0.0, %v3318
        %3320 = vmatmul.bf16.gmra.mxu0 %v3249
        %v3321 = vpop.f32.mrf.mxu0
        %v3322 = vadd.f32 0.0, %v3321
        %v3323 = vpop.f32.mrf.mxu0
        %v3324 = vadd.f32 0.0, %v3323
        %3325 = vmatmul.bf16.gmra.mxu0 %v3252
        %v3326 = vpop.f32.mrf.mxu0
        %v3327 = vadd.f32 0.0, %v3326
        %v3328 = vpop.f32.mrf.mxu0
        %v3329 = vadd.f32 0.0, %v3328
        %3330 = vmatmul.bf16.gmra.mxu0 %v3255
        %v3331 = vpop.f32.mrf.mxu0
        %v3332 = vadd.f32 0.0, %v3331
        %v3333 = vpop.f32.mrf.mxu0
        %v3334 = vadd.f32 0.0, %v3333
        %3335 = vmatmul.bf16.gmra.mxu0 %v3258
        %v3336 = vpop.f32.mrf.mxu0
        %v3337 = vadd.f32 0.0, %v3336
        %v3338 = vpop.f32.mrf.mxu0
        %v3339 = vadd.f32 0.0, %v3338
        %3340 = vmatmul.bf16.gmra.mxu0 %v3261
        %v3341 = vpop.f32.mrf.mxu0
        %v3342 = vadd.f32 0.0, %v3341
        %v3343 = vpop.f32.mrf.mxu0
        %v3344 = vadd.f32 0.0, %v3343
        %3345 = vmatmul.bf16.gmra.mxu0 %v3264
        %v3346 = vpop.f32.mrf.mxu0
        %v3347 = vadd.f32 0.0, %v3346
        %v3348 = vpop.f32.mrf.mxu0
        %v3349 = vadd.f32 0.0, %v3348
        %3350 = vmatmul.bf16.gmra.mxu0 %v3267
        %v3351 = vpop.f32.mrf.mxu0
        %v3352 = vadd.f32 0.0, %v3351
        %v3353 = vpop.f32.mrf.mxu0
        %v3354 = vadd.f32 0.0, %v3353
        %3355 = vmatmul.bf16.gmra.mxu0 %v3270
        %v3356 = vpop.f32.mrf.mxu0
        %v3357 = vadd.f32 0.0, %v3356
        %v3358 = vpop.f32.mrf.mxu0
        %v3359 = vadd.f32 0.0, %v3358
        %3360 = vmatmul.bf16.gmra.mxu0 %v3273
        %v3361 = vpop.f32.mrf.mxu0
        %v3362 = vadd.f32 0.0, %v3361
        %v3363 = vpop.f32.mrf.mxu0
        %v3364 = vadd.f32 0.0, %v3363
        %3365 = vmatmul.bf16.gmra.mxu0 %v3276
        %v3366 = vpop.f32.mrf.mxu0
        %v3367 = vadd.f32 0.0, %v3366
        %v3368 = vpop.f32.mrf.mxu0
        %v3369 = vadd.f32 0.0, %v3368
        %3370 = vmatmul.bf16.gmra.mxu0 %v3279
        %v3371 = vpop.f32.mrf.mxu0
        %v3372 = vadd.f32 0.0, %v3371
        %v3373 = vpop.f32.mrf.mxu0
        %v3374 = vadd.f32 0.0, %v3373
        %3375 = vmatmul.bf16.gmra.mxu0 %v3282
        %v3376 = vpop.f32.mrf.mxu0
        %v3377 = vadd.f32 0.0, %v3376
        %v3378 = vpop.f32.mrf.mxu0
        %v3379 = vadd.f32 0.0, %v3378
        %3380 = vdwg.mxu0
        %v3381 = vadd.f32 %v2894, %v3297
        %v3382 = vadd.f32 %v2895, %v3299
        %v3383 = vadd.f32 %v2896, %v3302
        %v3384 = vadd.f32 %v2897, %v3304
        %v3385 = vadd.f32 %v2898, %v3307
        %v3386 = vadd.f32 %v2899, %v3309
        %v3387 = vadd.f32 %v2900, %v3312
        %v3388 = vadd.f32 %v2901, %v3314
        %v3389 = vadd.f32 %v2902, %v3317
        %v3390 = vadd.f32 %v2903, %v3319
        %v3391 = vadd.f32 %v2904, %v3322
        %v3392 = vadd.f32 %v2905, %v3324
        %v3393 = vadd.f32 %v2906, %v3327
        %v3394 = vadd.f32 %v2907, %v3329
        %v3395 = vadd.f32 %v2908, %v3332
        %v3396 = vadd.f32 %v2909, %v3334
        %v3397 = vadd.f32 %v2910, %v3337
        %v3398 = vadd.f32 %v2911, %v3339
        %v3399 = vadd.f32 %v2912, %v3342
        %v3400 = vadd.f32 %v2913, %v3344
        %v3401 = vadd.f32 %v2914, %v3347
        %v3402 = vadd.f32 %v2915, %v3349
        %v3403 = vadd.f32 %v2916, %v3352
        %v3404 = vadd.f32 %v2917, %v3354
        %v3405 = vadd.f32 %v2918, %v3357
        %v3406 = vadd.f32 %v2919, %v3359
        %v3407 = vadd.f32 %v2920, %v3362
        %v3408 = vadd.f32 %v2921, %v3364
        %v3409 = vadd.f32 %v2922, %v3367
        %v3410 = vadd.f32 %v2923, %v3369
        %v3411 = vadd.f32 %v2924, %v3372
        %v3412 = vadd.f32 %v2925, %v3374
        %v3413 = vadd.f32 %v2926, %v3377
        %v3414 = vadd.f32 %v2927, %v3379
        %s3415 = scalar_lea.vmem %s1, 80
        %v3416 = vld [vmem:[%s3415] sm:$0xf]
        %v3417 = vld [vmem:[%s3415 + $0x4] sm:$0xf]
        %v3418 = vld [vmem:[%s3415 + $0x8] sm:$0xf]
        %v3419 = vld [vmem:[%s3415 + $0xc] sm:$0xf]
        %v3420 = vld [vmem:[%s3415 + $0x10] sm:$0x3]
        %v3421 = vpack.c.b16 %v3006, %v3005
        %v3422 = vpack.c.b16 %v3008, %v3007
        %v3423 = vpack.c.b16 %v3010, %v3009
        %v3424 = vpack.c.b16 %v3012, %v3011
        %v3425 = vpack.c.b16 %v3014, %v3013
        %v3426 = vpack.c.b16 %v3016, %v3015
        %v3427 = vpack.c.b16 %v3018, %v3017
        %v3428 = vpack.c.b16 %v3020, %v3019
        %v3429 = vpack.c.b16 %v3022, %v3021
        %v3430 = vpack.c.b16 %v3024, %v3023
        %v3431 = vpack.c.b16 %v3026, %v3025
        %v3432 = vpack.c.b16 %v3028, %v3027
        %v3433 = vpack.c.b16 %v3030, %v3029
        %v3434 = vpack.c.b16 %v3032, %v3031
        %v3435 = vpack.c.b16 %v3034, %v3033
        %v3436 = vpack.c.b16 %v3036, %v3035
        %v3437 = vpack.c.b16 %v3038, %v3037
        %v3443 = vunpack.c.l.b16 %v3416
        %v3444 = vunpack.c.l.b16 %v3417
        %v3445 = vunpack.c.l.b16 %v3418
        %v3446 = vunpack.c.l.b16 %v3419
        %v3447 = vunpack.c.l.b16 %v3420
        %v3448 = vpack.c.b16 %v3444, %v3443
        %v3449 = vpack.c.b16 %v3446, %v3445
        %v3450 = vpack.c.b16 %v3447, %v3447
        %v3454 = vsel %vm2155, %v3421, 0
        %v3457 = vsel %vm2155, %v3422, 0
        %v3460 = vsel %vm2155, %v3423, 0
        %v3463 = vsel %vm2155, %v3424, 0
        %v3466 = vsel %vm2155, %v3425, 0
        %v3469 = vsel %vm2155, %v3426, 0
        %v3472 = vsel %vm2155, %v3427, 0
        %v3475 = vsel %vm2155, %v3428, 0
        %v3478 = vsel %vm2155, %v3429, 0
        %v3481 = vsel %vm2155, %v3430, 0
        %v3484 = vsel %vm2155, %v3431, 0
        %v3487 = vsel %vm2155, %v3432, 0
        %v3490 = vsel %vm2155, %v3433, 0
        %v3493 = vsel %vm2155, %v3434, 0
        %v3496 = vsel %vm2155, %v3435, 0
        %v3499 = vsel %vm2155, %v3436, 0
        %v3502 = vsel %vm2155, %v3437, 0
        %v3505 = vsel %vm2207, %v3450, 0
        %3507 = vmatpush.bf16.msra.mxu0 0
        %3508 = vmatpush.bf16.msra.mxu0 0
        %3509 = vmatpush.bf16.msra.mxu0 0
        %3510 = vmatpush.bf16.msra.mxu0 0
        %3511 = vmatpush.bf16.msra.mxu0 0
        %3512 = vmatpush.bf16.msra.mxu0 %v3505
        %3513 = vmatpush.bf16.msra.mxu0 %v3449
        %3514 = vmatpush.bf16.msra.mxu0 %v3448
        %3515 = vmatmul.bf16.gmra.mxu0 %v3454
        %v3516 = vpop.f32.mrf.mxu0
        %v3517 = vadd.f32 0.0, %v3516
        %v3518 = vpop.f32.mrf.mxu0
        %v3519 = vadd.f32 0.0, %v3518
        %3520 = vmatmul.bf16.gmra.mxu0 %v3457
        %v3521 = vpop.f32.mrf.mxu0
        %v3522 = vadd.f32 0.0, %v3521
        %v3523 = vpop.f32.mrf.mxu0
        %v3524 = vadd.f32 0.0, %v3523
        %3525 = vmatmul.bf16.gmra.mxu0 %v3460
        %v3526 = vpop.f32.mrf.mxu0
        %v3527 = vadd.f32 0.0, %v3526
        %v3528 = vpop.f32.mrf.mxu0
        %v3529 = vadd.f32 0.0, %v3528
        %3530 = vmatmul.bf16.gmra.mxu0 %v3463
        %v3531 = vpop.f32.mrf.mxu0
        %v3532 = vadd.f32 0.0, %v3531
        %v3533 = vpop.f32.mrf.mxu0
        %v3534 = vadd.f32 0.0, %v3533
        %3535 = vmatmul.bf16.gmra.mxu0 %v3466
        %v3536 = vpop.f32.mrf.mxu0
        %v3537 = vadd.f32 0.0, %v3536
        %v3538 = vpop.f32.mrf.mxu0
        %v3539 = vadd.f32 0.0, %v3538
        %3540 = vmatmul.bf16.gmra.mxu0 %v3469
        %v3541 = vpop.f32.mrf.mxu0
        %v3542 = vadd.f32 0.0, %v3541
        %v3543 = vpop.f32.mrf.mxu0
        %v3544 = vadd.f32 0.0, %v3543
        %3545 = vmatmul.bf16.gmra.mxu0 %v3472
        %v3546 = vpop.f32.mrf.mxu0
        %v3547 = vadd.f32 0.0, %v3546
        %v3548 = vpop.f32.mrf.mxu0
        %v3549 = vadd.f32 0.0, %v3548
        %3550 = vmatmul.bf16.gmra.mxu0 %v3475
        %v3551 = vpop.f32.mrf.mxu0
        %v3552 = vadd.f32 0.0, %v3551
        %v3553 = vpop.f32.mrf.mxu0
        %v3554 = vadd.f32 0.0, %v3553
        %3555 = vmatmul.bf16.gmra.mxu0 %v3478
        %v3556 = vpop.f32.mrf.mxu0
        %v3557 = vadd.f32 0.0, %v3556
        %v3558 = vpop.f32.mrf.mxu0
        %v3559 = vadd.f32 0.0, %v3558
        %3560 = vmatmul.bf16.gmra.mxu0 %v3481
        %v3561 = vpop.f32.mrf.mxu0
        %v3562 = vadd.f32 0.0, %v3561
        %v3563 = vpop.f32.mrf.mxu0
        %v3564 = vadd.f32 0.0, %v3563
        %3565 = vmatmul.bf16.gmra.mxu0 %v3484
        %v3566 = vpop.f32.mrf.mxu0
        %v3567 = vadd.f32 0.0, %v3566
        %v3568 = vpop.f32.mrf.mxu0
        %v3569 = vadd.f32 0.0, %v3568
        %3570 = vmatmul.bf16.gmra.mxu0 %v3487
        %v3571 = vpop.f32.mrf.mxu0
        %v3572 = vadd.f32 0.0, %v3571
        %v3573 = vpop.f32.mrf.mxu0
        %v3574 = vadd.f32 0.0, %v3573
        %3575 = vmatmul.bf16.gmra.mxu0 %v3490
        %v3576 = vpop.f32.mrf.mxu0
        %v3577 = vadd.f32 0.0, %v3576
        %v3578 = vpop.f32.mrf.mxu0
        %v3579 = vadd.f32 0.0, %v3578
        %3580 = vmatmul.bf16.gmra.mxu0 %v3493
        %v3581 = vpop.f32.mrf.mxu0
        %v3582 = vadd.f32 0.0, %v3581
        %v3583 = vpop.f32.mrf.mxu0
        %v3584 = vadd.f32 0.0, %v3583
        %3585 = vmatmul.bf16.gmra.mxu0 %v3496
        %v3586 = vpop.f32.mrf.mxu0
        %v3587 = vadd.f32 0.0, %v3586
        %v3588 = vpop.f32.mrf.mxu0
        %v3589 = vadd.f32 0.0, %v3588
        %3590 = vmatmul.bf16.gmra.mxu0 %v3499
        %v3591 = vpop.f32.mrf.mxu0
        %v3592 = vadd.f32 0.0, %v3591
        %v3593 = vpop.f32.mrf.mxu0
        %v3594 = vadd.f32 0.0, %v3593
        %3595 = vmatmul.bf16.gmra.mxu0 %v3502
        %v3596 = vpop.f32.mrf.mxu0
        %v3597 = vadd.f32 0.0, %v3596
        %v3598 = vpop.f32.mrf.mxu0
        %v3599 = vadd.f32 0.0, %v3598
        %3600 = vdwg.mxu0
        %v3601 = vadd.f32 %v3381, %v3517
        %v3602 = vadd.f32 %v3382, %v3519
        %v3603 = vadd.f32 %v3383, %v3522
        %v3604 = vadd.f32 %v3384, %v3524
        %v3605 = vadd.f32 %v3385, %v3527
        %v3606 = vadd.f32 %v3386, %v3529
        %v3607 = vadd.f32 %v3387, %v3532
        %v3608 = vadd.f32 %v3388, %v3534
        %v3609 = vadd.f32 %v3389, %v3537
        %v3610 = vadd.f32 %v3390, %v3539
        %v3611 = vadd.f32 %v3391, %v3542
        %v3612 = vadd.f32 %v3392, %v3544
        %v3613 = vadd.f32 %v3393, %v3547
        %v3614 = vadd.f32 %v3394, %v3549
        %v3615 = vadd.f32 %v3395, %v3552
        %v3616 = vadd.f32 %v3396, %v3554
        %v3617 = vadd.f32 %v3397, %v3557
        %v3618 = vadd.f32 %v3398, %v3559
        %v3619 = vadd.f32 %v3399, %v3562
        %v3620 = vadd.f32 %v3400, %v3564
        %v3621 = vadd.f32 %v3401, %v3567
        %v3622 = vadd.f32 %v3402, %v3569
        %v3623 = vadd.f32 %v3403, %v3572
        %v3624 = vadd.f32 %v3404, %v3574
        %v3625 = vadd.f32 %v3405, %v3577
        %v3626 = vadd.f32 %v3406, %v3579
        %v3627 = vadd.f32 %v3407, %v3582
        %v3628 = vadd.f32 %v3408, %v3584
        %v3629 = vadd.f32 %v3409, %v3587
        %v3630 = vadd.f32 %v3410, %v3589
        %v3631 = vadd.f32 %v3411, %v3592
        %v3632 = vadd.f32 %v3412, %v3594
        %v3633 = vadd.f32 %v3413, %v3597
        %v3634 = vadd.f32 %v3414, %v3599
        %v3635 = vld [vmem:[#allocation2 + $0xc] sm:$0xf]
        %v3636 = vld [vmem:[#allocation2 + $0x10] sm:$0xf]
        %v3637 = vld [vmem:[#allocation2 + $0x14] sm:$0xf]
        %v3638 = vld [vmem:[#allocation2 + $0x18] sm:$0xf]
        %v3639 = vld [vmem:[#allocation2 + $0x1c] sm:$0xf]
        %v3640 = vld [vmem:[#allocation2 + $0x20] sm:$0xf]
        %v3641 = vld [vmem:[#allocation2 + $0x24] sm:$0xf]
        %v3642 = vld [vmem:[#allocation2 + $0x28] sm:$0xf]
        %v3643 = vld [vmem:[#allocation2 + $0x2c] sm:$0xf]
        %v3644 = vld [vmem:[#allocation2 + $0x30] sm:$0xf]
        %v3645 = vld [vmem:[#allocation2 + $0x34] sm:$0xf]
        %v3646 = vld [vmem:[#allocation2 + $0x38] sm:$0xf]
        %v3647 = vld [vmem:[#allocation2 + $0x3c] sm:$0xf]
        %v3648 = vld [vmem:[#allocation2 + $0x40] sm:$0xf]
        %v3649 = vld [vmem:[#allocation2 + $0x44] sm:$0xf]
        %v3650 = vld [vmem:[#allocation2 + $0x48] sm:$0xf]
        %v3651 = vld [vmem:[#allocation2 + $0x4c] sm:$0xf]
        %v3652 = vld [vmem:[#allocation2 + $0x50] sm:$0xf]
        %v3653 = vld [vmem:[#allocation2 + $0x54] sm:$0xf]
        %v3654 = vld [vmem:[#allocation2 + $0x58] sm:$0xf]
        %v3655 = vld [vmem:[#allocation2 + $0x5c] sm:$0xf]
        %v3656 = vld [vmem:[#allocation2 + $0x60] sm:$0xf]
        %v3657 = vld [vmem:[#allocation2 + $0x64] sm:$0xf]
        %v3658 = vld [vmem:[#allocation2 + $0x68] sm:$0xf]
        %v3659 = vld [vmem:[#allocation2 + $0x6c] sm:$0xf]
        %v3660 = vld [vmem:[#allocation2 + $0x70] sm:$0xf]
        %v3661 = vld [vmem:[#allocation2 + $0x74] sm:$0xf]
        %v3662 = vld [vmem:[#allocation2 + $0x78] sm:$0xf]
        %v3663 = vld [vmem:[#allocation2 + $0x7c] sm:$0xf]
        %v3664 = vld [vmem:[#allocation2 + $0x80] sm:$0xf]
        %v3665 = vld [vmem:[#allocation2 + $0x84] sm:$0xf]
        %v3666 = vld [vmem:[#allocation2 + $0x88] sm:$0xf]
        %v3667 = vld [vmem:[#allocation2 + $0x8c] sm:$0xf]
        %v3668 = vld [vmem:[#allocation2 + $0x90] sm:$0xf]
        %v3669 = vld [vmem:[#allocation2 + $0x94] sm:$0x1]
        %s3670 = scalar_lea.vmem %s1, 100
        %v3671 = vld [vmem:[%s3670] sm:$0xf]
        %v3672 = vld [vmem:[%s3670 + $0x4] sm:$0xf]
        %v3673 = vld [vmem:[%s3670 + $0x8] sm:$0xf]
        %v3674 = vld [vmem:[%s3670 + $0xc] sm:$0xf]
        %v3675 = vld [vmem:[%s3670 + $0x10] sm:$0x3]
        %v3711 = vunpack.c.l.b16 %v3635
        %v3712 = vunpack.c.l.b16 %v3636
        %v3713 = vunpack.c.l.b16 %v3637
        %v3714 = vunpack.c.l.b16 %v3638
        %v3715 = vunpack.c.l.b16 %v3639
        %v3716 = vunpack.c.l.b16 %v3640
        %v3717 = vunpack.c.l.b16 %v3641
        %v3718 = vunpack.c.l.b16 %v3642
        %v3719 = vunpack.c.l.b16 %v3643
        %v3720 = vunpack.c.l.b16 %v3644
        %v3721 = vunpack.c.l.b16 %v3645
        %v3722 = vunpack.c.l.b16 %v3646
        %v3723 = vunpack.c.l.b16 %v3647
        %v3724 = vunpack.c.l.b16 %v3648
        %v3725 = vunpack.c.l.b16 %v3649
        %v3726 = vunpack.c.l.b16 %v3650
        %v3727 = vunpack.c.l.b16 %v3651
        %v3728 = vunpack.c.l.b16 %v3652
        %v3729 = vunpack.c.l.b16 %v3653
        %v3730 = vunpack.c.l.b16 %v3654
        %v3731 = vunpack.c.l.b16 %v3655
        %v3732 = vunpack.c.l.b16 %v3656
        %v3733 = vunpack.c.l.b16 %v3657
        %v3734 = vunpack.c.l.b16 %v3658
        %v3735 = vunpack.c.l.b16 %v3659
        %v3736 = vunpack.c.l.b16 %v3660
        %v3737 = vunpack.c.l.b16 %v3661
        %v3738 = vunpack.c.l.b16 %v3662
        %v3739 = vunpack.c.l.b16 %v3663
        %v3740 = vunpack.c.l.b16 %v3664
        %v3741 = vunpack.c.l.b16 %v3665
        %v3742 = vunpack.c.l.b16 %v3666
        %v3743 = vunpack.c.l.b16 %v3667
        %v3744 = vunpack.c.l.b16 %v3668
        %v3745 = vunpack.c.l.b16 %v3669
        %v3746 = vpack.c.b16 %v3712, %v3711
        %v3747 = vpack.c.b16 %v3714, %v3713
        %v3748 = vpack.c.b16 %v3716, %v3715
        %v3749 = vpack.c.b16 %v3718, %v3717
        %v3750 = vpack.c.b16 %v3720, %v3719
        %v3751 = vpack.c.b16 %v3722, %v3721
        %v3752 = vpack.c.b16 %v3724, %v3723
        %v3753 = vpack.c.b16 %v3726, %v3725
        %v3754 = vpack.c.b16 %v3728, %v3727
        %v3755 = vpack.c.b16 %v3730, %v3729
        %v3756 = vpack.c.b16 %v3732, %v3731
        %v3757 = vpack.c.b16 %v3734, %v3733
        %v3758 = vpack.c.b16 %v3736, %v3735
        %v3759 = vpack.c.b16 %v3738, %v3737
        %v3760 = vpack.c.b16 %v3740, %v3739
        %v3761 = vpack.c.b16 %v3742, %v3741
        %v3762 = vpack.c.b16 %v3744, %v3743
        %v3763 = vpack.c.b16 %v3745, %v3745
        %vm3764 = vsmask.f32 7424
        %v3766 = vshrl.u32 %v3746, 16
        %v3768 = vshll.u32 %v3746, 16
        %v3770 = vrot.slane %v3768, 1
        %v3771 = vor.u32 %v3766, %v3770
        %v3773 = vshll.u32 %v3747, 16
        %v3775 = vrot.slane %v3773, 1
        %v3776 = vsel %vm3764, %v3771, %v3775
        %v3777 = vshrl.u32 %v3747, 16
        %v3779 = vor.u32 %v3777, %v3775
        %v3781 = vshll.u32 %v3748, 16
        %v3783 = vrot.slane %v3781, 1
        %v3784 = vsel %vm3764, %v3779, %v3783
        %v3785 = vshrl.u32 %v3748, 16
        %v3787 = vor.u32 %v3785, %v3783
        %v3789 = vshll.u32 %v3749, 16
        %v3791 = vrot.slane %v3789, 1
        %v3792 = vsel %vm3764, %v3787, %v3791
        %v3793 = vshrl.u32 %v3749, 16
        %v3795 = vor.u32 %v3793, %v3791
        %v3797 = vshll.u32 %v3750, 16
        %v3799 = vrot.slane %v3797, 1
        %v3800 = vsel %vm3764, %v3795, %v3799
        %v3801 = vshrl.u32 %v3750, 16
        %v3803 = vor.u32 %v3801, %v3799
        %v3805 = vshll.u32 %v3751, 16
        %v3807 = vrot.slane %v3805, 1
        %v3808 = vsel %vm3764, %v3803, %v3807
        %v3809 = vshrl.u32 %v3751, 16
        %v3811 = vor.u32 %v3809, %v3807
        %v3813 = vshll.u32 %v3752, 16
        %v3815 = vrot.slane %v3813, 1
        %v3816 = vsel %vm3764, %v3811, %v3815
        %v3817 = vshrl.u32 %v3752, 16
        %v3819 = vor.u32 %v3817, %v3815
        %v3821 = vshll.u32 %v3753, 16
        %v3823 = vrot.slane %v3821, 1
        %v3824 = vsel %vm3764, %v3819, %v3823
        %v3825 = vshrl.u32 %v3753, 16
        %v3827 = vor.u32 %v3825, %v3823
        %v3829 = vshll.u32 %v3754, 16
        %v3831 = vrot.slane %v3829, 1
        %v3832 = vsel %vm3764, %v3827, %v3831
        %v3833 = vshrl.u32 %v3754, 16
        %v3835 = vor.u32 %v3833, %v3831
        %v3837 = vshll.u32 %v3755, 16
        %v3839 = vrot.slane %v3837, 1
        %v3840 = vsel %vm3764, %v3835, %v3839
        %v3841 = vshrl.u32 %v3755, 16
        %v3843 = vor.u32 %v3841, %v3839
        %v3845 = vshll.u32 %v3756, 16
        %v3847 = vrot.slane %v3845, 1
        %v3848 = vsel %vm3764, %v3843, %v3847
        %v3849 = vshrl.u32 %v3756, 16
        %v3851 = vor.u32 %v3849, %v3847
        %v3853 = vshll.u32 %v3757, 16
        %v3855 = vrot.slane %v3853, 1
        %v3856 = vsel %vm3764, %v3851, %v3855
        %v3857 = vshrl.u32 %v3757, 16
        %v3859 = vor.u32 %v3857, %v3855
        %v3861 = vshll.u32 %v3758, 16
        %v3863 = vrot.slane %v3861, 1
        %v3864 = vsel %vm3764, %v3859, %v3863
        %v3865 = vshrl.u32 %v3758, 16
        %v3867 = vor.u32 %v3865, %v3863
        %v3869 = vshll.u32 %v3759, 16
        %v3871 = vrot.slane %v3869, 1
        %v3872 = vsel %vm3764, %v3867, %v3871
        %v3873 = vshrl.u32 %v3759, 16
        %v3875 = vor.u32 %v3873, %v3871
        %v3877 = vshll.u32 %v3760, 16
        %v3879 = vrot.slane %v3877, 1
        %v3880 = vsel %vm3764, %v3875, %v3879
        %v3881 = vshrl.u32 %v3760, 16
        %v3883 = vor.u32 %v3881, %v3879
        %v3885 = vshll.u32 %v3761, 16
        %v3887 = vrot.slane %v3885, 1
        %v3888 = vsel %vm3764, %v3883, %v3887
        %v3889 = vshrl.u32 %v3761, 16
        %v3891 = vor.u32 %v3889, %v3887
        %v3893 = vshll.u32 %v3762, 16
        %v3895 = vrot.slane %v3893, 1
        %v3896 = vsel %vm3764, %v3891, %v3895
        %v3897 = vshrl.u32 %v3762, 16
        %v3899 = vor.u32 %v3897, %v3895
        %v3901 = vshll.u32 %v3763, 16
        %v3903 = vrot.slane %v3901, 1
        %v3904 = vsel %vm3764, %v3899, %v3903
        %v3910 = vunpack.c.l.b16 %v3671
        %v3911 = vunpack.c.l.b16 %v3672
        %v3912 = vunpack.c.l.b16 %v3673
        %v3913 = vunpack.c.l.b16 %v3674
        %v3914 = vunpack.c.l.b16 %v3675
        %v3915 = vpack.c.b16 %v3911, %v3910
        %v3916 = vpack.c.b16 %v3913, %v3912
        %v3917 = vpack.c.b16 %v3914, %v3914
        %v3921 = vsel %vm2155, %v3776, 0
        %v3924 = vsel %vm2155, %v3784, 0
        %v3927 = vsel %vm2155, %v3792, 0
        %v3930 = vsel %vm2155, %v3800, 0
        %v3933 = vsel %vm2155, %v3808, 0
        %v3936 = vsel %vm2155, %v3816, 0
        %v3939 = vsel %vm2155, %v3824, 0
        %v3942 = vsel %vm2155, %v3832, 0
        %v3945 = vsel %vm2155, %v3840, 0
        %v3948 = vsel %vm2155, %v3848, 0
        %v3951 = vsel %vm2155, %v3856, 0
        %v3954 = vsel %vm2155, %v3864, 0
        %v3957 = vsel %vm2155, %v3872, 0
        %v3960 = vsel %vm2155, %v3880, 0
        %v3963 = vsel %vm2155, %v3888, 0
        %v3966 = vsel %vm2155, %v3896, 0
        %v3969 = vsel %vm2155, %v3904, 0
        %v3972 = vsel %vm2207, %v3917, 0
        %3974 = vmatpush.bf16.msra.mxu0 0
        %3975 = vmatpush.bf16.msra.mxu0 0
        %3976 = vmatpush.bf16.msra.mxu0 0
        %3977 = vmatpush.bf16.msra.mxu0 0
        %3978 = vmatpush.bf16.msra.mxu0 0
        %3979 = vmatpush.bf16.msra.mxu0 %v3972
        %3980 = vmatpush.bf16.msra.mxu0 %v3916
        %3981 = vmatpush.bf16.msra.mxu0 %v3915
        %3982 = vmatmul.bf16.gmra.mxu0 %v3921
        %v3983 = vpop.f32.mrf.mxu0
        %v3984 = vadd.f32 0.0, %v3983
        %v3985 = vpop.f32.mrf.mxu0
        %v3986 = vadd.f32 0.0, %v3985
        %3987 = vmatmul.bf16.gmra.mxu0 %v3924
        %v3988 = vpop.f32.mrf.mxu0
        %v3989 = vadd.f32 0.0, %v3988
        %v3990 = vpop.f32.mrf.mxu0
        %v3991 = vadd.f32 0.0, %v3990
        %3992 = vmatmul.bf16.gmra.mxu0 %v3927
        %v3993 = vpop.f32.mrf.mxu0
        %v3994 = vadd.f32 0.0, %v3993
        %v3995 = vpop.f32.mrf.mxu0
        %v3996 = vadd.f32 0.0, %v3995
        %3997 = vmatmul.bf16.gmra.mxu0 %v3930
        %v3998 = vpop.f32.mrf.mxu0
        %v3999 = vadd.f32 0.0, %v3998
        %v4000 = vpop.f32.mrf.mxu0
        %v4001 = vadd.f32 0.0, %v4000
        %4002 = vmatmul.bf16.gmra.mxu0 %v3933
        %v4003 = vpop.f32.mrf.mxu0
        %v4004 = vadd.f32 0.0, %v4003
        %v4005 = vpop.f32.mrf.mxu0
        %v4006 = vadd.f32 0.0, %v4005
        %4007 = vmatmul.bf16.gmra.mxu0 %v3936
        %v4008 = vpop.f32.mrf.mxu0
        %v4009 = vadd.f32 0.0, %v4008
        %v4010 = vpop.f32.mrf.mxu0
        %v4011 = vadd.f32 0.0, %v4010
        %4012 = vmatmul.bf16.gmra.mxu0 %v3939
        %v4013 = vpop.f32.mrf.mxu0
        %v4014 = vadd.f32 0.0, %v4013
        %v4015 = vpop.f32.mrf.mxu0
        %v4016 = vadd.f32 0.0, %v4015
        %4017 = vmatmul.bf16.gmra.mxu0 %v3942
        %v4018 = vpop.f32.mrf.mxu0
        %v4019 = vadd.f32 0.0, %v4018
        %v4020 = vpop.f32.mrf.mxu0
        %v4021 = vadd.f32 0.0, %v4020
        %4022 = vmatmul.bf16.gmra.mxu0 %v3945
        %v4023 = vpop.f32.mrf.mxu0
        %v4024 = vadd.f32 0.0, %v4023
        %v4025 = vpop.f32.mrf.mxu0
        %v4026 = vadd.f32 0.0, %v4025
        %4027 = vmatmul.bf16.gmra.mxu0 %v3948
        %v4028 = vpop.f32.mrf.mxu0
        %v4029 = vadd.f32 0.0, %v4028
        %v4030 = vpop.f32.mrf.mxu0
        %v4031 = vadd.f32 0.0, %v4030
        %4032 = vmatmul.bf16.gmra.mxu0 %v3951
        %v4033 = vpop.f32.mrf.mxu0
        %v4034 = vadd.f32 0.0, %v4033
        %v4035 = vpop.f32.mrf.mxu0
        %v4036 = vadd.f32 0.0, %v4035
        %4037 = vmatmul.bf16.gmra.mxu0 %v3954
        %v4038 = vpop.f32.mrf.mxu0
        %v4039 = vadd.f32 0.0, %v4038
        %v4040 = vpop.f32.mrf.mxu0
        %v4041 = vadd.f32 0.0, %v4040
        %4042 = vmatmul.bf16.gmra.mxu0 %v3957
        %v4043 = vpop.f32.mrf.mxu0
        %v4044 = vadd.f32 0.0, %v4043
        %v4045 = vpop.f32.mrf.mxu0
        %v4046 = vadd.f32 0.0, %v4045
        %4047 = vmatmul.bf16.gmra.mxu0 %v3960
        %v4048 = vpop.f32.mrf.mxu0
        %v4049 = vadd.f32 0.0, %v4048
        %v4050 = vpop.f32.mrf.mxu0
        %v4051 = vadd.f32 0.0, %v4050
        %4052 = vmatmul.bf16.gmra.mxu0 %v3963
        %v4053 = vpop.f32.mrf.mxu0
        %v4054 = vadd.f32 0.0, %v4053
        %v4055 = vpop.f32.mrf.mxu0
        %v4056 = vadd.f32 0.0, %v4055
        %4057 = vmatmul.bf16.gmra.mxu0 %v3966
        %v4058 = vpop.f32.mrf.mxu0
        %v4059 = vadd.f32 0.0, %v4058
        %v4060 = vpop.f32.mrf.mxu0
        %v4061 = vadd.f32 0.0, %v4060
        %4062 = vmatmul.bf16.gmra.mxu0 %v3969
        %v4063 = vpop.f32.mrf.mxu0
        %v4064 = vadd.f32 0.0, %v4063
        %v4065 = vpop.f32.mrf.mxu0
        %v4066 = vadd.f32 0.0, %v4065
        %4067 = vdwg.mxu0
        %v4068 = vadd.f32 %v3601, %v3984
        %v4069 = vadd.f32 %v3602, %v3986
        %v4070 = vadd.f32 %v3603, %v3989
        %v4071 = vadd.f32 %v3604, %v3991
        %v4072 = vadd.f32 %v3605, %v3994
        %v4073 = vadd.f32 %v3606, %v3996
        %v4074 = vadd.f32 %v3607, %v3999
        %v4075 = vadd.f32 %v3608, %v4001
        %v4076 = vadd.f32 %v3609, %v4004
        %v4077 = vadd.f32 %v3610, %v4006
        %v4078 = vadd.f32 %v3611, %v4009
        %v4079 = vadd.f32 %v3612, %v4011
        %v4080 = vadd.f32 %v3613, %v4014
        %v4081 = vadd.f32 %v3614, %v4016
        %v4082 = vadd.f32 %v3615, %v4019
        %v4083 = vadd.f32 %v3616, %v4021
        %v4084 = vadd.f32 %v3617, %v4024
        %v4085 = vadd.f32 %v3618, %v4026
        %v4086 = vadd.f32 %v3619, %v4029
        %v4087 = vadd.f32 %v3620, %v4031
        %v4088 = vadd.f32 %v3621, %v4034
        %v4089 = vadd.f32 %v3622, %v4036
        %v4090 = vadd.f32 %v3623, %v4039
        %v4091 = vadd.f32 %v3624, %v4041
        %v4092 = vadd.f32 %v3625, %v4044
        %v4093 = vadd.f32 %v3626, %v4046
        %v4094 = vadd.f32 %v3627, %v4049
        %v4095 = vadd.f32 %v3628, %v4051
        %v4096 = vadd.f32 %v3629, %v4054
        %v4097 = vadd.f32 %v3630, %v4056
        %v4098 = vadd.f32 %v3631, %v4059
        %v4099 = vadd.f32 %v3632, %v4061
        %v4100 = vadd.f32 %v3633, %v4064
        %v4101 = vadd.f32 %v3634, %v4066
        %v4102 = vld [vmem:[#allocation2 + $0x14] sm:$0xf]
        %v4103 = vld [vmem:[#allocation2 + $0x18] sm:$0xf]
        %v4104 = vld [vmem:[#allocation2 + $0x1c] sm:$0xf]
        %v4105 = vld [vmem:[#allocation2 + $0x20] sm:$0xf]
        %v4106 = vld [vmem:[#allocation2 + $0x24] sm:$0xf]
        %v4107 = vld [vmem:[#allocation2 + $0x28] sm:$0xf]
        %v4108 = vld [vmem:[#allocation2 + $0x2c] sm:$0xf]
        %v4109 = vld [vmem:[#allocation2 + $0x30] sm:$0xf]
        %v4110 = vld [vmem:[#allocation2 + $0x34] sm:$0xf]
        %v4111 = vld [vmem:[#allocation2 + $0x38] sm:$0xf]
        %v4112 = vld [vmem:[#allocation2 + $0x3c] sm:$0xf]
        %v4113 = vld [vmem:[#allocation2 + $0x40] sm:$0xf]
        %v4114 = vld [vmem:[#allocation2 + $0x44] sm:$0xf]
        %v4115 = vld [vmem:[#allocation2 + $0x48] sm:$0xf]
        %v4116 = vld [vmem:[#allocation2 + $0x4c] sm:$0xf]
        %v4117 = vld [vmem:[#allocation2 + $0x50] sm:$0xf]
        %v4118 = vld [vmem:[#allocation2 + $0x54] sm:$0xf]
        %v4119 = vld [vmem:[#allocation2 + $0x58] sm:$0xf]
        %v4120 = vld [vmem:[#allocation2 + $0x5c] sm:$0xf]
        %v4121 = vld [vmem:[#allocation2 + $0x60] sm:$0xf]
        %v4122 = vld [vmem:[#allocation2 + $0x64] sm:$0xf]
        %v4123 = vld [vmem:[#allocation2 + $0x68] sm:$0xf]
        %v4124 = vld [vmem:[#allocation2 + $0x6c] sm:$0xf]
        %v4125 = vld [vmem:[#allocation2 + $0x70] sm:$0xf]
        %v4126 = vld [vmem:[#allocation2 + $0x74] sm:$0xf]
        %v4127 = vld [vmem:[#allocation2 + $0x78] sm:$0xf]
        %v4128 = vld [vmem:[#allocation2 + $0x7c] sm:$0xf]
        %v4129 = vld [vmem:[#allocation2 + $0x80] sm:$0xf]
        %v4130 = vld [vmem:[#allocation2 + $0x84] sm:$0xf]
        %v4131 = vld [vmem:[#allocation2 + $0x88] sm:$0xf]
        %v4132 = vld [vmem:[#allocation2 + $0x8c] sm:$0xf]
        %v4133 = vld [vmem:[#allocation2 + $0x90] sm:$0xf]
        %v4134 = vld [vmem:[#allocation2 + $0x94] sm:$0xf]
        %v4135 = vld [vmem:[#allocation2 + $0x98] sm:$0xf]
        %s4136 = scalar_lea.vmem %s1, 120
        %v4137 = vld [vmem:[%s4136] sm:$0xf]
        %v4138 = vld [vmem:[%s4136 + $0x4] sm:$0xf]
        %v4139 = vld [vmem:[%s4136 + $0x8] sm:$0xf]
        %v4140 = vld [vmem:[%s4136 + $0xc] sm:$0xf]
        %v4141 = vld [vmem:[%s4136 + $0x10] sm:$0x3]
        %v4176 = vunpack.c.l.b16 %v4102
        %v4177 = vunpack.c.l.b16 %v4103
        %v4178 = vunpack.c.l.b16 %v4104
        %v4179 = vunpack.c.l.b16 %v4105
        %v4180 = vunpack.c.l.b16 %v4106
        %v4181 = vunpack.c.l.b16 %v4107
        %v4182 = vunpack.c.l.b16 %v4108
        %v4183 = vunpack.c.l.b16 %v4109
        %v4184 = vunpack.c.l.b16 %v4110
        %v4185 = vunpack.c.l.b16 %v4111
        %v4186 = vunpack.c.l.b16 %v4112
        %v4187 = vunpack.c.l.b16 %v4113
        %v4188 = vunpack.c.l.b16 %v4114
        %v4189 = vunpack.c.l.b16 %v4115
        %v4190 = vunpack.c.l.b16 %v4116
        %v4191 = vunpack.c.l.b16 %v4117
        %v4192 = vunpack.c.l.b16 %v4118
        %v4193 = vunpack.c.l.b16 %v4119
        %v4194 = vunpack.c.l.b16 %v4120
        %v4195 = vunpack.c.l.b16 %v4121
        %v4196 = vunpack.c.l.b16 %v4122
        %v4197 = vunpack.c.l.b16 %v4123
        %v4198 = vunpack.c.l.b16 %v4124
        %v4199 = vunpack.c.l.b16 %v4125
        %v4200 = vunpack.c.l.b16 %v4126
        %v4201 = vunpack.c.l.b16 %v4127
        %v4202 = vunpack.c.l.b16 %v4128
        %v4203 = vunpack.c.l.b16 %v4129
        %v4204 = vunpack.c.l.b16 %v4130
        %v4205 = vunpack.c.l.b16 %v4131
        %v4206 = vunpack.c.l.b16 %v4132
        %v4207 = vunpack.c.l.b16 %v4133
        %v4208 = vunpack.c.l.b16 %v4134
        %v4209 = vunpack.c.l.b16 %v4135
        %v4210 = vpack.c.b16 %v4177, %v4176
        %v4211 = vpack.c.b16 %v4179, %v4178
        %v4212 = vpack.c.b16 %v4181, %v4180
        %v4213 = vpack.c.b16 %v4183, %v4182
        %v4214 = vpack.c.b16 %v4185, %v4184
        %v4215 = vpack.c.b16 %v4187, %v4186
        %v4216 = vpack.c.b16 %v4189, %v4188
        %v4217 = vpack.c.b16 %v4191, %v4190
        %v4218 = vpack.c.b16 %v4193, %v4192
        %v4219 = vpack.c.b16 %v4195, %v4194
        %v4220 = vpack.c.b16 %v4197, %v4196
        %v4221 = vpack.c.b16 %v4199, %v4198
        %v4222 = vpack.c.b16 %v4201, %v4200
        %v4223 = vpack.c.b16 %v4203, %v4202
        %v4224 = vpack.c.b16 %v4205, %v4204
        %v4225 = vpack.c.b16 %v4207, %v4206
        %v4226 = vpack.c.b16 %v4209, %v4208
        %v4232 = vunpack.c.l.b16 %v4137
        %v4233 = vunpack.c.l.b16 %v4138
        %v4234 = vunpack.c.l.b16 %v4139
        %v4235 = vunpack.c.l.b16 %v4140
        %v4236 = vunpack.c.l.b16 %v4141
        %v4237 = vpack.c.b16 %v4233, %v4232
        %v4238 = vpack.c.b16 %v4235, %v4234
        %v4239 = vpack.c.b16 %v4236, %v4236
        %v4243 = vsel %vm2155, %v4210, 0
        %v4246 = vsel %vm2155, %v4211, 0
        %v4249 = vsel %vm2155, %v4212, 0
        %v4252 = vsel %vm2155, %v4213, 0
        %v4255 = vsel %vm2155, %v4214, 0
        %v4258 = vsel %vm2155, %v4215, 0
        %v4261 = vsel %vm2155, %v4216, 0
        %v4264 = vsel %vm2155, %v4217, 0
        %v4267 = vsel %vm2155, %v4218, 0
        %v4270 = vsel %vm2155, %v4219, 0
        %v4273 = vsel %vm2155, %v4220, 0
        %v4276 = vsel %vm2155, %v4221, 0
        %v4279 = vsel %vm2155, %v4222, 0
        %v4282 = vsel %vm2155, %v4223, 0
        %v4285 = vsel %vm2155, %v4224, 0
        %v4288 = vsel %vm2155, %v4225, 0
        %v4291 = vsel %vm2155, %v4226, 0
        %v4294 = vsel %vm2207, %v4239, 0
        %4296 = vmatpush.bf16.msra.mxu0 0
        %4297 = vmatpush.bf16.msra.mxu0 0
        %4298 = vmatpush.bf16.msra.mxu0 0
        %4299 = vmatpush.bf16.msra.mxu0 0
        %4300 = vmatpush.bf16.msra.mxu0 0
        %4301 = vmatpush.bf16.msra.mxu0 %v4294
        %4302 = vmatpush.bf16.msra.mxu0 %v4238
        %4303 = vmatpush.bf16.msra.mxu0 %v4237
        %4304 = vmatmul.bf16.gmra.mxu0 %v4243
        %v4305 = vpop.f32.mrf.mxu0
        %v4306 = vadd.f32 0.0, %v4305
        %v4307 = vpop.f32.mrf.mxu0
        %v4308 = vadd.f32 0.0, %v4307
        %4309 = vmatmul.bf16.gmra.mxu0 %v4246
        %v4310 = vpop.f32.mrf.mxu0
        %v4311 = vadd.f32 0.0, %v4310
        %v4312 = vpop.f32.mrf.mxu0
        %v4313 = vadd.f32 0.0, %v4312
        %4314 = vmatmul.bf16.gmra.mxu0 %v4249
        %v4315 = vpop.f32.mrf.mxu0
        %v4316 = vadd.f32 0.0, %v4315
        %v4317 = vpop.f32.mrf.mxu0
        %v4318 = vadd.f32 0.0, %v4317
        %4319 = vmatmul.bf16.gmra.mxu0 %v4252
        %v4320 = vpop.f32.mrf.mxu0
        %v4321 = vadd.f32 0.0, %v4320
        %v4322 = vpop.f32.mrf.mxu0
        %v4323 = vadd.f32 0.0, %v4322
        %4324 = vmatmul.bf16.gmra.mxu0 %v4255
        %v4325 = vpop.f32.mrf.mxu0
        %v4326 = vadd.f32 0.0, %v4325
        %v4327 = vpop.f32.mrf.mxu0
        %v4328 = vadd.f32 0.0, %v4327
        %4329 = vmatmul.bf16.gmra.mxu0 %v4258
        %v4330 = vpop.f32.mrf.mxu0
        %v4331 = vadd.f32 0.0, %v4330
        %v4332 = vpop.f32.mrf.mxu0
        %v4333 = vadd.f32 0.0, %v4332
        %4334 = vmatmul.bf16.gmra.mxu0 %v4261
        %v4335 = vpop.f32.mrf.mxu0
        %v4336 = vadd.f32 0.0, %v4335
        %v4337 = vpop.f32.mrf.mxu0
        %v4338 = vadd.f32 0.0, %v4337
        %4339 = vmatmul.bf16.gmra.mxu0 %v4264
        %v4340 = vpop.f32.mrf.mxu0
        %v4341 = vadd.f32 0.0, %v4340
        %v4342 = vpop.f32.mrf.mxu0
        %v4343 = vadd.f32 0.0, %v4342
        %4344 = vmatmul.bf16.gmra.mxu0 %v4267
        %v4345 = vpop.f32.mrf.mxu0
        %v4346 = vadd.f32 0.0, %v4345
        %v4347 = vpop.f32.mrf.mxu0
        %v4348 = vadd.f32 0.0, %v4347
        %4349 = vmatmul.bf16.gmra.mxu0 %v4270
        %v4350 = vpop.f32.mrf.mxu0
        %v4351 = vadd.f32 0.0, %v4350
        %v4352 = vpop.f32.mrf.mxu0
        %v4353 = vadd.f32 0.0, %v4352
        %4354 = vmatmul.bf16.gmra.mxu0 %v4273
        %v4355 = vpop.f32.mrf.mxu0
        %v4356 = vadd.f32 0.0, %v4355
        %v4357 = vpop.f32.mrf.mxu0
        %v4358 = vadd.f32 0.0, %v4357
        %4359 = vmatmul.bf16.gmra.mxu0 %v4276
        %v4360 = vpop.f32.mrf.mxu0
        %v4361 = vadd.f32 0.0, %v4360
        %v4362 = vpop.f32.mrf.mxu0
        %v4363 = vadd.f32 0.0, %v4362
        %4364 = vmatmul.bf16.gmra.mxu0 %v4279
        %v4365 = vpop.f32.mrf.mxu0
        %v4366 = vadd.f32 0.0, %v4365
        %v4367 = vpop.f32.mrf.mxu0
        %v4368 = vadd.f32 0.0, %v4367
        %4369 = vmatmul.bf16.gmra.mxu0 %v4282
        %v4370 = vpop.f32.mrf.mxu0
        %v4371 = vadd.f32 0.0, %v4370
        %v4372 = vpop.f32.mrf.mxu0
        %v4373 = vadd.f32 0.0, %v4372
        %4374 = vmatmul.bf16.gmra.mxu0 %v4285
        %v4375 = vpop.f32.mrf.mxu0
        %v4376 = vadd.f32 0.0, %v4375
        %v4377 = vpop.f32.mrf.mxu0
        %v4378 = vadd.f32 0.0, %v4377
        %4379 = vmatmul.bf16.gmra.mxu0 %v4288
        %v4380 = vpop.f32.mrf.mxu0
        %v4381 = vadd.f32 0.0, %v4380
        %v4382 = vpop.f32.mrf.mxu0
        %v4383 = vadd.f32 0.0, %v4382
        %4384 = vmatmul.bf16.gmra.mxu0 %v4291
        %v4385 = vpop.f32.mrf.mxu0
        %v4386 = vadd.f32 0.0, %v4385
        %v4387 = vpop.f32.mrf.mxu0
        %v4388 = vadd.f32 0.0, %v4387
        %4389 = vdwg.mxu0
        %v4390 = vadd.f32 %v4068, %v4306
        %v4391 = vadd.f32 %v4069, %v4308
        %v4392 = vadd.f32 %v4070, %v4311
        %v4393 = vadd.f32 %v4071, %v4313
        %v4394 = vadd.f32 %v4072, %v4316
        %v4395 = vadd.f32 %v4073, %v4318
        %v4396 = vadd.f32 %v4074, %v4321
        %v4397 = vadd.f32 %v4075, %v4323
        %v4398 = vadd.f32 %v4076, %v4326
        %v4399 = vadd.f32 %v4077, %v4328
        %v4400 = vadd.f32 %v4078, %v4331
        %v4401 = vadd.f32 %v4079, %v4333
        %v4402 = vadd.f32 %v4080, %v4336
        %v4403 = vadd.f32 %v4081, %v4338
        %v4404 = vadd.f32 %v4082, %v4341
        %v4405 = vadd.f32 %v4083, %v4343
        %v4406 = vadd.f32 %v4084, %v4346
        %v4407 = vadd.f32 %v4085, %v4348
        %v4408 = vadd.f32 %v4086, %v4351
        %v4409 = vadd.f32 %v4087, %v4353
        %v4410 = vadd.f32 %v4088, %v4356
        %v4411 = vadd.f32 %v4089, %v4358
        %v4412 = vadd.f32 %v4090, %v4361
        %v4413 = vadd.f32 %v4091, %v4363
        %v4414 = vadd.f32 %v4092, %v4366
        %v4415 = vadd.f32 %v4093, %v4368
        %v4416 = vadd.f32 %v4094, %v4371
        %v4417 = vadd.f32 %v4095, %v4373
        %v4418 = vadd.f32 %v4096, %v4376
        %v4419 = vadd.f32 %v4097, %v4378
        %v4420 = vadd.f32 %v4098, %v4381
        %v4421 = vadd.f32 %v4099, %v4383
        %v4422 = vadd.f32 %v4100, %v4386
        %v4423 = vadd.f32 %v4101, %v4388
        %v4424 = vld [vmem:[#allocation2 + $0x14] sm:$0xf]
        %v4425 = vld [vmem:[#allocation2 + $0x18] sm:$0xf]
        %v4426 = vld [vmem:[#allocation2 + $0x1c] sm:$0xf]
        %v4427 = vld [vmem:[#allocation2 + $0x20] sm:$0xf]
        %v4428 = vld [vmem:[#allocation2 + $0x24] sm:$0xf]
        %v4429 = vld [vmem:[#allocation2 + $0x28] sm:$0xf]
        %v4430 = vld [vmem:[#allocation2 + $0x2c] sm:$0xf]
        %v4431 = vld [vmem:[#allocation2 + $0x30] sm:$0xf]
        %v4432 = vld [vmem:[#allocation2 + $0x34] sm:$0xf]
        %v4433 = vld [vmem:[#allocation2 + $0x38] sm:$0xf]
        %v4434 = vld [vmem:[#allocation2 + $0x3c] sm:$0xf]
        %v4435 = vld [vmem:[#allocation2 + $0x40] sm:$0xf]
        %v4436 = vld [vmem:[#allocation2 + $0x44] sm:$0xf]
        %v4437 = vld [vmem:[#allocation2 + $0x48] sm:$0xf]
        %v4438 = vld [vmem:[#allocation2 + $0x4c] sm:$0xf]
        %v4439 = vld [vmem:[#allocation2 + $0x50] sm:$0xf]
        %v4440 = vld [vmem:[#allocation2 + $0x54] sm:$0xf]
        %v4441 = vld [vmem:[#allocation2 + $0x58] sm:$0xf]
        %v4442 = vld [vmem:[#allocation2 + $0x5c] sm:$0xf]
        %v4443 = vld [vmem:[#allocation2 + $0x60] sm:$0xf]
        %v4444 = vld [vmem:[#allocation2 + $0x64] sm:$0xf]
        %v4445 = vld [vmem:[#allocation2 + $0x68] sm:$0xf]
        %v4446 = vld [vmem:[#allocation2 + $0x6c] sm:$0xf]
        %v4447 = vld [vmem:[#allocation2 + $0x70] sm:$0xf]
        %v4448 = vld [vmem:[#allocation2 + $0x74] sm:$0xf]
        %v4449 = vld [vmem:[#allocation2 + $0x78] sm:$0xf]
        %v4450 = vld [vmem:[#allocation2 + $0x7c] sm:$0xf]
        %v4451 = vld [vmem:[#allocation2 + $0x80] sm:$0xf]
        %v4452 = vld [vmem:[#allocation2 + $0x84] sm:$0xf]
        %v4453 = vld [vmem:[#allocation2 + $0x88] sm:$0xf]
        %v4454 = vld [vmem:[#allocation2 + $0x8c] sm:$0xf]
        %v4455 = vld [vmem:[#allocation2 + $0x90] sm:$0xf]
        %v4456 = vld [vmem:[#allocation2 + $0x94] sm:$0xf]
        %v4457 = vld [vmem:[#allocation2 + $0x98] sm:$0xf]
        %v4458 = vld [vmem:[#allocation2 + $0x9c] sm:$0x1]
        %s4459 = scalar_lea.vmem %s1, 140
        %v4460 = vld [vmem:[%s4459] sm:$0xf]
        %v4461 = vld [vmem:[%s4459 + $0x4] sm:$0xf]
        %v4462 = vld [vmem:[%s4459 + $0x8] sm:$0xf]
        %v4463 = vld [vmem:[%s4459 + $0xc] sm:$0xf]
        %v4464 = vld [vmem:[%s4459 + $0x10] sm:$0x3]
        %v4500 = vunpack.c.l.b16 %v4424
        %v4501 = vunpack.c.l.b16 %v4425
        %v4502 = vunpack.c.l.b16 %v4426
        %v4503 = vunpack.c.l.b16 %v4427
        %v4504 = vunpack.c.l.b16 %v4428
        %v4505 = vunpack.c.l.b16 %v4429
        %v4506 = vunpack.c.l.b16 %v4430
        %v4507 = vunpack.c.l.b16 %v4431
        %v4508 = vunpack.c.l.b16 %v4432
        %v4509 = vunpack.c.l.b16 %v4433
        %v4510 = vunpack.c.l.b16 %v4434
        %v4511 = vunpack.c.l.b16 %v4435
        %v4512 = vunpack.c.l.b16 %v4436
        %v4513 = vunpack.c.l.b16 %v4437
        %v4514 = vunpack.c.l.b16 %v4438
        %v4515 = vunpack.c.l.b16 %v4439
        %v4516 = vunpack.c.l.b16 %v4440
        %v4517 = vunpack.c.l.b16 %v4441
        %v4518 = vunpack.c.l.b16 %v4442
        %v4519 = vunpack.c.l.b16 %v4443
        %v4520 = vunpack.c.l.b16 %v4444
        %v4521 = vunpack.c.l.b16 %v4445
        %v4522 = vunpack.c.l.b16 %v4446
        %v4523 = vunpack.c.l.b16 %v4447
        %v4524 = vunpack.c.l.b16 %v4448
        %v4525 = vunpack.c.l.b16 %v4449
        %v4526 = vunpack.c.l.b16 %v4450
        %v4527 = vunpack.c.l.b16 %v4451
        %v4528 = vunpack.c.l.b16 %v4452
        %v4529 = vunpack.c.l.b16 %v4453
        %v4530 = vunpack.c.l.b16 %v4454
        %v4531 = vunpack.c.l.b16 %v4455
        %v4532 = vunpack.c.l.b16 %v4456
        %v4533 = vunpack.c.l.b16 %v4457
        %v4534 = vunpack.c.l.b16 %v4458
        %v4535 = vpack.c.b16 %v4501, %v4500
        %v4536 = vpack.c.b16 %v4503, %v4502
        %v4537 = vpack.c.b16 %v4505, %v4504
        %v4538 = vpack.c.b16 %v4507, %v4506
        %v4539 = vpack.c.b16 %v4509, %v4508
        %v4540 = vpack.c.b16 %v4511, %v4510
        %v4541 = vpack.c.b16 %v4513, %v4512
        %v4542 = vpack.c.b16 %v4515, %v4514
        %v4543 = vpack.c.b16 %v4517, %v4516
        %v4544 = vpack.c.b16 %v4519, %v4518
        %v4545 = vpack.c.b16 %v4521, %v4520
        %v4546 = vpack.c.b16 %v4523, %v4522
        %v4547 = vpack.c.b16 %v4525, %v4524
        %v4548 = vpack.c.b16 %v4527, %v4526
        %v4549 = vpack.c.b16 %v4529, %v4528
        %v4550 = vpack.c.b16 %v4531, %v4530
        %v4551 = vpack.c.b16 %v4533, %v4532
        %v4552 = vpack.c.b16 %v4534, %v4534
        %v4554 = vshrl.u32 %v4535, 16
        %v4556 = vshll.u32 %v4535, 16
        %v4558 = vrot.slane %v4556, 1
        %v4559 = vor.u32 %v4554, %v4558
        %v4561 = vshll.u32 %v4536, 16
        %v4563 = vrot.slane %v4561, 1
        %v4564 = vsel %vm3764, %v4559, %v4563
        %v4565 = vshrl.u32 %v4536, 16
        %v4567 = vor.u32 %v4565, %v4563
        %v4569 = vshll.u32 %v4537, 16
        %v4571 = vrot.slane %v4569, 1
        %v4572 = vsel %vm3764, %v4567, %v4571
        %v4573 = vshrl.u32 %v4537, 16
        %v4575 = vor.u32 %v4573, %v4571
        %v4577 = vshll.u32 %v4538, 16
        %v4579 = vrot.slane %v4577, 1
        %v4580 = vsel %vm3764, %v4575, %v4579
        %v4581 = vshrl.u32 %v4538, 16
        %v4583 = vor.u32 %v4581, %v4579
        %v4585 = vshll.u32 %v4539, 16
        %v4587 = vrot.slane %v4585, 1
        %v4588 = vsel %vm3764, %v4583, %v4587
        %v4589 = vshrl.u32 %v4539, 16
        %v4591 = vor.u32 %v4589, %v4587
        %v4593 = vshll.u32 %v4540, 16
        %v4595 = vrot.slane %v4593, 1
        %v4596 = vsel %vm3764, %v4591, %v4595
        %v4597 = vshrl.u32 %v4540, 16
        %v4599 = vor.u32 %v4597, %v4595
        %v4601 = vshll.u32 %v4541, 16
        %v4603 = vrot.slane %v4601, 1
        %v4604 = vsel %vm3764, %v4599, %v4603
        %v4605 = vshrl.u32 %v4541, 16
        %v4607 = vor.u32 %v4605, %v4603
        %v4609 = vshll.u32 %v4542, 16
        %v4611 = vrot.slane %v4609, 1
        %v4612 = vsel %vm3764, %v4607, %v4611
        %v4613 = vshrl.u32 %v4542, 16
        %v4615 = vor.u32 %v4613, %v4611
        %v4617 = vshll.u32 %v4543, 16
        %v4619 = vrot.slane %v4617, 1
        %v4620 = vsel %vm3764, %v4615, %v4619
        %v4621 = vshrl.u32 %v4543, 16
        %v4623 = vor.u32 %v4621, %v4619
        %v4625 = vshll.u32 %v4544, 16
        %v4627 = vrot.slane %v4625, 1
        %v4628 = vsel %vm3764, %v4623, %v4627
        %v4629 = vshrl.u32 %v4544, 16
        %v4631 = vor.u32 %v4629, %v4627
        %v4633 = vshll.u32 %v4545, 16
        %v4635 = vrot.slane %v4633, 1
        %v4636 = vsel %vm3764, %v4631, %v4635
        %v4637 = vshrl.u32 %v4545, 16
        %v4639 = vor.u32 %v4637, %v4635
        %v4641 = vshll.u32 %v4546, 16
        %v4643 = vrot.slane %v4641, 1
        %v4644 = vsel %vm3764, %v4639, %v4643
        %v4645 = vshrl.u32 %v4546, 16
        %v4647 = vor.u32 %v4645, %v4643
        %v4649 = vshll.u32 %v4547, 16
        %v4651 = vrot.slane %v4649, 1
        %v4652 = vsel %vm3764, %v4647, %v4651
        %v4653 = vshrl.u32 %v4547, 16
        %v4655 = vor.u32 %v4653, %v4651
        %v4657 = vshll.u32 %v4548, 16
        %v4659 = vrot.slane %v4657, 1
        %v4660 = vsel %vm3764, %v4655, %v4659
        %v4661 = vshrl.u32 %v4548, 16
        %v4663 = vor.u32 %v4661, %v4659
        %v4665 = vshll.u32 %v4549, 16
        %v4667 = vrot.slane %v4665, 1
        %v4668 = vsel %vm3764, %v4663, %v4667
        %v4669 = vshrl.u32 %v4549, 16
        %v4671 = vor.u32 %v4669, %v4667
        %v4673 = vshll.u32 %v4550, 16
        %v4675 = vrot.slane %v4673, 1
        %v4676 = vsel %vm3764, %v4671, %v4675
        %v4677 = vshrl.u32 %v4550, 16
        %v4679 = vor.u32 %v4677, %v4675
        %v4681 = vshll.u32 %v4551, 16
        %v4683 = vrot.slane %v4681, 1
        %v4684 = vsel %vm3764, %v4679, %v4683
        %v4685 = vshrl.u32 %v4551, 16
        %v4687 = vor.u32 %v4685, %v4683
        %v4689 = vshll.u32 %v4552, 16
        %v4691 = vrot.slane %v4689, 1
        %v4692 = vsel %vm3764, %v4687, %v4691
        %v4698 = vunpack.c.l.b16 %v4460
        %v4699 = vunpack.c.l.b16 %v4461
        %v4700 = vunpack.c.l.b16 %v4462
        %v4701 = vunpack.c.l.b16 %v4463
        %v4702 = vunpack.c.l.b16 %v4464
        %v4703 = vpack.c.b16 %v4699, %v4698
        %v4704 = vpack.c.b16 %v4701, %v4700
        %v4705 = vpack.c.b16 %v4702, %v4702
        %v4709 = vsel %vm2155, %v4564, 0
        %v4712 = vsel %vm2155, %v4572, 0
        %v4715 = vsel %vm2155, %v4580, 0
        %v4718 = vsel %vm2155, %v4588, 0
        %v4721 = vsel %vm2155, %v4596, 0
        %v4724 = vsel %vm2155, %v4604, 0
        %v4727 = vsel %vm2155, %v4612, 0
        %v4730 = vsel %vm2155, %v4620, 0
        %v4733 = vsel %vm2155, %v4628, 0
        %v4736 = vsel %vm2155, %v4636, 0
        %v4739 = vsel %vm2155, %v4644, 0
        %v4742 = vsel %vm2155, %v4652, 0
        %v4745 = vsel %vm2155, %v4660, 0
        %v4748 = vsel %vm2155, %v4668, 0
        %v4751 = vsel %vm2155, %v4676, 0
        %v4754 = vsel %vm2155, %v4684, 0
        %v4757 = vsel %vm2155, %v4692, 0
        %v4760 = vsel %vm2207, %v4705, 0
        %4762 = vmatpush.bf16.msra.mxu0 0
        %4763 = vmatpush.bf16.msra.mxu0 0
        %4764 = vmatpush.bf16.msra.mxu0 0
        %4765 = vmatpush.bf16.msra.mxu0 0
        %4766 = vmatpush.bf16.msra.mxu0 0
        %4767 = vmatpush.bf16.msra.mxu0 %v4760
        %4768 = vmatpush.bf16.msra.mxu0 %v4704
        %4769 = vmatpush.bf16.msra.mxu0 %v4703
        %4770 = vmatmul.bf16.gmra.mxu0 %v4709
        %v4771 = vpop.f32.mrf.mxu0
        %v4772 = vadd.f32 0.0, %v4771
        %v4773 = vpop.f32.mrf.mxu0
        %v4774 = vadd.f32 0.0, %v4773
        %4775 = vmatmul.bf16.gmra.mxu0 %v4712
        %v4776 = vpop.f32.mrf.mxu0
        %v4777 = vadd.f32 0.0, %v4776
        %v4778 = vpop.f32.mrf.mxu0
        %v4779 = vadd.f32 0.0, %v4778
        %4780 = vmatmul.bf16.gmra.mxu0 %v4715
        %v4781 = vpop.f32.mrf.mxu0
        %v4782 = vadd.f32 0.0, %v4781
        %v4783 = vpop.f32.mrf.mxu0
        %v4784 = vadd.f32 0.0, %v4783
        %4785 = vmatmul.bf16.gmra.mxu0 %v4718
        %v4786 = vpop.f32.mrf.mxu0
        %v4787 = vadd.f32 0.0, %v4786
        %v4788 = vpop.f32.mrf.mxu0
        %v4789 = vadd.f32 0.0, %v4788
        %4790 = vmatmul.bf16.gmra.mxu0 %v4721
        %v4791 = vpop.f32.mrf.mxu0
        %v4792 = vadd.f32 0.0, %v4791
        %v4793 = vpop.f32.mrf.mxu0
        %v4794 = vadd.f32 0.0, %v4793
        %4795 = vmatmul.bf16.gmra.mxu0 %v4724
        %v4796 = vpop.f32.mrf.mxu0
        %v4797 = vadd.f32 0.0, %v4796
        %v4798 = vpop.f32.mrf.mxu0
        %v4799 = vadd.f32 0.0, %v4798
        %4800 = vmatmul.bf16.gmra.mxu0 %v4727
        %v4801 = vpop.f32.mrf.mxu0
        %v4802 = vadd.f32 0.0, %v4801
        %v4803 = vpop.f32.mrf.mxu0
        %v4804 = vadd.f32 0.0, %v4803
        %4805 = vmatmul.bf16.gmra.mxu0 %v4730
        %v4806 = vpop.f32.mrf.mxu0
        %v4807 = vadd.f32 0.0, %v4806
        %v4808 = vpop.f32.mrf.mxu0
        %v4809 = vadd.f32 0.0, %v4808
        %4810 = vmatmul.bf16.gmra.mxu0 %v4733
        %v4811 = vpop.f32.mrf.mxu0
        %v4812 = vadd.f32 0.0, %v4811
        %v4813 = vpop.f32.mrf.mxu0
        %v4814 = vadd.f32 0.0, %v4813
        %4815 = vmatmul.bf16.gmra.mxu0 %v4736
        %v4816 = vpop.f32.mrf.mxu0
        %v4817 = vadd.f32 0.0, %v4816
        %v4818 = vpop.f32.mrf.mxu0
        %v4819 = vadd.f32 0.0, %v4818
        %4820 = vmatmul.bf16.gmra.mxu0 %v4739
        %v4821 = vpop.f32.mrf.mxu0
        %v4822 = vadd.f32 0.0, %v4821
        %v4823 = vpop.f32.mrf.mxu0
        %v4824 = vadd.f32 0.0, %v4823
        %4825 = vmatmul.bf16.gmra.mxu0 %v4742
        %v4826 = vpop.f32.mrf.mxu0
        %v4827 = vadd.f32 0.0, %v4826
        %v4828 = vpop.f32.mrf.mxu0
        %v4829 = vadd.f32 0.0, %v4828
        %4830 = vmatmul.bf16.gmra.mxu0 %v4745
        %v4831 = vpop.f32.mrf.mxu0
        %v4832 = vadd.f32 0.0, %v4831
        %v4833 = vpop.f32.mrf.mxu0
        %v4834 = vadd.f32 0.0, %v4833
        %4835 = vmatmul.bf16.gmra.mxu0 %v4748
        %v4836 = vpop.f32.mrf.mxu0
        %v4837 = vadd.f32 0.0, %v4836
        %v4838 = vpop.f32.mrf.mxu0
        %v4839 = vadd.f32 0.0, %v4838
        %4840 = vmatmul.bf16.gmra.mxu0 %v4751
        %v4841 = vpop.f32.mrf.mxu0
        %v4842 = vadd.f32 0.0, %v4841
        %v4843 = vpop.f32.mrf.mxu0
        %v4844 = vadd.f32 0.0, %v4843
        %4845 = vmatmul.bf16.gmra.mxu0 %v4754
        %v4846 = vpop.f32.mrf.mxu0
        %v4847 = vadd.f32 0.0, %v4846
        %v4848 = vpop.f32.mrf.mxu0
        %v4849 = vadd.f32 0.0, %v4848
        %4850 = vmatmul.bf16.gmra.mxu0 %v4757
        %v4851 = vpop.f32.mrf.mxu0
        %v4852 = vadd.f32 0.0, %v4851
        %v4853 = vpop.f32.mrf.mxu0
        %v4854 = vadd.f32 0.0, %v4853
        %4855 = vdwg.mxu0
        %v4856 = vadd.f32 %v4390, %v4772
        %v4857 = vadd.f32 %v4391, %v4774
        %v4858 = vadd.f32 %v4392, %v4777
        %v4859 = vadd.f32 %v4393, %v4779
        %v4860 = vadd.f32 %v4394, %v4782
        %v4861 = vadd.f32 %v4395, %v4784
        %v4862 = vadd.f32 %v4396, %v4787
        %v4863 = vadd.f32 %v4397, %v4789
        %v4864 = vadd.f32 %v4398, %v4792
        %v4865 = vadd.f32 %v4399, %v4794
        %v4866 = vadd.f32 %v4400, %v4797
        %v4867 = vadd.f32 %v4401, %v4799
        %v4868 = vadd.f32 %v4402, %v4802
        %v4869 = vadd.f32 %v4403, %v4804
        %v4870 = vadd.f32 %v4404, %v4807
        %v4871 = vadd.f32 %v4405, %v4809
        %v4872 = vadd.f32 %v4406, %v4812
        %v4873 = vadd.f32 %v4407, %v4814
        %v4874 = vadd.f32 %v4408, %v4817
        %v4875 = vadd.f32 %v4409, %v4819
        %v4876 = vadd.f32 %v4410, %v4822
        %v4877 = vadd.f32 %v4411, %v4824
        %v4878 = vadd.f32 %v4412, %v4827
        %v4879 = vadd.f32 %v4413, %v4829
        %v4880 = vadd.f32 %v4414, %v4832
        %v4881 = vadd.f32 %v4415, %v4834
        %v4882 = vadd.f32 %v4416, %v4837
        %v4883 = vadd.f32 %v4417, %v4839
        %v4884 = vadd.f32 %v4418, %v4842
        %v4885 = vadd.f32 %v4419, %v4844
        %v4886 = vadd.f32 %v4420, %v4847
        %v4887 = vadd.f32 %v4421, %v4849
        %v4888 = vadd.f32 %v4422, %v4852
        %v4889 = vadd.f32 %v4423, %v4854
        %v4890 = vld [vmem:[#allocation2 + $0x14] sm:$0xe]
        %s4891 = scalar_lea.vmem %s1, 160
        %v4892 = vld [vmem:[%s4891] sm:$0xf]
        %v4893 = vld [vmem:[%s4891 + $0x4] sm:$0xf]
        %v4894 = vld [vmem:[%s4891 + $0x8] sm:$0xf]
        %v4895 = vld [vmem:[%s4891 + $0xc] sm:$0xf]
        %v4896 = vld [vmem:[%s4891 + $0x10] sm:$0x3]
        %v4898 = vunpack.c.l.b16 %v4890
        %v4899 = vpack.c.b16 %v4501, %v4898
        %vm4900 = vcmask 1046528
        %v4901 = vrot.slane %v4899, 1
        %v4902 = vrot.slane %v4536, 1
        %v4903 = vsel %vm4900, %v4901, %v4902
        %v4904 = vrot.slane %v4537, 1
        %v4905 = vsel %vm4900, %v4902, %v4904
        %v4906 = vrot.slane %v4538, 1
        %v4907 = vsel %vm4900, %v4904, %v4906
        %v4908 = vrot.slane %v4539, 1
        %v4909 = vsel %vm4900, %v4906, %v4908
        %v4910 = vrot.slane %v4540, 1
        %v4911 = vsel %vm4900, %v4908, %v4910
        %v4912 = vrot.slane %v4541, 1
        %v4913 = vsel %vm4900, %v4910, %v4912
        %v4914 = vrot.slane %v4542, 1
        %v4915 = vsel %vm4900, %v4912, %v4914
        %v4916 = vrot.slane %v4543, 1
        %v4917 = vsel %vm4900, %v4914, %v4916
        %v4918 = vrot.slane %v4544, 1
        %v4919 = vsel %vm4900, %v4916, %v4918
        %v4920 = vrot.slane %v4545, 1
        %v4921 = vsel %vm4900, %v4918, %v4920
        %v4922 = vrot.slane %v4546, 1
        %v4923 = vsel %vm4900, %v4920, %v4922
        %v4924 = vrot.slane %v4547, 1
        %v4925 = vsel %vm4900, %v4922, %v4924
        %v4926 = vrot.slane %v4548, 1
        %v4927 = vsel %vm4900, %v4924, %v4926
        %v4928 = vrot.slane %v4549, 1
        %v4929 = vsel %vm4900, %v4926, %v4928
        %v4930 = vrot.slane %v4550, 1
        %v4931 = vsel %vm4900, %v4928, %v4930
        %v4932 = vrot.slane %v4551, 1
        %v4933 = vsel %vm4900, %v4930, %v4932
        %v4934 = vrot.slane %v4552, 1
        %v4935 = vsel %vm4900, %v4932, %v4934
        %v4941 = vunpack.c.l.b16 %v4892
        %v4942 = vunpack.c.l.b16 %v4893
        %v4943 = vunpack.c.l.b16 %v4894
        %v4944 = vunpack.c.l.b16 %v4895
        %v4945 = vunpack.c.l.b16 %v4896
        %v4946 = vpack.c.b16 %v4942, %v4941
        %v4947 = vpack.c.b16 %v4944, %v4943
        %v4948 = vpack.c.b16 %v4945, %v4945
        %v4952 = vsel %vm2155, %v4903, 0
        %v4955 = vsel %vm2155, %v4905, 0
        %v4958 = vsel %vm2155, %v4907, 0
        %v4961 = vsel %vm2155, %v4909, 0
        %v4964 = vsel %vm2155, %v4911, 0
        %v4967 = vsel %vm2155, %v4913, 0
        %v4970 = vsel %vm2155, %v4915, 0
        %v4973 = vsel %vm2155, %v4917, 0
        %v4976 = vsel %vm2155, %v4919, 0
        %v4979 = vsel %vm2155, %v4921, 0
        %v4982 = vsel %vm2155, %v4923, 0
        %v4985 = vsel %vm2155, %v4925, 0
        %v4988 = vsel %vm2155, %v4927, 0
        %v4991 = vsel %vm2155, %v4929, 0
        %v4994 = vsel %vm2155, %v4931, 0
        %v4997 = vsel %vm2155, %v4933, 0
        %v5000 = vsel %vm2155, %v4935, 0
        %v5003 = vsel %vm2207, %v4948, 0
        %5005 = vmatpush.bf16.msra.mxu0 0
        %5006 = vmatpush.bf16.msra.mxu0 0
        %5007 = vmatpush.bf16.msra.mxu0 0
        %5008 = vmatpush.bf16.msra.mxu0 0
        %5009 = vmatpush.bf16.msra.mxu0 0
        %5010 = vmatpush.bf16.msra.mxu0 %v5003
        %5011 = vmatpush.bf16.msra.mxu0 %v4947
        %5012 = vmatpush.bf16.msra.mxu0 %v4946
        %5013 = vmatmul.bf16.gmra.mxu0 %v4952
        %v5014 = vpop.f32.mrf.mxu0
        %v5015 = vadd.f32 0.0, %v5014
        %v5016 = vpop.f32.mrf.mxu0
        %v5017 = vadd.f32 0.0, %v5016
        %5018 = vmatmul.bf16.gmra.mxu0 %v4955
        %v5019 = vpop.f32.mrf.mxu0
        %v5020 = vadd.f32 0.0, %v5019
        %v5021 = vpop.f32.mrf.mxu0
        %v5022 = vadd.f32 0.0, %v5021
        %5023 = vmatmul.bf16.gmra.mxu0 %v4958
        %v5024 = vpop.f32.mrf.mxu0
        %v5025 = vadd.f32 0.0, %v5024
        %v5026 = vpop.f32.mrf.mxu0
        %v5027 = vadd.f32 0.0, %v5026
        %5028 = vmatmul.bf16.gmra.mxu0 %v4961
        %v5029 = vpop.f32.mrf.mxu0
        %v5030 = vadd.f32 0.0, %v5029
        %v5031 = vpop.f32.mrf.mxu0
        %v5032 = vadd.f32 0.0, %v5031
        %5033 = vmatmul.bf16.gmra.mxu0 %v4964
        %v5034 = vpop.f32.mrf.mxu0
        %v5035 = vadd.f32 0.0, %v5034
        %v5036 = vpop.f32.mrf.mxu0
        %v5037 = vadd.f32 0.0, %v5036
        %5038 = vmatmul.bf16.gmra.mxu0 %v4967
        %v5039 = vpop.f32.mrf.mxu0
        %v5040 = vadd.f32 0.0, %v5039
        %v5041 = vpop.f32.mrf.mxu0
        %v5042 = vadd.f32 0.0, %v5041
        %5043 = vmatmul.bf16.gmra.mxu0 %v4970
        %v5044 = vpop.f32.mrf.mxu0
        %v5045 = vadd.f32 0.0, %v5044
        %v5046 = vpop.f32.mrf.mxu0
        %v5047 = vadd.f32 0.0, %v5046
        %5048 = vmatmul.bf16.gmra.mxu0 %v4973
        %v5049 = vpop.f32.mrf.mxu0
        %v5050 = vadd.f32 0.0, %v5049
        %v5051 = vpop.f32.mrf.mxu0
        %v5052 = vadd.f32 0.0, %v5051
        %5053 = vmatmul.bf16.gmra.mxu0 %v4976
        %v5054 = vpop.f32.mrf.mxu0
        %v5055 = vadd.f32 0.0, %v5054
        %v5056 = vpop.f32.mrf.mxu0
        %v5057 = vadd.f32 0.0, %v5056
        %5058 = vmatmul.bf16.gmra.mxu0 %v4979
        %v5059 = vpop.f32.mrf.mxu0
        %v5060 = vadd.f32 0.0, %v5059
        %v5061 = vpop.f32.mrf.mxu0
        %v5062 = vadd.f32 0.0, %v5061
        %5063 = vmatmul.bf16.gmra.mxu0 %v4982
        %v5064 = vpop.f32.mrf.mxu0
        %v5065 = vadd.f32 0.0, %v5064
        %v5066 = vpop.f32.mrf.mxu0
        %v5067 = vadd.f32 0.0, %v5066
        %5068 = vmatmul.bf16.gmra.mxu0 %v4985
        %v5069 = vpop.f32.mrf.mxu0
        %v5070 = vadd.f32 0.0, %v5069
        %v5071 = vpop.f32.mrf.mxu0
        %v5072 = vadd.f32 0.0, %v5071
        %5073 = vmatmul.bf16.gmra.mxu0 %v4988
        %v5074 = vpop.f32.mrf.mxu0
        %v5075 = vadd.f32 0.0, %v5074
        %v5076 = vpop.f32.mrf.mxu0
        %v5077 = vadd.f32 0.0, %v5076
        %5078 = vmatmul.bf16.gmra.mxu0 %v4991
        %v5079 = vpop.f32.mrf.mxu0
        %v5080 = vadd.f32 0.0, %v5079
        %v5081 = vpop.f32.mrf.mxu0
        %v5082 = vadd.f32 0.0, %v5081
        %5083 = vmatmul.bf16.gmra.mxu0 %v4994
        %v5084 = vpop.f32.mrf.mxu0
        %v5085 = vadd.f32 0.0, %v5084
        %v5086 = vpop.f32.mrf.mxu0
        %v5087 = vadd.f32 0.0, %v5086
        %5088 = vmatmul.bf16.gmra.mxu0 %v4997
        %v5089 = vpop.f32.mrf.mxu0
        %v5090 = vadd.f32 0.0, %v5089
        %v5091 = vpop.f32.mrf.mxu0
        %v5092 = vadd.f32 0.0, %v5091
        %5093 = vmatmul.bf16.gmra.mxu0 %v5000
        %v5094 = vpop.f32.mrf.mxu0
        %v5095 = vadd.f32 0.0, %v5094
        %v5096 = vpop.f32.mrf.mxu0
        %v5097 = vadd.f32 0.0, %v5096
        %5098 = vdwg.mxu0
        %v5099 = vadd.f32 %v4856, %v5015
        %v5100 = vadd.f32 %v4857, %v5017
        %v5101 = vadd.f32 %v4858, %v5020
        %v5102 = vadd.f32 %v4859, %v5022
        %v5103 = vadd.f32 %v4860, %v5025
        %v5104 = vadd.f32 %v4861, %v5027
        %v5105 = vadd.f32 %v4862, %v5030
        %v5106 = vadd.f32 %v4863, %v5032
        %v5107 = vadd.f32 %v4864, %v5035
        %v5108 = vadd.f32 %v4865, %v5037
        %v5109 = vadd.f32 %v4866, %v5040
        %v5110 = vadd.f32 %v4867, %v5042
        %v5111 = vadd.f32 %v4868, %v5045
        %v5112 = vadd.f32 %v4869, %v5047
        %v5113 = vadd.f32 %v4870, %v5050
        %v5114 = vadd.f32 %v4871, %v5052
        %v5115 = vadd.f32 %v4872, %v5055
        %v5116 = vadd.f32 %v4873, %v5057
        %v5117 = vadd.f32 %v4874, %v5060
        %v5118 = vadd.f32 %v4875, %v5062
        %v5119 = vadd.f32 %v4876, %v5065
        %v5120 = vadd.f32 %v4877, %v5067
        %v5121 = vadd.f32 %v4878, %v5070
        %v5122 = vadd.f32 %v4879, %v5072
        %v5123 = vadd.f32 %v4880, %v5075
        %v5124 = vadd.f32 %v4881, %v5077
        %v5125 = vadd.f32 %v4882, %v5080
        %v5126 = vadd.f32 %v4883, %v5082
        %v5127 = vadd.f32 %v4884, %v5085
        %v5128 = vadd.f32 %v4885, %v5087
        %v5129 = vadd.f32 %v4886, %v5090
        %v5130 = vadd.f32 %v4887, %v5092
        %v5131 = vadd.f32 %v4888, %v5095
        %v5132 = vadd.f32 %v4889, %v5097
        %v5133 = vxor.u32 %v5099, 2147483648
        %v5134 = vxor.u32 %v5100, 2147483648
        %v5135 = vxor.u32 %v5101, 2147483648
        %v5136 = vxor.u32 %v5102, 2147483648
        %v5137 = vxor.u32 %v5103, 2147483648
        %v5138 = vxor.u32 %v5104, 2147483648
        %v5139 = vxor.u32 %v5105, 2147483648
        %v5140 = vxor.u32 %v5106, 2147483648
        %v5141 = vxor.u32 %v5107, 2147483648
        %v5142 = vxor.u32 %v5108, 2147483648
        %v5143 = vxor.u32 %v5109, 2147483648
        %v5144 = vxor.u32 %v5110, 2147483648
        %v5145 = vxor.u32 %v5111, 2147483648
        %v5146 = vxor.u32 %v5112, 2147483648
        %v5147 = vxor.u32 %v5113, 2147483648
        %v5148 = vxor.u32 %v5114, 2147483648
        %v5149 = vxor.u32 %v5115, 2147483648
        %v5150 = vxor.u32 %v5116, 2147483648
        %v5151 = vxor.u32 %v5117, 2147483648
        %v5152 = vxor.u32 %v5118, 2147483648
        %v5153 = vxor.u32 %v5119, 2147483648
        %v5154 = vxor.u32 %v5120, 2147483648
        %v5155 = vxor.u32 %v5121, 2147483648
        %v5156 = vxor.u32 %v5122, 2147483648
        %v5157 = vxor.u32 %v5123, 2147483648
        %v5158 = vxor.u32 %v5124, 2147483648
        %v5159 = vxor.u32 %v5125, 2147483648
        %v5160 = vxor.u32 %v5126, 2147483648
        %v5161 = vxor.u32 %v5127, 2147483648
        %v5162 = vxor.u32 %v5128, 2147483648
        %v5163 = vxor.u32 %v5129, 2147483648
        %v5164 = vxor.u32 %v5130, 2147483648
        %v5165 = vxor.u32 %v5131, 2147483648
        %v5166 = vxor.u32 %v5132, 2147483648
        %v5167 = vmul.f32 %v5133, 1.442695
        %v5168 = vpow.pop %v5167
        %v5169 = vmul.f32 %v5134, 1.442695
        %v5170 = vpow.pop %v5169
        %v5171 = vmul.f32 %v5135, 1.442695
        %v5172 = vpow.pop %v5171
        %v5173 = vmul.f32 %v5136, 1.442695
        %v5174 = vpow.pop %v5173
        %v5175 = vmul.f32 %v5137, 1.442695
        %v5176 = vpow.pop %v5175
        %v5177 = vmul.f32 %v5138, 1.442695
        %v5178 = vpow.pop %v5177
        %v5179 = vmul.f32 %v5139, 1.442695
        %v5180 = vpow.pop %v5179
        %v5181 = vmul.f32 %v5140, 1.442695
        %v5182 = vpow.pop %v5181
        %v5183 = vmul.f32 %v5141, 1.442695
        %v5184 = vpow.pop %v5183
        %v5185 = vmul.f32 %v5142, 1.442695
        %v5186 = vpow.pop %v5185
        %v5187 = vmul.f32 %v5143, 1.442695
        %v5188 = vpow.pop %v5187
        %v5189 = vmul.f32 %v5144, 1.442695
        %v5190 = vpow.pop %v5189
        %v5191 = vmul.f32 %v5145, 1.442695
        %v5192 = vpow.pop %v5191
        %v5193 = vmul.f32 %v5146, 1.442695
        %v5194 = vpow.pop %v5193
        %v5195 = vmul.f32 %v5147, 1.442695
        %v5196 = vpow.pop %v5195
        %v5197 = vmul.f32 %v5148, 1.442695
        %v5198 = vpow.pop %v5197
        %v5199 = vmul.f32 %v5149, 1.442695
        %v5200 = vpow.pop %v5199
        %v5201 = vmul.f32 %v5150, 1.442695
        %v5202 = vpow.pop %v5201
        %v5203 = vmul.f32 %v5151, 1.442695
        %v5204 = vpow.pop %v5203
        %v5205 = vmul.f32 %v5152, 1.442695
        %v5206 = vpow.pop %v5205
        %v5207 = vmul.f32 %v5153, 1.442695
        %v5208 = vpow.pop %v5207
        %v5209 = vmul.f32 %v5154, 1.442695
        %v5210 = vpow.pop %v5209
        %v5211 = vmul.f32 %v5155, 1.442695
        %v5212 = vpow.pop %v5211
        %v5213 = vmul.f32 %v5156, 1.442695
        %v5214 = vpow.pop %v5213
        %v5215 = vmul.f32 %v5157, 1.442695
        %v5216 = vpow.pop %v5215
        %v5217 = vmul.f32 %v5158, 1.442695
        %v5218 = vpow.pop %v5217
        %v5219 = vmul.f32 %v5159, 1.442695
        %v5220 = vpow.pop %v5219
        %v5221 = vmul.f32 %v5160, 1.442695
        %v5222 = vpow.pop %v5221
        %v5223 = vmul.f32 %v5161, 1.442695
        %v5224 = vpow.pop %v5223
        %v5225 = vmul.f32 %v5162, 1.442695
        %v5226 = vpow.pop %v5225
        %v5227 = vmul.f32 %v5163, 1.442695
        %v5228 = vpow.pop %v5227
        %v5229 = vmul.f32 %v5164, 1.442695
        %v5230 = vpow.pop %v5229
        %v5231 = vmul.f32 %v5165, 1.442695
        %v5232 = vpow.pop %v5231
        %v5233 = vmul.f32 %v5166, 1.442695
        %v5234 = vpow.pop %v5233
        %v5235 = vadd.f32 %v5168, 1.0
        %v5236 = vadd.f32 %v5170, 1.0
        %v5237 = vadd.f32 %v5172, 1.0
        %v5238 = vadd.f32 %v5174, 1.0
        %v5239 = vadd.f32 %v5176, 1.0
        %v5240 = vadd.f32 %v5178, 1.0
        %v5241 = vadd.f32 %v5180, 1.0
        %v5242 = vadd.f32 %v5182, 1.0
        %v5243 = vadd.f32 %v5184, 1.0
        %v5244 = vadd.f32 %v5186, 1.0
        %v5245 = vadd.f32 %v5188, 1.0
        %v5246 = vadd.f32 %v5190, 1.0
        %v5247 = vadd.f32 %v5192, 1.0
        %v5248 = vadd.f32 %v5194, 1.0
        %v5249 = vadd.f32 %v5196, 1.0
        %v5250 = vadd.f32 %v5198, 1.0
        %v5251 = vadd.f32 %v5200, 1.0
        %v5252 = vadd.f32 %v5202, 1.0
        %v5253 = vadd.f32 %v5204, 1.0
        %v5254 = vadd.f32 %v5206, 1.0
        %v5255 = vadd.f32 %v5208, 1.0
        %v5256 = vadd.f32 %v5210, 1.0
        %v5257 = vadd.f32 %v5212, 1.0
        %v5258 = vadd.f32 %v5214, 1.0
        %v5259 = vadd.f32 %v5216, 1.0
        %v5260 = vadd.f32 %v5218, 1.0
        %v5261 = vadd.f32 %v5220, 1.0
        %v5262 = vadd.f32 %v5222, 1.0
        %v5263 = vadd.f32 %v5224, 1.0
        %v5264 = vadd.f32 %v5226, 1.0
        %v5265 = vadd.f32 %v5228, 1.0
        %v5266 = vadd.f32 %v5230, 1.0
        %v5267 = vadd.f32 %v5232, 1.0
        %v5268 = vadd.f32 %v5234, 1.0
        %v5269 = vrcp.pop %v5235
        %v5270 = vmul.f32 %v5235, %v5269
        %v5271 = vsub.f32 1.0, %v5270
        %v5272 = vmul.f32 %v5269, %v5271
        %v5273 = vadd.f32 %v5269, %v5272
        %vm5274 = vweird.f32 %v5235
        %vm5275 = vweird.f32 %v5269
        %vm5276 = vmor %vm5274, %vm5275
        %v5277 = vsel %vm5276, %v5269, %v5273
        %v5278 = vand.u32 2147483647, %v5235
        %vm5279 = vcmp.eq.f32.partialorder %v5278, 8.507059e+37
        %v5280 = vand.u32 %v5235, 2147483648
        %v5281 = vor.u32 1.1754944e-38, %v5280
        %v5282 = vsel %vm5279, %v5281, %v5277
        %v5283 = vmul.f32 1.0, %v5282
        %v5284 = vrcp.pop %v5236
        %v5285 = vmul.f32 %v5236, %v5284
        %v5286 = vsub.f32 1.0, %v5285
        %v5287 = vmul.f32 %v5284, %v5286
        %v5288 = vadd.f32 %v5284, %v5287
        %vm5289 = vweird.f32 %v5236
        %vm5290 = vweird.f32 %v5284
        %vm5291 = vmor %vm5289, %vm5290
        %v5292 = vsel %vm5291, %v5284, %v5288
        %v5293 = vand.u32 2147483647, %v5236
        %vm5294 = vcmp.eq.f32.partialorder %v5293, 8.507059e+37
        %v5295 = vand.u32 %v5236, 2147483648
        %v5296 = vor.u32 1.1754944e-38, %v5295
        %v5297 = vsel %vm5294, %v5296, %v5292
        %v5298 = vmul.f32 1.0, %v5297
        %v5299 = vrcp.pop %v5237
        %v5300 = vmul.f32 %v5237, %v5299
        %v5301 = vsub.f32 1.0, %v5300
        %v5302 = vmul.f32 %v5299, %v5301
        %v5303 = vadd.f32 %v5299, %v5302
        %vm5304 = vweird.f32 %v5237
        %vm5305 = vweird.f32 %v5299
        %vm5306 = vmor %vm5304, %vm5305
        %v5307 = vsel %vm5306, %v5299, %v5303
        %v5308 = vand.u32 2147483647, %v5237
        %vm5309 = vcmp.eq.f32.partialorder %v5308, 8.507059e+37
        %v5310 = vand.u32 %v5237, 2147483648
        %v5311 = vor.u32 1.1754944e-38, %v5310
        %v5312 = vsel %vm5309, %v5311, %v5307
        %v5313 = vmul.f32 1.0, %v5312
        %v5314 = vrcp.pop %v5238
        %v5315 = vmul.f32 %v5238, %v5314
        %v5316 = vsub.f32 1.0, %v5315
        %v5317 = vmul.f32 %v5314, %v5316
        %v5318 = vadd.f32 %v5314, %v5317
        %vm5319 = vweird.f32 %v5238
        %vm5320 = vweird.f32 %v5314
        %vm5321 = vmor %vm5319, %vm5320
        %v5322 = vsel %vm5321, %v5314, %v5318
        %v5323 = vand.u32 2147483647, %v5238
        %vm5324 = vcmp.eq.f32.partialorder %v5323, 8.507059e+37
        %v5325 = vand.u32 %v5238, 2147483648
        %v5326 = vor.u32 1.1754944e-38, %v5325
        %v5327 = vsel %vm5324, %v5326, %v5322
        %v5328 = vmul.f32 1.0, %v5327
        %v5329 = vrcp.pop %v5239
        %v5330 = vmul.f32 %v5239, %v5329
        %v5331 = vsub.f32 1.0, %v5330
        %v5332 = vmul.f32 %v5329, %v5331
        %v5333 = vadd.f32 %v5329, %v5332
        %vm5334 = vweird.f32 %v5239
        %vm5335 = vweird.f32 %v5329
        %vm5336 = vmor %vm5334, %vm5335
        %v5337 = vsel %vm5336, %v5329, %v5333
        %v5338 = vand.u32 2147483647, %v5239
        %vm5339 = vcmp.eq.f32.partialorder %v5338, 8.507059e+37
        %v5340 = vand.u32 %v5239, 2147483648
        %v5341 = vor.u32 1.1754944e-38, %v5340
        %v5342 = vsel %vm5339, %v5341, %v5337
        %v5343 = vmul.f32 1.0, %v5342
        %v5344 = vrcp.pop %v5240
        %v5345 = vmul.f32 %v5240, %v5344
        %v5346 = vsub.f32 1.0, %v5345
        %v5347 = vmul.f32 %v5344, %v5346
        %v5348 = vadd.f32 %v5344, %v5347
        %vm5349 = vweird.f32 %v5240
        %vm5350 = vweird.f32 %v5344
        %vm5351 = vmor %vm5349, %vm5350
        %v5352 = vsel %vm5351, %v5344, %v5348
        %v5353 = vand.u32 2147483647, %v5240
        %vm5354 = vcmp.eq.f32.partialorder %v5353, 8.507059e+37
        %v5355 = vand.u32 %v5240, 2147483648
        %v5356 = vor.u32 1.1754944e-38, %v5355
        %v5357 = vsel %vm5354, %v5356, %v5352
        %v5358 = vmul.f32 1.0, %v5357
        %v5359 = vrcp.pop %v5241
        %v5360 = vmul.f32 %v5241, %v5359
        %v5361 = vsub.f32 1.0, %v5360
        %v5362 = vmul.f32 %v5359, %v5361
        %v5363 = vadd.f32 %v5359, %v5362
        %vm5364 = vweird.f32 %v5241
        %vm5365 = vweird.f32 %v5359
        %vm5366 = vmor %vm5364, %vm5365
        %v5367 = vsel %vm5366, %v5359, %v5363
        %v5368 = vand.u32 2147483647, %v5241
        %vm5369 = vcmp.eq.f32.partialorder %v5368, 8.507059e+37
        %v5370 = vand.u32 %v5241, 2147483648
        %v5371 = vor.u32 1.1754944e-38, %v5370
        %v5372 = vsel %vm5369, %v5371, %v5367
        %v5373 = vmul.f32 1.0, %v5372
        %v5374 = vrcp.pop %v5242
        %v5375 = vmul.f32 %v5242, %v5374
        %v5376 = vsub.f32 1.0, %v5375
        %v5377 = vmul.f32 %v5374, %v5376
        %v5378 = vadd.f32 %v5374, %v5377
        %vm5379 = vweird.f32 %v5242
        %vm5380 = vweird.f32 %v5374
        %vm5381 = vmor %vm5379, %vm5380
        %v5382 = vsel %vm5381, %v5374, %v5378
        %v5383 = vand.u32 2147483647, %v5242
        %vm5384 = vcmp.eq.f32.partialorder %v5383, 8.507059e+37
        %v5385 = vand.u32 %v5242, 2147483648
        %v5386 = vor.u32 1.1754944e-38, %v5385
        %v5387 = vsel %vm5384, %v5386, %v5382
        %v5388 = vmul.f32 1.0, %v5387
        %v5389 = vrcp.pop %v5243
        %v5390 = vmul.f32 %v5243, %v5389
        %v5391 = vsub.f32 1.0, %v5390
        %v5392 = vmul.f32 %v5389, %v5391
        %v5393 = vadd.f32 %v5389, %v5392
        %vm5394 = vweird.f32 %v5243
        %vm5395 = vweird.f32 %v5389
        %vm5396 = vmor %vm5394, %vm5395
        %v5397 = vsel %vm5396, %v5389, %v5393
        %v5398 = vand.u32 2147483647, %v5243
        %vm5399 = vcmp.eq.f32.partialorder %v5398, 8.507059e+37
        %v5400 = vand.u32 %v5243, 2147483648
        %v5401 = vor.u32 1.1754944e-38, %v5400
        %v5402 = vsel %vm5399, %v5401, %v5397
        %v5403 = vmul.f32 1.0, %v5402
        %v5404 = vrcp.pop %v5244
        %v5405 = vmul.f32 %v5244, %v5404
        %v5406 = vsub.f32 1.0, %v5405
        %v5407 = vmul.f32 %v5404, %v5406
        %v5408 = vadd.f32 %v5404, %v5407
        %vm5409 = vweird.f32 %v5244
        %vm5410 = vweird.f32 %v5404
        %vm5411 = vmor %vm5409, %vm5410
        %v5412 = vsel %vm5411, %v5404, %v5408
        %v5413 = vand.u32 2147483647, %v5244
        %vm5414 = vcmp.eq.f32.partialorder %v5413, 8.507059e+37
        %v5415 = vand.u32 %v5244, 2147483648
        %v5416 = vor.u32 1.1754944e-38, %v5415
        %v5417 = vsel %vm5414, %v5416, %v5412
        %v5418 = vmul.f32 1.0, %v5417
        %v5419 = vrcp.pop %v5245
        %v5420 = vmul.f32 %v5245, %v5419
        %v5421 = vsub.f32 1.0, %v5420
        %v5422 = vmul.f32 %v5419, %v5421
        %v5423 = vadd.f32 %v5419, %v5422
        %vm5424 = vweird.f32 %v5245
        %vm5425 = vweird.f32 %v5419
        %vm5426 = vmor %vm5424, %vm5425
        %v5427 = vsel %vm5426, %v5419, %v5423
        %v5428 = vand.u32 2147483647, %v5245
        %vm5429 = vcmp.eq.f32.partialorder %v5428, 8.507059e+37
        %v5430 = vand.u32 %v5245, 2147483648
        %v5431 = vor.u32 1.1754944e-38, %v5430
        %v5432 = vsel %vm5429, %v5431, %v5427
        %v5433 = vmul.f32 1.0, %v5432
        %v5434 = vrcp.pop %v5246
        %v5435 = vmul.f32 %v5246, %v5434
        %v5436 = vsub.f32 1.0, %v5435
        %v5437 = vmul.f32 %v5434, %v5436
        %v5438 = vadd.f32 %v5434, %v5437
        %vm5439 = vweird.f32 %v5246
        %vm5440 = vweird.f32 %v5434
        %vm5441 = vmor %vm5439, %vm5440
        %v5442 = vsel %vm5441, %v5434, %v5438
        %v5443 = vand.u32 2147483647, %v5246
        %vm5444 = vcmp.eq.f32.partialorder %v5443, 8.507059e+37
        %v5445 = vand.u32 %v5246, 2147483648
        %v5446 = vor.u32 1.1754944e-38, %v5445
        %v5447 = vsel %vm5444, %v5446, %v5442
        %v5448 = vmul.f32 1.0, %v5447
        %v5449 = vrcp.pop %v5247
        %v5450 = vmul.f32 %v5247, %v5449
        %v5451 = vsub.f32 1.0, %v5450
        %v5452 = vmul.f32 %v5449, %v5451
        %v5453 = vadd.f32 %v5449, %v5452
        %vm5454 = vweird.f32 %v5247
        %vm5455 = vweird.f32 %v5449
        %vm5456 = vmor %vm5454, %vm5455
        %v5457 = vsel %vm5456, %v5449, %v5453
        %v5458 = vand.u32 2147483647, %v5247
        %vm5459 = vcmp.eq.f32.partialorder %v5458, 8.507059e+37
        %v5460 = vand.u32 %v5247, 2147483648
        %v5461 = vor.u32 1.1754944e-38, %v5460
        %v5462 = vsel %vm5459, %v5461, %v5457
        %v5463 = vmul.f32 1.0, %v5462
        %v5464 = vrcp.pop %v5248
        %v5465 = vmul.f32 %v5248, %v5464
        %v5466 = vsub.f32 1.0, %v5465
        %v5467 = vmul.f32 %v5464, %v5466
        %v5468 = vadd.f32 %v5464, %v5467
        %vm5469 = vweird.f32 %v5248
        %vm5470 = vweird.f32 %v5464
        %vm5471 = vmor %vm5469, %vm5470
        %v5472 = vsel %vm5471, %v5464, %v5468
        %v5473 = vand.u32 2147483647, %v5248
        %vm5474 = vcmp.eq.f32.partialorder %v5473, 8.507059e+37
        %v5475 = vand.u32 %v5248, 2147483648
        %v5476 = vor.u32 1.1754944e-38, %v5475
        %v5477 = vsel %vm5474, %v5476, %v5472
        %v5478 = vmul.f32 1.0, %v5477
        %v5479 = vrcp.pop %v5249
        %v5480 = vmul.f32 %v5249, %v5479
        %v5481 = vsub.f32 1.0, %v5480
        %v5482 = vmul.f32 %v5479, %v5481
        %v5483 = vadd.f32 %v5479, %v5482
        %vm5484 = vweird.f32 %v5249
        %vm5485 = vweird.f32 %v5479
        %vm5486 = vmor %vm5484, %vm5485
        %v5487 = vsel %vm5486, %v5479, %v5483
        %v5488 = vand.u32 2147483647, %v5249
        %vm5489 = vcmp.eq.f32.partialorder %v5488, 8.507059e+37
        %v5490 = vand.u32 %v5249, 2147483648
        %v5491 = vor.u32 1.1754944e-38, %v5490
        %v5492 = vsel %vm5489, %v5491, %v5487
        %v5493 = vmul.f32 1.0, %v5492
        %v5494 = vrcp.pop %v5250
        %v5495 = vmul.f32 %v5250, %v5494
        %v5496 = vsub.f32 1.0, %v5495
        %v5497 = vmul.f32 %v5494, %v5496
        %v5498 = vadd.f32 %v5494, %v5497
        %vm5499 = vweird.f32 %v5250
        %vm5500 = vweird.f32 %v5494
        %vm5501 = vmor %vm5499, %vm5500
        %v5502 = vsel %vm5501, %v5494, %v5498
        %v5503 = vand.u32 2147483647, %v5250
        %vm5504 = vcmp.eq.f32.partialorder %v5503, 8.507059e+37
        %v5505 = vand.u32 %v5250, 2147483648
        %v5506 = vor.u32 1.1754944e-38, %v5505
        %v5507 = vsel %vm5504, %v5506, %v5502
        %v5508 = vmul.f32 1.0, %v5507
        %v5509 = vrcp.pop %v5251
        %v5510 = vmul.f32 %v5251, %v5509
        %v5511 = vsub.f32 1.0, %v5510
        %v5512 = vmul.f32 %v5509, %v5511
        %v5513 = vadd.f32 %v5509, %v5512
        %vm5514 = vweird.f32 %v5251
        %vm5515 = vweird.f32 %v5509
        %vm5516 = vmor %vm5514, %vm5515
        %v5517 = vsel %vm5516, %v5509, %v5513
        %v5518 = vand.u32 2147483647, %v5251
        %vm5519 = vcmp.eq.f32.partialorder %v5518, 8.507059e+37
        %v5520 = vand.u32 %v5251, 2147483648
        %v5521 = vor.u32 1.1754944e-38, %v5520
        %v5522 = vsel %vm5519, %v5521, %v5517
        %v5523 = vmul.f32 1.0, %v5522
        %v5524 = vrcp.pop %v5252
        %v5525 = vmul.f32 %v5252, %v5524
        %v5526 = vsub.f32 1.0, %v5525
        %v5527 = vmul.f32 %v5524, %v5526
        %v5528 = vadd.f32 %v5524, %v5527
        %vm5529 = vweird.f32 %v5252
        %vm5530 = vweird.f32 %v5524
        %vm5531 = vmor %vm5529, %vm5530
        %v5532 = vsel %vm5531, %v5524, %v5528
        %v5533 = vand.u32 2147483647, %v5252
        %vm5534 = vcmp.eq.f32.partialorder %v5533, 8.507059e+37
        %v5535 = vand.u32 %v5252, 2147483648
        %v5536 = vor.u32 1.1754944e-38, %v5535
        %v5537 = vsel %vm5534, %v5536, %v5532
        %v5538 = vmul.f32 1.0, %v5537
        %v5539 = vrcp.pop %v5253
        %v5540 = vmul.f32 %v5253, %v5539
        %v5541 = vsub.f32 1.0, %v5540
        %v5542 = vmul.f32 %v5539, %v5541
        %v5543 = vadd.f32 %v5539, %v5542
        %vm5544 = vweird.f32 %v5253
        %vm5545 = vweird.f32 %v5539
        %vm5546 = vmor %vm5544, %vm5545
        %v5547 = vsel %vm5546, %v5539, %v5543
        %v5548 = vand.u32 2147483647, %v5253
        %vm5549 = vcmp.eq.f32.partialorder %v5548, 8.507059e+37
        %v5550 = vand.u32 %v5253, 2147483648
        %v5551 = vor.u32 1.1754944e-38, %v5550
        %v5552 = vsel %vm5549, %v5551, %v5547
        %v5553 = vmul.f32 1.0, %v5552
        %v5554 = vrcp.pop %v5254
        %v5555 = vmul.f32 %v5254, %v5554
        %v5556 = vsub.f32 1.0, %v5555
        %v5557 = vmul.f32 %v5554, %v5556
        %v5558 = vadd.f32 %v5554, %v5557
        %vm5559 = vweird.f32 %v5254
        %vm5560 = vweird.f32 %v5554
        %vm5561 = vmor %vm5559, %vm5560
        %v5562 = vsel %vm5561, %v5554, %v5558
        %v5563 = vand.u32 2147483647, %v5254
        %vm5564 = vcmp.eq.f32.partialorder %v5563, 8.507059e+37
        %v5565 = vand.u32 %v5254, 2147483648
        %v5566 = vor.u32 1.1754944e-38, %v5565
        %v5567 = vsel %vm5564, %v5566, %v5562
        %v5568 = vmul.f32 1.0, %v5567
        %v5569 = vrcp.pop %v5255
        %v5570 = vmul.f32 %v5255, %v5569
        %v5571 = vsub.f32 1.0, %v5570
        %v5572 = vmul.f32 %v5569, %v5571
        %v5573 = vadd.f32 %v5569, %v5572
        %vm5574 = vweird.f32 %v5255
        %vm5575 = vweird.f32 %v5569
        %vm5576 = vmor %vm5574, %vm5575
        %v5577 = vsel %vm5576, %v5569, %v5573
        %v5578 = vand.u32 2147483647, %v5255
        %vm5579 = vcmp.eq.f32.partialorder %v5578, 8.507059e+37
        %v5580 = vand.u32 %v5255, 2147483648
        %v5581 = vor.u32 1.1754944e-38, %v5580
        %v5582 = vsel %vm5579, %v5581, %v5577
        %v5583 = vmul.f32 1.0, %v5582
        %v5584 = vrcp.pop %v5256
        %v5585 = vmul.f32 %v5256, %v5584
        %v5586 = vsub.f32 1.0, %v5585
        %v5587 = vmul.f32 %v5584, %v5586
        %v5588 = vadd.f32 %v5584, %v5587
        %vm5589 = vweird.f32 %v5256
        %vm5590 = vweird.f32 %v5584
        %vm5591 = vmor %vm5589, %vm5590
        %v5592 = vsel %vm5591, %v5584, %v5588
        %v5593 = vand.u32 2147483647, %v5256
        %vm5594 = vcmp.eq.f32.partialorder %v5593, 8.507059e+37
        %v5595 = vand.u32 %v5256, 2147483648
        %v5596 = vor.u32 1.1754944e-38, %v5595
        %v5597 = vsel %vm5594, %v5596, %v5592
        %v5598 = vmul.f32 1.0, %v5597
        %v5599 = vrcp.pop %v5257
        %v5600 = vmul.f32 %v5257, %v5599
        %v5601 = vsub.f32 1.0, %v5600
        %v5602 = vmul.f32 %v5599, %v5601
        %v5603 = vadd.f32 %v5599, %v5602
        %vm5604 = vweird.f32 %v5257
        %vm5605 = vweird.f32 %v5599
        %vm5606 = vmor %vm5604, %vm5605
        %v5607 = vsel %vm5606, %v5599, %v5603
        %v5608 = vand.u32 2147483647, %v5257
        %vm5609 = vcmp.eq.f32.partialorder %v5608, 8.507059e+37
        %v5610 = vand.u32 %v5257, 2147483648
        %v5611 = vor.u32 1.1754944e-38, %v5610
        %v5612 = vsel %vm5609, %v5611, %v5607
        %v5613 = vmul.f32 1.0, %v5612
        %v5614 = vrcp.pop %v5258
        %v5615 = vmul.f32 %v5258, %v5614
        %v5616 = vsub.f32 1.0, %v5615
        %v5617 = vmul.f32 %v5614, %v5616
        %v5618 = vadd.f32 %v5614, %v5617
        %vm5619 = vweird.f32 %v5258
        %vm5620 = vweird.f32 %v5614
        %vm5621 = vmor %vm5619, %vm5620
        %v5622 = vsel %vm5621, %v5614, %v5618
        %v5623 = vand.u32 2147483647, %v5258
        %vm5624 = vcmp.eq.f32.partialorder %v5623, 8.507059e+37
        %v5625 = vand.u32 %v5258, 2147483648
        %v5626 = vor.u32 1.1754944e-38, %v5625
        %v5627 = vsel %vm5624, %v5626, %v5622
        %v5628 = vmul.f32 1.0, %v5627
        %v5629 = vrcp.pop %v5259
        %v5630 = vmul.f32 %v5259, %v5629
        %v5631 = vsub.f32 1.0, %v5630
        %v5632 = vmul.f32 %v5629, %v5631
        %v5633 = vadd.f32 %v5629, %v5632
        %vm5634 = vweird.f32 %v5259
        %vm5635 = vweird.f32 %v5629
        %vm5636 = vmor %vm5634, %vm5635
        %v5637 = vsel %vm5636, %v5629, %v5633
        %v5638 = vand.u32 2147483647, %v5259
        %vm5639 = vcmp.eq.f32.partialorder %v5638, 8.507059e+37
        %v5640 = vand.u32 %v5259, 2147483648
        %v5641 = vor.u32 1.1754944e-38, %v5640
        %v5642 = vsel %vm5639, %v5641, %v5637
        %v5643 = vmul.f32 1.0, %v5642
        %v5644 = vrcp.pop %v5260
        %v5645 = vmul.f32 %v5260, %v5644
        %v5646 = vsub.f32 1.0, %v5645
        %v5647 = vmul.f32 %v5644, %v5646
        %v5648 = vadd.f32 %v5644, %v5647
        %vm5649 = vweird.f32 %v5260
        %vm5650 = vweird.f32 %v5644
        %vm5651 = vmor %vm5649, %vm5650
        %v5652 = vsel %vm5651, %v5644, %v5648
        %v5653 = vand.u32 2147483647, %v5260
        %vm5654 = vcmp.eq.f32.partialorder %v5653, 8.507059e+37
        %v5655 = vand.u32 %v5260, 2147483648
        %v5656 = vor.u32 1.1754944e-38, %v5655
        %v5657 = vsel %vm5654, %v5656, %v5652
        %v5658 = vmul.f32 1.0, %v5657
        %v5659 = vrcp.pop %v5261
        %v5660 = vmul.f32 %v5261, %v5659
        %v5661 = vsub.f32 1.0, %v5660
        %v5662 = vmul.f32 %v5659, %v5661
        %v5663 = vadd.f32 %v5659, %v5662
        %vm5664 = vweird.f32 %v5261
        %vm5665 = vweird.f32 %v5659
        %vm5666 = vmor %vm5664, %vm5665
        %v5667 = vsel %vm5666, %v5659, %v5663
        %v5668 = vand.u32 2147483647, %v5261
        %vm5669 = vcmp.eq.f32.partialorder %v5668, 8.507059e+37
        %v5670 = vand.u32 %v5261, 2147483648
        %v5671 = vor.u32 1.1754944e-38, %v5670
        %v5672 = vsel %vm5669, %v5671, %v5667
        %v5673 = vmul.f32 1.0, %v5672
        %v5674 = vrcp.pop %v5262
        %v5675 = vmul.f32 %v5262, %v5674
        %v5676 = vsub.f32 1.0, %v5675
        %v5677 = vmul.f32 %v5674, %v5676
        %v5678 = vadd.f32 %v5674, %v5677
        %vm5679 = vweird.f32 %v5262
        %vm5680 = vweird.f32 %v5674
        %vm5681 = vmor %vm5679, %vm5680
        %v5682 = vsel %vm5681, %v5674, %v5678
        %v5683 = vand.u32 2147483647, %v5262
        %vm5684 = vcmp.eq.f32.partialorder %v5683, 8.507059e+37
        %v5685 = vand.u32 %v5262, 2147483648
        %v5686 = vor.u32 1.1754944e-38, %v5685
        %v5687 = vsel %vm5684, %v5686, %v5682
        %v5688 = vmul.f32 1.0, %v5687
        %v5689 = vrcp.pop %v5263
        %v5690 = vmul.f32 %v5263, %v5689
        %v5691 = vsub.f32 1.0, %v5690
        %v5692 = vmul.f32 %v5689, %v5691
        %v5693 = vadd.f32 %v5689, %v5692
        %vm5694 = vweird.f32 %v5263
        %vm5695 = vweird.f32 %v5689
        %vm5696 = vmor %vm5694, %vm5695
        %v5697 = vsel %vm5696, %v5689, %v5693
        %v5698 = vand.u32 2147483647, %v5263
        %vm5699 = vcmp.eq.f32.partialorder %v5698, 8.507059e+37
        %v5700 = vand.u32 %v5263, 2147483648
        %v5701 = vor.u32 1.1754944e-38, %v5700
        %v5702 = vsel %vm5699, %v5701, %v5697
        %v5703 = vmul.f32 1.0, %v5702
        %v5704 = vrcp.pop %v5264
        %v5705 = vmul.f32 %v5264, %v5704
        %v5706 = vsub.f32 1.0, %v5705
        %v5707 = vmul.f32 %v5704, %v5706
        %v5708 = vadd.f32 %v5704, %v5707
        %vm5709 = vweird.f32 %v5264
        %vm5710 = vweird.f32 %v5704
        %vm5711 = vmor %vm5709, %vm5710
        %v5712 = vsel %vm5711, %v5704, %v5708
        %v5713 = vand.u32 2147483647, %v5264
        %vm5714 = vcmp.eq.f32.partialorder %v5713, 8.507059e+37
        %v5715 = vand.u32 %v5264, 2147483648
        %v5716 = vor.u32 1.1754944e-38, %v5715
        %v5717 = vsel %vm5714, %v5716, %v5712
        %v5718 = vmul.f32 1.0, %v5717
        %v5719 = vrcp.pop %v5265
        %v5720 = vmul.f32 %v5265, %v5719
        %v5721 = vsub.f32 1.0, %v5720
        %v5722 = vmul.f32 %v5719, %v5721
        %v5723 = vadd.f32 %v5719, %v5722
        %vm5724 = vweird.f32 %v5265
        %vm5725 = vweird.f32 %v5719
        %vm5726 = vmor %vm5724, %vm5725
        %v5727 = vsel %vm5726, %v5719, %v5723
        %v5728 = vand.u32 2147483647, %v5265
        %vm5729 = vcmp.eq.f32.partialorder %v5728, 8.507059e+37
        %v5730 = vand.u32 %v5265, 2147483648
        %v5731 = vor.u32 1.1754944e-38, %v5730
        %v5732 = vsel %vm5729, %v5731, %v5727
        %v5733 = vmul.f32 1.0, %v5732
        %v5734 = vrcp.pop %v5266
        %v5735 = vmul.f32 %v5266, %v5734
        %v5736 = vsub.f32 1.0, %v5735
        %v5737 = vmul.f32 %v5734, %v5736
        %v5738 = vadd.f32 %v5734, %v5737
        %vm5739 = vweird.f32 %v5266
        %vm5740 = vweird.f32 %v5734
        %vm5741 = vmor %vm5739, %vm5740
        %v5742 = vsel %vm5741, %v5734, %v5738
        %v5743 = vand.u32 2147483647, %v5266
        %vm5744 = vcmp.eq.f32.partialorder %v5743, 8.507059e+37
        %v5745 = vand.u32 %v5266, 2147483648
        %v5746 = vor.u32 1.1754944e-38, %v5745
        %v5747 = vsel %vm5744, %v5746, %v5742
        %v5748 = vmul.f32 1.0, %v5747
        %v5749 = vrcp.pop %v5267
        %v5750 = vmul.f32 %v5267, %v5749
        %v5751 = vsub.f32 1.0, %v5750
        %v5752 = vmul.f32 %v5749, %v5751
        %v5753 = vadd.f32 %v5749, %v5752
        %vm5754 = vweird.f32 %v5267
        %vm5755 = vweird.f32 %v5749
        %vm5756 = vmor %vm5754, %vm5755
        %v5757 = vsel %vm5756, %v5749, %v5753
        %v5758 = vand.u32 2147483647, %v5267
        %vm5759 = vcmp.eq.f32.partialorder %v5758, 8.507059e+37
        %v5760 = vand.u32 %v5267, 2147483648
        %v5761 = vor.u32 1.1754944e-38, %v5760
        %v5762 = vsel %vm5759, %v5761, %v5757
        %v5763 = vmul.f32 1.0, %v5762
        %v5764 = vrcp.pop %v5268
        %v5765 = vmul.f32 %v5268, %v5764
        %v5766 = vsub.f32 1.0, %v5765
        %v5767 = vmul.f32 %v5764, %v5766
        %v5768 = vadd.f32 %v5764, %v5767
        %vm5769 = vweird.f32 %v5268
        %vm5770 = vweird.f32 %v5764
        %vm5771 = vmor %vm5769, %vm5770
        %v5772 = vsel %vm5771, %v5764, %v5768
        %v5773 = vand.u32 2147483647, %v5268
        %vm5774 = vcmp.eq.f32.partialorder %v5773, 8.507059e+37
        %v5775 = vand.u32 %v5268, 2147483648
        %v5776 = vor.u32 1.1754944e-38, %v5775
        %v5777 = vsel %vm5774, %v5776, %v5772
        %v5778 = vmul.f32 1.0, %v5777
        %v5779 = vtanh.pop %v5099
        %v5780 = vtanh.pop %v5100
        %v5781 = vtanh.pop %v5101
        %v5782 = vtanh.pop %v5102
        %v5783 = vtanh.pop %v5103
        %v5784 = vtanh.pop %v5104
        %v5785 = vtanh.pop %v5105
        %v5786 = vtanh.pop %v5106
        %v5787 = vtanh.pop %v5107
        %v5788 = vtanh.pop %v5108
        %v5789 = vtanh.pop %v5109
        %v5790 = vtanh.pop %v5110
        %v5791 = vtanh.pop %v5111
        %v5792 = vtanh.pop %v5112
        %v5793 = vtanh.pop %v5113
        %v5794 = vtanh.pop %v5114
        %v5795 = vtanh.pop %v5115
        %v5796 = vtanh.pop %v5116
        %v5797 = vtanh.pop %v5117
        %v5798 = vtanh.pop %v5118
        %v5799 = vtanh.pop %v5119
        %v5800 = vtanh.pop %v5120
        %v5801 = vtanh.pop %v5121
        %v5802 = vtanh.pop %v5122
        %v5803 = vtanh.pop %v5123
        %v5804 = vtanh.pop %v5124
        %v5805 = vtanh.pop %v5125
        %v5806 = vtanh.pop %v5126
        %v5807 = vtanh.pop %v5127
        %v5808 = vtanh.pop %v5128
        %v5809 = vtanh.pop %v5129
        %v5810 = vtanh.pop %v5130
        %v5811 = vtanh.pop %v5131
        %v5812 = vtanh.pop %v5132
        %v5813 = vld [vmem:[#allocation3] sm:$0xff]
        %v5814 = vld [vmem:[#allocation3 + $0x8] sm:$0xff]
        %v5815 = vld [vmem:[#allocation3 + $0x10] sm:$0xff]
        %v5816 = vld [vmem:[#allocation3 + $0x18] sm:$0xff]
        %v5817 = vld [vmem:[#allocation3 + $0x20] sm:$0xff]
        %v5818 = vld [vmem:[#allocation3 + $0x28] sm:$0xff]
        %v5819 = vld [vmem:[#allocation3 + $0x30] sm:$0xff]
        %v5820 = vld [vmem:[#allocation3 + $0x38] sm:$0xff]
        %v5821 = vld [vmem:[#allocation3 + $0x40] sm:$0xff]
        %v5822 = vld [vmem:[#allocation3 + $0x48] sm:$0xff]
        %v5823 = vld [vmem:[#allocation3 + $0x50] sm:$0xff]
        %v5824 = vld [vmem:[#allocation3 + $0x58] sm:$0xff]
        %v5825 = vld [vmem:[#allocation3 + $0x60] sm:$0xff]
        %v5826 = vld [vmem:[#allocation3 + $0x68] sm:$0xff]
        %v5827 = vld [vmem:[#allocation3 + $0x70] sm:$0xff]
        %v5828 = vld [vmem:[#allocation3 + $0x78] sm:$0xff]
        %v5829 = vld [vmem:[#allocation3 + $0x80] sm:$0xff]
        %v5830 = vld [vmem:[#allocation3 + $0x88] sm:$0xff]
        %v5831 = vld [vmem:[#allocation3 + $0x90] sm:$0xff]
        %v5832 = vld [vmem:[#allocation3 + $0x98] sm:$0xff]
        %v5833 = vld [vmem:[#allocation3 + $0xa0] sm:$0xff]
        %v5834 = vld [vmem:[#allocation3 + $0xa8] sm:$0xff]
        %v5835 = vld [vmem:[#allocation3 + $0xb0] sm:$0xff]
        %v5836 = vld [vmem:[#allocation3 + $0xb8] sm:$0xff]
        %v5837 = vld [vmem:[#allocation3 + $0xc0] sm:$0xff]
        %v5838 = vld [vmem:[#allocation3 + $0xc8] sm:$0xff]
        %v5839 = vld [vmem:[#allocation3 + $0xd0] sm:$0xff]
        %v5840 = vld [vmem:[#allocation3 + $0xd8] sm:$0xff]
        %v5841 = vld [vmem:[#allocation3 + $0xe0] sm:$0xff]
        %v5842 = vld [vmem:[#allocation3 + $0xe8] sm:$0xff]
        %v5843 = vld [vmem:[#allocation3 + $0xf0] sm:$0xff]
        %v5844 = vld [vmem:[#allocation3 + $0xf8] sm:$0xff]
        %v5845 = vld [vmem:[#allocation3 + $0x100] sm:$0xff]
        %v5846 = vld [vmem:[#allocation3 + $0x108] sm:$0xff]
        %5881 = vrot.lane.b32.xlu0 %v5813, 32
        %v5882 = vpop.permute.xlu0 %5881
        %5883 = vrot.lane.b32.xlu0 %v5814, 32
        %v5884 = vpop.permute.xlu0 %5883
        %5885 = vrot.lane.b32.xlu0 %v5815, 32
        %v5886 = vpop.permute.xlu0 %5885
        %5887 = vrot.lane.b32.xlu0 %v5816, 32
        %v5888 = vpop.permute.xlu0 %5887
        %5889 = vrot.lane.b32.xlu0 %v5817, 32
        %v5890 = vpop.permute.xlu0 %5889
        %5891 = vrot.lane.b32.xlu0 %v5818, 32
        %v5892 = vpop.permute.xlu0 %5891
        %5893 = vrot.lane.b32.xlu0 %v5819, 32
        %v5894 = vpop.permute.xlu0 %5893
        %5895 = vrot.lane.b32.xlu0 %v5820, 32
        %v5896 = vpop.permute.xlu0 %5895
        %5897 = vrot.lane.b32.xlu0 %v5821, 32
        %v5898 = vpop.permute.xlu0 %5897
        %5899 = vrot.lane.b32.xlu0 %v5822, 32
        %v5900 = vpop.permute.xlu0 %5899
        %5901 = vrot.lane.b32.xlu0 %v5823, 32
        %v5902 = vpop.permute.xlu0 %5901
        %5903 = vrot.lane.b32.xlu0 %v5824, 32
        %v5904 = vpop.permute.xlu0 %5903
        %5905 = vrot.lane.b32.xlu0 %v5825, 32
        %v5906 = vpop.permute.xlu0 %5905
        %5907 = vrot.lane.b32.xlu0 %v5826, 32
        %v5908 = vpop.permute.xlu0 %5907
        %5909 = vrot.lane.b32.xlu0 %v5827, 32
        %v5910 = vpop.permute.xlu0 %5909
        %5911 = vrot.lane.b32.xlu0 %v5828, 32
        %v5912 = vpop.permute.xlu0 %5911
        %5913 = vrot.lane.b32.xlu0 %v5829, 32
        %v5914 = vpop.permute.xlu0 %5913
        %5915 = vrot.lane.b32.xlu0 %v5830, 32
        %v5916 = vpop.permute.xlu0 %5915
        %5917 = vrot.lane.b32.xlu0 %v5831, 32
        %v5918 = vpop.permute.xlu0 %5917
        %5919 = vrot.lane.b32.xlu0 %v5832, 32
        %v5920 = vpop.permute.xlu0 %5919
        %5921 = vrot.lane.b32.xlu0 %v5833, 32
        %v5922 = vpop.permute.xlu0 %5921
        %5923 = vrot.lane.b32.xlu0 %v5834, 32
        %v5924 = vpop.permute.xlu0 %5923
        %5925 = vrot.lane.b32.xlu0 %v5835, 32
        %v5926 = vpop.permute.xlu0 %5925
        %5927 = vrot.lane.b32.xlu0 %v5836, 32
        %v5928 = vpop.permute.xlu0 %5927
        %5929 = vrot.lane.b32.xlu0 %v5837, 32
        %v5930 = vpop.permute.xlu0 %5929
        %5931 = vrot.lane.b32.xlu0 %v5838, 32
        %v5932 = vpop.permute.xlu0 %5931
        %5933 = vrot.lane.b32.xlu0 %v5839, 32
        %v5934 = vpop.permute.xlu0 %5933
        %5935 = vrot.lane.b32.xlu0 %v5840, 32
        %v5936 = vpop.permute.xlu0 %5935
        %5937 = vrot.lane.b32.xlu0 %v5841, 32
        %v5938 = vpop.permute.xlu0 %5937
        %5939 = vrot.lane.b32.xlu0 %v5842, 32
        %v5940 = vpop.permute.xlu0 %5939
        %5941 = vrot.lane.b32.xlu0 %v5843, 32
        %v5942 = vpop.permute.xlu0 %5941
        %5943 = vrot.lane.b32.xlu0 %v5844, 32
        %v5944 = vpop.permute.xlu0 %5943
        %5945 = vrot.lane.b32.xlu0 %v5845, 32
        %v5946 = vpop.permute.xlu0 %5945
        %5947 = vrot.lane.b32.xlu0 %v5846, 32
        %v5948 = vpop.permute.xlu0 %5947
        %v5983 = vmul.f32 %v5283, %v5882
        %v5984 = vmul.f32 %v5298, %v5884
        %v5985 = vmul.f32 %v5313, %v5886
        %v5986 = vmul.f32 %v5328, %v5888
        %v5987 = vmul.f32 %v5343, %v5890
        %v5988 = vmul.f32 %v5358, %v5892
        %v5989 = vmul.f32 %v5373, %v5894
        %v5990 = vmul.f32 %v5388, %v5896
        %v5991 = vmul.f32 %v5403, %v5898
        %v5992 = vmul.f32 %v5418, %v5900
        %v5993 = vmul.f32 %v5433, %v5902
        %v5994 = vmul.f32 %v5448, %v5904
        %v5995 = vmul.f32 %v5463, %v5906
        %v5996 = vmul.f32 %v5478, %v5908
        %v5997 = vmul.f32 %v5493, %v5910
        %v5998 = vmul.f32 %v5508, %v5912
        %v5999 = vmul.f32 %v5523, %v5914
        %v6000 = vmul.f32 %v5538, %v5916
        %v6001 = vmul.f32 %v5553, %v5918
        %v6002 = vmul.f32 %v5568, %v5920
        %v6003 = vmul.f32 %v5583, %v5922
        %v6004 = vmul.f32 %v5598, %v5924
        %v6005 = vmul.f32 %v5613, %v5926
        %v6006 = vmul.f32 %v5628, %v5928
        %v6007 = vmul.f32 %v5643, %v5930
        %v6008 = vmul.f32 %v5658, %v5932
        %v6009 = vmul.f32 %v5673, %v5934
        %v6010 = vmul.f32 %v5688, %v5936
        %v6011 = vmul.f32 %v5703, %v5938
        %v6012 = vmul.f32 %v5718, %v5940
        %v6013 = vmul.f32 %v5733, %v5942
        %v6014 = vmul.f32 %v5748, %v5944
        %v6015 = vmul.f32 %v5763, %v5946
        %v6016 = vmul.f32 %v5778, %v5948
        %6051 = vrot.lane.b32.xlu0 %v5779, 32
        %v6052 = vpop.permute.xlu0 %6051
        %6053 = vrot.lane.b32.xlu0 %v5780, 32
        %v6054 = vpop.permute.xlu0 %6053
        %6055 = vrot.lane.b32.xlu0 %v5781, 32
        %v6056 = vpop.permute.xlu0 %6055
        %6057 = vrot.lane.b32.xlu0 %v5782, 32
        %v6058 = vpop.permute.xlu0 %6057
        %6059 = vrot.lane.b32.xlu0 %v5783, 32
        %v6060 = vpop.permute.xlu0 %6059
        %6061 = vrot.lane.b32.xlu0 %v5784, 32
        %v6062 = vpop.permute.xlu0 %6061
        %6063 = vrot.lane.b32.xlu0 %v5785, 32
        %v6064 = vpop.permute.xlu0 %6063
        %6065 = vrot.lane.b32.xlu0 %v5786, 32
        %v6066 = vpop.permute.xlu0 %6065
        %6067 = vrot.lane.b32.xlu0 %v5787, 32
        %v6068 = vpop.permute.xlu0 %6067
        %6069 = vrot.lane.b32.xlu0 %v5788, 32
        %v6070 = vpop.permute.xlu0 %6069
        %6071 = vrot.lane.b32.xlu0 %v5789, 32
        %v6072 = vpop.permute.xlu0 %6071
        %6073 = vrot.lane.b32.xlu0 %v5790, 32
        %v6074 = vpop.permute.xlu0 %6073
        %6075 = vrot.lane.b32.xlu0 %v5791, 32
        %v6076 = vpop.permute.xlu0 %6075
        %6077 = vrot.lane.b32.xlu0 %v5792, 32
        %v6078 = vpop.permute.xlu0 %6077
        %6079 = vrot.lane.b32.xlu0 %v5793, 32
        %v6080 = vpop.permute.xlu0 %6079
        %6081 = vrot.lane.b32.xlu0 %v5794, 32
        %v6082 = vpop.permute.xlu0 %6081
        %6083 = vrot.lane.b32.xlu0 %v5795, 32
        %v6084 = vpop.permute.xlu0 %6083
        %6085 = vrot.lane.b32.xlu0 %v5796, 32
        %v6086 = vpop.permute.xlu0 %6085
        %6087 = vrot.lane.b32.xlu0 %v5797, 32
        %v6088 = vpop.permute.xlu0 %6087
        %6089 = vrot.lane.b32.xlu0 %v5798, 32
        %v6090 = vpop.permute.xlu0 %6089
        %6091 = vrot.lane.b32.xlu0 %v5799, 32
        %v6092 = vpop.permute.xlu0 %6091
        %6093 = vrot.lane.b32.xlu0 %v5800, 32
        %v6094 = vpop.permute.xlu0 %6093
        %6095 = vrot.lane.b32.xlu0 %v5801, 32
        %v6096 = vpop.permute.xlu0 %6095
        %6097 = vrot.lane.b32.xlu0 %v5802, 32
        %v6098 = vpop.permute.xlu0 %6097
        %6099 = vrot.lane.b32.xlu0 %v5803, 32
        %v6100 = vpop.permute.xlu0 %6099
        %6101 = vrot.lane.b32.xlu0 %v5804, 32
        %v6102 = vpop.permute.xlu0 %6101
        %6103 = vrot.lane.b32.xlu0 %v5805, 32
        %v6104 = vpop.permute.xlu0 %6103
        %6105 = vrot.lane.b32.xlu0 %v5806, 32
        %v6106 = vpop.permute.xlu0 %6105
        %6107 = vrot.lane.b32.xlu0 %v5807, 32
        %v6108 = vpop.permute.xlu0 %6107
        %6109 = vrot.lane.b32.xlu0 %v5808, 32
        %v6110 = vpop.permute.xlu0 %6109
        %6111 = vrot.lane.b32.xlu0 %v5809, 32
        %v6112 = vpop.permute.xlu0 %6111
        %6113 = vrot.lane.b32.xlu0 %v5810, 32
        %v6114 = vpop.permute.xlu0 %6113
        %6115 = vrot.lane.b32.xlu0 %v5811, 32
        %v6116 = vpop.permute.xlu0 %6115
        %6117 = vrot.lane.b32.xlu0 %v5812, 32
        %v6118 = vpop.permute.xlu0 %6117
        %v6153 = vmul.f32 %v5283, %v6052
        %v6154 = vmul.f32 %v5298, %v6054
        %v6155 = vmul.f32 %v5313, %v6056
        %v6156 = vmul.f32 %v5328, %v6058
        %v6157 = vmul.f32 %v5343, %v6060
        %v6158 = vmul.f32 %v5358, %v6062
        %v6159 = vmul.f32 %v5373, %v6064
        %v6160 = vmul.f32 %v5388, %v6066
        %v6161 = vmul.f32 %v5403, %v6068
        %v6162 = vmul.f32 %v5418, %v6070
        %v6163 = vmul.f32 %v5433, %v6072
        %v6164 = vmul.f32 %v5448, %v6074
        %v6165 = vmul.f32 %v5463, %v6076
        %v6166 = vmul.f32 %v5478, %v6078
        %v6167 = vmul.f32 %v5493, %v6080
        %v6168 = vmul.f32 %v5508, %v6082
        %v6169 = vmul.f32 %v5523, %v6084
        %v6170 = vmul.f32 %v5538, %v6086
        %v6171 = vmul.f32 %v5553, %v6088
        %v6172 = vmul.f32 %v5568, %v6090
        %v6173 = vmul.f32 %v5583, %v6092
        %v6174 = vmul.f32 %v5598, %v6094
        %v6175 = vmul.f32 %v5613, %v6096
        %v6176 = vmul.f32 %v5628, %v6098
        %v6177 = vmul.f32 %v5643, %v6100
        %v6178 = vmul.f32 %v5658, %v6102
        %v6179 = vmul.f32 %v5673, %v6104
        %v6180 = vmul.f32 %v5688, %v6106
        %v6181 = vmul.f32 %v5703, %v6108
        %v6182 = vmul.f32 %v5718, %v6110
        %v6183 = vmul.f32 %v5733, %v6112
        %v6184 = vmul.f32 %v5748, %v6114
        %v6185 = vmul.f32 %v5763, %v6116
        %v6186 = vmul.f32 %v5778, %v6118
        %6221 = vrot.lane.b32.xlu0 %v6153, 32
        %v6222 = vpop.permute.xlu0 %6221
        %6223 = vrot.lane.b32.xlu0 %v6154, 32
        %v6224 = vpop.permute.xlu0 %6223
        %6225 = vrot.lane.b32.xlu0 %v6155, 32
        %v6226 = vpop.permute.xlu0 %6225
        %6227 = vrot.lane.b32.xlu0 %v6156, 32
        %v6228 = vpop.permute.xlu0 %6227
        %6229 = vrot.lane.b32.xlu0 %v6157, 32
        %v6230 = vpop.permute.xlu0 %6229
        %6231 = vrot.lane.b32.xlu0 %v6158, 32
        %v6232 = vpop.permute.xlu0 %6231
        %6233 = vrot.lane.b32.xlu0 %v6159, 32
        %v6234 = vpop.permute.xlu0 %6233
        %6235 = vrot.lane.b32.xlu0 %v6160, 32
        %v6236 = vpop.permute.xlu0 %6235
        %6237 = vrot.lane.b32.xlu0 %v6161, 32
        %v6238 = vpop.permute.xlu0 %6237
        %6239 = vrot.lane.b32.xlu0 %v6162, 32
        %v6240 = vpop.permute.xlu0 %6239
        %6241 = vrot.lane.b32.xlu0 %v6163, 32
        %v6242 = vpop.permute.xlu0 %6241
        %6243 = vrot.lane.b32.xlu0 %v6164, 32
        %v6244 = vpop.permute.xlu0 %6243
        %6245 = vrot.lane.b32.xlu0 %v6165, 32
        %v6246 = vpop.permute.xlu0 %6245
        %6247 = vrot.lane.b32.xlu0 %v6166, 32
        %v6248 = vpop.permute.xlu0 %6247
        %6249 = vrot.lane.b32.xlu0 %v6167, 32
        %v6250 = vpop.permute.xlu0 %6249
        %6251 = vrot.lane.b32.xlu0 %v6168, 32
        %v6252 = vpop.permute.xlu0 %6251
        %6253 = vrot.lane.b32.xlu0 %v6169, 32
        %v6254 = vpop.permute.xlu0 %6253
        %6255 = vrot.lane.b32.xlu0 %v6170, 32
        %v6256 = vpop.permute.xlu0 %6255
        %6257 = vrot.lane.b32.xlu0 %v6171, 32
        %v6258 = vpop.permute.xlu0 %6257
        %6259 = vrot.lane.b32.xlu0 %v6172, 32
        %v6260 = vpop.permute.xlu0 %6259
        %6261 = vrot.lane.b32.xlu0 %v6173, 32
        %v6262 = vpop.permute.xlu0 %6261
        %6263 = vrot.lane.b32.xlu0 %v6174, 32
        %v6264 = vpop.permute.xlu0 %6263
        %6265 = vrot.lane.b32.xlu0 %v6175, 32
        %v6266 = vpop.permute.xlu0 %6265
        %6267 = vrot.lane.b32.xlu0 %v6176, 32
        %v6268 = vpop.permute.xlu0 %6267
        %6269 = vrot.lane.b32.xlu0 %v6177, 32
        %v6270 = vpop.permute.xlu0 %6269
        %6271 = vrot.lane.b32.xlu0 %v6178, 32
        %v6272 = vpop.permute.xlu0 %6271
        %6273 = vrot.lane.b32.xlu0 %v6179, 32
        %v6274 = vpop.permute.xlu0 %6273
        %6275 = vrot.lane.b32.xlu0 %v6180, 32
        %v6276 = vpop.permute.xlu0 %6275
        %6277 = vrot.lane.b32.xlu0 %v6181, 32
        %v6278 = vpop.permute.xlu0 %6277
        %6279 = vrot.lane.b32.xlu0 %v6182, 32
        %v6280 = vpop.permute.xlu0 %6279
        %6281 = vrot.lane.b32.xlu0 %v6183, 32
        %v6282 = vpop.permute.xlu0 %6281
        %6283 = vrot.lane.b32.xlu0 %v6184, 32
        %v6284 = vpop.permute.xlu0 %6283
        %6285 = vrot.lane.b32.xlu0 %v6185, 32
        %v6286 = vpop.permute.xlu0 %6285
        %6287 = vrot.lane.b32.xlu0 %v6186, 32
        %v6288 = vpop.permute.xlu0 %6287
        %v6323 = vadd.f32 %v5983, %v6222
        %v6324 = vadd.f32 %v5984, %v6224
        %v6325 = vadd.f32 %v5985, %v6226
        %v6326 = vadd.f32 %v5986, %v6228
        %v6327 = vadd.f32 %v5987, %v6230
        %v6328 = vadd.f32 %v5988, %v6232
        %v6329 = vadd.f32 %v5989, %v6234
        %v6330 = vadd.f32 %v5990, %v6236
        %v6331 = vadd.f32 %v5991, %v6238
        %v6332 = vadd.f32 %v5992, %v6240
        %v6333 = vadd.f32 %v5993, %v6242
        %v6334 = vadd.f32 %v5994, %v6244
        %v6335 = vadd.f32 %v5995, %v6246
        %v6336 = vadd.f32 %v5996, %v6248
        %v6337 = vadd.f32 %v5997, %v6250
        %v6338 = vadd.f32 %v5998, %v6252
        %v6339 = vadd.f32 %v5999, %v6254
        %v6340 = vadd.f32 %v6000, %v6256
        %v6341 = vadd.f32 %v6001, %v6258
        %v6342 = vadd.f32 %v6002, %v6260
        %v6343 = vadd.f32 %v6003, %v6262
        %v6344 = vadd.f32 %v6004, %v6264
        %v6345 = vadd.f32 %v6005, %v6266
        %v6346 = vadd.f32 %v6006, %v6268
        %v6347 = vadd.f32 %v6007, %v6270
        %v6348 = vadd.f32 %v6008, %v6272
        %v6349 = vadd.f32 %v6009, %v6274
        %v6350 = vadd.f32 %v6010, %v6276
        %v6351 = vadd.f32 %v6011, %v6278
        %v6352 = vadd.f32 %v6012, %v6280
        %v6353 = vadd.f32 %v6013, %v6282
        %v6354 = vadd.f32 %v6014, %v6284
        %v6355 = vadd.f32 %v6015, %v6286
        %v6356 = vadd.f32 %v6016, %v6288
        %v6357 = vtanh.pop %v6323
        %v6358 = vtanh.pop %v6324
        %v6359 = vtanh.pop %v6325
        %v6360 = vtanh.pop %v6326
        %v6361 = vtanh.pop %v6327
        %v6362 = vtanh.pop %v6328
        %v6363 = vtanh.pop %v6329
        %v6364 = vtanh.pop %v6330
        %v6365 = vtanh.pop %v6331
        %v6366 = vtanh.pop %v6332
        %v6367 = vtanh.pop %v6333
        %v6368 = vtanh.pop %v6334
        %v6369 = vtanh.pop %v6335
        %v6370 = vtanh.pop %v6336
        %v6371 = vtanh.pop %v6337
        %v6372 = vtanh.pop %v6338
        %v6373 = vtanh.pop %v6339
        %v6374 = vtanh.pop %v6340
        %v6375 = vtanh.pop %v6341
        %v6376 = vtanh.pop %v6342
        %v6377 = vtanh.pop %v6343
        %v6378 = vtanh.pop %v6344
        %v6379 = vtanh.pop %v6345
        %v6380 = vtanh.pop %v6346
        %v6381 = vtanh.pop %v6347
        %v6382 = vtanh.pop %v6348
        %v6383 = vtanh.pop %v6349
        %v6384 = vtanh.pop %v6350
        %v6385 = vtanh.pop %v6351
        %v6386 = vtanh.pop %v6352
        %v6387 = vtanh.pop %v6353
        %v6388 = vtanh.pop %v6354
        %v6389 = vtanh.pop %v6355
        %v6390 = vtanh.pop %v6356
        %6425 = vrot.lane.b32.xlu0 %v6357, 32
        %v6426 = vpop.permute.xlu0 %6425
        %6427 = vrot.lane.b32.xlu0 %v6358, 32
        %v6428 = vpop.permute.xlu0 %6427
        %6429 = vrot.lane.b32.xlu0 %v6359, 32
        %v6430 = vpop.permute.xlu0 %6429
        %6431 = vrot.lane.b32.xlu0 %v6360, 32
        %v6432 = vpop.permute.xlu0 %6431
        %6433 = vrot.lane.b32.xlu0 %v6361, 32
        %v6434 = vpop.permute.xlu0 %6433
        %6435 = vrot.lane.b32.xlu0 %v6362, 32
        %v6436 = vpop.permute.xlu0 %6435
        %6437 = vrot.lane.b32.xlu0 %v6363, 32
        %v6438 = vpop.permute.xlu0 %6437
        %6439 = vrot.lane.b32.xlu0 %v6364, 32
        %v6440 = vpop.permute.xlu0 %6439
        %6441 = vrot.lane.b32.xlu0 %v6365, 32
        %v6442 = vpop.permute.xlu0 %6441
        %6443 = vrot.lane.b32.xlu0 %v6366, 32
        %v6444 = vpop.permute.xlu0 %6443
        %6445 = vrot.lane.b32.xlu0 %v6367, 32
        %v6446 = vpop.permute.xlu0 %6445
        %6447 = vrot.lane.b32.xlu0 %v6368, 32
        %v6448 = vpop.permute.xlu0 %6447
        %6449 = vrot.lane.b32.xlu0 %v6369, 32
        %v6450 = vpop.permute.xlu0 %6449
        %6451 = vrot.lane.b32.xlu0 %v6370, 32
        %v6452 = vpop.permute.xlu0 %6451
        %6453 = vrot.lane.b32.xlu0 %v6371, 32
        %v6454 = vpop.permute.xlu0 %6453
        %6455 = vrot.lane.b32.xlu0 %v6372, 32
        %v6456 = vpop.permute.xlu0 %6455
        %6457 = vrot.lane.b32.xlu0 %v6373, 32
        %v6458 = vpop.permute.xlu0 %6457
        %6459 = vrot.lane.b32.xlu0 %v6374, 32
        %v6460 = vpop.permute.xlu0 %6459
        %6461 = vrot.lane.b32.xlu0 %v6375, 32
        %v6462 = vpop.permute.xlu0 %6461
        %6463 = vrot.lane.b32.xlu0 %v6376, 32
        %v6464 = vpop.permute.xlu0 %6463
        %6465 = vrot.lane.b32.xlu0 %v6377, 32
        %v6466 = vpop.permute.xlu0 %6465
        %6467 = vrot.lane.b32.xlu0 %v6378, 32
        %v6468 = vpop.permute.xlu0 %6467
        %6469 = vrot.lane.b32.xlu0 %v6379, 32
        %v6470 = vpop.permute.xlu0 %6469
        %6471 = vrot.lane.b32.xlu0 %v6380, 32
        %v6472 = vpop.permute.xlu0 %6471
        %6473 = vrot.lane.b32.xlu0 %v6381, 32
        %v6474 = vpop.permute.xlu0 %6473
        %6475 = vrot.lane.b32.xlu0 %v6382, 32
        %v6476 = vpop.permute.xlu0 %6475
        %6477 = vrot.lane.b32.xlu0 %v6383, 32
        %v6478 = vpop.permute.xlu0 %6477
        %6479 = vrot.lane.b32.xlu0 %v6384, 32
        %v6480 = vpop.permute.xlu0 %6479
        %6481 = vrot.lane.b32.xlu0 %v6385, 32
        %v6482 = vpop.permute.xlu0 %6481
        %6483 = vrot.lane.b32.xlu0 %v6386, 32
        %v6484 = vpop.permute.xlu0 %6483
        %6485 = vrot.lane.b32.xlu0 %v6387, 32
        %v6486 = vpop.permute.xlu0 %6485
        %6487 = vrot.lane.b32.xlu0 %v6388, 32
        %v6488 = vpop.permute.xlu0 %6487
        %6489 = vrot.lane.b32.xlu0 %v6389, 32
        %v6490 = vpop.permute.xlu0 %6489
        %6491 = vrot.lane.b32.xlu0 %v6390, 32
        %v6492 = vpop.permute.xlu0 %6491
        %v6527 = vmul.f32 %v5283, %v6426
        %v6528 = vmul.f32 %v5298, %v6428
        %v6529 = vmul.f32 %v5313, %v6430
        %v6530 = vmul.f32 %v5328, %v6432
        %v6531 = vmul.f32 %v5343, %v6434
        %v6532 = vmul.f32 %v5358, %v6436
        %v6533 = vmul.f32 %v5373, %v6438
        %v6534 = vmul.f32 %v5388, %v6440
        %v6535 = vmul.f32 %v5403, %v6442
        %v6536 = vmul.f32 %v5418, %v6444
        %v6537 = vmul.f32 %v5433, %v6446
        %v6538 = vmul.f32 %v5448, %v6448
        %v6539 = vmul.f32 %v5463, %v6450
        %v6540 = vmul.f32 %v5478, %v6452
        %v6541 = vmul.f32 %v5493, %v6454
        %v6542 = vmul.f32 %v5508, %v6456
        %v6543 = vmul.f32 %v5523, %v6458
        %v6544 = vmul.f32 %v5538, %v6460
        %v6545 = vmul.f32 %v5553, %v6462
        %v6546 = vmul.f32 %v5568, %v6464
        %v6547 = vmul.f32 %v5583, %v6466
        %v6548 = vmul.f32 %v5598, %v6468
        %v6549 = vmul.f32 %v5613, %v6470
        %v6550 = vmul.f32 %v5628, %v6472
        %v6551 = vmul.f32 %v5643, %v6474
        %v6552 = vmul.f32 %v5658, %v6476
        %v6553 = vmul.f32 %v5673, %v6478
        %v6554 = vmul.f32 %v5688, %v6480
        %v6555 = vmul.f32 %v5703, %v6482
        %v6556 = vmul.f32 %v5718, %v6484
        %v6557 = vmul.f32 %v5733, %v6486
        %v6558 = vmul.f32 %v5748, %v6488
        %v6559 = vmul.f32 %v5763, %v6490
        %v6560 = vmul.f32 %v5778, %v6492
        %v6561 = vmul.f32 %v6527, %v1690
        %v6562 = vmul.f32 %v6528, %v1691
        %v6563 = vmul.f32 %v6529, %v1692
        %v6564 = vmul.f32 %v6530, %v1693
        %v6565 = vmul.f32 %v6531, %v1694
        %v6566 = vmul.f32 %v6532, %v1695
        %v6567 = vmul.f32 %v6533, %v1696
        %v6568 = vmul.f32 %v6534, %v1697
        %v6569 = vmul.f32 %v6535, %v1698
        %v6570 = vmul.f32 %v6536, %v1699
        %v6571 = vmul.f32 %v6537, %v1700
        %v6572 = vmul.f32 %v6538, %v1701
        %v6573 = vmul.f32 %v6539, %v1702
        %v6574 = vmul.f32 %v6540, %v1703
        %v6575 = vmul.f32 %v6541, %v1704
        %v6576 = vmul.f32 %v6542, %v1705
        %v6577 = vmul.f32 %v6543, %v1706
        %v6578 = vmul.f32 %v6544, %v1707
        %v6579 = vmul.f32 %v6545, %v1708
        %v6580 = vmul.f32 %v6546, %v1709
        %v6581 = vmul.f32 %v6547, %v1710
        %v6582 = vmul.f32 %v6548, %v1711
        %v6583 = vmul.f32 %v6549, %v1712
        %v6584 = vmul.f32 %v6550, %v1713
        %v6585 = vmul.f32 %v6551, %v1714
        %v6586 = vmul.f32 %v6552, %v1715
        %v6587 = vmul.f32 %v6553, %v1716
        %v6588 = vmul.f32 %v6554, %v1717
        %v6589 = vmul.f32 %v6555, %v1718
        %v6590 = vmul.f32 %v6556, %v1719
        %v6591 = vmul.f32 %v6557, %v1720
        %v6592 = vmul.f32 %v6558, %v1721
        %v6593 = vmul.f32 %v6559, %v1722
        %v6594 = vmul.f32 %v6560, %v1723
        %6629 = vrot.lane.b32.xlu0 %v6323, 96
        %v6630 = vpop.permute.xlu0 %6629
        %6631 = vrot.lane.b32.xlu0 %v6324, 96
        %v6632 = vpop.permute.xlu0 %6631
        %6633 = vrot.lane.b32.xlu0 %v6325, 96
        %v6634 = vpop.permute.xlu0 %6633
        %6635 = vrot.lane.b32.xlu0 %v6326, 96
        %v6636 = vpop.permute.xlu0 %6635
        %6637 = vrot.lane.b32.xlu0 %v6327, 96
        %v6638 = vpop.permute.xlu0 %6637
        %6639 = vrot.lane.b32.xlu0 %v6328, 96
        %v6640 = vpop.permute.xlu0 %6639
        %6641 = vrot.lane.b32.xlu0 %v6329, 96
        %v6642 = vpop.permute.xlu0 %6641
        %6643 = vrot.lane.b32.xlu0 %v6330, 96
        %v6644 = vpop.permute.xlu0 %6643
        %6645 = vrot.lane.b32.xlu0 %v6331, 96
        %v6646 = vpop.permute.xlu0 %6645
        %6647 = vrot.lane.b32.xlu0 %v6332, 96
        %v6648 = vpop.permute.xlu0 %6647
        %6649 = vrot.lane.b32.xlu0 %v6333, 96
        %v6650 = vpop.permute.xlu0 %6649
        %6651 = vrot.lane.b32.xlu0 %v6334, 96
        %v6652 = vpop.permute.xlu0 %6651
        %6653 = vrot.lane.b32.xlu0 %v6335, 96
        %v6654 = vpop.permute.xlu0 %6653
        %6655 = vrot.lane.b32.xlu0 %v6336, 96
        %v6656 = vpop.permute.xlu0 %6655
        %6657 = vrot.lane.b32.xlu0 %v6337, 96
        %v6658 = vpop.permute.xlu0 %6657
        %6659 = vrot.lane.b32.xlu0 %v6338, 96
        %v6660 = vpop.permute.xlu0 %6659
        %6661 = vrot.lane.b32.xlu0 %v6339, 96
        %v6662 = vpop.permute.xlu0 %6661
        %6663 = vrot.lane.b32.xlu0 %v6340, 96
        %v6664 = vpop.permute.xlu0 %6663
        %6665 = vrot.lane.b32.xlu0 %v6341, 96
        %v6666 = vpop.permute.xlu0 %6665
        %6667 = vrot.lane.b32.xlu0 %v6342, 96
        %v6668 = vpop.permute.xlu0 %6667
        %6669 = vrot.lane.b32.xlu0 %v6343, 96
        %v6670 = vpop.permute.xlu0 %6669
        %6671 = vrot.lane.b32.xlu0 %v6344, 96
        %v6672 = vpop.permute.xlu0 %6671
        %6673 = vrot.lane.b32.xlu0 %v6345, 96
        %v6674 = vpop.permute.xlu0 %6673
        %6675 = vrot.lane.b32.xlu0 %v6346, 96
        %v6676 = vpop.permute.xlu0 %6675
        %6677 = vrot.lane.b32.xlu0 %v6347, 96
        %v6678 = vpop.permute.xlu0 %6677
        %6679 = vrot.lane.b32.xlu0 %v6348, 96
        %v6680 = vpop.permute.xlu0 %6679
        %6681 = vrot.lane.b32.xlu0 %v6349, 96
        %v6682 = vpop.permute.xlu0 %6681
        %6683 = vrot.lane.b32.xlu0 %v6350, 96
        %v6684 = vpop.permute.xlu0 %6683
        %6685 = vrot.lane.b32.xlu0 %v6351, 96
        %v6686 = vpop.permute.xlu0 %6685
        %6687 = vrot.lane.b32.xlu0 %v6352, 96
        %v6688 = vpop.permute.xlu0 %6687
        %6689 = vrot.lane.b32.xlu0 %v6353, 96
        %v6690 = vpop.permute.xlu0 %6689
        %6691 = vrot.lane.b32.xlu0 %v6354, 96
        %v6692 = vpop.permute.xlu0 %6691
        %6693 = vrot.lane.b32.xlu0 %v6355, 96
        %v6694 = vpop.permute.xlu0 %6693
        %6695 = vrot.lane.b32.xlu0 %v6356, 96
        %v6696 = vpop.permute.xlu0 %6695
        %6731 = vst.msk [vmem:[#allocation3] sm:$0xff] %vm321, %v6630
        %6732 = vst.msk [vmem:[#allocation3 + $0x8] sm:$0xff] %vm321, %v6632
        %6733 = vst.msk [vmem:[#allocation3 + $0x10] sm:$0xff] %vm321, %v6634
        %6734 = vst.msk [vmem:[#allocation3 + $0x18] sm:$0xff] %vm321, %v6636
        %6735 = vst.msk [vmem:[#allocation3 + $0x20] sm:$0xff] %vm321, %v6638
        %6736 = vst.msk [vmem:[#allocation3 + $0x28] sm:$0xff] %vm321, %v6640
        %6737 = vst.msk [vmem:[#allocation3 + $0x30] sm:$0xff] %vm321, %v6642
        %6738 = vst.msk [vmem:[#allocation3 + $0x38] sm:$0xff] %vm321, %v6644
        %6739 = vst.msk [vmem:[#allocation3 + $0x40] sm:$0xff] %vm321, %v6646
        %6740 = vst.msk [vmem:[#allocation3 + $0x48] sm:$0xff] %vm321, %v6648
        %6741 = vst.msk [vmem:[#allocation3 + $0x50] sm:$0xff] %vm321, %v6650
        %6742 = vst.msk [vmem:[#allocation3 + $0x58] sm:$0xff] %vm321, %v6652
        %6743 = vst.msk [vmem:[#allocation3 + $0x60] sm:$0xff] %vm321, %v6654
        %6744 = vst.msk [vmem:[#allocation3 + $0x68] sm:$0xff] %vm321, %v6656
        %6745 = vst.msk [vmem:[#allocation3 + $0x70] sm:$0xff] %vm321, %v6658
        %6746 = vst.msk [vmem:[#allocation3 + $0x78] sm:$0xff] %vm321, %v6660
        %6747 = vst.msk [vmem:[#allocation3 + $0x80] sm:$0xff] %vm321, %v6662
        %6748 = vst.msk [vmem:[#allocation3 + $0x88] sm:$0xff] %vm321, %v6664
        %6749 = vst.msk [vmem:[#allocation3 + $0x90] sm:$0xff] %vm321, %v6666
        %6750 = vst.msk [vmem:[#allocation3 + $0x98] sm:$0xff] %vm321, %v6668
        %6751 = vst.msk [vmem:[#allocation3 + $0xa0] sm:$0xff] %vm321, %v6670
        %6752 = vst.msk [vmem:[#allocation3 + $0xa8] sm:$0xff] %vm321, %v6672
        %6753 = vst.msk [vmem:[#allocation3 + $0xb0] sm:$0xff] %vm321, %v6674
        %6754 = vst.msk [vmem:[#allocation3 + $0xb8] sm:$0xff] %vm321, %v6676
        %6755 = vst.msk [vmem:[#allocation3 + $0xc0] sm:$0xff] %vm321, %v6678
        %6756 = vst.msk [vmem:[#allocation3 + $0xc8] sm:$0xff] %vm321, %v6680
        %6757 = vst.msk [vmem:[#allocation3 + $0xd0] sm:$0xff] %vm321, %v6682
        %6758 = vst.msk [vmem:[#allocation3 + $0xd8] sm:$0xff] %vm321, %v6684
        %6759 = vst.msk [vmem:[#allocation3 + $0xe0] sm:$0xff] %vm321, %v6686
        %6760 = vst.msk [vmem:[#allocation3 + $0xe8] sm:$0xff] %vm321, %v6688
        %6761 = vst.msk [vmem:[#allocation3 + $0xf0] sm:$0xff] %vm321, %v6690
        %6762 = vst.msk [vmem:[#allocation3 + $0xf8] sm:$0xff] %vm321, %v6692
        %6763 = vst.msk [vmem:[#allocation3 + $0x100] sm:$0xff] %vm321, %v6694
        %6764 = vst.msk [vmem:[#allocation3 + $0x108] sm:$0xff] %vm321, %v6696
        %v6765 = vpack.c.bf16 %v6561, %v6561
        %v6766 = vpack.c.bf16 %v6562, %v6562
        %v6767 = vpack.c.bf16 %v6563, %v6563
        %v6768 = vpack.c.bf16 %v6564, %v6564
        %v6769 = vpack.c.bf16 %v6565, %v6565
        %v6770 = vpack.c.bf16 %v6566, %v6566
        %v6771 = vpack.c.bf16 %v6567, %v6567
        %v6772 = vpack.c.bf16 %v6568, %v6568
        %v6773 = vpack.c.bf16 %v6569, %v6569
        %v6774 = vpack.c.bf16 %v6570, %v6570
        %v6775 = vpack.c.bf16 %v6571, %v6571
        %v6776 = vpack.c.bf16 %v6572, %v6572
        %v6777 = vpack.c.bf16 %v6573, %v6573
        %v6778 = vpack.c.bf16 %v6574, %v6574
        %v6779 = vpack.c.bf16 %v6575, %v6575
        %v6780 = vpack.c.bf16 %v6576, %v6576
        %v6781 = vpack.c.bf16 %v6577, %v6577
        %v6782 = vpack.c.bf16 %v6578, %v6578
        %v6783 = vpack.c.bf16 %v6579, %v6579
        %v6784 = vpack.c.bf16 %v6580, %v6580
        %v6785 = vpack.c.bf16 %v6581, %v6581
        %v6786 = vpack.c.bf16 %v6582, %v6582
        %v6787 = vpack.c.bf16 %v6583, %v6583
        %v6788 = vpack.c.bf16 %v6584, %v6584
        %v6789 = vpack.c.bf16 %v6585, %v6585
        %v6790 = vpack.c.bf16 %v6586, %v6586
        %v6791 = vpack.c.bf16 %v6587, %v6587
        %v6792 = vpack.c.bf16 %v6588, %v6588
        %v6793 = vpack.c.bf16 %v6589, %v6589
        %v6794 = vpack.c.bf16 %v6590, %v6590
        %v6795 = vpack.c.bf16 %v6591, %v6591
        %v6796 = vpack.c.bf16 %v6592, %v6592
        %v6797 = vpack.c.bf16 %v6593, %v6593
        %v6798 = vpack.c.bf16 %v6594, %v6594
        %6833 = vrot.lane.b32.xlu0 %v6765, 64
        %v6834 = vpop.permute.xlu0 %6833
        %6835 = vrot.lane.b32.xlu0 %v6766, 64
        %v6836 = vpop.permute.xlu0 %6835
        %6837 = vrot.lane.b32.xlu0 %v6767, 64
        %v6838 = vpop.permute.xlu0 %6837
        %6839 = vrot.lane.b32.xlu0 %v6768, 64
        %v6840 = vpop.permute.xlu0 %6839
        %6841 = vrot.lane.b32.xlu0 %v6769, 64
        %v6842 = vpop.permute.xlu0 %6841
        %6843 = vrot.lane.b32.xlu0 %v6770, 64
        %v6844 = vpop.permute.xlu0 %6843
        %6845 = vrot.lane.b32.xlu0 %v6771, 64
        %v6846 = vpop.permute.xlu0 %6845
        %6847 = vrot.lane.b32.xlu0 %v6772, 64
        %v6848 = vpop.permute.xlu0 %6847
        %6849 = vrot.lane.b32.xlu0 %v6773, 64
        %v6850 = vpop.permute.xlu0 %6849
        %6851 = vrot.lane.b32.xlu0 %v6774, 64
        %v6852 = vpop.permute.xlu0 %6851
        %6853 = vrot.lane.b32.xlu0 %v6775, 64
        %v6854 = vpop.permute.xlu0 %6853
        %6855 = vrot.lane.b32.xlu0 %v6776, 64
        %v6856 = vpop.permute.xlu0 %6855
        %6857 = vrot.lane.b32.xlu0 %v6777, 64
        %v6858 = vpop.permute.xlu0 %6857
        %6859 = vrot.lane.b32.xlu0 %v6778, 64
        %v6860 = vpop.permute.xlu0 %6859
        %6861 = vrot.lane.b32.xlu0 %v6779, 64
        %v6862 = vpop.permute.xlu0 %6861
        %6863 = vrot.lane.b32.xlu0 %v6780, 64
        %v6864 = vpop.permute.xlu0 %6863
        %6865 = vrot.lane.b32.xlu0 %v6781, 64
        %v6866 = vpop.permute.xlu0 %6865
        %6867 = vrot.lane.b32.xlu0 %v6782, 64
        %v6868 = vpop.permute.xlu0 %6867
        %6869 = vrot.lane.b32.xlu0 %v6783, 64
        %v6870 = vpop.permute.xlu0 %6869
        %6871 = vrot.lane.b32.xlu0 %v6784, 64
        %v6872 = vpop.permute.xlu0 %6871
        %6873 = vrot.lane.b32.xlu0 %v6785, 64
        %v6874 = vpop.permute.xlu0 %6873
        %6875 = vrot.lane.b32.xlu0 %v6786, 64
        %v6876 = vpop.permute.xlu0 %6875
        %6877 = vrot.lane.b32.xlu0 %v6787, 64
        %v6878 = vpop.permute.xlu0 %6877
        %6879 = vrot.lane.b32.xlu0 %v6788, 64
        %v6880 = vpop.permute.xlu0 %6879
        %6881 = vrot.lane.b32.xlu0 %v6789, 64
        %v6882 = vpop.permute.xlu0 %6881
        %6883 = vrot.lane.b32.xlu0 %v6790, 64
        %v6884 = vpop.permute.xlu0 %6883
        %6885 = vrot.lane.b32.xlu0 %v6791, 64
        %v6886 = vpop.permute.xlu0 %6885
        %6887 = vrot.lane.b32.xlu0 %v6792, 64
        %v6888 = vpop.permute.xlu0 %6887
        %6889 = vrot.lane.b32.xlu0 %v6793, 64
        %v6890 = vpop.permute.xlu0 %6889
        %6891 = vrot.lane.b32.xlu0 %v6794, 64
        %v6892 = vpop.permute.xlu0 %6891
        %6893 = vrot.lane.b32.xlu0 %v6795, 64
        %v6894 = vpop.permute.xlu0 %6893
        %6895 = vrot.lane.b32.xlu0 %v6796, 64
        %v6896 = vpop.permute.xlu0 %6895
        %6897 = vrot.lane.b32.xlu0 %v6797, 64
        %v6898 = vpop.permute.xlu0 %6897
        %6899 = vrot.lane.b32.xlu0 %v6798, 64
        %v6900 = vpop.permute.xlu0 %6899
        %vm6935 = vcmask 257024
        %6936 = vst.msk [vmem:[#allocation2 + $0xc] sm:$0xf] %vm6935, %v6834
        %6937 = vst.msk [vmem:[#allocation2 + $0x10] sm:$0xf] %vm6935, %v6836
        %6938 = vst.msk [vmem:[#allocation2 + $0x14] sm:$0xf] %vm6935, %v6838
        %6939 = vst.msk [vmem:[#allocation2 + $0x18] sm:$0xf] %vm6935, %v6840
        %6940 = vst.msk [vmem:[#allocation2 + $0x1c] sm:$0xf] %vm6935, %v6842
        %6941 = vst.msk [vmem:[#allocation2 + $0x20] sm:$0xf] %vm6935, %v6844
        %6942 = vst.msk [vmem:[#allocation2 + $0x24] sm:$0xf] %vm6935, %v6846
        %6943 = vst.msk [vmem:[#allocation2 + $0x28] sm:$0xf] %vm6935, %v6848
        %6944 = vst.msk [vmem:[#allocation2 + $0x2c] sm:$0xf] %vm6935, %v6850
        %6945 = vst.msk [vmem:[#allocation2 + $0x30] sm:$0xf] %vm6935, %v6852
        %6946 = vst.msk [vmem:[#allocation2 + $0x34] sm:$0xf] %vm6935, %v6854
        %6947 = vst.msk [vmem:[#allocation2 + $0x38] sm:$0xf] %vm6935, %v6856
        %6948 = vst.msk [vmem:[#allocation2 + $0x3c] sm:$0xf] %vm6935, %v6858
        %6949 = vst.msk [vmem:[#allocation2 + $0x40] sm:$0xf] %vm6935, %v6860
        %6950 = vst.msk [vmem:[#allocation2 + $0x44] sm:$0xf] %vm6935, %v6862
        %6951 = vst.msk [vmem:[#allocation2 + $0x48] sm:$0xf] %vm6935, %v6864
        %6952 = vst.msk [vmem:[#allocation2 + $0x4c] sm:$0xf] %vm6935, %v6866
        %6953 = vst.msk [vmem:[#allocation2 + $0x50] sm:$0xf] %vm6935, %v6868
        %6954 = vst.msk [vmem:[#allocation2 + $0x54] sm:$0xf] %vm6935, %v6870
        %6955 = vst.msk [vmem:[#allocation2 + $0x58] sm:$0xf] %vm6935, %v6872
        %6956 = vst.msk [vmem:[#allocation2 + $0x5c] sm:$0xf] %vm6935, %v6874
        %6957 = vst.msk [vmem:[#allocation2 + $0x60] sm:$0xf] %vm6935, %v6876
        %6958 = vst.msk [vmem:[#allocation2 + $0x64] sm:$0xf] %vm6935, %v6878
        %6959 = vst.msk [vmem:[#allocation2 + $0x68] sm:$0xf] %vm6935, %v6880
        %6960 = vst.msk [vmem:[#allocation2 + $0x6c] sm:$0xf] %vm6935, %v6882
        %6961 = vst.msk [vmem:[#allocation2 + $0x70] sm:$0xf] %vm6935, %v6884
        %6962 = vst.msk [vmem:[#allocation2 + $0x74] sm:$0xf] %vm6935, %v6886
        %6963 = vst.msk [vmem:[#allocation2 + $0x78] sm:$0xf] %vm6935, %v6888
        %6964 = vst.msk [vmem:[#allocation2 + $0x7c] sm:$0xf] %vm6935, %v6890
        %6965 = vst.msk [vmem:[#allocation2 + $0x80] sm:$0xf] %vm6935, %v6892
        %6966 = vst.msk [vmem:[#allocation2 + $0x84] sm:$0xf] %vm6935, %v6894
        %6967 = vst.msk [vmem:[#allocation2 + $0x88] sm:$0xf] %vm6935, %v6896
        %6968 = vst.msk [vmem:[#allocation2 + $0x8c] sm:$0xf] %vm6935, %v6898
        %6969 = vst.msk [vmem:[#allocation2 + $0x90] sm:$0xf] %vm6935, %v6900
        %6970 = vrot.lane.b32.xlu0 %v6765, 96
        %v6971 = vpop.permute.xlu0 %6970
        %6972 = vrot.lane.b32.xlu0 %v6766, 96
        %v6973 = vpop.permute.xlu0 %6972
        %6974 = vrot.lane.b32.xlu0 %v6767, 96
        %v6975 = vpop.permute.xlu0 %6974
        %6976 = vrot.lane.b32.xlu0 %v6768, 96
        %v6977 = vpop.permute.xlu0 %6976
        %6978 = vrot.lane.b32.xlu0 %v6769, 96
        %v6979 = vpop.permute.xlu0 %6978
        %6980 = vrot.lane.b32.xlu0 %v6770, 96
        %v6981 = vpop.permute.xlu0 %6980
        %6982 = vrot.lane.b32.xlu0 %v6771, 96
        %v6983 = vpop.permute.xlu0 %6982
        %6984 = vrot.lane.b32.xlu0 %v6772, 96
        %v6985 = vpop.permute.xlu0 %6984
        %6986 = vrot.lane.b32.xlu0 %v6773, 96
        %v6987 = vpop.permute.xlu0 %6986
        %6988 = vrot.lane.b32.xlu0 %v6774, 96
        %v6989 = vpop.permute.xlu0 %6988
        %6990 = vrot.lane.b32.xlu0 %v6775, 96
        %v6991 = vpop.permute.xlu0 %6990
        %6992 = vrot.lane.b32.xlu0 %v6776, 96
        %v6993 = vpop.permute.xlu0 %6992
        %6994 = vrot.lane.b32.xlu0 %v6777, 96
        %v6995 = vpop.permute.xlu0 %6994
        %6996 = vrot.lane.b32.xlu0 %v6778, 96
        %v6997 = vpop.permute.xlu0 %6996
        %6998 = vrot.lane.b32.xlu0 %v6779, 96
        %v6999 = vpop.permute.xlu0 %6998
        %7000 = vrot.lane.b32.xlu0 %v6780, 96
        %v7001 = vpop.permute.xlu0 %7000
        %7002 = vrot.lane.b32.xlu0 %v6781, 96
        %v7003 = vpop.permute.xlu0 %7002
        %7004 = vrot.lane.b32.xlu0 %v6782, 96
        %v7005 = vpop.permute.xlu0 %7004
        %7006 = vrot.lane.b32.xlu0 %v6783, 96
        %v7007 = vpop.permute.xlu0 %7006
        %7008 = vrot.lane.b32.xlu0 %v6784, 96
        %v7009 = vpop.permute.xlu0 %7008
        %7010 = vrot.lane.b32.xlu0 %v6785, 96
        %v7011 = vpop.permute.xlu0 %7010
        %7012 = vrot.lane.b32.xlu0 %v6786, 96
        %v7013 = vpop.permute.xlu0 %7012
        %7014 = vrot.lane.b32.xlu0 %v6787, 96
        %v7015 = vpop.permute.xlu0 %7014
        %7016 = vrot.lane.b32.xlu0 %v6788, 96
        %v7017 = vpop.permute.xlu0 %7016
        %7018 = vrot.lane.b32.xlu0 %v6789, 96
        %v7019 = vpop.permute.xlu0 %7018
        %7020 = vrot.lane.b32.xlu0 %v6790, 96
        %v7021 = vpop.permute.xlu0 %7020
        %7022 = vrot.lane.b32.xlu0 %v6791, 96
        %v7023 = vpop.permute.xlu0 %7022
        %7024 = vrot.lane.b32.xlu0 %v6792, 96
        %v7025 = vpop.permute.xlu0 %7024
        %7026 = vrot.lane.b32.xlu0 %v6793, 96
        %v7027 = vpop.permute.xlu0 %7026
        %7028 = vrot.lane.b32.xlu0 %v6794, 96
        %v7029 = vpop.permute.xlu0 %7028
        %7030 = vrot.lane.b32.xlu0 %v6795, 96
        %v7031 = vpop.permute.xlu0 %7030
        %7032 = vrot.lane.b32.xlu0 %v6796, 96
        %v7033 = vpop.permute.xlu0 %7032
        %7034 = vrot.lane.b32.xlu0 %v6797, 96
        %v7035 = vpop.permute.xlu0 %7034
        %7036 = vrot.lane.b32.xlu0 %v6798, 96
        %v7037 = vpop.permute.xlu0 %7036
        %vm7072 = vcmask 519424
        %7073 = vst.msk [vmem:[#allocation4 + $0xc] sm:$0xf] %vm7072, %v6971
        %7074 = vst.msk [vmem:[#allocation4 + $0x10] sm:$0xf] %vm7072, %v6973
        %7075 = vst.msk [vmem:[#allocation4 + $0x14] sm:$0xf] %vm7072, %v6975
        %7076 = vst.msk [vmem:[#allocation4 + $0x18] sm:$0xf] %vm7072, %v6977
        %7077 = vst.msk [vmem:[#allocation4 + $0x1c] sm:$0xf] %vm7072, %v6979
        %7078 = vst.msk [vmem:[#allocation4 + $0x20] sm:$0xf] %vm7072, %v6981
        %7079 = vst.msk [vmem:[#allocation4 + $0x24] sm:$0xf] %vm7072, %v6983
        %7080 = vst.msk [vmem:[#allocation4 + $0x28] sm:$0xf] %vm7072, %v6985
        %7081 = vst.msk [vmem:[#allocation4 + $0x2c] sm:$0xf] %vm7072, %v6987
        %7082 = vst.msk [vmem:[#allocation4 + $0x30] sm:$0xf] %vm7072, %v6989
        %7083 = vst.msk [vmem:[#allocation4 + $0x34] sm:$0xf] %vm7072, %v6991
        %7084 = vst.msk [vmem:[#allocation4 + $0x38] sm:$0xf] %vm7072, %v6993
        %7085 = vst.msk [vmem:[#allocation4 + $0x3c] sm:$0xf] %vm7072, %v6995
        %7086 = vst.msk [vmem:[#allocation4 + $0x40] sm:$0xf] %vm7072, %v6997
        %7087 = vst.msk [vmem:[#allocation4 + $0x44] sm:$0xf] %vm7072, %v6999
        %7088 = vst.msk [vmem:[#allocation4 + $0x48] sm:$0xf] %vm7072, %v7001
        %7089 = vst.msk [vmem:[#allocation4 + $0x4c] sm:$0xf] %vm7072, %v7003
        %7090 = vst.msk [vmem:[#allocation4 + $0x50] sm:$0xf] %vm7072, %v7005
        %7091 = vst.msk [vmem:[#allocation4 + $0x54] sm:$0xf] %vm7072, %v7007
        %7092 = vst.msk [vmem:[#allocation4 + $0x58] sm:$0xf] %vm7072, %v7009
        %7093 = vst.msk [vmem:[#allocation4 + $0x5c] sm:$0xf] %vm7072, %v7011
        %7094 = vst.msk [vmem:[#allocation4 + $0x60] sm:$0xf] %vm7072, %v7013
        %7095 = vst.msk [vmem:[#allocation4 + $0x64] sm:$0xf] %vm7072, %v7015
        %7096 = vst.msk [vmem:[#allocation4 + $0x68] sm:$0xf] %vm7072, %v7017
        %7097 = vst.msk [vmem:[#allocation4 + $0x6c] sm:$0xf] %vm7072, %v7019
        %7098 = vst.msk [vmem:[#allocation4 + $0x70] sm:$0xf] %vm7072, %v7021
        %7099 = vst.msk [vmem:[#allocation4 + $0x74] sm:$0xf] %vm7072, %v7023
        %7100 = vst.msk [vmem:[#allocation4 + $0x78] sm:$0xf] %vm7072, %v7025
        %7101 = vst.msk [vmem:[#allocation4 + $0x7c] sm:$0xf] %vm7072, %v7027
        %7102 = vst.msk [vmem:[#allocation4 + $0x80] sm:$0xf] %vm7072, %v7029
        %7103 = vst.msk [vmem:[#allocation4 + $0x84] sm:$0xf] %vm7072, %v7031
        %7104 = vst.msk [vmem:[#allocation4 + $0x88] sm:$0xf] %vm7072, %v7033
        %7105 = vst.msk [vmem:[#allocation4 + $0x8c] sm:$0xf] %vm7072, %v7035
        %7106 = vst.msk [vmem:[#allocation4 + $0x90] sm:$0xf] %vm7072, %v7037
        %v7107 = vld [vmem:[%s4] sm:$0x1]
        %v7109 = vperm.slane %v7107, 0
        %v7111 = vld [vmem:[#allocation4] sm:$0x8]
        %v7112 = vld [vmem:[#allocation4 + $0x4] sm:$0xf]
        %v7113 = vld [vmem:[#allocation4 + $0x8] sm:$0xf]
        %v7114 = vld [vmem:[#allocation4 + $0xc] sm:$0xf]
        %v7115 = vld [vmem:[#allocation4 + $0x10] sm:$0xf]
        %v7116 = vld [vmem:[#allocation4 + $0x14] sm:$0xf]
        %v7117 = vld [vmem:[#allocation4 + $0x18] sm:$0xf]
        %v7118 = vld [vmem:[#allocation4 + $0x1c] sm:$0xf]
        %v7119 = vld [vmem:[#allocation4 + $0x20] sm:$0xf]
        %v7120 = vld [vmem:[#allocation4 + $0x24] sm:$0xf]
        %v7121 = vld [vmem:[#allocation4 + $0x28] sm:$0xf]
        %v7122 = vld [vmem:[#allocation4 + $0x2c] sm:$0xf]
        %v7123 = vld [vmem:[#allocation4 + $0x30] sm:$0xf]
        %v7124 = vld [vmem:[#allocation4 + $0x34] sm:$0xf]
        %v7125 = vld [vmem:[#allocation4 + $0x38] sm:$0xf]
        %v7126 = vld [vmem:[#allocation4 + $0x3c] sm:$0xf]
        %v7127 = vld [vmem:[#allocation4 + $0x40] sm:$0xf]
        %v7128 = vld [vmem:[#allocation4 + $0x44] sm:$0xf]
        %v7129 = vld [vmem:[#allocation4 + $0x48] sm:$0xf]
        %v7130 = vld [vmem:[#allocation4 + $0x4c] sm:$0xf]
        %v7131 = vld [vmem:[#allocation4 + $0x50] sm:$0xf]
        %v7132 = vld [vmem:[#allocation4 + $0x54] sm:$0xf]
        %v7133 = vld [vmem:[#allocation4 + $0x58] sm:$0xf]
        %v7134 = vld [vmem:[#allocation4 + $0x5c] sm:$0xf]
        %v7135 = vld [vmem:[#allocation4 + $0x60] sm:$0xf]
        %v7136 = vld [vmem:[#allocation4 + $0x64] sm:$0xf]
        %v7137 = vld [vmem:[#allocation4 + $0x68] sm:$0xf]
        %v7138 = vld [vmem:[#allocation4 + $0x6c] sm:$0xf]
        %v7139 = vld [vmem:[#allocation4 + $0x70] sm:$0xf]
        %v7140 = vld [vmem:[#allocation4 + $0x74] sm:$0xf]
        %v7141 = vld [vmem:[#allocation4 + $0x78] sm:$0xf]
        %v7142 = vld [vmem:[#allocation4 + $0x7c] sm:$0xf]
        %v7143 = vld [vmem:[#allocation4 + $0x80] sm:$0xf]
        %v7144 = vld [vmem:[#allocation4 + $0x84] sm:$0xf]
        %v7145 = vld [vmem:[#allocation4 + $0x88] sm:$0x7]
        %v7146 = vld [vmem:[%s3] sm:$0xf]
        %v7147 = vld [vmem:[%s3 + $0x4] sm:$0xf]
        %v7148 = vld [vmem:[%s3 + $0x8] sm:$0xf]
        %v7149 = vld [vmem:[%s3 + $0xc] sm:$0xf]
        %v7150 = vld [vmem:[%s3 + $0x10] sm:$0xf]
        %v7151 = vld [vmem:[%s3 + $0x14] sm:$0xf]
        %v7152 = vld [vmem:[%s3 + $0x18] sm:$0xf]
        %v7153 = vld [vmem:[%s3 + $0x1c] sm:$0xf]
        %v7189 = vunpack.c.l.b16 %v7111
        %v7190 = vunpack.c.l.b16 %v7112
        %v7191 = vunpack.c.l.b16 %v7113
        %v7192 = vunpack.c.l.b16 %v7114
        %v7193 = vunpack.c.l.b16 %v7115
        %v7194 = vunpack.c.l.b16 %v7116
        %v7195 = vunpack.c.l.b16 %v7117
        %v7196 = vunpack.c.l.b16 %v7118
        %v7197 = vunpack.c.l.b16 %v7119
        %v7198 = vunpack.c.l.b16 %v7120
        %v7199 = vunpack.c.l.b16 %v7121
        %v7200 = vunpack.c.l.b16 %v7122
        %v7201 = vunpack.c.l.b16 %v7123
        %v7202 = vunpack.c.l.b16 %v7124
        %v7203 = vunpack.c.l.b16 %v7125
        %v7204 = vunpack.c.l.b16 %v7126
        %v7205 = vunpack.c.l.b16 %v7127
        %v7206 = vunpack.c.l.b16 %v7128
        %v7207 = vunpack.c.l.b16 %v7129
        %v7208 = vunpack.c.l.b16 %v7130
        %v7209 = vunpack.c.l.b16 %v7131
        %v7210 = vunpack.c.l.b16 %v7132
        %v7211 = vunpack.c.l.b16 %v7133
        %v7212 = vunpack.c.l.b16 %v7134
        %v7213 = vunpack.c.l.b16 %v7135
        %v7214 = vunpack.c.l.b16 %v7136
        %v7215 = vunpack.c.l.b16 %v7137
        %v7216 = vunpack.c.l.b16 %v7138
        %v7217 = vunpack.c.l.b16 %v7139
        %v7218 = vunpack.c.l.b16 %v7140
        %v7219 = vunpack.c.l.b16 %v7141
        %v7220 = vunpack.c.l.b16 %v7142
        %v7221 = vunpack.c.l.b16 %v7143
        %v7222 = vunpack.c.l.b16 %v7144
        %v7223 = vunpack.c.l.b16 %v7145
        %v7224 = vpack.c.b16 %v7190, %v7189
        %v7225 = vpack.c.b16 %v7192, %v7191
        %v7226 = vpack.c.b16 %v7194, %v7193
        %v7227 = vpack.c.b16 %v7196, %v7195
        %v7228 = vpack.c.b16 %v7198, %v7197
        %v7229 = vpack.c.b16 %v7200, %v7199
        %v7230 = vpack.c.b16 %v7202, %v7201
        %v7231 = vpack.c.b16 %v7204, %v7203
        %v7232 = vpack.c.b16 %v7206, %v7205
        %v7233 = vpack.c.b16 %v7208, %v7207
        %v7234 = vpack.c.b16 %v7210, %v7209
        %v7235 = vpack.c.b16 %v7212, %v7211
        %v7236 = vpack.c.b16 %v7214, %v7213
        %v7237 = vpack.c.b16 %v7216, %v7215
        %v7238 = vpack.c.b16 %v7218, %v7217
        %v7239 = vpack.c.b16 %v7220, %v7219
        %v7240 = vpack.c.b16 %v7222, %v7221
        %v7241 = vpack.c.b16 %v7223, %v7223
        %v7242 = vrot.slane %v7224, 3
        %v7243 = vrot.slane %v7225, 3
        %v7244 = vsel %vm2104, %v7242, %v7243
        %v7245 = vrot.slane %v7226, 3
        %v7246 = vsel %vm2104, %v7243, %v7245
        %v7247 = vrot.slane %v7227, 3
        %v7248 = vsel %vm2104, %v7245, %v7247
        %v7249 = vrot.slane %v7228, 3
        %v7250 = vsel %vm2104, %v7247, %v7249
        %v7251 = vrot.slane %v7229, 3
        %v7252 = vsel %vm2104, %v7249, %v7251
        %v7253 = vrot.slane %v7230, 3
        %v7254 = vsel %vm2104, %v7251, %v7253
        %v7255 = vrot.slane %v7231, 3
        %v7256 = vsel %vm2104, %v7253, %v7255
        %v7257 = vrot.slane %v7232, 3
        %v7258 = vsel %vm2104, %v7255, %v7257
        %v7259 = vrot.slane %v7233, 3
        %v7260 = vsel %vm2104, %v7257, %v7259
        %v7261 = vrot.slane %v7234, 3
        %v7262 = vsel %vm2104, %v7259, %v7261
        %v7263 = vrot.slane %v7235, 3
        %v7264 = vsel %vm2104, %v7261, %v7263
        %v7265 = vrot.slane %v7236, 3
        %v7266 = vsel %vm2104, %v7263, %v7265
        %v7267 = vrot.slane %v7237, 3
        %v7268 = vsel %vm2104, %v7265, %v7267
        %v7269 = vrot.slane %v7238, 3
        %v7270 = vsel %vm2104, %v7267, %v7269
        %v7271 = vrot.slane %v7239, 3
        %v7272 = vsel %vm2104, %v7269, %v7271
        %v7273 = vrot.slane %v7240, 3
        %v7274 = vsel %vm2104, %v7271, %v7273
        %v7275 = vrot.slane %v7241, 3
        %v7276 = vsel %vm2104, %v7273, %v7275
        %v7285 = vunpack.c.l.b16 %v7146
        %v7286 = vunpack.c.l.b16 %v7147
        %v7287 = vunpack.c.l.b16 %v7148
        %v7288 = vunpack.c.l.b16 %v7149
        %v7289 = vunpack.c.l.b16 %v7150
        %v7290 = vunpack.c.l.b16 %v7151
        %v7291 = vunpack.c.l.b16 %v7152
        %v7292 = vunpack.c.l.b16 %v7153
        %v7293 = vpack.c.b16 %v7286, %v7285
        %v7294 = vpack.c.b16 %v7288, %v7287
        %v7295 = vpack.c.b16 %v7290, %v7289
        %v7296 = vpack.c.b16 %v7292, %v7291
        %vm7301 = vcmask 523264
        %v7303 = vsel %vm7301, %v7244, 0
        %v7306 = vsel %vm7301, %v7246, 0
        %v7309 = vsel %vm7301, %v7248, 0
        %v7312 = vsel %vm7301, %v7250, 0
        %v7315 = vsel %vm7301, %v7252, 0
        %v7318 = vsel %vm7301, %v7254, 0
        %v7321 = vsel %vm7301, %v7256, 0
        %v7324 = vsel %vm7301, %v7258, 0
        %v7327 = vsel %vm7301, %v7260, 0
        %v7330 = vsel %vm7301, %v7262, 0
        %v7333 = vsel %vm7301, %v7264, 0
        %v7336 = vsel %vm7301, %v7266, 0
        %v7339 = vsel %vm7301, %v7268, 0
        %v7342 = vsel %vm7301, %v7270, 0
        %v7345 = vsel %vm7301, %v7272, 0
        %v7348 = vsel %vm7301, %v7274, 0
        %v7351 = vsel %vm7301, %v7276, 0
        %7353 = vmatpush.bf16.msra.mxu0 0
        %7354 = vmatpush.bf16.msra.mxu0 0
        %7355 = vmatpush.bf16.msra.mxu0 0
        %7356 = vmatpush.bf16.msra.mxu0 0
        %7357 = vmatpush.bf16.msra.mxu0 %v7296
        %7358 = vmatpush.bf16.msra.mxu0 %v7295
        %7359 = vmatpush.bf16.msra.mxu0 %v7294
        %7360 = vmatpush.bf16.msra.mxu0 %v7293
        %7361 = vmatmul.bf16.gmra.mxu0 %v7303
        %v7362 = vpop.f32.mrf.mxu0
        %v7363 = vadd.f32 0.0, %v7362
        %v7364 = vpop.f32.mrf.mxu0
        %v7365 = vadd.f32 0.0, %v7364
        %7366 = vmatmul.bf16.gmra.mxu0 %v7306
        %v7367 = vpop.f32.mrf.mxu0
        %v7368 = vadd.f32 0.0, %v7367
        %v7369 = vpop.f32.mrf.mxu0
        %v7370 = vadd.f32 0.0, %v7369
        %7371 = vmatmul.bf16.gmra.mxu0 %v7309
        %v7372 = vpop.f32.mrf.mxu0
        %v7373 = vadd.f32 0.0, %v7372
        %v7374 = vpop.f32.mrf.mxu0
        %v7375 = vadd.f32 0.0, %v7374
        %7376 = vmatmul.bf16.gmra.mxu0 %v7312
        %v7377 = vpop.f32.mrf.mxu0
        %v7378 = vadd.f32 0.0, %v7377
        %v7379 = vpop.f32.mrf.mxu0
        %v7380 = vadd.f32 0.0, %v7379
        %7381 = vmatmul.bf16.gmra.mxu0 %v7315
        %v7382 = vpop.f32.mrf.mxu0
        %v7383 = vadd.f32 0.0, %v7382
        %v7384 = vpop.f32.mrf.mxu0
        %v7385 = vadd.f32 0.0, %v7384
        %7386 = vmatmul.bf16.gmra.mxu0 %v7318
        %v7387 = vpop.f32.mrf.mxu0
        %v7388 = vadd.f32 0.0, %v7387
        %v7389 = vpop.f32.mrf.mxu0
        %v7390 = vadd.f32 0.0, %v7389
        %7391 = vmatmul.bf16.gmra.mxu0 %v7321
        %v7392 = vpop.f32.mrf.mxu0
        %v7393 = vadd.f32 0.0, %v7392
        %v7394 = vpop.f32.mrf.mxu0
        %v7395 = vadd.f32 0.0, %v7394
        %7396 = vmatmul.bf16.gmra.mxu0 %v7324
        %v7397 = vpop.f32.mrf.mxu0
        %v7398 = vadd.f32 0.0, %v7397
        %v7399 = vpop.f32.mrf.mxu0
        %v7400 = vadd.f32 0.0, %v7399
        %7401 = vmatmul.bf16.gmra.mxu0 %v7327
        %v7402 = vpop.f32.mrf.mxu0
        %v7403 = vadd.f32 0.0, %v7402
        %v7404 = vpop.f32.mrf.mxu0
        %v7405 = vadd.f32 0.0, %v7404
        %7406 = vmatmul.bf16.gmra.mxu0 %v7330
        %v7407 = vpop.f32.mrf.mxu0
        %v7408 = vadd.f32 0.0, %v7407
        %v7409 = vpop.f32.mrf.mxu0
        %v7410 = vadd.f32 0.0, %v7409
        %7411 = vmatmul.bf16.gmra.mxu0 %v7333
        %v7412 = vpop.f32.mrf.mxu0
        %v7413 = vadd.f32 0.0, %v7412
        %v7414 = vpop.f32.mrf.mxu0
        %v7415 = vadd.f32 0.0, %v7414
        %7416 = vmatmul.bf16.gmra.mxu0 %v7336
        %v7417 = vpop.f32.mrf.mxu0
        %v7418 = vadd.f32 0.0, %v7417
        %v7419 = vpop.f32.mrf.mxu0
        %v7420 = vadd.f32 0.0, %v7419
        %7421 = vmatmul.bf16.gmra.mxu0 %v7339
        %v7422 = vpop.f32.mrf.mxu0
        %v7423 = vadd.f32 0.0, %v7422
        %v7424 = vpop.f32.mrf.mxu0
        %v7425 = vadd.f32 0.0, %v7424
        %7426 = vmatmul.bf16.gmra.mxu0 %v7342
        %v7427 = vpop.f32.mrf.mxu0
        %v7428 = vadd.f32 0.0, %v7427
        %v7429 = vpop.f32.mrf.mxu0
        %v7430 = vadd.f32 0.0, %v7429
        %7431 = vmatmul.bf16.gmra.mxu0 %v7345
        %v7432 = vpop.f32.mrf.mxu0
        %v7433 = vadd.f32 0.0, %v7432
        %v7434 = vpop.f32.mrf.mxu0
        %v7435 = vadd.f32 0.0, %v7434
        %7436 = vmatmul.bf16.gmra.mxu0 %v7348
        %v7437 = vpop.f32.mrf.mxu0
        %v7438 = vadd.f32 0.0, %v7437
        %v7439 = vpop.f32.mrf.mxu0
        %v7440 = vadd.f32 0.0, %v7439
        %7441 = vmatmul.bf16.gmra.mxu0 %v7351
        %v7442 = vpop.f32.mrf.mxu0
        %v7443 = vadd.f32 0.0, %v7442
        %v7444 = vpop.f32.mrf.mxu0
        %v7445 = vadd.f32 0.0, %v7444
        %7446 = vdwg.mxu0
        %v7447 = vadd.f32 %v7109, %v7363
        %v7448 = vadd.f32 %v7109, %v7365
        %v7449 = vadd.f32 %v7109, %v7368
        %v7450 = vadd.f32 %v7109, %v7370
        %v7451 = vadd.f32 %v7109, %v7373
        %v7452 = vadd.f32 %v7109, %v7375
        %v7453 = vadd.f32 %v7109, %v7378
        %v7454 = vadd.f32 %v7109, %v7380
        %v7455 = vadd.f32 %v7109, %v7383
        %v7456 = vadd.f32 %v7109, %v7385
        %v7457 = vadd.f32 %v7109, %v7388
        %v7458 = vadd.f32 %v7109, %v7390
        %v7459 = vadd.f32 %v7109, %v7393
        %v7460 = vadd.f32 %v7109, %v7395
        %v7461 = vadd.f32 %v7109, %v7398
        %v7462 = vadd.f32 %v7109, %v7400
        %v7463 = vadd.f32 %v7109, %v7403
        %v7464 = vadd.f32 %v7109, %v7405
        %v7465 = vadd.f32 %v7109, %v7408
        %v7466 = vadd.f32 %v7109, %v7410
        %v7467 = vadd.f32 %v7109, %v7413
        %v7468 = vadd.f32 %v7109, %v7415
        %v7469 = vadd.f32 %v7109, %v7418
        %v7470 = vadd.f32 %v7109, %v7420
        %v7471 = vadd.f32 %v7109, %v7423
        %v7472 = vadd.f32 %v7109, %v7425
        %v7473 = vadd.f32 %v7109, %v7428
        %v7474 = vadd.f32 %v7109, %v7430
        %v7475 = vadd.f32 %v7109, %v7433
        %v7476 = vadd.f32 %v7109, %v7435
        %v7477 = vadd.f32 %v7109, %v7438
        %v7478 = vadd.f32 %v7109, %v7440
        %v7479 = vadd.f32 %v7109, %v7443
        %v7480 = vadd.f32 %v7109, %v7445
        %v7481 = vld [vmem:[#allocation4 + $0x88] sm:$0xf]
        %s7482 = scalar_lea.vmem %s3, 32
        %v7483 = vld [vmem:[%s7482] sm:$0xf]
        %v7484 = vld [vmem:[%s7482 + $0x4] sm:$0xf]
        %v7485 = vld [vmem:[%s7482 + $0x8] sm:$0xf]
        %v7486 = vld [vmem:[%s7482 + $0xc] sm:$0xf]
        %v7487 = vld [vmem:[%s7482 + $0x10] sm:$0xf]
        %v7488 = vld [vmem:[%s7482 + $0x14] sm:$0xf]
        %v7489 = vld [vmem:[%s7482 + $0x18] sm:$0xf]
        %v7490 = vld [vmem:[%s7482 + $0x1c] sm:$0xf]
        %v7492 = vunpack.c.l.b16 %v7481
        %v7493 = vpack.c.b16 %v7492, %v7492
        %v7495 = vshrl.u32 %v7224, 16
        %v7497 = vrot.slane %v7495, 3
        %v7498 = vshll.u32 %v7224, 16
        %v7500 = vrot.slane %v7498, 4
        %v7501 = vor.u32 %v7497, %v7500
        %v7503 = vshrl.u32 %v7225, 16
        %v7505 = vrot.slane %v7503, 3
        %v7506 = vshll.u32 %v7225, 16
        %v7508 = vrot.slane %v7506, 4
        %v7509 = vor.u32 %v7505, %v7508
        %v7510 = vsel %vm2349, %v7501, %v7509
        %v7512 = vshrl.u32 %v7226, 16
        %v7514 = vrot.slane %v7512, 3
        %v7515 = vshll.u32 %v7226, 16
        %v7517 = vrot.slane %v7515, 4
        %v7518 = vor.u32 %v7514, %v7517
        %v7519 = vsel %vm2349, %v7509, %v7518
        %v7521 = vshrl.u32 %v7227, 16
        %v7523 = vrot.slane %v7521, 3
        %v7524 = vshll.u32 %v7227, 16
        %v7526 = vrot.slane %v7524, 4
        %v7527 = vor.u32 %v7523, %v7526
        %v7528 = vsel %vm2349, %v7518, %v7527
        %v7530 = vshrl.u32 %v7228, 16
        %v7532 = vrot.slane %v7530, 3
        %v7533 = vshll.u32 %v7228, 16
        %v7535 = vrot.slane %v7533, 4
        %v7536 = vor.u32 %v7532, %v7535
        %v7537 = vsel %vm2349, %v7527, %v7536
        %v7539 = vshrl.u32 %v7229, 16
        %v7541 = vrot.slane %v7539, 3
        %v7542 = vshll.u32 %v7229, 16
        %v7544 = vrot.slane %v7542, 4
        %v7545 = vor.u32 %v7541, %v7544
        %v7546 = vsel %vm2349, %v7536, %v7545
        %v7548 = vshrl.u32 %v7230, 16
        %v7550 = vrot.slane %v7548, 3
        %v7551 = vshll.u32 %v7230, 16
        %v7553 = vrot.slane %v7551, 4
        %v7554 = vor.u32 %v7550, %v7553
        %v7555 = vsel %vm2349, %v7545, %v7554
        %v7557 = vshrl.u32 %v7231, 16
        %v7559 = vrot.slane %v7557, 3
        %v7560 = vshll.u32 %v7231, 16
        %v7562 = vrot.slane %v7560, 4
        %v7563 = vor.u32 %v7559, %v7562
        %v7564 = vsel %vm2349, %v7554, %v7563
        %v7566 = vshrl.u32 %v7232, 16
        %v7568 = vrot.slane %v7566, 3
        %v7569 = vshll.u32 %v7232, 16
        %v7571 = vrot.slane %v7569, 4
        %v7572 = vor.u32 %v7568, %v7571
        %v7573 = vsel %vm2349, %v7563, %v7572
        %v7575 = vshrl.u32 %v7233, 16
        %v7577 = vrot.slane %v7575, 3
        %v7578 = vshll.u32 %v7233, 16
        %v7580 = vrot.slane %v7578, 4
        %v7581 = vor.u32 %v7577, %v7580
        %v7582 = vsel %vm2349, %v7572, %v7581
        %v7584 = vshrl.u32 %v7234, 16
        %v7586 = vrot.slane %v7584, 3
        %v7587 = vshll.u32 %v7234, 16
        %v7589 = vrot.slane %v7587, 4
        %v7590 = vor.u32 %v7586, %v7589
        %v7591 = vsel %vm2349, %v7581, %v7590
        %v7593 = vshrl.u32 %v7235, 16
        %v7595 = vrot.slane %v7593, 3
        %v7596 = vshll.u32 %v7235, 16
        %v7598 = vrot.slane %v7596, 4
        %v7599 = vor.u32 %v7595, %v7598
        %v7600 = vsel %vm2349, %v7590, %v7599
        %v7602 = vshrl.u32 %v7236, 16
        %v7604 = vrot.slane %v7602, 3
        %v7605 = vshll.u32 %v7236, 16
        %v7607 = vrot.slane %v7605, 4
        %v7608 = vor.u32 %v7604, %v7607
        %v7609 = vsel %vm2349, %v7599, %v7608
        %v7611 = vshrl.u32 %v7237, 16
        %v7613 = vrot.slane %v7611, 3
        %v7614 = vshll.u32 %v7237, 16
        %v7616 = vrot.slane %v7614, 4
        %v7617 = vor.u32 %v7613, %v7616
        %v7618 = vsel %vm2349, %v7608, %v7617
        %v7620 = vshrl.u32 %v7238, 16
        %v7622 = vrot.slane %v7620, 3
        %v7623 = vshll.u32 %v7238, 16
        %v7625 = vrot.slane %v7623, 4
        %v7626 = vor.u32 %v7622, %v7625
        %v7627 = vsel %vm2349, %v7617, %v7626
        %v7629 = vshrl.u32 %v7239, 16
        %v7631 = vrot.slane %v7629, 3
        %v7632 = vshll.u32 %v7239, 16
        %v7634 = vrot.slane %v7632, 4
        %v7635 = vor.u32 %v7631, %v7634
        %v7636 = vsel %vm2349, %v7626, %v7635
        %v7638 = vshrl.u32 %v7240, 16
        %v7640 = vrot.slane %v7638, 3
        %v7641 = vshll.u32 %v7240, 16
        %v7643 = vrot.slane %v7641, 4
        %v7644 = vor.u32 %v7640, %v7643
        %v7645 = vsel %vm2349, %v7635, %v7644
        %v7647 = vshrl.u32 %v7493, 16
        %v7649 = vrot.slane %v7647, 3
        %v7650 = vshll.u32 %v7493, 16
        %v7652 = vrot.slane %v7650, 4
        %v7653 = vor.u32 %v7649, %v7652
        %v7654 = vsel %vm2349, %v7644, %v7653
        %v7663 = vunpack.c.l.b16 %v7483
        %v7664 = vunpack.c.l.b16 %v7484
        %v7665 = vunpack.c.l.b16 %v7485
        %v7666 = vunpack.c.l.b16 %v7486
        %v7667 = vunpack.c.l.b16 %v7487
        %v7668 = vunpack.c.l.b16 %v7488
        %v7669 = vunpack.c.l.b16 %v7489
        %v7670 = vunpack.c.l.b16 %v7490
        %v7671 = vpack.c.b16 %v7664, %v7663
        %v7672 = vpack.c.b16 %v7666, %v7665
        %v7673 = vpack.c.b16 %v7668, %v7667
        %v7674 = vpack.c.b16 %v7670, %v7669
        %v7680 = vsel %vm7301, %v7510, 0
        %v7683 = vsel %vm7301, %v7519, 0
        %v7686 = vsel %vm7301, %v7528, 0
        %v7689 = vsel %vm7301, %v7537, 0
        %v7692 = vsel %vm7301, %v7546, 0
        %v7695 = vsel %vm7301, %v7555, 0
        %v7698 = vsel %vm7301, %v7564, 0
        %v7701 = vsel %vm7301, %v7573, 0
        %v7704 = vsel %vm7301, %v7582, 0
        %v7707 = vsel %vm7301, %v7591, 0
        %v7710 = vsel %vm7301, %v7600, 0
        %v7713 = vsel %vm7301, %v7609, 0
        %v7716 = vsel %vm7301, %v7618, 0
        %v7719 = vsel %vm7301, %v7627, 0
        %v7722 = vsel %vm7301, %v7636, 0
        %v7725 = vsel %vm7301, %v7645, 0
        %v7728 = vsel %vm7301, %v7654, 0
        %7730 = vmatpush.bf16.msra.mxu0 0
        %7731 = vmatpush.bf16.msra.mxu0 0
        %7732 = vmatpush.bf16.msra.mxu0 0
        %7733 = vmatpush.bf16.msra.mxu0 0
        %7734 = vmatpush.bf16.msra.mxu0 %v7674
        %7735 = vmatpush.bf16.msra.mxu0 %v7673
        %7736 = vmatpush.bf16.msra.mxu0 %v7672
        %7737 = vmatpush.bf16.msra.mxu0 %v7671
        %7738 = vmatmul.bf16.gmra.mxu0 %v7680
        %v7739 = vpop.f32.mrf.mxu0
        %v7740 = vadd.f32 0.0, %v7739
        %v7741 = vpop.f32.mrf.mxu0
        %v7742 = vadd.f32 0.0, %v7741
        %7743 = vmatmul.bf16.gmra.mxu0 %v7683
        %v7744 = vpop.f32.mrf.mxu0
        %v7745 = vadd.f32 0.0, %v7744
        %v7746 = vpop.f32.mrf.mxu0
        %v7747 = vadd.f32 0.0, %v7746
        %7748 = vmatmul.bf16.gmra.mxu0 %v7686
        %v7749 = vpop.f32.mrf.mxu0
        %v7750 = vadd.f32 0.0, %v7749
        %v7751 = vpop.f32.mrf.mxu0
        %v7752 = vadd.f32 0.0, %v7751
        %7753 = vmatmul.bf16.gmra.mxu0 %v7689
        %v7754 = vpop.f32.mrf.mxu0
        %v7755 = vadd.f32 0.0, %v7754
        %v7756 = vpop.f32.mrf.mxu0
        %v7757 = vadd.f32 0.0, %v7756
        %7758 = vmatmul.bf16.gmra.mxu0 %v7692
        %v7759 = vpop.f32.mrf.mxu0
        %v7760 = vadd.f32 0.0, %v7759
        %v7761 = vpop.f32.mrf.mxu0
        %v7762 = vadd.f32 0.0, %v7761
        %7763 = vmatmul.bf16.gmra.mxu0 %v7695
        %v7764 = vpop.f32.mrf.mxu0
        %v7765 = vadd.f32 0.0, %v7764
        %v7766 = vpop.f32.mrf.mxu0
        %v7767 = vadd.f32 0.0, %v7766
        %7768 = vmatmul.bf16.gmra.mxu0 %v7698
        %v7769 = vpop.f32.mrf.mxu0
        %v7770 = vadd.f32 0.0, %v7769
        %v7771 = vpop.f32.mrf.mxu0
        %v7772 = vadd.f32 0.0, %v7771
        %7773 = vmatmul.bf16.gmra.mxu0 %v7701
        %v7774 = vpop.f32.mrf.mxu0
        %v7775 = vadd.f32 0.0, %v7774
        %v7776 = vpop.f32.mrf.mxu0
        %v7777 = vadd.f32 0.0, %v7776
        %7778 = vmatmul.bf16.gmra.mxu0 %v7704
        %v7779 = vpop.f32.mrf.mxu0
        %v7780 = vadd.f32 0.0, %v7779
        %v7781 = vpop.f32.mrf.mxu0
        %v7782 = vadd.f32 0.0, %v7781
        %7783 = vmatmul.bf16.gmra.mxu0 %v7707
        %v7784 = vpop.f32.mrf.mxu0
        %v7785 = vadd.f32 0.0, %v7784
        %v7786 = vpop.f32.mrf.mxu0
        %v7787 = vadd.f32 0.0, %v7786
        %7788 = vmatmul.bf16.gmra.mxu0 %v7710
        %v7789 = vpop.f32.mrf.mxu0
        %v7790 = vadd.f32 0.0, %v7789
        %v7791 = vpop.f32.mrf.mxu0
        %v7792 = vadd.f32 0.0, %v7791
        %7793 = vmatmul.bf16.gmra.mxu0 %v7713
        %v7794 = vpop.f32.mrf.mxu0
        %v7795 = vadd.f32 0.0, %v7794
        %v7796 = vpop.f32.mrf.mxu0
        %v7797 = vadd.f32 0.0, %v7796
        %7798 = vmatmul.bf16.gmra.mxu0 %v7716
        %v7799 = vpop.f32.mrf.mxu0
        %v7800 = vadd.f32 0.0, %v7799
        %v7801 = vpop.f32.mrf.mxu0
        %v7802 = vadd.f32 0.0, %v7801
        %7803 = vmatmul.bf16.gmra.mxu0 %v7719
        %v7804 = vpop.f32.mrf.mxu0
        %v7805 = vadd.f32 0.0, %v7804
        %v7806 = vpop.f32.mrf.mxu0
        %v7807 = vadd.f32 0.0, %v7806
        %7808 = vmatmul.bf16.gmra.mxu0 %v7722
        %v7809 = vpop.f32.mrf.mxu0
        %v7810 = vadd.f32 0.0, %v7809
        %v7811 = vpop.f32.mrf.mxu0
        %v7812 = vadd.f32 0.0, %v7811
        %7813 = vmatmul.bf16.gmra.mxu0 %v7725
        %v7814 = vpop.f32.mrf.mxu0
        %v7815 = vadd.f32 0.0, %v7814
        %v7816 = vpop.f32.mrf.mxu0
        %v7817 = vadd.f32 0.0, %v7816
        %7818 = vmatmul.bf16.gmra.mxu0 %v7728
        %v7819 = vpop.f32.mrf.mxu0
        %v7820 = vadd.f32 0.0, %v7819
        %v7821 = vpop.f32.mrf.mxu0
        %v7822 = vadd.f32 0.0, %v7821
        %7823 = vdwg.mxu0
        %v7824 = vadd.f32 %v7447, %v7740
        %v7825 = vadd.f32 %v7448, %v7742
        %v7826 = vadd.f32 %v7449, %v7745
        %v7827 = vadd.f32 %v7450, %v7747
        %v7828 = vadd.f32 %v7451, %v7750
        %v7829 = vadd.f32 %v7452, %v7752
        %v7830 = vadd.f32 %v7453, %v7755
        %v7831 = vadd.f32 %v7454, %v7757
        %v7832 = vadd.f32 %v7455, %v7760
        %v7833 = vadd.f32 %v7456, %v7762
        %v7834 = vadd.f32 %v7457, %v7765
        %v7835 = vadd.f32 %v7458, %v7767
        %v7836 = vadd.f32 %v7459, %v7770
        %v7837 = vadd.f32 %v7460, %v7772
        %v7838 = vadd.f32 %v7461, %v7775
        %v7839 = vadd.f32 %v7462, %v7777
        %v7840 = vadd.f32 %v7463, %v7780
        %v7841 = vadd.f32 %v7464, %v7782
        %v7842 = vadd.f32 %v7465, %v7785
        %v7843 = vadd.f32 %v7466, %v7787
        %v7844 = vadd.f32 %v7467, %v7790
        %v7845 = vadd.f32 %v7468, %v7792
        %v7846 = vadd.f32 %v7469, %v7795
        %v7847 = vadd.f32 %v7470, %v7797
        %v7848 = vadd.f32 %v7471, %v7800
        %v7849 = vadd.f32 %v7472, %v7802
        %v7850 = vadd.f32 %v7473, %v7805
        %v7851 = vadd.f32 %v7474, %v7807
        %v7852 = vadd.f32 %v7475, %v7810
        %v7853 = vadd.f32 %v7476, %v7812
        %v7854 = vadd.f32 %v7477, %v7815
        %v7855 = vadd.f32 %v7478, %v7817
        %v7856 = vadd.f32 %v7479, %v7820
        %v7857 = vadd.f32 %v7480, %v7822
        %s7858 = scalar_lea.vmem %s3, 64
        %v7859 = vld [vmem:[%s7858] sm:$0xf]
        %v7860 = vld [vmem:[%s7858 + $0x4] sm:$0xf]
        %v7861 = vld [vmem:[%s7858 + $0x8] sm:$0xf]
        %v7862 = vld [vmem:[%s7858 + $0xc] sm:$0xf]
        %v7863 = vld [vmem:[%s7858 + $0x10] sm:$0xf]
        %v7864 = vld [vmem:[%s7858 + $0x14] sm:$0xf]
        %v7865 = vld [vmem:[%s7858 + $0x18] sm:$0xf]
        %v7866 = vld [vmem:[%s7858 + $0x1c] sm:$0xf]
        %v7867 = vpack.c.b16 %v7191, %v7190
        %v7868 = vpack.c.b16 %v7193, %v7192
        %v7869 = vpack.c.b16 %v7195, %v7194
        %v7870 = vpack.c.b16 %v7197, %v7196
        %v7871 = vpack.c.b16 %v7199, %v7198
        %v7872 = vpack.c.b16 %v7201, %v7200
        %v7873 = vpack.c.b16 %v7203, %v7202
        %v7874 = vpack.c.b16 %v7205, %v7204
        %v7875 = vpack.c.b16 %v7207, %v7206
        %v7876 = vpack.c.b16 %v7209, %v7208
        %v7877 = vpack.c.b16 %v7211, %v7210
        %v7878 = vpack.c.b16 %v7213, %v7212
        %v7879 = vpack.c.b16 %v7215, %v7214
        %v7880 = vpack.c.b16 %v7217, %v7216
        %v7881 = vpack.c.b16 %v7219, %v7218
        %v7882 = vpack.c.b16 %v7221, %v7220
        %v7883 = vpack.c.b16 %v7492, %v7222
        %v7892 = vunpack.c.l.b16 %v7859
        %v7893 = vunpack.c.l.b16 %v7860
        %v7894 = vunpack.c.l.b16 %v7861
        %v7895 = vunpack.c.l.b16 %v7862
        %v7896 = vunpack.c.l.b16 %v7863
        %v7897 = vunpack.c.l.b16 %v7864
        %v7898 = vunpack.c.l.b16 %v7865
        %v7899 = vunpack.c.l.b16 %v7866
        %v7900 = vpack.c.b16 %v7893, %v7892
        %v7901 = vpack.c.b16 %v7895, %v7894
        %v7902 = vpack.c.b16 %v7897, %v7896
        %v7903 = vpack.c.b16 %v7899, %v7898
        %v7909 = vsel %vm7301, %v7867, 0
        %v7912 = vsel %vm7301, %v7868, 0
        %v7915 = vsel %vm7301, %v7869, 0
        %v7918 = vsel %vm7301, %v7870, 0
        %v7921 = vsel %vm7301, %v7871, 0
        %v7924 = vsel %vm7301, %v7872, 0
        %v7927 = vsel %vm7301, %v7873, 0
        %v7930 = vsel %vm7301, %v7874, 0
        %v7933 = vsel %vm7301, %v7875, 0
        %v7936 = vsel %vm7301, %v7876, 0
        %v7939 = vsel %vm7301, %v7877, 0
        %v7942 = vsel %vm7301, %v7878, 0
        %v7945 = vsel %vm7301, %v7879, 0
        %v7948 = vsel %vm7301, %v7880, 0
        %v7951 = vsel %vm7301, %v7881, 0
        %v7954 = vsel %vm7301, %v7882, 0
        %v7957 = vsel %vm7301, %v7883, 0
        %7959 = vmatpush.bf16.msra.mxu0 0
        %7960 = vmatpush.bf16.msra.mxu0 0
        %7961 = vmatpush.bf16.msra.mxu0 0
        %7962 = vmatpush.bf16.msra.mxu0 0
        %7963 = vmatpush.bf16.msra.mxu0 %v7903
        %7964 = vmatpush.bf16.msra.mxu0 %v7902
        %7965 = vmatpush.bf16.msra.mxu0 %v7901
        %7966 = vmatpush.bf16.msra.mxu0 %v7900
        %7967 = vmatmul.bf16.gmra.mxu0 %v7909
        %v7968 = vpop.f32.mrf.mxu0
        %v7969 = vadd.f32 0.0, %v7968
        %v7970 = vpop.f32.mrf.mxu0
        %v7971 = vadd.f32 0.0, %v7970
        %7972 = vmatmul.bf16.gmra.mxu0 %v7912
        %v7973 = vpop.f32.mrf.mxu0
        %v7974 = vadd.f32 0.0, %v7973
        %v7975 = vpop.f32.mrf.mxu0
        %v7976 = vadd.f32 0.0, %v7975
        %7977 = vmatmul.bf16.gmra.mxu0 %v7915
        %v7978 = vpop.f32.mrf.mxu0
        %v7979 = vadd.f32 0.0, %v7978
        %v7980 = vpop.f32.mrf.mxu0
        %v7981 = vadd.f32 0.0, %v7980
        %7982 = vmatmul.bf16.gmra.mxu0 %v7918
        %v7983 = vpop.f32.mrf.mxu0
        %v7984 = vadd.f32 0.0, %v7983
        %v7985 = vpop.f32.mrf.mxu0
        %v7986 = vadd.f32 0.0, %v7985
        %7987 = vmatmul.bf16.gmra.mxu0 %v7921
        %v7988 = vpop.f32.mrf.mxu0
        %v7989 = vadd.f32 0.0, %v7988
        %v7990 = vpop.f32.mrf.mxu0
        %v7991 = vadd.f32 0.0, %v7990
        %7992 = vmatmul.bf16.gmra.mxu0 %v7924
        %v7993 = vpop.f32.mrf.mxu0
        %v7994 = vadd.f32 0.0, %v7993
        %v7995 = vpop.f32.mrf.mxu0
        %v7996 = vadd.f32 0.0, %v7995
        %7997 = vmatmul.bf16.gmra.mxu0 %v7927
        %v7998 = vpop.f32.mrf.mxu0
        %v7999 = vadd.f32 0.0, %v7998
        %v8000 = vpop.f32.mrf.mxu0
        %v8001 = vadd.f32 0.0, %v8000
        %8002 = vmatmul.bf16.gmra.mxu0 %v7930
        %v8003 = vpop.f32.mrf.mxu0
        %v8004 = vadd.f32 0.0, %v8003
        %v8005 = vpop.f32.mrf.mxu0
        %v8006 = vadd.f32 0.0, %v8005
        %8007 = vmatmul.bf16.gmra.mxu0 %v7933
        %v8008 = vpop.f32.mrf.mxu0
        %v8009 = vadd.f32 0.0, %v8008
        %v8010 = vpop.f32.mrf.mxu0
        %v8011 = vadd.f32 0.0, %v8010
        %8012 = vmatmul.bf16.gmra.mxu0 %v7936
        %v8013 = vpop.f32.mrf.mxu0
        %v8014 = vadd.f32 0.0, %v8013
        %v8015 = vpop.f32.mrf.mxu0
        %v8016 = vadd.f32 0.0, %v8015
        %8017 = vmatmul.bf16.gmra.mxu0 %v7939
        %v8018 = vpop.f32.mrf.mxu0
        %v8019 = vadd.f32 0.0, %v8018
        %v8020 = vpop.f32.mrf.mxu0
        %v8021 = vadd.f32 0.0, %v8020
        %8022 = vmatmul.bf16.gmra.mxu0 %v7942
        %v8023 = vpop.f32.mrf.mxu0
        %v8024 = vadd.f32 0.0, %v8023
        %v8025 = vpop.f32.mrf.mxu0
        %v8026 = vadd.f32 0.0, %v8025
        %8027 = vmatmul.bf16.gmra.mxu0 %v7945
        %v8028 = vpop.f32.mrf.mxu0
        %v8029 = vadd.f32 0.0, %v8028
        %v8030 = vpop.f32.mrf.mxu0
        %v8031 = vadd.f32 0.0, %v8030
        %8032 = vmatmul.bf16.gmra.mxu0 %v7948
        %v8033 = vpop.f32.mrf.mxu0
        %v8034 = vadd.f32 0.0, %v8033
        %v8035 = vpop.f32.mrf.mxu0
        %v8036 = vadd.f32 0.0, %v8035
        %8037 = vmatmul.bf16.gmra.mxu0 %v7951
        %v8038 = vpop.f32.mrf.mxu0
        %v8039 = vadd.f32 0.0, %v8038
        %v8040 = vpop.f32.mrf.mxu0
        %v8041 = vadd.f32 0.0, %v8040
        %8042 = vmatmul.bf16.gmra.mxu0 %v7954
        %v8043 = vpop.f32.mrf.mxu0
        %v8044 = vadd.f32 0.0, %v8043
        %v8045 = vpop.f32.mrf.mxu0
        %v8046 = vadd.f32 0.0, %v8045
        %8047 = vmatmul.bf16.gmra.mxu0 %v7957
        %v8048 = vpop.f32.mrf.mxu0
        %v8049 = vadd.f32 0.0, %v8048
        %v8050 = vpop.f32.mrf.mxu0
        %v8051 = vadd.f32 0.0, %v8050
        %8052 = vdwg.mxu0
        %v8053 = vadd.f32 %v7824, %v7969
        %v8054 = vadd.f32 %v7825, %v7971
        %v8055 = vadd.f32 %v7826, %v7974
        %v8056 = vadd.f32 %v7827, %v7976
        %v8057 = vadd.f32 %v7828, %v7979
        %v8058 = vadd.f32 %v7829, %v7981
        %v8059 = vadd.f32 %v7830, %v7984
        %v8060 = vadd.f32 %v7831, %v7986
        %v8061 = vadd.f32 %v7832, %v7989
        %v8062 = vadd.f32 %v7833, %v7991
        %v8063 = vadd.f32 %v7834, %v7994
        %v8064 = vadd.f32 %v7835, %v7996
        %v8065 = vadd.f32 %v7836, %v7999
        %v8066 = vadd.f32 %v7837, %v8001
        %v8067 = vadd.f32 %v7838, %v8004
        %v8068 = vadd.f32 %v7839, %v8006
        %v8069 = vadd.f32 %v7840, %v8009
        %v8070 = vadd.f32 %v7841, %v8011
        %v8071 = vadd.f32 %v7842, %v8014
        %v8072 = vadd.f32 %v7843, %v8016
        %v8073 = vadd.f32 %v7844, %v8019
        %v8074 = vadd.f32 %v7845, %v8021
        %v8075 = vadd.f32 %v7846, %v8024
        %v8076 = vadd.f32 %v7847, %v8026
        %v8077 = vadd.f32 %v7848, %v8029
        %v8078 = vadd.f32 %v7849, %v8031
        %v8079 = vadd.f32 %v7850, %v8034
        %v8080 = vadd.f32 %v7851, %v8036
        %v8081 = vadd.f32 %v7852, %v8039
        %v8082 = vadd.f32 %v7853, %v8041
        %v8083 = vadd.f32 %v7854, %v8044
        %v8084 = vadd.f32 %v7855, %v8046
        %v8085 = vadd.f32 %v7856, %v8049
        %v8086 = vadd.f32 %v7857, %v8051
        %v8087 = vld [vmem:[#allocation4 + $0x8] sm:$0x8]
        %v8088 = vld [vmem:[#allocation4 + $0xc] sm:$0xf]
        %v8089 = vld [vmem:[#allocation4 + $0x10] sm:$0xf]
        %v8090 = vld [vmem:[#allocation4 + $0x14] sm:$0xf]
        %v8091 = vld [vmem:[#allocation4 + $0x18] sm:$0xf]
        %v8092 = vld [vmem:[#allocation4 + $0x1c] sm:$0xf]
        %v8093 = vld [vmem:[#allocation4 + $0x20] sm:$0xf]
        %v8094 = vld [vmem:[#allocation4 + $0x24] sm:$0xf]
        %v8095 = vld [vmem:[#allocation4 + $0x28] sm:$0xf]
        %v8096 = vld [vmem:[#allocation4 + $0x2c] sm:$0xf]
        %v8097 = vld [vmem:[#allocation4 + $0x30] sm:$0xf]
        %v8098 = vld [vmem:[#allocation4 + $0x34] sm:$0xf]
        %v8099 = vld [vmem:[#allocation4 + $0x38] sm:$0xf]
        %v8100 = vld [vmem:[#allocation4 + $0x3c] sm:$0xf]
        %v8101 = vld [vmem:[#allocation4 + $0x40] sm:$0xf]
        %v8102 = vld [vmem:[#allocation4 + $0x44] sm:$0xf]
        %v8103 = vld [vmem:[#allocation4 + $0x48] sm:$0xf]
        %v8104 = vld [vmem:[#allocation4 + $0x4c] sm:$0xf]
        %v8105 = vld [vmem:[#allocation4 + $0x50] sm:$0xf]
        %v8106 = vld [vmem:[#allocation4 + $0x54] sm:$0xf]
        %v8107 = vld [vmem:[#allocation4 + $0x58] sm:$0xf]
        %v8108 = vld [vmem:[#allocation4 + $0x5c] sm:$0xf]
        %v8109 = vld [vmem:[#allocation4 + $0x60] sm:$0xf]
        %v8110 = vld [vmem:[#allocation4 + $0x64] sm:$0xf]
        %v8111 = vld [vmem:[#allocation4 + $0x68] sm:$0xf]
        %v8112 = vld [vmem:[#allocation4 + $0x6c] sm:$0xf]
        %v8113 = vld [vmem:[#allocation4 + $0x70] sm:$0xf]
        %v8114 = vld [vmem:[#allocation4 + $0x74] sm:$0xf]
        %v8115 = vld [vmem:[#allocation4 + $0x78] sm:$0xf]
        %v8116 = vld [vmem:[#allocation4 + $0x7c] sm:$0xf]
        %v8117 = vld [vmem:[#allocation4 + $0x80] sm:$0xf]
        %v8118 = vld [vmem:[#allocation4 + $0x84] sm:$0xf]
        %v8119 = vld [vmem:[#allocation4 + $0x88] sm:$0xf]
        %v8120 = vld [vmem:[#allocation4 + $0x8c] sm:$0xf]
        %v8121 = vld [vmem:[#allocation4 + $0x90] sm:$0xf]
        %s8122 = scalar_lea.vmem %s3, 96
        %v8123 = vld [vmem:[%s8122] sm:$0xf]
        %v8124 = vld [vmem:[%s8122 + $0x4] sm:$0xf]
        %v8125 = vld [vmem:[%s8122 + $0x8] sm:$0xf]
        %v8126 = vld [vmem:[%s8122 + $0xc] sm:$0xf]
        %v8127 = vld [vmem:[%s8122 + $0x10] sm:$0xf]
        %v8128 = vld [vmem:[%s8122 + $0x14] sm:$0xf]
        %v8129 = vld [vmem:[%s8122 + $0x18] sm:$0xf]
        %v8130 = vld [vmem:[%s8122 + $0x1c] sm:$0xf]
        %v8166 = vunpack.c.l.b16 %v8087
        %v8167 = vunpack.c.l.b16 %v8088
        %v8168 = vunpack.c.l.b16 %v8089
        %v8169 = vunpack.c.l.b16 %v8090
        %v8170 = vunpack.c.l.b16 %v8091
        %v8171 = vunpack.c.l.b16 %v8092
        %v8172 = vunpack.c.l.b16 %v8093
        %v8173 = vunpack.c.l.b16 %v8094
        %v8174 = vunpack.c.l.b16 %v8095
        %v8175 = vunpack.c.l.b16 %v8096
        %v8176 = vunpack.c.l.b16 %v8097
        %v8177 = vunpack.c.l.b16 %v8098
        %v8178 = vunpack.c.l.b16 %v8099
        %v8179 = vunpack.c.l.b16 %v8100
        %v8180 = vunpack.c.l.b16 %v8101
        %v8181 = vunpack.c.l.b16 %v8102
        %v8182 = vunpack.c.l.b16 %v8103
        %v8183 = vunpack.c.l.b16 %v8104
        %v8184 = vunpack.c.l.b16 %v8105
        %v8185 = vunpack.c.l.b16 %v8106
        %v8186 = vunpack.c.l.b16 %v8107
        %v8187 = vunpack.c.l.b16 %v8108
        %v8188 = vunpack.c.l.b16 %v8109
        %v8189 = vunpack.c.l.b16 %v8110
        %v8190 = vunpack.c.l.b16 %v8111
        %v8191 = vunpack.c.l.b16 %v8112
        %v8192 = vunpack.c.l.b16 %v8113
        %v8193 = vunpack.c.l.b16 %v8114
        %v8194 = vunpack.c.l.b16 %v8115
        %v8195 = vunpack.c.l.b16 %v8116
        %v8196 = vunpack.c.l.b16 %v8117
        %v8197 = vunpack.c.l.b16 %v8118
        %v8198 = vunpack.c.l.b16 %v8119
        %v8199 = vunpack.c.l.b16 %v8120
        %v8200 = vunpack.c.l.b16 %v8121
        %v8201 = vpack.c.b16 %v8167, %v8166
        %v8202 = vpack.c.b16 %v8169, %v8168
        %v8203 = vpack.c.b16 %v8171, %v8170
        %v8204 = vpack.c.b16 %v8173, %v8172
        %v8205 = vpack.c.b16 %v8175, %v8174
        %v8206 = vpack.c.b16 %v8177, %v8176
        %v8207 = vpack.c.b16 %v8179, %v8178
        %v8208 = vpack.c.b16 %v8181, %v8180
        %v8209 = vpack.c.b16 %v8183, %v8182
        %v8210 = vpack.c.b16 %v8185, %v8184
        %v8211 = vpack.c.b16 %v8187, %v8186
        %v8212 = vpack.c.b16 %v8189, %v8188
        %v8213 = vpack.c.b16 %v8191, %v8190
        %v8214 = vpack.c.b16 %v8193, %v8192
        %v8215 = vpack.c.b16 %v8195, %v8194
        %v8216 = vpack.c.b16 %v8197, %v8196
        %v8217 = vpack.c.b16 %v8199, %v8198
        %v8218 = vpack.c.b16 %v8200, %v8200
        %v8220 = vshrl.u32 %v8201, 16
        %v8222 = vrot.slane %v8220, 3
        %v8223 = vshll.u32 %v8201, 16
        %v8225 = vrot.slane %v8223, 4
        %v8226 = vor.u32 %v8222, %v8225
        %v8228 = vshrl.u32 %v8202, 16
        %v8230 = vrot.slane %v8228, 3
        %v8231 = vshll.u32 %v8202, 16
        %v8233 = vrot.slane %v8231, 4
        %v8234 = vor.u32 %v8230, %v8233
        %v8235 = vsel %vm2349, %v8226, %v8234
        %v8237 = vshrl.u32 %v8203, 16
        %v8239 = vrot.slane %v8237, 3
        %v8240 = vshll.u32 %v8203, 16
        %v8242 = vrot.slane %v8240, 4
        %v8243 = vor.u32 %v8239, %v8242
        %v8244 = vsel %vm2349, %v8234, %v8243
        %v8246 = vshrl.u32 %v8204, 16
        %v8248 = vrot.slane %v8246, 3
        %v8249 = vshll.u32 %v8204, 16
        %v8251 = vrot.slane %v8249, 4
        %v8252 = vor.u32 %v8248, %v8251
        %v8253 = vsel %vm2349, %v8243, %v8252
        %v8255 = vshrl.u32 %v8205, 16
        %v8257 = vrot.slane %v8255, 3
        %v8258 = vshll.u32 %v8205, 16
        %v8260 = vrot.slane %v8258, 4
        %v8261 = vor.u32 %v8257, %v8260
        %v8262 = vsel %vm2349, %v8252, %v8261
        %v8264 = vshrl.u32 %v8206, 16
        %v8266 = vrot.slane %v8264, 3
        %v8267 = vshll.u32 %v8206, 16
        %v8269 = vrot.slane %v8267, 4
        %v8270 = vor.u32 %v8266, %v8269
        %v8271 = vsel %vm2349, %v8261, %v8270
        %v8273 = vshrl.u32 %v8207, 16
        %v8275 = vrot.slane %v8273, 3
        %v8276 = vshll.u32 %v8207, 16
        %v8278 = vrot.slane %v8276, 4
        %v8279 = vor.u32 %v8275, %v8278
        %v8280 = vsel %vm2349, %v8270, %v8279
        %v8282 = vshrl.u32 %v8208, 16
        %v8284 = vrot.slane %v8282, 3
        %v8285 = vshll.u32 %v8208, 16
        %v8287 = vrot.slane %v8285, 4
        %v8288 = vor.u32 %v8284, %v8287
        %v8289 = vsel %vm2349, %v8279, %v8288
        %v8291 = vshrl.u32 %v8209, 16
        %v8293 = vrot.slane %v8291, 3
        %v8294 = vshll.u32 %v8209, 16
        %v8296 = vrot.slane %v8294, 4
        %v8297 = vor.u32 %v8293, %v8296
        %v8298 = vsel %vm2349, %v8288, %v8297
        %v8300 = vshrl.u32 %v8210, 16
        %v8302 = vrot.slane %v8300, 3
        %v8303 = vshll.u32 %v8210, 16
        %v8305 = vrot.slane %v8303, 4
        %v8306 = vor.u32 %v8302, %v8305
        %v8307 = vsel %vm2349, %v8297, %v8306
        %v8309 = vshrl.u32 %v8211, 16
        %v8311 = vrot.slane %v8309, 3
        %v8312 = vshll.u32 %v8211, 16
        %v8314 = vrot.slane %v8312, 4
        %v8315 = vor.u32 %v8311, %v8314
        %v8316 = vsel %vm2349, %v8306, %v8315
        %v8318 = vshrl.u32 %v8212, 16
        %v8320 = vrot.slane %v8318, 3
        %v8321 = vshll.u32 %v8212, 16
        %v8323 = vrot.slane %v8321, 4
        %v8324 = vor.u32 %v8320, %v8323
        %v8325 = vsel %vm2349, %v8315, %v8324
        %v8327 = vshrl.u32 %v8213, 16
        %v8329 = vrot.slane %v8327, 3
        %v8330 = vshll.u32 %v8213, 16
        %v8332 = vrot.slane %v8330, 4
        %v8333 = vor.u32 %v8329, %v8332
        %v8334 = vsel %vm2349, %v8324, %v8333
        %v8336 = vshrl.u32 %v8214, 16
        %v8338 = vrot.slane %v8336, 3
        %v8339 = vshll.u32 %v8214, 16
        %v8341 = vrot.slane %v8339, 4
        %v8342 = vor.u32 %v8338, %v8341
        %v8343 = vsel %vm2349, %v8333, %v8342
        %v8345 = vshrl.u32 %v8215, 16
        %v8347 = vrot.slane %v8345, 3
        %v8348 = vshll.u32 %v8215, 16
        %v8350 = vrot.slane %v8348, 4
        %v8351 = vor.u32 %v8347, %v8350
        %v8352 = vsel %vm2349, %v8342, %v8351
        %v8354 = vshrl.u32 %v8216, 16
        %v8356 = vrot.slane %v8354, 3
        %v8357 = vshll.u32 %v8216, 16
        %v8359 = vrot.slane %v8357, 4
        %v8360 = vor.u32 %v8356, %v8359
        %v8361 = vsel %vm2349, %v8351, %v8360
        %v8363 = vshrl.u32 %v8217, 16
        %v8365 = vrot.slane %v8363, 3
        %v8366 = vshll.u32 %v8217, 16
        %v8368 = vrot.slane %v8366, 4
        %v8369 = vor.u32 %v8365, %v8368
        %v8370 = vsel %vm2349, %v8360, %v8369
        %v8372 = vshrl.u32 %v8218, 16
        %v8374 = vrot.slane %v8372, 3
        %v8375 = vshll.u32 %v8218, 16
        %v8377 = vrot.slane %v8375, 4
        %v8378 = vor.u32 %v8374, %v8377
        %v8379 = vsel %vm2349, %v8369, %v8378
        %v8388 = vunpack.c.l.b16 %v8123
        %v8389 = vunpack.c.l.b16 %v8124
        %v8390 = vunpack.c.l.b16 %v8125
        %v8391 = vunpack.c.l.b16 %v8126
        %v8392 = vunpack.c.l.b16 %v8127
        %v8393 = vunpack.c.l.b16 %v8128
        %v8394 = vunpack.c.l.b16 %v8129
        %v8395 = vunpack.c.l.b16 %v8130
        %v8396 = vpack.c.b16 %v8389, %v8388
        %v8397 = vpack.c.b16 %v8391, %v8390
        %v8398 = vpack.c.b16 %v8393, %v8392
        %v8399 = vpack.c.b16 %v8395, %v8394
        %v8405 = vsel %vm7301, %v8235, 0
        %v8408 = vsel %vm7301, %v8244, 0
        %v8411 = vsel %vm7301, %v8253, 0
        %v8414 = vsel %vm7301, %v8262, 0
        %v8417 = vsel %vm7301, %v8271, 0
        %v8420 = vsel %vm7301, %v8280, 0
        %v8423 = vsel %vm7301, %v8289, 0
        %v8426 = vsel %vm7301, %v8298, 0
        %v8429 = vsel %vm7301, %v8307, 0
        %v8432 = vsel %vm7301, %v8316, 0
        %v8435 = vsel %vm7301, %v8325, 0
        %v8438 = vsel %vm7301, %v8334, 0
        %v8441 = vsel %vm7301, %v8343, 0
        %v8444 = vsel %vm7301, %v8352, 0
        %v8447 = vsel %vm7301, %v8361, 0
        %v8450 = vsel %vm7301, %v8370, 0
        %v8453 = vsel %vm7301, %v8379, 0
        %8455 = vmatpush.bf16.msra.mxu0 0
        %8456 = vmatpush.bf16.msra.mxu0 0
        %8457 = vmatpush.bf16.msra.mxu0 0
        %8458 = vmatpush.bf16.msra.mxu0 0
        %8459 = vmatpush.bf16.msra.mxu0 %v8399
        %8460 = vmatpush.bf16.msra.mxu0 %v8398
        %8461 = vmatpush.bf16.msra.mxu0 %v8397
        %8462 = vmatpush.bf16.msra.mxu0 %v8396
        %8463 = vmatmul.bf16.gmra.mxu0 %v8405
        %v8464 = vpop.f32.mrf.mxu0
        %v8465 = vadd.f32 0.0, %v8464
        %v8466 = vpop.f32.mrf.mxu0
        %v8467 = vadd.f32 0.0, %v8466
        %8468 = vmatmul.bf16.gmra.mxu0 %v8408
        %v8469 = vpop.f32.mrf.mxu0
        %v8470 = vadd.f32 0.0, %v8469
        %v8471 = vpop.f32.mrf.mxu0
        %v8472 = vadd.f32 0.0, %v8471
        %8473 = vmatmul.bf16.gmra.mxu0 %v8411
        %v8474 = vpop.f32.mrf.mxu0
        %v8475 = vadd.f32 0.0, %v8474
        %v8476 = vpop.f32.mrf.mxu0
        %v8477 = vadd.f32 0.0, %v8476
        %8478 = vmatmul.bf16.gmra.mxu0 %v8414
        %v8479 = vpop.f32.mrf.mxu0
        %v8480 = vadd.f32 0.0, %v8479
        %v8481 = vpop.f32.mrf.mxu0
        %v8482 = vadd.f32 0.0, %v8481
        %8483 = vmatmul.bf16.gmra.mxu0 %v8417
        %v8484 = vpop.f32.mrf.mxu0
        %v8485 = vadd.f32 0.0, %v8484
        %v8486 = vpop.f32.mrf.mxu0
        %v8487 = vadd.f32 0.0, %v8486
        %8488 = vmatmul.bf16.gmra.mxu0 %v8420
        %v8489 = vpop.f32.mrf.mxu0
        %v8490 = vadd.f32 0.0, %v8489
        %v8491 = vpop.f32.mrf.mxu0
        %v8492 = vadd.f32 0.0, %v8491
        %8493 = vmatmul.bf16.gmra.mxu0 %v8423
        %v8494 = vpop.f32.mrf.mxu0
        %v8495 = vadd.f32 0.0, %v8494
        %v8496 = vpop.f32.mrf.mxu0
        %v8497 = vadd.f32 0.0, %v8496
        %8498 = vmatmul.bf16.gmra.mxu0 %v8426
        %v8499 = vpop.f32.mrf.mxu0
        %v8500 = vadd.f32 0.0, %v8499
        %v8501 = vpop.f32.mrf.mxu0
        %v8502 = vadd.f32 0.0, %v8501
        %8503 = vmatmul.bf16.gmra.mxu0 %v8429
        %v8504 = vpop.f32.mrf.mxu0
        %v8505 = vadd.f32 0.0, %v8504
        %v8506 = vpop.f32.mrf.mxu0
        %v8507 = vadd.f32 0.0, %v8506
        %8508 = vmatmul.bf16.gmra.mxu0 %v8432
        %v8509 = vpop.f32.mrf.mxu0
        %v8510 = vadd.f32 0.0, %v8509
        %v8511 = vpop.f32.mrf.mxu0
        %v8512 = vadd.f32 0.0, %v8511
        %8513 = vmatmul.bf16.gmra.mxu0 %v8435
        %v8514 = vpop.f32.mrf.mxu0
        %v8515 = vadd.f32 0.0, %v8514
        %v8516 = vpop.f32.mrf.mxu0
        %v8517 = vadd.f32 0.0, %v8516
        %8518 = vmatmul.bf16.gmra.mxu0 %v8438
        %v8519 = vpop.f32.mrf.mxu0
        %v8520 = vadd.f32 0.0, %v8519
        %v8521 = vpop.f32.mrf.mxu0
        %v8522 = vadd.f32 0.0, %v8521
        %8523 = vmatmul.bf16.gmra.mxu0 %v8441
        %v8524 = vpop.f32.mrf.mxu0
        %v8525 = vadd.f32 0.0, %v8524
        %v8526 = vpop.f32.mrf.mxu0
        %v8527 = vadd.f32 0.0, %v8526
        %8528 = vmatmul.bf16.gmra.mxu0 %v8444
        %v8529 = vpop.f32.mrf.mxu0
        %v8530 = vadd.f32 0.0, %v8529
        %v8531 = vpop.f32.mrf.mxu0
        %v8532 = vadd.f32 0.0, %v8531
        %8533 = vmatmul.bf16.gmra.mxu0 %v8447
        %v8534 = vpop.f32.mrf.mxu0
        %v8535 = vadd.f32 0.0, %v8534
        %v8536 = vpop.f32.mrf.mxu0
        %v8537 = vadd.f32 0.0, %v8536
        %8538 = vmatmul.bf16.gmra.mxu0 %v8450
        %v8539 = vpop.f32.mrf.mxu0
        %v8540 = vadd.f32 0.0, %v8539
        %v8541 = vpop.f32.mrf.mxu0
        %v8542 = vadd.f32 0.0, %v8541
        %8543 = vmatmul.bf16.gmra.mxu0 %v8453
        %v8544 = vpop.f32.mrf.mxu0
        %v8545 = vadd.f32 0.0, %v8544
        %v8546 = vpop.f32.mrf.mxu0
        %v8547 = vadd.f32 0.0, %v8546
        %8548 = vdwg.mxu0
        %v8549 = vadd.f32 %v8053, %v8465
        %v8550 = vadd.f32 %v8054, %v8467
        %v8551 = vadd.f32 %v8055, %v8470
        %v8552 = vadd.f32 %v8056, %v8472
        %v8553 = vadd.f32 %v8057, %v8475
        %v8554 = vadd.f32 %v8058, %v8477
        %v8555 = vadd.f32 %v8059, %v8480
        %v8556 = vadd.f32 %v8060, %v8482
        %v8557 = vadd.f32 %v8061, %v8485
        %v8558 = vadd.f32 %v8062, %v8487
        %v8559 = vadd.f32 %v8063, %v8490
        %v8560 = vadd.f32 %v8064, %v8492
        %v8561 = vadd.f32 %v8065, %v8495
        %v8562 = vadd.f32 %v8066, %v8497
        %v8563 = vadd.f32 %v8067, %v8500
        %v8564 = vadd.f32 %v8068, %v8502
        %v8565 = vadd.f32 %v8069, %v8505
        %v8566 = vadd.f32 %v8070, %v8507
        %v8567 = vadd.f32 %v8071, %v8510
        %v8568 = vadd.f32 %v8072, %v8512
        %v8569 = vadd.f32 %v8073, %v8515
        %v8570 = vadd.f32 %v8074, %v8517
        %v8571 = vadd.f32 %v8075, %v8520
        %v8572 = vadd.f32 %v8076, %v8522
        %v8573 = vadd.f32 %v8077, %v8525
        %v8574 = vadd.f32 %v8078, %v8527
        %v8575 = vadd.f32 %v8079, %v8530
        %v8576 = vadd.f32 %v8080, %v8532
        %v8577 = vadd.f32 %v8081, %v8535
        %v8578 = vadd.f32 %v8082, %v8537
        %v8579 = vadd.f32 %v8083, %v8540
        %v8580 = vadd.f32 %v8084, %v8542
        %v8581 = vadd.f32 %v8085, %v8545
        %v8582 = vadd.f32 %v8086, %v8547
        %s8583 = scalar_lea.vmem %s3, 128
        %v8584 = vld [vmem:[%s8583] sm:$0xf]
        %v8585 = vld [vmem:[%s8583 + $0x4] sm:$0xf]
        %v8586 = vld [vmem:[%s8583 + $0x8] sm:$0xf]
        %v8587 = vld [vmem:[%s8583 + $0xc] sm:$0xf]
        %v8588 = vld [vmem:[%s8583 + $0x10] sm:$0xf]
        %v8589 = vld [vmem:[%s8583 + $0x14] sm:$0xf]
        %v8590 = vld [vmem:[%s8583 + $0x18] sm:$0xf]
        %v8591 = vld [vmem:[%s8583 + $0x1c] sm:$0xf]
        %v8592 = vpack.c.b16 %v8168, %v8167
        %v8593 = vpack.c.b16 %v8170, %v8169
        %v8594 = vpack.c.b16 %v8172, %v8171
        %v8595 = vpack.c.b16 %v8174, %v8173
        %v8596 = vpack.c.b16 %v8176, %v8175
        %v8597 = vpack.c.b16 %v8178, %v8177
        %v8598 = vpack.c.b16 %v8180, %v8179
        %v8599 = vpack.c.b16 %v8182, %v8181
        %v8600 = vpack.c.b16 %v8184, %v8183
        %v8601 = vpack.c.b16 %v8186, %v8185
        %v8602 = vpack.c.b16 %v8188, %v8187
        %v8603 = vpack.c.b16 %v8190, %v8189
        %v8604 = vpack.c.b16 %v8192, %v8191
        %v8605 = vpack.c.b16 %v8194, %v8193
        %v8606 = vpack.c.b16 %v8196, %v8195
        %v8607 = vpack.c.b16 %v8198, %v8197
        %v8608 = vpack.c.b16 %v8200, %v8199
        %v8617 = vunpack.c.l.b16 %v8584
        %v8618 = vunpack.c.l.b16 %v8585
        %v8619 = vunpack.c.l.b16 %v8586
        %v8620 = vunpack.c.l.b16 %v8587
        %v8621 = vunpack.c.l.b16 %v8588
        %v8622 = vunpack.c.l.b16 %v8589
        %v8623 = vunpack.c.l.b16 %v8590
        %v8624 = vunpack.c.l.b16 %v8591
        %v8625 = vpack.c.b16 %v8618, %v8617
        %v8626 = vpack.c.b16 %v8620, %v8619
        %v8627 = vpack.c.b16 %v8622, %v8621
        %v8628 = vpack.c.b16 %v8624, %v8623
        %v8634 = vsel %vm7301, %v8592, 0
        %v8637 = vsel %vm7301, %v8593, 0
        %v8640 = vsel %vm7301, %v8594, 0
        %v8643 = vsel %vm7301, %v8595, 0
        %v8646 = vsel %vm7301, %v8596, 0
        %v8649 = vsel %vm7301, %v8597, 0
        %v8652 = vsel %vm7301, %v8598, 0
        %v8655 = vsel %vm7301, %v8599, 0
        %v8658 = vsel %vm7301, %v8600, 0
        %v8661 = vsel %vm7301, %v8601, 0
        %v8664 = vsel %vm7301, %v8602, 0
        %v8667 = vsel %vm7301, %v8603, 0
        %v8670 = vsel %vm7301, %v8604, 0
        %v8673 = vsel %vm7301, %v8605, 0
        %v8676 = vsel %vm7301, %v8606, 0
        %v8679 = vsel %vm7301, %v8607, 0
        %v8682 = vsel %vm7301, %v8608, 0
        %8684 = vmatpush.bf16.msra.mxu0 0
        %8685 = vmatpush.bf16.msra.mxu0 0
        %8686 = vmatpush.bf16.msra.mxu0 0
        %8687 = vmatpush.bf16.msra.mxu0 0
        %8688 = vmatpush.bf16.msra.mxu0 %v8628
        %8689 = vmatpush.bf16.msra.mxu0 %v8627
        %8690 = vmatpush.bf16.msra.mxu0 %v8626
        %8691 = vmatpush.bf16.msra.mxu0 %v8625
        %8692 = vmatmul.bf16.gmra.mxu0 %v8634
        %v8693 = vpop.f32.mrf.mxu0
        %v8694 = vadd.f32 0.0, %v8693
        %v8695 = vpop.f32.mrf.mxu0
        %v8696 = vadd.f32 0.0, %v8695
        %8697 = vmatmul.bf16.gmra.mxu0 %v8637
        %v8698 = vpop.f32.mrf.mxu0
        %v8699 = vadd.f32 0.0, %v8698
        %v8700 = vpop.f32.mrf.mxu0
        %v8701 = vadd.f32 0.0, %v8700
        %8702 = vmatmul.bf16.gmra.mxu0 %v8640
        %v8703 = vpop.f32.mrf.mxu0
        %v8704 = vadd.f32 0.0, %v8703
        %v8705 = vpop.f32.mrf.mxu0
        %v8706 = vadd.f32 0.0, %v8705
        %8707 = vmatmul.bf16.gmra.mxu0 %v8643
        %v8708 = vpop.f32.mrf.mxu0
        %v8709 = vadd.f32 0.0, %v8708
        %v8710 = vpop.f32.mrf.mxu0
        %v8711 = vadd.f32 0.0, %v8710
        %8712 = vmatmul.bf16.gmra.mxu0 %v8646
        %v8713 = vpop.f32.mrf.mxu0
        %v8714 = vadd.f32 0.0, %v8713
        %v8715 = vpop.f32.mrf.mxu0
        %v8716 = vadd.f32 0.0, %v8715
        %8717 = vmatmul.bf16.gmra.mxu0 %v8649
        %v8718 = vpop.f32.mrf.mxu0
        %v8719 = vadd.f32 0.0, %v8718
        %v8720 = vpop.f32.mrf.mxu0
        %v8721 = vadd.f32 0.0, %v8720
        %8722 = vmatmul.bf16.gmra.mxu0 %v8652
        %v8723 = vpop.f32.mrf.mxu0
        %v8724 = vadd.f32 0.0, %v8723
        %v8725 = vpop.f32.mrf.mxu0
        %v8726 = vadd.f32 0.0, %v8725
        %8727 = vmatmul.bf16.gmra.mxu0 %v8655
        %v8728 = vpop.f32.mrf.mxu0
        %v8729 = vadd.f32 0.0, %v8728
        %v8730 = vpop.f32.mrf.mxu0
        %v8731 = vadd.f32 0.0, %v8730
        %8732 = vmatmul.bf16.gmra.mxu0 %v8658
        %v8733 = vpop.f32.mrf.mxu0
        %v8734 = vadd.f32 0.0, %v8733
        %v8735 = vpop.f32.mrf.mxu0
        %v8736 = vadd.f32 0.0, %v8735
        %8737 = vmatmul.bf16.gmra.mxu0 %v8661
        %v8738 = vpop.f32.mrf.mxu0
        %v8739 = vadd.f32 0.0, %v8738
        %v8740 = vpop.f32.mrf.mxu0
        %v8741 = vadd.f32 0.0, %v8740
        %8742 = vmatmul.bf16.gmra.mxu0 %v8664
        %v8743 = vpop.f32.mrf.mxu0
        %v8744 = vadd.f32 0.0, %v8743
        %v8745 = vpop.f32.mrf.mxu0
        %v8746 = vadd.f32 0.0, %v8745
        %8747 = vmatmul.bf16.gmra.mxu0 %v8667
        %v8748 = vpop.f32.mrf.mxu0
        %v8749 = vadd.f32 0.0, %v8748
        %v8750 = vpop.f32.mrf.mxu0
        %v8751 = vadd.f32 0.0, %v8750
        %8752 = vmatmul.bf16.gmra.mxu0 %v8670
        %v8753 = vpop.f32.mrf.mxu0
        %v8754 = vadd.f32 0.0, %v8753
        %v8755 = vpop.f32.mrf.mxu0
        %v8756 = vadd.f32 0.0, %v8755
        %8757 = vmatmul.bf16.gmra.mxu0 %v8673
        %v8758 = vpop.f32.mrf.mxu0
        %v8759 = vadd.f32 0.0, %v8758
        %v8760 = vpop.f32.mrf.mxu0
        %v8761 = vadd.f32 0.0, %v8760
        %8762 = vmatmul.bf16.gmra.mxu0 %v8676
        %v8763 = vpop.f32.mrf.mxu0
        %v8764 = vadd.f32 0.0, %v8763
        %v8765 = vpop.f32.mrf.mxu0
        %v8766 = vadd.f32 0.0, %v8765
        %8767 = vmatmul.bf16.gmra.mxu0 %v8679
        %v8768 = vpop.f32.mrf.mxu0
        %v8769 = vadd.f32 0.0, %v8768
        %v8770 = vpop.f32.mrf.mxu0
        %v8771 = vadd.f32 0.0, %v8770
        %8772 = vmatmul.bf16.gmra.mxu0 %v8682
        %v8773 = vpop.f32.mrf.mxu0
        %v8774 = vadd.f32 0.0, %v8773
        %v8775 = vpop.f32.mrf.mxu0
        %v8776 = vadd.f32 0.0, %v8775
        %8777 = vdwg.mxu0
        %v8778 = vadd.f32 %v8549, %v8694
        %v8779 = vadd.f32 %v8550, %v8696
        %v8780 = vadd.f32 %v8551, %v8699
        %v8781 = vadd.f32 %v8552, %v8701
        %v8782 = vadd.f32 %v8553, %v8704
        %v8783 = vadd.f32 %v8554, %v8706
        %v8784 = vadd.f32 %v8555, %v8709
        %v8785 = vadd.f32 %v8556, %v8711
        %v8786 = vadd.f32 %v8557, %v8714
        %v8787 = vadd.f32 %v8558, %v8716
        %v8788 = vadd.f32 %v8559, %v8719
        %v8789 = vadd.f32 %v8560, %v8721
        %v8790 = vadd.f32 %v8561, %v8724
        %v8791 = vadd.f32 %v8562, %v8726
        %v8792 = vadd.f32 %v8563, %v8729
        %v8793 = vadd.f32 %v8564, %v8731
        %v8794 = vadd.f32 %v8565, %v8734
        %v8795 = vadd.f32 %v8566, %v8736
        %v8796 = vadd.f32 %v8567, %v8739
        %v8797 = vadd.f32 %v8568, %v8741
        %v8798 = vadd.f32 %v8569, %v8744
        %v8799 = vadd.f32 %v8570, %v8746
        %v8800 = vadd.f32 %v8571, %v8749
        %v8801 = vadd.f32 %v8572, %v8751
        %v8802 = vadd.f32 %v8573, %v8754
        %v8803 = vadd.f32 %v8574, %v8756
        %v8804 = vadd.f32 %v8575, %v8759
        %v8805 = vadd.f32 %v8576, %v8761
        %v8806 = vadd.f32 %v8577, %v8764
        %v8807 = vadd.f32 %v8578, %v8766
        %v8808 = vadd.f32 %v8579, %v8769
        %v8809 = vadd.f32 %v8580, %v8771
        %v8810 = vadd.f32 %v8581, %v8774
        %v8811 = vadd.f32 %v8582, %v8776
        %v8812 = vld [vmem:[#allocation4 + $0xc] sm:$0xf]
        %v8813 = vld [vmem:[#allocation4 + $0x10] sm:$0xf]
        %v8814 = vld [vmem:[#allocation4 + $0x14] sm:$0xf]
        %v8815 = vld [vmem:[#allocation4 + $0x18] sm:$0xf]
        %v8816 = vld [vmem:[#allocation4 + $0x1c] sm:$0xf]
        %v8817 = vld [vmem:[#allocation4 + $0x20] sm:$0xf]
        %v8818 = vld [vmem:[#allocation4 + $0x24] sm:$0xf]
        %v8819 = vld [vmem:[#allocation4 + $0x28] sm:$0xf]
        %v8820 = vld [vmem:[#allocation4 + $0x2c] sm:$0xf]
        %v8821 = vld [vmem:[#allocation4 + $0x30] sm:$0xf]
        %v8822 = vld [vmem:[#allocation4 + $0x34] sm:$0xf]
        %v8823 = vld [vmem:[#allocation4 + $0x38] sm:$0xf]
        %v8824 = vld [vmem:[#allocation4 + $0x3c] sm:$0xf]
        %v8825 = vld [vmem:[#allocation4 + $0x40] sm:$0xf]
        %v8826 = vld [vmem:[#allocation4 + $0x44] sm:$0xf]
        %v8827 = vld [vmem:[#allocation4 + $0x48] sm:$0xf]
        %v8828 = vld [vmem:[#allocation4 + $0x4c] sm:$0xf]
        %v8829 = vld [vmem:[#allocation4 + $0x50] sm:$0xf]
        %v8830 = vld [vmem:[#allocation4 + $0x54] sm:$0xf]
        %v8831 = vld [vmem:[#allocation4 + $0x58] sm:$0xf]
        %v8832 = vld [vmem:[#allocation4 + $0x5c] sm:$0xf]
        %v8833 = vld [vmem:[#allocation4 + $0x60] sm:$0xf]
        %v8834 = vld [vmem:[#allocation4 + $0x64] sm:$0xf]
        %v8835 = vld [vmem:[#allocation4 + $0x68] sm:$0xf]
        %v8836 = vld [vmem:[#allocation4 + $0x6c] sm:$0xf]
        %v8837 = vld [vmem:[#allocation4 + $0x70] sm:$0xf]
        %v8838 = vld [vmem:[#allocation4 + $0x74] sm:$0xf]
        %v8839 = vld [vmem:[#allocation4 + $0x78] sm:$0xf]
        %v8840 = vld [vmem:[#allocation4 + $0x7c] sm:$0xf]
        %v8841 = vld [vmem:[#allocation4 + $0x80] sm:$0xf]
        %v8842 = vld [vmem:[#allocation4 + $0x84] sm:$0xf]
        %v8843 = vld [vmem:[#allocation4 + $0x88] sm:$0xf]
        %v8844 = vld [vmem:[#allocation4 + $0x8c] sm:$0xf]
        %v8845 = vld [vmem:[#allocation4 + $0x90] sm:$0xf]
        %v8846 = vld [vmem:[#allocation4 + $0x94] sm:$0x1]
        %s8847 = scalar_lea.vmem %s3, 160
        %v8848 = vld [vmem:[%s8847] sm:$0xf]
        %v8849 = vld [vmem:[%s8847 + $0x4] sm:$0xf]
        %v8850 = vld [vmem:[%s8847 + $0x8] sm:$0xf]
        %v8851 = vld [vmem:[%s8847 + $0xc] sm:$0xf]
        %v8852 = vld [vmem:[%s8847 + $0x10] sm:$0xf]
        %v8853 = vld [vmem:[%s8847 + $0x14] sm:$0xf]
        %v8854 = vld [vmem:[%s8847 + $0x18] sm:$0xf]
        %v8855 = vld [vmem:[%s8847 + $0x1c] sm:$0xf]
        %v8891 = vunpack.c.l.b16 %v8812
        %v8892 = vunpack.c.l.b16 %v8813
        %v8893 = vunpack.c.l.b16 %v8814
        %v8894 = vunpack.c.l.b16 %v8815
        %v8895 = vunpack.c.l.b16 %v8816
        %v8896 = vunpack.c.l.b16 %v8817
        %v8897 = vunpack.c.l.b16 %v8818
        %v8898 = vunpack.c.l.b16 %v8819
        %v8899 = vunpack.c.l.b16 %v8820
        %v8900 = vunpack.c.l.b16 %v8821
        %v8901 = vunpack.c.l.b16 %v8822
        %v8902 = vunpack.c.l.b16 %v8823
        %v8903 = vunpack.c.l.b16 %v8824
        %v8904 = vunpack.c.l.b16 %v8825
        %v8905 = vunpack.c.l.b16 %v8826
        %v8906 = vunpack.c.l.b16 %v8827
        %v8907 = vunpack.c.l.b16 %v8828
        %v8908 = vunpack.c.l.b16 %v8829
        %v8909 = vunpack.c.l.b16 %v8830
        %v8910 = vunpack.c.l.b16 %v8831
        %v8911 = vunpack.c.l.b16 %v8832
        %v8912 = vunpack.c.l.b16 %v8833
        %v8913 = vunpack.c.l.b16 %v8834
        %v8914 = vunpack.c.l.b16 %v8835
        %v8915 = vunpack.c.l.b16 %v8836
        %v8916 = vunpack.c.l.b16 %v8837
        %v8917 = vunpack.c.l.b16 %v8838
        %v8918 = vunpack.c.l.b16 %v8839
        %v8919 = vunpack.c.l.b16 %v8840
        %v8920 = vunpack.c.l.b16 %v8841
        %v8921 = vunpack.c.l.b16 %v8842
        %v8922 = vunpack.c.l.b16 %v8843
        %v8923 = vunpack.c.l.b16 %v8844
        %v8924 = vunpack.c.l.b16 %v8845
        %v8925 = vunpack.c.l.b16 %v8846
        %v8926 = vpack.c.b16 %v8892, %v8891
        %v8927 = vpack.c.b16 %v8894, %v8893
        %v8928 = vpack.c.b16 %v8896, %v8895
        %v8929 = vpack.c.b16 %v8898, %v8897
        %v8930 = vpack.c.b16 %v8900, %v8899
        %v8931 = vpack.c.b16 %v8902, %v8901
        %v8932 = vpack.c.b16 %v8904, %v8903
        %v8933 = vpack.c.b16 %v8906, %v8905
        %v8934 = vpack.c.b16 %v8908, %v8907
        %v8935 = vpack.c.b16 %v8910, %v8909
        %v8936 = vpack.c.b16 %v8912, %v8911
        %v8937 = vpack.c.b16 %v8914, %v8913
        %v8938 = vpack.c.b16 %v8916, %v8915
        %v8939 = vpack.c.b16 %v8918, %v8917
        %v8940 = vpack.c.b16 %v8920, %v8919
        %v8941 = vpack.c.b16 %v8922, %v8921
        %v8942 = vpack.c.b16 %v8924, %v8923
        %v8943 = vpack.c.b16 %v8925, %v8925
        %v8945 = vshrl.u32 %v8926, 16
        %v8947 = vshll.u32 %v8926, 16
        %v8949 = vrot.slane %v8947, 1
        %v8950 = vor.u32 %v8945, %v8949
        %v8952 = vshll.u32 %v8927, 16
        %v8954 = vrot.slane %v8952, 1
        %v8955 = vsel %vm3764, %v8950, %v8954
        %v8956 = vshrl.u32 %v8927, 16
        %v8958 = vor.u32 %v8956, %v8954
        %v8960 = vshll.u32 %v8928, 16
        %v8962 = vrot.slane %v8960, 1
        %v8963 = vsel %vm3764, %v8958, %v8962
        %v8964 = vshrl.u32 %v8928, 16
        %v8966 = vor.u32 %v8964, %v8962
        %v8968 = vshll.u32 %v8929, 16
        %v8970 = vrot.slane %v8968, 1
        %v8971 = vsel %vm3764, %v8966, %v8970
        %v8972 = vshrl.u32 %v8929, 16
        %v8974 = vor.u32 %v8972, %v8970
        %v8976 = vshll.u32 %v8930, 16
        %v8978 = vrot.slane %v8976, 1
        %v8979 = vsel %vm3764, %v8974, %v8978
        %v8980 = vshrl.u32 %v8930, 16
        %v8982 = vor.u32 %v8980, %v8978
        %v8984 = vshll.u32 %v8931, 16
        %v8986 = vrot.slane %v8984, 1
        %v8987 = vsel %vm3764, %v8982, %v8986
        %v8988 = vshrl.u32 %v8931, 16
        %v8990 = vor.u32 %v8988, %v8986
        %v8992 = vshll.u32 %v8932, 16
        %v8994 = vrot.slane %v8992, 1
        %v8995 = vsel %vm3764, %v8990, %v8994
        %v8996 = vshrl.u32 %v8932, 16
        %v8998 = vor.u32 %v8996, %v8994
        %v9000 = vshll.u32 %v8933, 16
        %v9002 = vrot.slane %v9000, 1
        %v9003 = vsel %vm3764, %v8998, %v9002
        %v9004 = vshrl.u32 %v8933, 16
        %v9006 = vor.u32 %v9004, %v9002
        %v9008 = vshll.u32 %v8934, 16
        %v9010 = vrot.slane %v9008, 1
        %v9011 = vsel %vm3764, %v9006, %v9010
        %v9012 = vshrl.u32 %v8934, 16
        %v9014 = vor.u32 %v9012, %v9010
        %v9016 = vshll.u32 %v8935, 16
        %v9018 = vrot.slane %v9016, 1
        %v9019 = vsel %vm3764, %v9014, %v9018
        %v9020 = vshrl.u32 %v8935, 16
        %v9022 = vor.u32 %v9020, %v9018
        %v9024 = vshll.u32 %v8936, 16
        %v9026 = vrot.slane %v9024, 1
        %v9027 = vsel %vm3764, %v9022, %v9026
        %v9028 = vshrl.u32 %v8936, 16
        %v9030 = vor.u32 %v9028, %v9026
        %v9032 = vshll.u32 %v8937, 16
        %v9034 = vrot.slane %v9032, 1
        %v9035 = vsel %vm3764, %v9030, %v9034
        %v9036 = vshrl.u32 %v8937, 16
        %v9038 = vor.u32 %v9036, %v9034
        %v9040 = vshll.u32 %v8938, 16
        %v9042 = vrot.slane %v9040, 1
        %v9043 = vsel %vm3764, %v9038, %v9042
        %v9044 = vshrl.u32 %v8938, 16
        %v9046 = vor.u32 %v9044, %v9042
        %v9048 = vshll.u32 %v8939, 16
        %v9050 = vrot.slane %v9048, 1
        %v9051 = vsel %vm3764, %v9046, %v9050
        %v9052 = vshrl.u32 %v8939, 16
        %v9054 = vor.u32 %v9052, %v9050
        %v9056 = vshll.u32 %v8940, 16
        %v9058 = vrot.slane %v9056, 1
        %v9059 = vsel %vm3764, %v9054, %v9058
        %v9060 = vshrl.u32 %v8940, 16
        %v9062 = vor.u32 %v9060, %v9058
        %v9064 = vshll.u32 %v8941, 16
        %v9066 = vrot.slane %v9064, 1
        %v9067 = vsel %vm3764, %v9062, %v9066
        %v9068 = vshrl.u32 %v8941, 16
        %v9070 = vor.u32 %v9068, %v9066
        %v9072 = vshll.u32 %v8942, 16
        %v9074 = vrot.slane %v9072, 1
        %v9075 = vsel %vm3764, %v9070, %v9074
        %v9076 = vshrl.u32 %v8942, 16
        %v9078 = vor.u32 %v9076, %v9074
        %v9080 = vshll.u32 %v8943, 16
        %v9082 = vrot.slane %v9080, 1
        %v9083 = vsel %vm3764, %v9078, %v9082
        %v9092 = vunpack.c.l.b16 %v8848
        %v9093 = vunpack.c.l.b16 %v8849
        %v9094 = vunpack.c.l.b16 %v8850
        %v9095 = vunpack.c.l.b16 %v8851
        %v9096 = vunpack.c.l.b16 %v8852
        %v9097 = vunpack.c.l.b16 %v8853
        %v9098 = vunpack.c.l.b16 %v8854
        %v9099 = vunpack.c.l.b16 %v8855
        %v9100 = vpack.c.b16 %v9093, %v9092
        %v9101 = vpack.c.b16 %v9095, %v9094
        %v9102 = vpack.c.b16 %v9097, %v9096
        %v9103 = vpack.c.b16 %v9099, %v9098
        %v9109 = vsel %vm7301, %v8955, 0
        %v9112 = vsel %vm7301, %v8963, 0
        %v9115 = vsel %vm7301, %v8971, 0
        %v9118 = vsel %vm7301, %v8979, 0
        %v9121 = vsel %vm7301, %v8987, 0
        %v9124 = vsel %vm7301, %v8995, 0
        %v9127 = vsel %vm7301, %v9003, 0
        %v9130 = vsel %vm7301, %v9011, 0
        %v9133 = vsel %vm7301, %v9019, 0
        %v9136 = vsel %vm7301, %v9027, 0
        %v9139 = vsel %vm7301, %v9035, 0
        %v9142 = vsel %vm7301, %v9043, 0
        %v9145 = vsel %vm7301, %v9051, 0
        %v9148 = vsel %vm7301, %v9059, 0
        %v9151 = vsel %vm7301, %v9067, 0
        %v9154 = vsel %vm7301, %v9075, 0
        %v9157 = vsel %vm7301, %v9083, 0
        %9159 = vmatpush.bf16.msra.mxu0 0
        %9160 = vmatpush.bf16.msra.mxu0 0
        %9161 = vmatpush.bf16.msra.mxu0 0
        %9162 = vmatpush.bf16.msra.mxu0 0
        %9163 = vmatpush.bf16.msra.mxu0 %v9103
        %9164 = vmatpush.bf16.msra.mxu0 %v9102
        %9165 = vmatpush.bf16.msra.mxu0 %v9101
        %9166 = vmatpush.bf16.msra.mxu0 %v9100
        %9167 = vmatmul.bf16.gmra.mxu0 %v9109
        %v9168 = vpop.f32.mrf.mxu0
        %v9169 = vadd.f32 0.0, %v9168
        %v9170 = vpop.f32.mrf.mxu0
        %v9171 = vadd.f32 0.0, %v9170
        %9172 = vmatmul.bf16.gmra.mxu0 %v9112
        %v9173 = vpop.f32.mrf.mxu0
        %v9174 = vadd.f32 0.0, %v9173
        %v9175 = vpop.f32.mrf.mxu0
        %v9176 = vadd.f32 0.0, %v9175
        %9177 = vmatmul.bf16.gmra.mxu0 %v9115
        %v9178 = vpop.f32.mrf.mxu0
        %v9179 = vadd.f32 0.0, %v9178
        %v9180 = vpop.f32.mrf.mxu0
        %v9181 = vadd.f32 0.0, %v9180
        %9182 = vmatmul.bf16.gmra.mxu0 %v9118
        %v9183 = vpop.f32.mrf.mxu0
        %v9184 = vadd.f32 0.0, %v9183
        %v9185 = vpop.f32.mrf.mxu0
        %v9186 = vadd.f32 0.0, %v9185
        %9187 = vmatmul.bf16.gmra.mxu0 %v9121
        %v9188 = vpop.f32.mrf.mxu0
        %v9189 = vadd.f32 0.0, %v9188
        %v9190 = vpop.f32.mrf.mxu0
        %v9191 = vadd.f32 0.0, %v9190
        %9192 = vmatmul.bf16.gmra.mxu0 %v9124
        %v9193 = vpop.f32.mrf.mxu0
        %v9194 = vadd.f32 0.0, %v9193
        %v9195 = vpop.f32.mrf.mxu0
        %v9196 = vadd.f32 0.0, %v9195
        %9197 = vmatmul.bf16.gmra.mxu0 %v9127
        %v9198 = vpop.f32.mrf.mxu0
        %v9199 = vadd.f32 0.0, %v9198
        %v9200 = vpop.f32.mrf.mxu0
        %v9201 = vadd.f32 0.0, %v9200
        %9202 = vmatmul.bf16.gmra.mxu0 %v9130
        %v9203 = vpop.f32.mrf.mxu0
        %v9204 = vadd.f32 0.0, %v9203
        %v9205 = vpop.f32.mrf.mxu0
        %v9206 = vadd.f32 0.0, %v9205
        %9207 = vmatmul.bf16.gmra.mxu0 %v9133
        %v9208 = vpop.f32.mrf.mxu0
        %v9209 = vadd.f32 0.0, %v9208
        %v9210 = vpop.f32.mrf.mxu0
        %v9211 = vadd.f32 0.0, %v9210
        %9212 = vmatmul.bf16.gmra.mxu0 %v9136
        %v9213 = vpop.f32.mrf.mxu0
        %v9214 = vadd.f32 0.0, %v9213
        %v9215 = vpop.f32.mrf.mxu0
        %v9216 = vadd.f32 0.0, %v9215
        %9217 = vmatmul.bf16.gmra.mxu0 %v9139
        %v9218 = vpop.f32.mrf.mxu0
        %v9219 = vadd.f32 0.0, %v9218
        %v9220 = vpop.f32.mrf.mxu0
        %v9221 = vadd.f32 0.0, %v9220
        %9222 = vmatmul.bf16.gmra.mxu0 %v9142
        %v9223 = vpop.f32.mrf.mxu0
        %v9224 = vadd.f32 0.0, %v9223
        %v9225 = vpop.f32.mrf.mxu0
        %v9226 = vadd.f32 0.0, %v9225
        %9227 = vmatmul.bf16.gmra.mxu0 %v9145
        %v9228 = vpop.f32.mrf.mxu0
        %v9229 = vadd.f32 0.0, %v9228
        %v9230 = vpop.f32.mrf.mxu0
        %v9231 = vadd.f32 0.0, %v9230
        %9232 = vmatmul.bf16.gmra.mxu0 %v9148
        %v9233 = vpop.f32.mrf.mxu0
        %v9234 = vadd.f32 0.0, %v9233
        %v9235 = vpop.f32.mrf.mxu0
        %v9236 = vadd.f32 0.0, %v9235
        %9237 = vmatmul.bf16.gmra.mxu0 %v9151
        %v9238 = vpop.f32.mrf.mxu0
        %v9239 = vadd.f32 0.0, %v9238
        %v9240 = vpop.f32.mrf.mxu0
        %v9241 = vadd.f32 0.0, %v9240
        %9242 = vmatmul.bf16.gmra.mxu0 %v9154
        %v9243 = vpop.f32.mrf.mxu0
        %v9244 = vadd.f32 0.0, %v9243
        %v9245 = vpop.f32.mrf.mxu0
        %v9246 = vadd.f32 0.0, %v9245
        %9247 = vmatmul.bf16.gmra.mxu0 %v9157
        %v9248 = vpop.f32.mrf.mxu0
        %v9249 = vadd.f32 0.0, %v9248
        %v9250 = vpop.f32.mrf.mxu0
        %v9251 = vadd.f32 0.0, %v9250
        %9252 = vdwg.mxu0
        %v9253 = vadd.f32 %v8778, %v9169
        %v9254 = vadd.f32 %v8779, %v9171
        %v9255 = vadd.f32 %v8780, %v9174
        %v9256 = vadd.f32 %v8781, %v9176
        %v9257 = vadd.f32 %v8782, %v9179
        %v9258 = vadd.f32 %v8783, %v9181
        %v9259 = vadd.f32 %v8784, %v9184
        %v9260 = vadd.f32 %v8785, %v9186
        %v9261 = vadd.f32 %v8786, %v9189
        %v9262 = vadd.f32 %v8787, %v9191
        %v9263 = vadd.f32 %v8788, %v9194
        %v9264 = vadd.f32 %v8789, %v9196
        %v9265 = vadd.f32 %v8790, %v9199
        %v9266 = vadd.f32 %v8791, %v9201
        %v9267 = vadd.f32 %v8792, %v9204
        %v9268 = vadd.f32 %v8793, %v9206
        %v9269 = vadd.f32 %v8794, %v9209
        %v9270 = vadd.f32 %v8795, %v9211
        %v9271 = vadd.f32 %v8796, %v9214
        %v9272 = vadd.f32 %v8797, %v9216
        %v9273 = vadd.f32 %v8798, %v9219
        %v9274 = vadd.f32 %v8799, %v9221
        %v9275 = vadd.f32 %v8800, %v9224
        %v9276 = vadd.f32 %v8801, %v9226
        %v9277 = vadd.f32 %v8802, %v9229
        %v9278 = vadd.f32 %v8803, %v9231
        %v9279 = vadd.f32 %v8804, %v9234
        %v9280 = vadd.f32 %v8805, %v9236
        %v9281 = vadd.f32 %v8806, %v9239
        %v9282 = vadd.f32 %v8807, %v9241
        %v9283 = vadd.f32 %v8808, %v9244
        %v9284 = vadd.f32 %v8809, %v9246
        %v9285 = vadd.f32 %v8810, %v9249
        %v9286 = vadd.f32 %v8811, %v9251
        %v9287 = vld [vmem:[#allocation4 + $0x14] sm:$0xf]
        %v9288 = vld [vmem:[#allocation4 + $0x18] sm:$0xf]
        %v9289 = vld [vmem:[#allocation4 + $0x1c] sm:$0xf]
        %v9290 = vld [vmem:[#allocation4 + $0x20] sm:$0xf]
        %v9291 = vld [vmem:[#allocation4 + $0x24] sm:$0xf]
        %v9292 = vld [vmem:[#allocation4 + $0x28] sm:$0xf]
        %v9293 = vld [vmem:[#allocation4 + $0x2c] sm:$0xf]
        %v9294 = vld [vmem:[#allocation4 + $0x30] sm:$0xf]
        %v9295 = vld [vmem:[#allocation4 + $0x34] sm:$0xf]
        %v9296 = vld [vmem:[#allocation4 + $0x38] sm:$0xf]
        %v9297 = vld [vmem:[#allocation4 + $0x3c] sm:$0xf]
        %v9298 = vld [vmem:[#allocation4 + $0x40] sm:$0xf]
        %v9299 = vld [vmem:[#allocation4 + $0x44] sm:$0xf]
        %v9300 = vld [vmem:[#allocation4 + $0x48] sm:$0xf]
        %v9301 = vld [vmem:[#allocation4 + $0x4c] sm:$0xf]
        %v9302 = vld [vmem:[#allocation4 + $0x50] sm:$0xf]
        %v9303 = vld [vmem:[#allocation4 + $0x54] sm:$0xf]
        %v9304 = vld [vmem:[#allocation4 + $0x58] sm:$0xf]
        %v9305 = vld [vmem:[#allocation4 + $0x5c] sm:$0xf]
        %v9306 = vld [vmem:[#allocation4 + $0x60] sm:$0xf]
        %v9307 = vld [vmem:[#allocation4 + $0x64] sm:$0xf]
        %v9308 = vld [vmem:[#allocation4 + $0x68] sm:$0xf]
        %v9309 = vld [vmem:[#allocation4 + $0x6c] sm:$0xf]
        %v9310 = vld [vmem:[#allocation4 + $0x70] sm:$0xf]
        %v9311 = vld [vmem:[#allocation4 + $0x74] sm:$0xf]
        %v9312 = vld [vmem:[#allocation4 + $0x78] sm:$0xf]
        %v9313 = vld [vmem:[#allocation4 + $0x7c] sm:$0xf]
        %v9314 = vld [vmem:[#allocation4 + $0x80] sm:$0xf]
        %v9315 = vld [vmem:[#allocation4 + $0x84] sm:$0xf]
        %v9316 = vld [vmem:[#allocation4 + $0x88] sm:$0xf]
        %v9317 = vld [vmem:[#allocation4 + $0x8c] sm:$0xf]
        %v9318 = vld [vmem:[#allocation4 + $0x90] sm:$0xf]
        %v9319 = vld [vmem:[#allocation4 + $0x94] sm:$0xf]
        %v9320 = vld [vmem:[#allocation4 + $0x98] sm:$0xf]
        %s9321 = scalar_lea.vmem %s3, 192
        %v9322 = vld [vmem:[%s9321] sm:$0xf]
        %v9323 = vld [vmem:[%s9321 + $0x4] sm:$0xf]
        %v9324 = vld [vmem:[%s9321 + $0x8] sm:$0xf]
        %v9325 = vld [vmem:[%s9321 + $0xc] sm:$0xf]
        %v9326 = vld [vmem:[%s9321 + $0x10] sm:$0xf]
        %v9327 = vld [vmem:[%s9321 + $0x14] sm:$0xf]
        %v9328 = vld [vmem:[%s9321 + $0x18] sm:$0xf]
        %v9329 = vld [vmem:[%s9321 + $0x1c] sm:$0xf]
        %v9364 = vunpack.c.l.b16 %v9287
        %v9365 = vunpack.c.l.b16 %v9288
        %v9366 = vunpack.c.l.b16 %v9289
        %v9367 = vunpack.c.l.b16 %v9290
        %v9368 = vunpack.c.l.b16 %v9291
        %v9369 = vunpack.c.l.b16 %v9292
        %v9370 = vunpack.c.l.b16 %v9293
        %v9371 = vunpack.c.l.b16 %v9294
        %v9372 = vunpack.c.l.b16 %v9295
        %v9373 = vunpack.c.l.b16 %v9296
        %v9374 = vunpack.c.l.b16 %v9297
        %v9375 = vunpack.c.l.b16 %v9298
        %v9376 = vunpack.c.l.b16 %v9299
        %v9377 = vunpack.c.l.b16 %v9300
        %v9378 = vunpack.c.l.b16 %v9301
        %v9379 = vunpack.c.l.b16 %v9302
        %v9380 = vunpack.c.l.b16 %v9303
        %v9381 = vunpack.c.l.b16 %v9304
        %v9382 = vunpack.c.l.b16 %v9305
        %v9383 = vunpack.c.l.b16 %v9306
        %v9384 = vunpack.c.l.b16 %v9307
        %v9385 = vunpack.c.l.b16 %v9308
        %v9386 = vunpack.c.l.b16 %v9309
        %v9387 = vunpack.c.l.b16 %v9310
        %v9388 = vunpack.c.l.b16 %v9311
        %v9389 = vunpack.c.l.b16 %v9312
        %v9390 = vunpack.c.l.b16 %v9313
        %v9391 = vunpack.c.l.b16 %v9314
        %v9392 = vunpack.c.l.b16 %v9315
        %v9393 = vunpack.c.l.b16 %v9316
        %v9394 = vunpack.c.l.b16 %v9317
        %v9395 = vunpack.c.l.b16 %v9318
        %v9396 = vunpack.c.l.b16 %v9319
        %v9397 = vunpack.c.l.b16 %v9320
        %v9398 = vpack.c.b16 %v9365, %v9364
        %v9399 = vpack.c.b16 %v9367, %v9366
        %v9400 = vpack.c.b16 %v9369, %v9368
        %v9401 = vpack.c.b16 %v9371, %v9370
        %v9402 = vpack.c.b16 %v9373, %v9372
        %v9403 = vpack.c.b16 %v9375, %v9374
        %v9404 = vpack.c.b16 %v9377, %v9376
        %v9405 = vpack.c.b16 %v9379, %v9378
        %v9406 = vpack.c.b16 %v9381, %v9380
        %v9407 = vpack.c.b16 %v9383, %v9382
        %v9408 = vpack.c.b16 %v9385, %v9384
        %v9409 = vpack.c.b16 %v9387, %v9386
        %v9410 = vpack.c.b16 %v9389, %v9388
        %v9411 = vpack.c.b16 %v9391, %v9390
        %v9412 = vpack.c.b16 %v9393, %v9392
        %v9413 = vpack.c.b16 %v9395, %v9394
        %v9414 = vpack.c.b16 %v9397, %v9396
        %v9423 = vunpack.c.l.b16 %v9322
        %v9424 = vunpack.c.l.b16 %v9323
        %v9425 = vunpack.c.l.b16 %v9324
        %v9426 = vunpack.c.l.b16 %v9325
        %v9427 = vunpack.c.l.b16 %v9326
        %v9428 = vunpack.c.l.b16 %v9327
        %v9429 = vunpack.c.l.b16 %v9328
        %v9430 = vunpack.c.l.b16 %v9329
        %v9431 = vpack.c.b16 %v9424, %v9423
        %v9432 = vpack.c.b16 %v9426, %v9425
        %v9433 = vpack.c.b16 %v9428, %v9427
        %v9434 = vpack.c.b16 %v9430, %v9429
        %v9440 = vsel %vm7301, %v9398, 0
        %v9443 = vsel %vm7301, %v9399, 0
        %v9446 = vsel %vm7301, %v9400, 0
        %v9449 = vsel %vm7301, %v9401, 0
        %v9452 = vsel %vm7301, %v9402, 0
        %v9455 = vsel %vm7301, %v9403, 0
        %v9458 = vsel %vm7301, %v9404, 0
        %v9461 = vsel %vm7301, %v9405, 0
        %v9464 = vsel %vm7301, %v9406, 0
        %v9467 = vsel %vm7301, %v9407, 0
        %v9470 = vsel %vm7301, %v9408, 0
        %v9473 = vsel %vm7301, %v9409, 0
        %v9476 = vsel %vm7301, %v9410, 0
        %v9479 = vsel %vm7301, %v9411, 0
        %v9482 = vsel %vm7301, %v9412, 0
        %v9485 = vsel %vm7301, %v9413, 0
        %v9488 = vsel %vm7301, %v9414, 0
        %9490 = vmatpush.bf16.msra.mxu0 0
        %9491 = vmatpush.bf16.msra.mxu0 0
        %9492 = vmatpush.bf16.msra.mxu0 0
        %9493 = vmatpush.bf16.msra.mxu0 0
        %9494 = vmatpush.bf16.msra.mxu0 %v9434
        %9495 = vmatpush.bf16.msra.mxu0 %v9433
        %9496 = vmatpush.bf16.msra.mxu0 %v9432
        %9497 = vmatpush.bf16.msra.mxu0 %v9431
        %9498 = vmatmul.bf16.gmra.mxu0 %v9440
        %v9499 = vpop.f32.mrf.mxu0
        %v9500 = vadd.f32 0.0, %v9499
        %v9501 = vpop.f32.mrf.mxu0
        %v9502 = vadd.f32 0.0, %v9501
        %9503 = vmatmul.bf16.gmra.mxu0 %v9443
        %v9504 = vpop.f32.mrf.mxu0
        %v9505 = vadd.f32 0.0, %v9504
        %v9506 = vpop.f32.mrf.mxu0
        %v9507 = vadd.f32 0.0, %v9506
        %9508 = vmatmul.bf16.gmra.mxu0 %v9446
        %v9509 = vpop.f32.mrf.mxu0
        %v9510 = vadd.f32 0.0, %v9509
        %v9511 = vpop.f32.mrf.mxu0
        %v9512 = vadd.f32 0.0, %v9511
        %9513 = vmatmul.bf16.gmra.mxu0 %v9449
        %v9514 = vpop.f32.mrf.mxu0
        %v9515 = vadd.f32 0.0, %v9514
        %v9516 = vpop.f32.mrf.mxu0
        %v9517 = vadd.f32 0.0, %v9516
        %9518 = vmatmul.bf16.gmra.mxu0 %v9452
        %v9519 = vpop.f32.mrf.mxu0
        %v9520 = vadd.f32 0.0, %v9519
        %v9521 = vpop.f32.mrf.mxu0
        %v9522 = vadd.f32 0.0, %v9521
        %9523 = vmatmul.bf16.gmra.mxu0 %v9455
        %v9524 = vpop.f32.mrf.mxu0
        %v9525 = vadd.f32 0.0, %v9524
        %v9526 = vpop.f32.mrf.mxu0
        %v9527 = vadd.f32 0.0, %v9526
        %9528 = vmatmul.bf16.gmra.mxu0 %v9458
        %v9529 = vpop.f32.mrf.mxu0
        %v9530 = vadd.f32 0.0, %v9529
        %v9531 = vpop.f32.mrf.mxu0
        %v9532 = vadd.f32 0.0, %v9531
        %9533 = vmatmul.bf16.gmra.mxu0 %v9461
        %v9534 = vpop.f32.mrf.mxu0
        %v9535 = vadd.f32 0.0, %v9534
        %v9536 = vpop.f32.mrf.mxu0
        %v9537 = vadd.f32 0.0, %v9536
        %9538 = vmatmul.bf16.gmra.mxu0 %v9464
        %v9539 = vpop.f32.mrf.mxu0
        %v9540 = vadd.f32 0.0, %v9539
        %v9541 = vpop.f32.mrf.mxu0
        %v9542 = vadd.f32 0.0, %v9541
        %9543 = vmatmul.bf16.gmra.mxu0 %v9467
        %v9544 = vpop.f32.mrf.mxu0
        %v9545 = vadd.f32 0.0, %v9544
        %v9546 = vpop.f32.mrf.mxu0
        %v9547 = vadd.f32 0.0, %v9546
        %9548 = vmatmul.bf16.gmra.mxu0 %v9470
        %v9549 = vpop.f32.mrf.mxu0
        %v9550 = vadd.f32 0.0, %v9549
        %v9551 = vpop.f32.mrf.mxu0
        %v9552 = vadd.f32 0.0, %v9551
        %9553 = vmatmul.bf16.gmra.mxu0 %v9473
        %v9554 = vpop.f32.mrf.mxu0
        %v9555 = vadd.f32 0.0, %v9554
        %v9556 = vpop.f32.mrf.mxu0
        %v9557 = vadd.f32 0.0, %v9556
        %9558 = vmatmul.bf16.gmra.mxu0 %v9476
        %v9559 = vpop.f32.mrf.mxu0
        %v9560 = vadd.f32 0.0, %v9559
        %v9561 = vpop.f32.mrf.mxu0
        %v9562 = vadd.f32 0.0, %v9561
        %9563 = vmatmul.bf16.gmra.mxu0 %v9479
        %v9564 = vpop.f32.mrf.mxu0
        %v9565 = vadd.f32 0.0, %v9564
        %v9566 = vpop.f32.mrf.mxu0
        %v9567 = vadd.f32 0.0, %v9566
        %9568 = vmatmul.bf16.gmra.mxu0 %v9482
        %v9569 = vpop.f32.mrf.mxu0
        %v9570 = vadd.f32 0.0, %v9569
        %v9571 = vpop.f32.mrf.mxu0
        %v9572 = vadd.f32 0.0, %v9571
        %9573 = vmatmul.bf16.gmra.mxu0 %v9485
        %v9574 = vpop.f32.mrf.mxu0
        %v9575 = vadd.f32 0.0, %v9574
        %v9576 = vpop.f32.mrf.mxu0
        %v9577 = vadd.f32 0.0, %v9576
        %9578 = vmatmul.bf16.gmra.mxu0 %v9488
        %v9579 = vpop.f32.mrf.mxu0
        %v9580 = vadd.f32 0.0, %v9579
        %v9581 = vpop.f32.mrf.mxu0
        %v9582 = vadd.f32 0.0, %v9581
        %9583 = vdwg.mxu0
        %v9584 = vadd.f32 %v9253, %v9500
        %v9585 = vadd.f32 %v9254, %v9502
        %v9586 = vadd.f32 %v9255, %v9505
        %v9587 = vadd.f32 %v9256, %v9507
        %v9588 = vadd.f32 %v9257, %v9510
        %v9589 = vadd.f32 %v9258, %v9512
        %v9590 = vadd.f32 %v9259, %v9515
        %v9591 = vadd.f32 %v9260, %v9517
        %v9592 = vadd.f32 %v9261, %v9520
        %v9593 = vadd.f32 %v9262, %v9522
        %v9594 = vadd.f32 %v9263, %v9525
        %v9595 = vadd.f32 %v9264, %v9527
        %v9596 = vadd.f32 %v9265, %v9530
        %v9597 = vadd.f32 %v9266, %v9532
        %v9598 = vadd.f32 %v9267, %v9535
        %v9599 = vadd.f32 %v9268, %v9537
        %v9600 = vadd.f32 %v9269, %v9540
        %v9601 = vadd.f32 %v9270, %v9542
        %v9602 = vadd.f32 %v9271, %v9545
        %v9603 = vadd.f32 %v9272, %v9547
        %v9604 = vadd.f32 %v9273, %v9550
        %v9605 = vadd.f32 %v9274, %v9552
        %v9606 = vadd.f32 %v9275, %v9555
        %v9607 = vadd.f32 %v9276, %v9557
        %v9608 = vadd.f32 %v9277, %v9560
        %v9609 = vadd.f32 %v9278, %v9562
        %v9610 = vadd.f32 %v9279, %v9565
        %v9611 = vadd.f32 %v9280, %v9567
        %v9612 = vadd.f32 %v9281, %v9570
        %v9613 = vadd.f32 %v9282, %v9572
        %v9614 = vadd.f32 %v9283, %v9575
        %v9615 = vadd.f32 %v9284, %v9577
        %v9616 = vadd.f32 %v9285, %v9580
        %v9617 = vadd.f32 %v9286, %v9582
        %v9618 = vld [vmem:[#allocation4 + $0x14] sm:$0xf]
        %v9619 = vld [vmem:[#allocation4 + $0x18] sm:$0xf]
        %v9620 = vld [vmem:[#allocation4 + $0x1c] sm:$0xf]
        %v9621 = vld [vmem:[#allocation4 + $0x20] sm:$0xf]
        %v9622 = vld [vmem:[#allocation4 + $0x24] sm:$0xf]
        %v9623 = vld [vmem:[#allocation4 + $0x28] sm:$0xf]
        %v9624 = vld [vmem:[#allocation4 + $0x2c] sm:$0xf]
        %v9625 = vld [vmem:[#allocation4 + $0x30] sm:$0xf]
        %v9626 = vld [vmem:[#allocation4 + $0x34] sm:$0xf]
        %v9627 = vld [vmem:[#allocation4 + $0x38] sm:$0xf]
        %v9628 = vld [vmem:[#allocation4 + $0x3c] sm:$0xf]
        %v9629 = vld [vmem:[#allocation4 + $0x40] sm:$0xf]
        %v9630 = vld [vmem:[#allocation4 + $0x44] sm:$0xf]
        %v9631 = vld [vmem:[#allocation4 + $0x48] sm:$0xf]
        %v9632 = vld [vmem:[#allocation4 + $0x4c] sm:$0xf]
        %v9633 = vld [vmem:[#allocation4 + $0x50] sm:$0xf]
        %v9634 = vld [vmem:[#allocation4 + $0x54] sm:$0xf]
        %v9635 = vld [vmem:[#allocation4 + $0x58] sm:$0xf]
        %v9636 = vld [vmem:[#allocation4 + $0x5c] sm:$0xf]
        %v9637 = vld [vmem:[#allocation4 + $0x60] sm:$0xf]
        %v9638 = vld [vmem:[#allocation4 + $0x64] sm:$0xf]
        %v9639 = vld [vmem:[#allocation4 + $0x68] sm:$0xf]
        %v9640 = vld [vmem:[#allocation4 + $0x6c] sm:$0xf]
        %v9641 = vld [vmem:[#allocation4 + $0x70] sm:$0xf]
        %v9642 = vld [vmem:[#allocation4 + $0x74] sm:$0xf]
        %v9643 = vld [vmem:[#allocation4 + $0x78] sm:$0xf]
        %v9644 = vld [vmem:[#allocation4 + $0x7c] sm:$0xf]
        %v9645 = vld [vmem:[#allocation4 + $0x80] sm:$0xf]
        %v9646 = vld [vmem:[#allocation4 + $0x84] sm:$0xf]
        %v9647 = vld [vmem:[#allocation4 + $0x88] sm:$0xf]
        %v9648 = vld [vmem:[#allocation4 + $0x8c] sm:$0xf]
        %v9649 = vld [vmem:[#allocation4 + $0x90] sm:$0xf]
        %v9650 = vld [vmem:[#allocation4 + $0x94] sm:$0xf]
        %v9651 = vld [vmem:[#allocation4 + $0x98] sm:$0xf]
        %v9652 = vld [vmem:[#allocation4 + $0x9c] sm:$0x1]
        %s9653 = scalar_lea.vmem %s3, 224
        %v9654 = vld [vmem:[%s9653] sm:$0xf]
        %v9655 = vld [vmem:[%s9653 + $0x4] sm:$0xf]
        %v9656 = vld [vmem:[%s9653 + $0x8] sm:$0xf]
        %v9657 = vld [vmem:[%s9653 + $0xc] sm:$0xf]
        %v9658 = vld [vmem:[%s9653 + $0x10] sm:$0xf]
        %v9659 = vld [vmem:[%s9653 + $0x14] sm:$0xf]
        %v9660 = vld [vmem:[%s9653 + $0x18] sm:$0xf]
        %v9661 = vld [vmem:[%s9653 + $0x1c] sm:$0xf]
        %v9697 = vunpack.c.l.b16 %v9618
        %v9698 = vunpack.c.l.b16 %v9619
        %v9699 = vunpack.c.l.b16 %v9620
        %v9700 = vunpack.c.l.b16 %v9621
        %v9701 = vunpack.c.l.b16 %v9622
        %v9702 = vunpack.c.l.b16 %v9623
        %v9703 = vunpack.c.l.b16 %v9624
        %v9704 = vunpack.c.l.b16 %v9625
        %v9705 = vunpack.c.l.b16 %v9626
        %v9706 = vunpack.c.l.b16 %v9627
        %v9707 = vunpack.c.l.b16 %v9628
        %v9708 = vunpack.c.l.b16 %v9629
        %v9709 = vunpack.c.l.b16 %v9630
        %v9710 = vunpack.c.l.b16 %v9631
        %v9711 = vunpack.c.l.b16 %v9632
        %v9712 = vunpack.c.l.b16 %v9633
        %v9713 = vunpack.c.l.b16 %v9634
        %v9714 = vunpack.c.l.b16 %v9635
        %v9715 = vunpack.c.l.b16 %v9636
        %v9716 = vunpack.c.l.b16 %v9637
        %v9717 = vunpack.c.l.b16 %v9638
        %v9718 = vunpack.c.l.b16 %v9639
        %v9719 = vunpack.c.l.b16 %v9640
        %v9720 = vunpack.c.l.b16 %v9641
        %v9721 = vunpack.c.l.b16 %v9642
        %v9722 = vunpack.c.l.b16 %v9643
        %v9723 = vunpack.c.l.b16 %v9644
        %v9724 = vunpack.c.l.b16 %v9645
        %v9725 = vunpack.c.l.b16 %v9646
        %v9726 = vunpack.c.l.b16 %v9647
        %v9727 = vunpack.c.l.b16 %v9648
        %v9728 = vunpack.c.l.b16 %v9649
        %v9729 = vunpack.c.l.b16 %v9650
        %v9730 = vunpack.c.l.b16 %v9651
        %v9731 = vunpack.c.l.b16 %v9652
        %v9732 = vpack.c.b16 %v9698, %v9697
        %v9733 = vpack.c.b16 %v9700, %v9699
        %v9734 = vpack.c.b16 %v9702, %v9701
        %v9735 = vpack.c.b16 %v9704, %v9703
        %v9736 = vpack.c.b16 %v9706, %v9705
        %v9737 = vpack.c.b16 %v9708, %v9707
        %v9738 = vpack.c.b16 %v9710, %v9709
        %v9739 = vpack.c.b16 %v9712, %v9711
        %v9740 = vpack.c.b16 %v9714, %v9713
        %v9741 = vpack.c.b16 %v9716, %v9715
        %v9742 = vpack.c.b16 %v9718, %v9717
        %v9743 = vpack.c.b16 %v9720, %v9719
        %v9744 = vpack.c.b16 %v9722, %v9721
        %v9745 = vpack.c.b16 %v9724, %v9723
        %v9746 = vpack.c.b16 %v9726, %v9725
        %v9747 = vpack.c.b16 %v9728, %v9727
        %v9748 = vpack.c.b16 %v9730, %v9729
        %v9749 = vpack.c.b16 %v9731, %v9731
        %v9751 = vshrl.u32 %v9732, 16
        %v9753 = vshll.u32 %v9732, 16
        %v9755 = vrot.slane %v9753, 1
        %v9756 = vor.u32 %v9751, %v9755
        %v9758 = vshll.u32 %v9733, 16
        %v9760 = vrot.slane %v9758, 1
        %v9761 = vsel %vm3764, %v9756, %v9760
        %v9762 = vshrl.u32 %v9733, 16
        %v9764 = vor.u32 %v9762, %v9760
        %v9766 = vshll.u32 %v9734, 16
        %v9768 = vrot.slane %v9766, 1
        %v9769 = vsel %vm3764, %v9764, %v9768
        %v9770 = vshrl.u32 %v9734, 16
        %v9772 = vor.u32 %v9770, %v9768
        %v9774 = vshll.u32 %v9735, 16
        %v9776 = vrot.slane %v9774, 1
        %v9777 = vsel %vm3764, %v9772, %v9776
        %v9778 = vshrl.u32 %v9735, 16
        %v9780 = vor.u32 %v9778, %v9776
        %v9782 = vshll.u32 %v9736, 16
        %v9784 = vrot.slane %v9782, 1
        %v9785 = vsel %vm3764, %v9780, %v9784
        %v9786 = vshrl.u32 %v9736, 16
        %v9788 = vor.u32 %v9786, %v9784
        %v9790 = vshll.u32 %v9737, 16
        %v9792 = vrot.slane %v9790, 1
        %v9793 = vsel %vm3764, %v9788, %v9792
        %v9794 = vshrl.u32 %v9737, 16
        %v9796 = vor.u32 %v9794, %v9792
        %v9798 = vshll.u32 %v9738, 16
        %v9800 = vrot.slane %v9798, 1
        %v9801 = vsel %vm3764, %v9796, %v9800
        %v9802 = vshrl.u32 %v9738, 16
        %v9804 = vor.u32 %v9802, %v9800
        %v9806 = vshll.u32 %v9739, 16
        %v9808 = vrot.slane %v9806, 1
        %v9809 = vsel %vm3764, %v9804, %v9808
        %v9810 = vshrl.u32 %v9739, 16
        %v9812 = vor.u32 %v9810, %v9808
        %v9814 = vshll.u32 %v9740, 16
        %v9816 = vrot.slane %v9814, 1
        %v9817 = vsel %vm3764, %v9812, %v9816
        %v9818 = vshrl.u32 %v9740, 16
        %v9820 = vor.u32 %v9818, %v9816
        %v9822 = vshll.u32 %v9741, 16
        %v9824 = vrot.slane %v9822, 1
        %v9825 = vsel %vm3764, %v9820, %v9824
        %v9826 = vshrl.u32 %v9741, 16
        %v9828 = vor.u32 %v9826, %v9824
        %v9830 = vshll.u32 %v9742, 16
        %v9832 = vrot.slane %v9830, 1
        %v9833 = vsel %vm3764, %v9828, %v9832
        %v9834 = vshrl.u32 %v9742, 16
        %v9836 = vor.u32 %v9834, %v9832
        %v9838 = vshll.u32 %v9743, 16
        %v9840 = vrot.slane %v9838, 1
        %v9841 = vsel %vm3764, %v9836, %v9840
        %v9842 = vshrl.u32 %v9743, 16
        %v9844 = vor.u32 %v9842, %v9840
        %v9846 = vshll.u32 %v9744, 16
        %v9848 = vrot.slane %v9846, 1
        %v9849 = vsel %vm3764, %v9844, %v9848
        %v9850 = vshrl.u32 %v9744, 16
        %v9852 = vor.u32 %v9850, %v9848
        %v9854 = vshll.u32 %v9745, 16
        %v9856 = vrot.slane %v9854, 1
        %v9857 = vsel %vm3764, %v9852, %v9856
        %v9858 = vshrl.u32 %v9745, 16
        %v9860 = vor.u32 %v9858, %v9856
        %v9862 = vshll.u32 %v9746, 16
        %v9864 = vrot.slane %v9862, 1
        %v9865 = vsel %vm3764, %v9860, %v9864
        %v9866 = vshrl.u32 %v9746, 16
        %v9868 = vor.u32 %v9866, %v9864
        %v9870 = vshll.u32 %v9747, 16
        %v9872 = vrot.slane %v9870, 1
        %v9873 = vsel %vm3764, %v9868, %v9872
        %v9874 = vshrl.u32 %v9747, 16
        %v9876 = vor.u32 %v9874, %v9872
        %v9878 = vshll.u32 %v9748, 16
        %v9880 = vrot.slane %v9878, 1
        %v9881 = vsel %vm3764, %v9876, %v9880
        %v9882 = vshrl.u32 %v9748, 16
        %v9884 = vor.u32 %v9882, %v9880
        %v9886 = vshll.u32 %v9749, 16
        %v9888 = vrot.slane %v9886, 1
        %v9889 = vsel %vm3764, %v9884, %v9888
        %v9898 = vunpack.c.l.b16 %v9654
        %v9899 = vunpack.c.l.b16 %v9655
        %v9900 = vunpack.c.l.b16 %v9656
        %v9901 = vunpack.c.l.b16 %v9657
        %v9902 = vunpack.c.l.b16 %v9658
        %v9903 = vunpack.c.l.b16 %v9659
        %v9904 = vunpack.c.l.b16 %v9660
        %v9905 = vunpack.c.l.b16 %v9661
        %v9906 = vpack.c.b16 %v9899, %v9898
        %v9907 = vpack.c.b16 %v9901, %v9900
        %v9908 = vpack.c.b16 %v9903, %v9902
        %v9909 = vpack.c.b16 %v9905, %v9904
        %v9915 = vsel %vm7301, %v9761, 0
        %v9918 = vsel %vm7301, %v9769, 0
        %v9921 = vsel %vm7301, %v9777, 0
        %v9924 = vsel %vm7301, %v9785, 0
        %v9927 = vsel %vm7301, %v9793, 0
        %v9930 = vsel %vm7301, %v9801, 0
        %v9933 = vsel %vm7301, %v9809, 0
        %v9936 = vsel %vm7301, %v9817, 0
        %v9939 = vsel %vm7301, %v9825, 0
        %v9942 = vsel %vm7301, %v9833, 0
        %v9945 = vsel %vm7301, %v9841, 0
        %v9948 = vsel %vm7301, %v9849, 0
        %v9951 = vsel %vm7301, %v9857, 0
        %v9954 = vsel %vm7301, %v9865, 0
        %v9957 = vsel %vm7301, %v9873, 0
        %v9960 = vsel %vm7301, %v9881, 0
        %v9963 = vsel %vm7301, %v9889, 0
        %9965 = vmatpush.bf16.msra.mxu0 0
        %9966 = vmatpush.bf16.msra.mxu0 0
        %9967 = vmatpush.bf16.msra.mxu0 0
        %9968 = vmatpush.bf16.msra.mxu0 0
        %9969 = vmatpush.bf16.msra.mxu0 %v9909
        %9970 = vmatpush.bf16.msra.mxu0 %v9908
        %9971 = vmatpush.bf16.msra.mxu0 %v9907
        %9972 = vmatpush.bf16.msra.mxu0 %v9906
        %9973 = vmatmul.bf16.gmra.mxu0 %v9915
        %v9974 = vpop.f32.mrf.mxu0
        %v9975 = vadd.f32 0.0, %v9974
        %v9976 = vpop.f32.mrf.mxu0
        %v9977 = vadd.f32 0.0, %v9976
        %9978 = vmatmul.bf16.gmra.mxu0 %v9918
        %v9979 = vpop.f32.mrf.mxu0
        %v9980 = vadd.f32 0.0, %v9979
        %v9981 = vpop.f32.mrf.mxu0
        %v9982 = vadd.f32 0.0, %v9981
        %9983 = vmatmul.bf16.gmra.mxu0 %v9921
        %v9984 = vpop.f32.mrf.mxu0
        %v9985 = vadd.f32 0.0, %v9984
        %v9986 = vpop.f32.mrf.mxu0
        %v9987 = vadd.f32 0.0, %v9986
        %9988 = vmatmul.bf16.gmra.mxu0 %v9924
        %v9989 = vpop.f32.mrf.mxu0
        %v9990 = vadd.f32 0.0, %v9989
        %v9991 = vpop.f32.mrf.mxu0
        %v9992 = vadd.f32 0.0, %v9991
        %9993 = vmatmul.bf16.gmra.mxu0 %v9927
        %v9994 = vpop.f32.mrf.mxu0
        %v9995 = vadd.f32 0.0, %v9994
        %v9996 = vpop.f32.mrf.mxu0
        %v9997 = vadd.f32 0.0, %v9996
        %9998 = vmatmul.bf16.gmra.mxu0 %v9930
        %v9999 = vpop.f32.mrf.mxu0
        %v10000 = vadd.f32 0.0, %v9999
        %v10001 = vpop.f32.mrf.mxu0
        %v10002 = vadd.f32 0.0, %v10001
        %10003 = vmatmul.bf16.gmra.mxu0 %v9933
        %v10004 = vpop.f32.mrf.mxu0
        %v10005 = vadd.f32 0.0, %v10004
        %v10006 = vpop.f32.mrf.mxu0
        %v10007 = vadd.f32 0.0, %v10006
        %10008 = vmatmul.bf16.gmra.mxu0 %v9936
        %v10009 = vpop.f32.mrf.mxu0
        %v10010 = vadd.f32 0.0, %v10009
        %v10011 = vpop.f32.mrf.mxu0
        %v10012 = vadd.f32 0.0, %v10011
        %10013 = vmatmul.bf16.gmra.mxu0 %v9939
        %v10014 = vpop.f32.mrf.mxu0
        %v10015 = vadd.f32 0.0, %v10014
        %v10016 = vpop.f32.mrf.mxu0
        %v10017 = vadd.f32 0.0, %v10016
        %10018 = vmatmul.bf16.gmra.mxu0 %v9942
        %v10019 = vpop.f32.mrf.mxu0
        %v10020 = vadd.f32 0.0, %v10019
        %v10021 = vpop.f32.mrf.mxu0
        %v10022 = vadd.f32 0.0, %v10021
        %10023 = vmatmul.bf16.gmra.mxu0 %v9945
        %v10024 = vpop.f32.mrf.mxu0
        %v10025 = vadd.f32 0.0, %v10024
        %v10026 = vpop.f32.mrf.mxu0
        %v10027 = vadd.f32 0.0, %v10026
        %10028 = vmatmul.bf16.gmra.mxu0 %v9948
        %v10029 = vpop.f32.mrf.mxu0
        %v10030 = vadd.f32 0.0, %v10029
        %v10031 = vpop.f32.mrf.mxu0
        %v10032 = vadd.f32 0.0, %v10031
        %10033 = vmatmul.bf16.gmra.mxu0 %v9951
        %v10034 = vpop.f32.mrf.mxu0
        %v10035 = vadd.f32 0.0, %v10034
        %v10036 = vpop.f32.mrf.mxu0
        %v10037 = vadd.f32 0.0, %v10036
        %10038 = vmatmul.bf16.gmra.mxu0 %v9954
        %v10039 = vpop.f32.mrf.mxu0
        %v10040 = vadd.f32 0.0, %v10039
        %v10041 = vpop.f32.mrf.mxu0
        %v10042 = vadd.f32 0.0, %v10041
        %10043 = vmatmul.bf16.gmra.mxu0 %v9957
        %v10044 = vpop.f32.mrf.mxu0
        %v10045 = vadd.f32 0.0, %v10044
        %v10046 = vpop.f32.mrf.mxu0
        %v10047 = vadd.f32 0.0, %v10046
        %10048 = vmatmul.bf16.gmra.mxu0 %v9960
        %v10049 = vpop.f32.mrf.mxu0
        %v10050 = vadd.f32 0.0, %v10049
        %v10051 = vpop.f32.mrf.mxu0
        %v10052 = vadd.f32 0.0, %v10051
        %10053 = vmatmul.bf16.gmra.mxu0 %v9963
        %v10054 = vpop.f32.mrf.mxu0
        %v10055 = vadd.f32 0.0, %v10054
        %v10056 = vpop.f32.mrf.mxu0
        %v10057 = vadd.f32 0.0, %v10056
        %10058 = vdwg.mxu0
        %v10059 = vadd.f32 %v9584, %v9975
        %v10060 = vadd.f32 %v9585, %v9977
        %v10061 = vadd.f32 %v9586, %v9980
        %v10062 = vadd.f32 %v9587, %v9982
        %v10063 = vadd.f32 %v9588, %v9985
        %v10064 = vadd.f32 %v9589, %v9987
        %v10065 = vadd.f32 %v9590, %v9990
        %v10066 = vadd.f32 %v9591, %v9992
        %v10067 = vadd.f32 %v9592, %v9995
        %v10068 = vadd.f32 %v9593, %v9997
        %v10069 = vadd.f32 %v9594, %v10000
        %v10070 = vadd.f32 %v9595, %v10002
        %v10071 = vadd.f32 %v9596, %v10005
        %v10072 = vadd.f32 %v9597, %v10007
        %v10073 = vadd.f32 %v9598, %v10010
        %v10074 = vadd.f32 %v9599, %v10012
        %v10075 = vadd.f32 %v9600, %v10015
        %v10076 = vadd.f32 %v9601, %v10017
        %v10077 = vadd.f32 %v9602, %v10020
        %v10078 = vadd.f32 %v9603, %v10022
        %v10079 = vadd.f32 %v9604, %v10025
        %v10080 = vadd.f32 %v9605, %v10027
        %v10081 = vadd.f32 %v9606, %v10030
        %v10082 = vadd.f32 %v9607, %v10032
        %v10083 = vadd.f32 %v9608, %v10035
        %v10084 = vadd.f32 %v9609, %v10037
        %v10085 = vadd.f32 %v9610, %v10040
        %v10086 = vadd.f32 %v9611, %v10042
        %v10087 = vadd.f32 %v9612, %v10045
        %v10088 = vadd.f32 %v9613, %v10047
        %v10089 = vadd.f32 %v9614, %v10050
        %v10090 = vadd.f32 %v9615, %v10052
        %v10091 = vadd.f32 %v9616, %v10055
        %v10092 = vadd.f32 %v9617, %v10057
        %v10093 = vld [vmem:[#allocation4 + $0x14] sm:$0xe]
        %s10094 = scalar_lea.vmem %s3, 256
        %v10095 = vld [vmem:[%s10094] sm:$0xf]
        %v10096 = vld [vmem:[%s10094 + $0x4] sm:$0xf]
        %v10097 = vld [vmem:[%s10094 + $0x8] sm:$0xf]
        %v10098 = vld [vmem:[%s10094 + $0xc] sm:$0xf]
        %v10099 = vld [vmem:[%s10094 + $0x10] sm:$0xf]
        %v10100 = vld [vmem:[%s10094 + $0x14] sm:$0xf]
        %v10101 = vld [vmem:[%s10094 + $0x18] sm:$0xf]
        %v10102 = vld [vmem:[%s10094 + $0x1c] sm:$0xf]
        %v10104 = vunpack.c.l.b16 %v10093
        %v10105 = vpack.c.b16 %v9698, %v10104
        %v10106 = vrot.slane %v10105, 1
        %v10107 = vrot.slane %v9733, 1
        %v10108 = vsel %vm4900, %v10106, %v10107
        %v10109 = vrot.slane %v9734, 1
        %v10110 = vsel %vm4900, %v10107, %v10109
        %v10111 = vrot.slane %v9735, 1
        %v10112 = vsel %vm4900, %v10109, %v10111
        %v10113 = vrot.slane %v9736, 1
        %v10114 = vsel %vm4900, %v10111, %v10113
        %v10115 = vrot.slane %v9737, 1
        %v10116 = vsel %vm4900, %v10113, %v10115
        %v10117 = vrot.slane %v9738, 1
        %v10118 = vsel %vm4900, %v10115, %v10117
        %v10119 = vrot.slane %v9739, 1
        %v10120 = vsel %vm4900, %v10117, %v10119
        %v10121 = vrot.slane %v9740, 1
        %v10122 = vsel %vm4900, %v10119, %v10121
        %v10123 = vrot.slane %v9741, 1
        %v10124 = vsel %vm4900, %v10121, %v10123
        %v10125 = vrot.slane %v9742, 1
        %v10126 = vsel %vm4900, %v10123, %v10125
        %v10127 = vrot.slane %v9743, 1
        %v10128 = vsel %vm4900, %v10125, %v10127
        %v10129 = vrot.slane %v9744, 1
        %v10130 = vsel %vm4900, %v10127, %v10129
        %v10131 = vrot.slane %v9745, 1
        %v10132 = vsel %vm4900, %v10129, %v10131
        %v10133 = vrot.slane %v9746, 1
        %v10134 = vsel %vm4900, %v10131, %v10133
        %v10135 = vrot.slane %v9747, 1
        %v10136 = vsel %vm4900, %v10133, %v10135
        %v10137 = vrot.slane %v9748, 1
        %v10138 = vsel %vm4900, %v10135, %v10137
        %v10139 = vrot.slane %v9749, 1
        %v10140 = vsel %vm4900, %v10137, %v10139
        %v10149 = vunpack.c.l.b16 %v10095
        %v10150 = vunpack.c.l.b16 %v10096
        %v10151 = vunpack.c.l.b16 %v10097
        %v10152 = vunpack.c.l.b16 %v10098
        %v10153 = vunpack.c.l.b16 %v10099
        %v10154 = vunpack.c.l.b16 %v10100
        %v10155 = vunpack.c.l.b16 %v10101
        %v10156 = vunpack.c.l.b16 %v10102
        %v10157 = vpack.c.b16 %v10150, %v10149
        %v10158 = vpack.c.b16 %v10152, %v10151
        %v10159 = vpack.c.b16 %v10154, %v10153
        %v10160 = vpack.c.b16 %v10156, %v10155
        %v10166 = vsel %vm7301, %v10108, 0
        %v10169 = vsel %vm7301, %v10110, 0
        %v10172 = vsel %vm7301, %v10112, 0
        %v10175 = vsel %vm7301, %v10114, 0
        %v10178 = vsel %vm7301, %v10116, 0
        %v10181 = vsel %vm7301, %v10118, 0
        %v10184 = vsel %vm7301, %v10120, 0
        %v10187 = vsel %vm7301, %v10122, 0
        %v10190 = vsel %vm7301, %v10124, 0
        %v10193 = vsel %vm7301, %v10126, 0
        %v10196 = vsel %vm7301, %v10128, 0
        %v10199 = vsel %vm7301, %v10130, 0
        %v10202 = vsel %vm7301, %v10132, 0
        %v10205 = vsel %vm7301, %v10134, 0
        %v10208 = vsel %vm7301, %v10136, 0
        %v10211 = vsel %vm7301, %v10138, 0
        %v10214 = vsel %vm7301, %v10140, 0
        %10216 = vmatpush.bf16.msra.mxu0 0
        %10217 = vmatpush.bf16.msra.mxu0 0
        %10218 = vmatpush.bf16.msra.mxu0 0
        %10219 = vmatpush.bf16.msra.mxu0 0
        %10220 = vmatpush.bf16.msra.mxu0 %v10160
        %10221 = vmatpush.bf16.msra.mxu0 %v10159
        %10222 = vmatpush.bf16.msra.mxu0 %v10158
        %10223 = vmatpush.bf16.msra.mxu0 %v10157
        %10224 = vmatmul.bf16.gmra.mxu0 %v10166
        %v10225 = vpop.f32.mrf.mxu0
        %v10226 = vadd.f32 0.0, %v10225
        %v10227 = vpop.f32.mrf.mxu0
        %v10228 = vadd.f32 0.0, %v10227
        %10229 = vmatmul.bf16.gmra.mxu0 %v10169
        %v10230 = vpop.f32.mrf.mxu0
        %v10231 = vadd.f32 0.0, %v10230
        %v10232 = vpop.f32.mrf.mxu0
        %v10233 = vadd.f32 0.0, %v10232
        %10234 = vmatmul.bf16.gmra.mxu0 %v10172
        %v10235 = vpop.f32.mrf.mxu0
        %v10236 = vadd.f32 0.0, %v10235
        %v10237 = vpop.f32.mrf.mxu0
        %v10238 = vadd.f32 0.0, %v10237
        %10239 = vmatmul.bf16.gmra.mxu0 %v10175
        %v10240 = vpop.f32.mrf.mxu0
        %v10241 = vadd.f32 0.0, %v10240
        %v10242 = vpop.f32.mrf.mxu0
        %v10243 = vadd.f32 0.0, %v10242
        %10244 = vmatmul.bf16.gmra.mxu0 %v10178
        %v10245 = vpop.f32.mrf.mxu0
        %v10246 = vadd.f32 0.0, %v10245
        %v10247 = vpop.f32.mrf.mxu0
        %v10248 = vadd.f32 0.0, %v10247
        %10249 = vmatmul.bf16.gmra.mxu0 %v10181
        %v10250 = vpop.f32.mrf.mxu0
        %v10251 = vadd.f32 0.0, %v10250
        %v10252 = vpop.f32.mrf.mxu0
        %v10253 = vadd.f32 0.0, %v10252
        %10254 = vmatmul.bf16.gmra.mxu0 %v10184
        %v10255 = vpop.f32.mrf.mxu0
        %v10256 = vadd.f32 0.0, %v10255
        %v10257 = vpop.f32.mrf.mxu0
        %v10258 = vadd.f32 0.0, %v10257
        %10259 = vmatmul.bf16.gmra.mxu0 %v10187
        %v10260 = vpop.f32.mrf.mxu0
        %v10261 = vadd.f32 0.0, %v10260
        %v10262 = vpop.f32.mrf.mxu0
        %v10263 = vadd.f32 0.0, %v10262
        %10264 = vmatmul.bf16.gmra.mxu0 %v10190
        %v10265 = vpop.f32.mrf.mxu0
        %v10266 = vadd.f32 0.0, %v10265
        %v10267 = vpop.f32.mrf.mxu0
        %v10268 = vadd.f32 0.0, %v10267
        %10269 = vmatmul.bf16.gmra.mxu0 %v10193
        %v10270 = vpop.f32.mrf.mxu0
        %v10271 = vadd.f32 0.0, %v10270
        %v10272 = vpop.f32.mrf.mxu0
        %v10273 = vadd.f32 0.0, %v10272
        %10274 = vmatmul.bf16.gmra.mxu0 %v10196
        %v10275 = vpop.f32.mrf.mxu0
        %v10276 = vadd.f32 0.0, %v10275
        %v10277 = vpop.f32.mrf.mxu0
        %v10278 = vadd.f32 0.0, %v10277
        %10279 = vmatmul.bf16.gmra.mxu0 %v10199
        %v10280 = vpop.f32.mrf.mxu0
        %v10281 = vadd.f32 0.0, %v10280
        %v10282 = vpop.f32.mrf.mxu0
        %v10283 = vadd.f32 0.0, %v10282
        %10284 = vmatmul.bf16.gmra.mxu0 %v10202
        %v10285 = vpop.f32.mrf.mxu0
        %v10286 = vadd.f32 0.0, %v10285
        %v10287 = vpop.f32.mrf.mxu0
        %v10288 = vadd.f32 0.0, %v10287
        %10289 = vmatmul.bf16.gmra.mxu0 %v10205
        %v10290 = vpop.f32.mrf.mxu0
        %v10291 = vadd.f32 0.0, %v10290
        %v10292 = vpop.f32.mrf.mxu0
        %v10293 = vadd.f32 0.0, %v10292
        %10294 = vmatmul.bf16.gmra.mxu0 %v10208
        %v10295 = vpop.f32.mrf.mxu0
        %v10296 = vadd.f32 0.0, %v10295
        %v10297 = vpop.f32.mrf.mxu0
        %v10298 = vadd.f32 0.0, %v10297
        %10299 = vmatmul.bf16.gmra.mxu0 %v10211
        %v10300 = vpop.f32.mrf.mxu0
        %v10301 = vadd.f32 0.0, %v10300
        %v10302 = vpop.f32.mrf.mxu0
        %v10303 = vadd.f32 0.0, %v10302
        %10304 = vmatmul.bf16.gmra.mxu0 %v10214
        %v10305 = vpop.f32.mrf.mxu0
        %v10306 = vadd.f32 0.0, %v10305
        %v10307 = vpop.f32.mrf.mxu0
        %v10308 = vadd.f32 0.0, %v10307
        %10309 = vdwg.mxu0
        %v10310 = vadd.f32 %v10059, %v10226
        %v10311 = vadd.f32 %v10060, %v10228
        %v10312 = vadd.f32 %v10061, %v10231
        %v10313 = vadd.f32 %v10062, %v10233
        %v10314 = vadd.f32 %v10063, %v10236
        %v10315 = vadd.f32 %v10064, %v10238
        %v10316 = vadd.f32 %v10065, %v10241
        %v10317 = vadd.f32 %v10066, %v10243
        %v10318 = vadd.f32 %v10067, %v10246
        %v10319 = vadd.f32 %v10068, %v10248
        %v10320 = vadd.f32 %v10069, %v10251
        %v10321 = vadd.f32 %v10070, %v10253
        %v10322 = vadd.f32 %v10071, %v10256
        %v10323 = vadd.f32 %v10072, %v10258
        %v10324 = vadd.f32 %v10073, %v10261
        %v10325 = vadd.f32 %v10074, %v10263
        %v10326 = vadd.f32 %v10075, %v10266
        %v10327 = vadd.f32 %v10076, %v10268
        %v10328 = vadd.f32 %v10077, %v10271
        %v10329 = vadd.f32 %v10078, %v10273
        %v10330 = vadd.f32 %v10079, %v10276
        %v10331 = vadd.f32 %v10080, %v10278
        %v10332 = vadd.f32 %v10081, %v10281
        %v10333 = vadd.f32 %v10082, %v10283
        %v10334 = vadd.f32 %v10083, %v10286
        %v10335 = vadd.f32 %v10084, %v10288
        %v10336 = vadd.f32 %v10085, %v10291
        %v10337 = vadd.f32 %v10086, %v10293
        %v10338 = vadd.f32 %v10087, %v10296
        %v10339 = vadd.f32 %v10088, %v10298
        %v10340 = vadd.f32 %v10089, %v10301
        %v10341 = vadd.f32 %v10090, %v10303
        %v10342 = vadd.f32 %v10091, %v10306
        %v10343 = vadd.f32 %v10092, %v10308
        %v10344 = vxor.u32 %v10310, 2147483648
        %v10345 = vxor.u32 %v10311, 2147483648
        %v10346 = vxor.u32 %v10312, 2147483648
        %v10347 = vxor.u32 %v10313, 2147483648
        %v10348 = vxor.u32 %v10314, 2147483648
        %v10349 = vxor.u32 %v10315, 2147483648
        %v10350 = vxor.u32 %v10316, 2147483648
        %v10351 = vxor.u32 %v10317, 2147483648
        %v10352 = vxor.u32 %v10318, 2147483648
        %v10353 = vxor.u32 %v10319, 2147483648
        %v10354 = vxor.u32 %v10320, 2147483648
        %v10355 = vxor.u32 %v10321, 2147483648
        %v10356 = vxor.u32 %v10322, 2147483648
        %v10357 = vxor.u32 %v10323, 2147483648
        %v10358 = vxor.u32 %v10324, 2147483648
        %v10359 = vxor.u32 %v10325, 2147483648
        %v10360 = vxor.u32 %v10326, 2147483648
        %v10361 = vxor.u32 %v10327, 2147483648
        %v10362 = vxor.u32 %v10328, 2147483648
        %v10363 = vxor.u32 %v10329, 2147483648
        %v10364 = vxor.u32 %v10330, 2147483648
        %v10365 = vxor.u32 %v10331, 2147483648
        %v10366 = vxor.u32 %v10332, 2147483648
        %v10367 = vxor.u32 %v10333, 2147483648
        %v10368 = vxor.u32 %v10334, 2147483648
        %v10369 = vxor.u32 %v10335, 2147483648
        %v10370 = vxor.u32 %v10336, 2147483648
        %v10371 = vxor.u32 %v10337, 2147483648
        %v10372 = vxor.u32 %v10338, 2147483648
        %v10373 = vxor.u32 %v10339, 2147483648
        %v10374 = vxor.u32 %v10340, 2147483648
        %v10375 = vxor.u32 %v10341, 2147483648
        %v10376 = vxor.u32 %v10342, 2147483648
        %v10377 = vxor.u32 %v10343, 2147483648
        %v10378 = vmul.f32 %v10344, 1.442695
        %v10379 = vpow.pop %v10378
        %v10380 = vmul.f32 %v10345, 1.442695
        %v10381 = vpow.pop %v10380
        %v10382 = vmul.f32 %v10346, 1.442695
        %v10383 = vpow.pop %v10382
        %v10384 = vmul.f32 %v10347, 1.442695
        %v10385 = vpow.pop %v10384
        %v10386 = vmul.f32 %v10348, 1.442695
        %v10387 = vpow.pop %v10386
        %v10388 = vmul.f32 %v10349, 1.442695
        %v10389 = vpow.pop %v10388
        %v10390 = vmul.f32 %v10350, 1.442695
        %v10391 = vpow.pop %v10390
        %v10392 = vmul.f32 %v10351, 1.442695
        %v10393 = vpow.pop %v10392
        %v10394 = vmul.f32 %v10352, 1.442695
        %v10395 = vpow.pop %v10394
        %v10396 = vmul.f32 %v10353, 1.442695
        %v10397 = vpow.pop %v10396
        %v10398 = vmul.f32 %v10354, 1.442695
        %v10399 = vpow.pop %v10398
        %v10400 = vmul.f32 %v10355, 1.442695
        %v10401 = vpow.pop %v10400
        %v10402 = vmul.f32 %v10356, 1.442695
        %v10403 = vpow.pop %v10402
        %v10404 = vmul.f32 %v10357, 1.442695
        %v10405 = vpow.pop %v10404
        %v10406 = vmul.f32 %v10358, 1.442695
        %v10407 = vpow.pop %v10406
        %v10408 = vmul.f32 %v10359, 1.442695
        %v10409 = vpow.pop %v10408
        %v10410 = vmul.f32 %v10360, 1.442695
        %v10411 = vpow.pop %v10410
        %v10412 = vmul.f32 %v10361, 1.442695
        %v10413 = vpow.pop %v10412
        %v10414 = vmul.f32 %v10362, 1.442695
        %v10415 = vpow.pop %v10414
        %v10416 = vmul.f32 %v10363, 1.442695
        %v10417 = vpow.pop %v10416
        %v10418 = vmul.f32 %v10364, 1.442695
        %v10419 = vpow.pop %v10418
        %v10420 = vmul.f32 %v10365, 1.442695
        %v10421 = vpow.pop %v10420
        %v10422 = vmul.f32 %v10366, 1.442695
        %v10423 = vpow.pop %v10422
        %v10424 = vmul.f32 %v10367, 1.442695
        %v10425 = vpow.pop %v10424
        %v10426 = vmul.f32 %v10368, 1.442695
        %v10427 = vpow.pop %v10426
        %v10428 = vmul.f32 %v10369, 1.442695
        %v10429 = vpow.pop %v10428
        %v10430 = vmul.f32 %v10370, 1.442695
        %v10431 = vpow.pop %v10430
        %v10432 = vmul.f32 %v10371, 1.442695
        %v10433 = vpow.pop %v10432
        %v10434 = vmul.f32 %v10372, 1.442695
        %v10435 = vpow.pop %v10434
        %v10436 = vmul.f32 %v10373, 1.442695
        %v10437 = vpow.pop %v10436
        %v10438 = vmul.f32 %v10374, 1.442695
        %v10439 = vpow.pop %v10438
        %v10440 = vmul.f32 %v10375, 1.442695
        %v10441 = vpow.pop %v10440
        %v10442 = vmul.f32 %v10376, 1.442695
        %v10443 = vpow.pop %v10442
        %v10444 = vmul.f32 %v10377, 1.442695
        %v10445 = vpow.pop %v10444
        %v10446 = vadd.f32 %v10379, 1.0
        %v10447 = vadd.f32 %v10381, 1.0
        %v10448 = vadd.f32 %v10383, 1.0
        %v10449 = vadd.f32 %v10385, 1.0
        %v10450 = vadd.f32 %v10387, 1.0
        %v10451 = vadd.f32 %v10389, 1.0
        %v10452 = vadd.f32 %v10391, 1.0
        %v10453 = vadd.f32 %v10393, 1.0
        %v10454 = vadd.f32 %v10395, 1.0
        %v10455 = vadd.f32 %v10397, 1.0
        %v10456 = vadd.f32 %v10399, 1.0
        %v10457 = vadd.f32 %v10401, 1.0
        %v10458 = vadd.f32 %v10403, 1.0
        %v10459 = vadd.f32 %v10405, 1.0
        %v10460 = vadd.f32 %v10407, 1.0
        %v10461 = vadd.f32 %v10409, 1.0
        %v10462 = vadd.f32 %v10411, 1.0
        %v10463 = vadd.f32 %v10413, 1.0
        %v10464 = vadd.f32 %v10415, 1.0
        %v10465 = vadd.f32 %v10417, 1.0
        %v10466 = vadd.f32 %v10419, 1.0
        %v10467 = vadd.f32 %v10421, 1.0
        %v10468 = vadd.f32 %v10423, 1.0
        %v10469 = vadd.f32 %v10425, 1.0
        %v10470 = vadd.f32 %v10427, 1.0
        %v10471 = vadd.f32 %v10429, 1.0
        %v10472 = vadd.f32 %v10431, 1.0
        %v10473 = vadd.f32 %v10433, 1.0
        %v10474 = vadd.f32 %v10435, 1.0
        %v10475 = vadd.f32 %v10437, 1.0
        %v10476 = vadd.f32 %v10439, 1.0
        %v10477 = vadd.f32 %v10441, 1.0
        %v10478 = vadd.f32 %v10443, 1.0
        %v10479 = vadd.f32 %v10445, 1.0
        %v10480 = vrcp.pop %v10446
        %v10481 = vmul.f32 %v10446, %v10480
        %v10482 = vsub.f32 1.0, %v10481
        %v10483 = vmul.f32 %v10480, %v10482
        %v10484 = vadd.f32 %v10480, %v10483
        %vm10485 = vweird.f32 %v10446
        %vm10486 = vweird.f32 %v10480
        %vm10487 = vmor %vm10485, %vm10486
        %v10488 = vsel %vm10487, %v10480, %v10484
        %v10489 = vand.u32 2147483647, %v10446
        %vm10490 = vcmp.eq.f32.partialorder %v10489, 8.507059e+37
        %v10491 = vand.u32 %v10446, 2147483648
        %v10492 = vor.u32 1.1754944e-38, %v10491
        %v10493 = vsel %vm10490, %v10492, %v10488
        %v10494 = vmul.f32 1.0, %v10493
        %v10495 = vrcp.pop %v10447
        %v10496 = vmul.f32 %v10447, %v10495
        %v10497 = vsub.f32 1.0, %v10496
        %v10498 = vmul.f32 %v10495, %v10497
        %v10499 = vadd.f32 %v10495, %v10498
        %vm10500 = vweird.f32 %v10447
        %vm10501 = vweird.f32 %v10495
        %vm10502 = vmor %vm10500, %vm10501
        %v10503 = vsel %vm10502, %v10495, %v10499
        %v10504 = vand.u32 2147483647, %v10447
        %vm10505 = vcmp.eq.f32.partialorder %v10504, 8.507059e+37
        %v10506 = vand.u32 %v10447, 2147483648
        %v10507 = vor.u32 1.1754944e-38, %v10506
        %v10508 = vsel %vm10505, %v10507, %v10503
        %v10509 = vmul.f32 1.0, %v10508
        %v10510 = vrcp.pop %v10448
        %v10511 = vmul.f32 %v10448, %v10510
        %v10512 = vsub.f32 1.0, %v10511
        %v10513 = vmul.f32 %v10510, %v10512
        %v10514 = vadd.f32 %v10510, %v10513
        %vm10515 = vweird.f32 %v10448
        %vm10516 = vweird.f32 %v10510
        %vm10517 = vmor %vm10515, %vm10516
        %v10518 = vsel %vm10517, %v10510, %v10514
        %v10519 = vand.u32 2147483647, %v10448
        %vm10520 = vcmp.eq.f32.partialorder %v10519, 8.507059e+37
        %v10521 = vand.u32 %v10448, 2147483648
        %v10522 = vor.u32 1.1754944e-38, %v10521
        %v10523 = vsel %vm10520, %v10522, %v10518
        %v10524 = vmul.f32 1.0, %v10523
        %v10525 = vrcp.pop %v10449
        %v10526 = vmul.f32 %v10449, %v10525
        %v10527 = vsub.f32 1.0, %v10526
        %v10528 = vmul.f32 %v10525, %v10527
        %v10529 = vadd.f32 %v10525, %v10528
        %vm10530 = vweird.f32 %v10449
        %vm10531 = vweird.f32 %v10525
        %vm10532 = vmor %vm10530, %vm10531
        %v10533 = vsel %vm10532, %v10525, %v10529
        %v10534 = vand.u32 2147483647, %v10449
        %vm10535 = vcmp.eq.f32.partialorder %v10534, 8.507059e+37
        %v10536 = vand.u32 %v10449, 2147483648
        %v10537 = vor.u32 1.1754944e-38, %v10536
        %v10538 = vsel %vm10535, %v10537, %v10533
        %v10539 = vmul.f32 1.0, %v10538
        %v10540 = vrcp.pop %v10450
        %v10541 = vmul.f32 %v10450, %v10540
        %v10542 = vsub.f32 1.0, %v10541
        %v10543 = vmul.f32 %v10540, %v10542
        %v10544 = vadd.f32 %v10540, %v10543
        %vm10545 = vweird.f32 %v10450
        %vm10546 = vweird.f32 %v10540
        %vm10547 = vmor %vm10545, %vm10546
        %v10548 = vsel %vm10547, %v10540, %v10544
        %v10549 = vand.u32 2147483647, %v10450
        %vm10550 = vcmp.eq.f32.partialorder %v10549, 8.507059e+37
        %v10551 = vand.u32 %v10450, 2147483648
        %v10552 = vor.u32 1.1754944e-38, %v10551
        %v10553 = vsel %vm10550, %v10552, %v10548
        %v10554 = vmul.f32 1.0, %v10553
        %v10555 = vrcp.pop %v10451
        %v10556 = vmul.f32 %v10451, %v10555
        %v10557 = vsub.f32 1.0, %v10556
        %v10558 = vmul.f32 %v10555, %v10557
        %v10559 = vadd.f32 %v10555, %v10558
        %vm10560 = vweird.f32 %v10451
        %vm10561 = vweird.f32 %v10555
        %vm10562 = vmor %vm10560, %vm10561
        %v10563 = vsel %vm10562, %v10555, %v10559
        %v10564 = vand.u32 2147483647, %v10451
        %vm10565 = vcmp.eq.f32.partialorder %v10564, 8.507059e+37
        %v10566 = vand.u32 %v10451, 2147483648
        %v10567 = vor.u32 1.1754944e-38, %v10566
        %v10568 = vsel %vm10565, %v10567, %v10563
        %v10569 = vmul.f32 1.0, %v10568
        %v10570 = vrcp.pop %v10452
        %v10571 = vmul.f32 %v10452, %v10570
        %v10572 = vsub.f32 1.0, %v10571
        %v10573 = vmul.f32 %v10570, %v10572
        %v10574 = vadd.f32 %v10570, %v10573
        %vm10575 = vweird.f32 %v10452
        %vm10576 = vweird.f32 %v10570
        %vm10577 = vmor %vm10575, %vm10576
        %v10578 = vsel %vm10577, %v10570, %v10574
        %v10579 = vand.u32 2147483647, %v10452
        %vm10580 = vcmp.eq.f32.partialorder %v10579, 8.507059e+37
        %v10581 = vand.u32 %v10452, 2147483648
        %v10582 = vor.u32 1.1754944e-38, %v10581
        %v10583 = vsel %vm10580, %v10582, %v10578
        %v10584 = vmul.f32 1.0, %v10583
        %v10585 = vrcp.pop %v10453
        %v10586 = vmul.f32 %v10453, %v10585
        %v10587 = vsub.f32 1.0, %v10586
        %v10588 = vmul.f32 %v10585, %v10587
        %v10589 = vadd.f32 %v10585, %v10588
        %vm10590 = vweird.f32 %v10453
        %vm10591 = vweird.f32 %v10585
        %vm10592 = vmor %vm10590, %vm10591
        %v10593 = vsel %vm10592, %v10585, %v10589
        %v10594 = vand.u32 2147483647, %v10453
        %vm10595 = vcmp.eq.f32.partialorder %v10594, 8.507059e+37
        %v10596 = vand.u32 %v10453, 2147483648
        %v10597 = vor.u32 1.1754944e-38, %v10596
        %v10598 = vsel %vm10595, %v10597, %v10593
        %v10599 = vmul.f32 1.0, %v10598
        %v10600 = vrcp.pop %v10454
        %v10601 = vmul.f32 %v10454, %v10600
        %v10602 = vsub.f32 1.0, %v10601
        %v10603 = vmul.f32 %v10600, %v10602
        %v10604 = vadd.f32 %v10600, %v10603
        %vm10605 = vweird.f32 %v10454
        %vm10606 = vweird.f32 %v10600
        %vm10607 = vmor %vm10605, %vm10606
        %v10608 = vsel %vm10607, %v10600, %v10604
        %v10609 = vand.u32 2147483647, %v10454
        %vm10610 = vcmp.eq.f32.partialorder %v10609, 8.507059e+37
        %v10611 = vand.u32 %v10454, 2147483648
        %v10612 = vor.u32 1.1754944e-38, %v10611
        %v10613 = vsel %vm10610, %v10612, %v10608
        %v10614 = vmul.f32 1.0, %v10613
        %v10615 = vrcp.pop %v10455
        %v10616 = vmul.f32 %v10455, %v10615
        %v10617 = vsub.f32 1.0, %v10616
        %v10618 = vmul.f32 %v10615, %v10617
        %v10619 = vadd.f32 %v10615, %v10618
        %vm10620 = vweird.f32 %v10455
        %vm10621 = vweird.f32 %v10615
        %vm10622 = vmor %vm10620, %vm10621
        %v10623 = vsel %vm10622, %v10615, %v10619
        %v10624 = vand.u32 2147483647, %v10455
        %vm10625 = vcmp.eq.f32.partialorder %v10624, 8.507059e+37
        %v10626 = vand.u32 %v10455, 2147483648
        %v10627 = vor.u32 1.1754944e-38, %v10626
        %v10628 = vsel %vm10625, %v10627, %v10623
        %v10629 = vmul.f32 1.0, %v10628
        %v10630 = vrcp.pop %v10456
        %v10631 = vmul.f32 %v10456, %v10630
        %v10632 = vsub.f32 1.0, %v10631
        %v10633 = vmul.f32 %v10630, %v10632
        %v10634 = vadd.f32 %v10630, %v10633
        %vm10635 = vweird.f32 %v10456
        %vm10636 = vweird.f32 %v10630
        %vm10637 = vmor %vm10635, %vm10636
        %v10638 = vsel %vm10637, %v10630, %v10634
        %v10639 = vand.u32 2147483647, %v10456
        %vm10640 = vcmp.eq.f32.partialorder %v10639, 8.507059e+37
        %v10641 = vand.u32 %v10456, 2147483648
        %v10642 = vor.u32 1.1754944e-38, %v10641
        %v10643 = vsel %vm10640, %v10642, %v10638
        %v10644 = vmul.f32 1.0, %v10643
        %v10645 = vrcp.pop %v10457
        %v10646 = vmul.f32 %v10457, %v10645
        %v10647 = vsub.f32 1.0, %v10646
        %v10648 = vmul.f32 %v10645, %v10647
        %v10649 = vadd.f32 %v10645, %v10648
        %vm10650 = vweird.f32 %v10457
        %vm10651 = vweird.f32 %v10645
        %vm10652 = vmor %vm10650, %vm10651
        %v10653 = vsel %vm10652, %v10645, %v10649
        %v10654 = vand.u32 2147483647, %v10457
        %vm10655 = vcmp.eq.f32.partialorder %v10654, 8.507059e+37
        %v10656 = vand.u32 %v10457, 2147483648
        %v10657 = vor.u32 1.1754944e-38, %v10656
        %v10658 = vsel %vm10655, %v10657, %v10653
        %v10659 = vmul.f32 1.0, %v10658
        %v10660 = vrcp.pop %v10458
        %v10661 = vmul.f32 %v10458, %v10660
        %v10662 = vsub.f32 1.0, %v10661
        %v10663 = vmul.f32 %v10660, %v10662
        %v10664 = vadd.f32 %v10660, %v10663
        %vm10665 = vweird.f32 %v10458
        %vm10666 = vweird.f32 %v10660
        %vm10667 = vmor %vm10665, %vm10666
        %v10668 = vsel %vm10667, %v10660, %v10664
        %v10669 = vand.u32 2147483647, %v10458
        %vm10670 = vcmp.eq.f32.partialorder %v10669, 8.507059e+37
        %v10671 = vand.u32 %v10458, 2147483648
        %v10672 = vor.u32 1.1754944e-38, %v10671
        %v10673 = vsel %vm10670, %v10672, %v10668
        %v10674 = vmul.f32 1.0, %v10673
        %v10675 = vrcp.pop %v10459
        %v10676 = vmul.f32 %v10459, %v10675
        %v10677 = vsub.f32 1.0, %v10676
        %v10678 = vmul.f32 %v10675, %v10677
        %v10679 = vadd.f32 %v10675, %v10678
        %vm10680 = vweird.f32 %v10459
        %vm10681 = vweird.f32 %v10675
        %vm10682 = vmor %vm10680, %vm10681
        %v10683 = vsel %vm10682, %v10675, %v10679
        %v10684 = vand.u32 2147483647, %v10459
        %vm10685 = vcmp.eq.f32.partialorder %v10684, 8.507059e+37
        %v10686 = vand.u32 %v10459, 2147483648
        %v10687 = vor.u32 1.1754944e-38, %v10686
        %v10688 = vsel %vm10685, %v10687, %v10683
        %v10689 = vmul.f32 1.0, %v10688
        %v10690 = vrcp.pop %v10460
        %v10691 = vmul.f32 %v10460, %v10690
        %v10692 = vsub.f32 1.0, %v10691
        %v10693 = vmul.f32 %v10690, %v10692
        %v10694 = vadd.f32 %v10690, %v10693
        %vm10695 = vweird.f32 %v10460
        %vm10696 = vweird.f32 %v10690
        %vm10697 = vmor %vm10695, %vm10696
        %v10698 = vsel %vm10697, %v10690, %v10694
        %v10699 = vand.u32 2147483647, %v10460
        %vm10700 = vcmp.eq.f32.partialorder %v10699, 8.507059e+37
        %v10701 = vand.u32 %v10460, 2147483648
        %v10702 = vor.u32 1.1754944e-38, %v10701
        %v10703 = vsel %vm10700, %v10702, %v10698
        %v10704 = vmul.f32 1.0, %v10703
        %v10705 = vrcp.pop %v10461
        %v10706 = vmul.f32 %v10461, %v10705
        %v10707 = vsub.f32 1.0, %v10706
        %v10708 = vmul.f32 %v10705, %v10707
        %v10709 = vadd.f32 %v10705, %v10708
        %vm10710 = vweird.f32 %v10461
        %vm10711 = vweird.f32 %v10705
        %vm10712 = vmor %vm10710, %vm10711
        %v10713 = vsel %vm10712, %v10705, %v10709
        %v10714 = vand.u32 2147483647, %v10461
        %vm10715 = vcmp.eq.f32.partialorder %v10714, 8.507059e+37
        %v10716 = vand.u32 %v10461, 2147483648
        %v10717 = vor.u32 1.1754944e-38, %v10716
        %v10718 = vsel %vm10715, %v10717, %v10713
        %v10719 = vmul.f32 1.0, %v10718
        %v10720 = vrcp.pop %v10462
        %v10721 = vmul.f32 %v10462, %v10720
        %v10722 = vsub.f32 1.0, %v10721
        %v10723 = vmul.f32 %v10720, %v10722
        %v10724 = vadd.f32 %v10720, %v10723
        %vm10725 = vweird.f32 %v10462
        %vm10726 = vweird.f32 %v10720
        %vm10727 = vmor %vm10725, %vm10726
        %v10728 = vsel %vm10727, %v10720, %v10724
        %v10729 = vand.u32 2147483647, %v10462
        %vm10730 = vcmp.eq.f32.partialorder %v10729, 8.507059e+37
        %v10731 = vand.u32 %v10462, 2147483648
        %v10732 = vor.u32 1.1754944e-38, %v10731
        %v10733 = vsel %vm10730, %v10732, %v10728
        %v10734 = vmul.f32 1.0, %v10733
        %v10735 = vrcp.pop %v10463
        %v10736 = vmul.f32 %v10463, %v10735
        %v10737 = vsub.f32 1.0, %v10736
        %v10738 = vmul.f32 %v10735, %v10737
        %v10739 = vadd.f32 %v10735, %v10738
        %vm10740 = vweird.f32 %v10463
        %vm10741 = vweird.f32 %v10735
        %vm10742 = vmor %vm10740, %vm10741
        %v10743 = vsel %vm10742, %v10735, %v10739
        %v10744 = vand.u32 2147483647, %v10463
        %vm10745 = vcmp.eq.f32.partialorder %v10744, 8.507059e+37
        %v10746 = vand.u32 %v10463, 2147483648
        %v10747 = vor.u32 1.1754944e-38, %v10746
        %v10748 = vsel %vm10745, %v10747, %v10743
        %v10749 = vmul.f32 1.0, %v10748
        %v10750 = vrcp.pop %v10464
        %v10751 = vmul.f32 %v10464, %v10750
        %v10752 = vsub.f32 1.0, %v10751
        %v10753 = vmul.f32 %v10750, %v10752
        %v10754 = vadd.f32 %v10750, %v10753
        %vm10755 = vweird.f32 %v10464
        %vm10756 = vweird.f32 %v10750
        %vm10757 = vmor %vm10755, %vm10756
        %v10758 = vsel %vm10757, %v10750, %v10754
        %v10759 = vand.u32 2147483647, %v10464
        %vm10760 = vcmp.eq.f32.partialorder %v10759, 8.507059e+37
        %v10761 = vand.u32 %v10464, 2147483648
        %v10762 = vor.u32 1.1754944e-38, %v10761
        %v10763 = vsel %vm10760, %v10762, %v10758
        %v10764 = vmul.f32 1.0, %v10763
        %v10765 = vrcp.pop %v10465
        %v10766 = vmul.f32 %v10465, %v10765
        %v10767 = vsub.f32 1.0, %v10766
        %v10768 = vmul.f32 %v10765, %v10767
        %v10769 = vadd.f32 %v10765, %v10768
        %vm10770 = vweird.f32 %v10465
        %vm10771 = vweird.f32 %v10765
        %vm10772 = vmor %vm10770, %vm10771
        %v10773 = vsel %vm10772, %v10765, %v10769
        %v10774 = vand.u32 2147483647, %v10465
        %vm10775 = vcmp.eq.f32.partialorder %v10774, 8.507059e+37
        %v10776 = vand.u32 %v10465, 2147483648
        %v10777 = vor.u32 1.1754944e-38, %v10776
        %v10778 = vsel %vm10775, %v10777, %v10773
        %v10779 = vmul.f32 1.0, %v10778
        %v10780 = vrcp.pop %v10466
        %v10781 = vmul.f32 %v10466, %v10780
        %v10782 = vsub.f32 1.0, %v10781
        %v10783 = vmul.f32 %v10780, %v10782
        %v10784 = vadd.f32 %v10780, %v10783
        %vm10785 = vweird.f32 %v10466
        %vm10786 = vweird.f32 %v10780
        %vm10787 = vmor %vm10785, %vm10786
        %v10788 = vsel %vm10787, %v10780, %v10784
        %v10789 = vand.u32 2147483647, %v10466
        %vm10790 = vcmp.eq.f32.partialorder %v10789, 8.507059e+37
        %v10791 = vand.u32 %v10466, 2147483648
        %v10792 = vor.u32 1.1754944e-38, %v10791
        %v10793 = vsel %vm10790, %v10792, %v10788
        %v10794 = vmul.f32 1.0, %v10793
        %v10795 = vrcp.pop %v10467
        %v10796 = vmul.f32 %v10467, %v10795
        %v10797 = vsub.f32 1.0, %v10796
        %v10798 = vmul.f32 %v10795, %v10797
        %v10799 = vadd.f32 %v10795, %v10798
        %vm10800 = vweird.f32 %v10467
        %vm10801 = vweird.f32 %v10795
        %vm10802 = vmor %vm10800, %vm10801
        %v10803 = vsel %vm10802, %v10795, %v10799
        %v10804 = vand.u32 2147483647, %v10467
        %vm10805 = vcmp.eq.f32.partialorder %v10804, 8.507059e+37
        %v10806 = vand.u32 %v10467, 2147483648
        %v10807 = vor.u32 1.1754944e-38, %v10806
        %v10808 = vsel %vm10805, %v10807, %v10803
        %v10809 = vmul.f32 1.0, %v10808
        %v10810 = vrcp.pop %v10468
        %v10811 = vmul.f32 %v10468, %v10810
        %v10812 = vsub.f32 1.0, %v10811
        %v10813 = vmul.f32 %v10810, %v10812
        %v10814 = vadd.f32 %v10810, %v10813
        %vm10815 = vweird.f32 %v10468
        %vm10816 = vweird.f32 %v10810
        %vm10817 = vmor %vm10815, %vm10816
        %v10818 = vsel %vm10817, %v10810, %v10814
        %v10819 = vand.u32 2147483647, %v10468
        %vm10820 = vcmp.eq.f32.partialorder %v10819, 8.507059e+37
        %v10821 = vand.u32 %v10468, 2147483648
        %v10822 = vor.u32 1.1754944e-38, %v10821
        %v10823 = vsel %vm10820, %v10822, %v10818
        %v10824 = vmul.f32 1.0, %v10823
        %v10825 = vrcp.pop %v10469
        %v10826 = vmul.f32 %v10469, %v10825
        %v10827 = vsub.f32 1.0, %v10826
        %v10828 = vmul.f32 %v10825, %v10827
        %v10829 = vadd.f32 %v10825, %v10828
        %vm10830 = vweird.f32 %v10469
        %vm10831 = vweird.f32 %v10825
        %vm10832 = vmor %vm10830, %vm10831
        %v10833 = vsel %vm10832, %v10825, %v10829
        %v10834 = vand.u32 2147483647, %v10469
        %vm10835 = vcmp.eq.f32.partialorder %v10834, 8.507059e+37
        %v10836 = vand.u32 %v10469, 2147483648
        %v10837 = vor.u32 1.1754944e-38, %v10836
        %v10838 = vsel %vm10835, %v10837, %v10833
        %v10839 = vmul.f32 1.0, %v10838
        %v10840 = vrcp.pop %v10470
        %v10841 = vmul.f32 %v10470, %v10840
        %v10842 = vsub.f32 1.0, %v10841
        %v10843 = vmul.f32 %v10840, %v10842
        %v10844 = vadd.f32 %v10840, %v10843
        %vm10845 = vweird.f32 %v10470
        %vm10846 = vweird.f32 %v10840
        %vm10847 = vmor %vm10845, %vm10846
        %v10848 = vsel %vm10847, %v10840, %v10844
        %v10849 = vand.u32 2147483647, %v10470
        %vm10850 = vcmp.eq.f32.partialorder %v10849, 8.507059e+37
        %v10851 = vand.u32 %v10470, 2147483648
        %v10852 = vor.u32 1.1754944e-38, %v10851
        %v10853 = vsel %vm10850, %v10852, %v10848
        %v10854 = vmul.f32 1.0, %v10853
        %v10855 = vrcp.pop %v10471
        %v10856 = vmul.f32 %v10471, %v10855
        %v10857 = vsub.f32 1.0, %v10856
        %v10858 = vmul.f32 %v10855, %v10857
        %v10859 = vadd.f32 %v10855, %v10858
        %vm10860 = vweird.f32 %v10471
        %vm10861 = vweird.f32 %v10855
        %vm10862 = vmor %vm10860, %vm10861
        %v10863 = vsel %vm10862, %v10855, %v10859
        %v10864 = vand.u32 2147483647, %v10471
        %vm10865 = vcmp.eq.f32.partialorder %v10864, 8.507059e+37
        %v10866 = vand.u32 %v10471, 2147483648
        %v10867 = vor.u32 1.1754944e-38, %v10866
        %v10868 = vsel %vm10865, %v10867, %v10863
        %v10869 = vmul.f32 1.0, %v10868
        %v10870 = vrcp.pop %v10472
        %v10871 = vmul.f32 %v10472, %v10870
        %v10872 = vsub.f32 1.0, %v10871
        %v10873 = vmul.f32 %v10870, %v10872
        %v10874 = vadd.f32 %v10870, %v10873
        %vm10875 = vweird.f32 %v10472
        %vm10876 = vweird.f32 %v10870
        %vm10877 = vmor %vm10875, %vm10876
        %v10878 = vsel %vm10877, %v10870, %v10874
        %v10879 = vand.u32 2147483647, %v10472
        %vm10880 = vcmp.eq.f32.partialorder %v10879, 8.507059e+37
        %v10881 = vand.u32 %v10472, 2147483648
        %v10882 = vor.u32 1.1754944e-38, %v10881
        %v10883 = vsel %vm10880, %v10882, %v10878
        %v10884 = vmul.f32 1.0, %v10883
        %v10885 = vrcp.pop %v10473
        %v10886 = vmul.f32 %v10473, %v10885
        %v10887 = vsub.f32 1.0, %v10886
        %v10888 = vmul.f32 %v10885, %v10887
        %v10889 = vadd.f32 %v10885, %v10888
        %vm10890 = vweird.f32 %v10473
        %vm10891 = vweird.f32 %v10885
        %vm10892 = vmor %vm10890, %vm10891
        %v10893 = vsel %vm10892, %v10885, %v10889
        %v10894 = vand.u32 2147483647, %v10473
        %vm10895 = vcmp.eq.f32.partialorder %v10894, 8.507059e+37
        %v10896 = vand.u32 %v10473, 2147483648
        %v10897 = vor.u32 1.1754944e-38, %v10896
        %v10898 = vsel %vm10895, %v10897, %v10893
        %v10899 = vmul.f32 1.0, %v10898
        %v10900 = vrcp.pop %v10474
        %v10901 = vmul.f32 %v10474, %v10900
        %v10902 = vsub.f32 1.0, %v10901
        %v10903 = vmul.f32 %v10900, %v10902
        %v10904 = vadd.f32 %v10900, %v10903
        %vm10905 = vweird.f32 %v10474
        %vm10906 = vweird.f32 %v10900
        %vm10907 = vmor %vm10905, %vm10906
        %v10908 = vsel %vm10907, %v10900, %v10904
        %v10909 = vand.u32 2147483647, %v10474
        %vm10910 = vcmp.eq.f32.partialorder %v10909, 8.507059e+37
        %v10911 = vand.u32 %v10474, 2147483648
        %v10912 = vor.u32 1.1754944e-38, %v10911
        %v10913 = vsel %vm10910, %v10912, %v10908
        %v10914 = vmul.f32 1.0, %v10913
        %v10915 = vrcp.pop %v10475
        %v10916 = vmul.f32 %v10475, %v10915
        %v10917 = vsub.f32 1.0, %v10916
        %v10918 = vmul.f32 %v10915, %v10917
        %v10919 = vadd.f32 %v10915, %v10918
        %vm10920 = vweird.f32 %v10475
        %vm10921 = vweird.f32 %v10915
        %vm10922 = vmor %vm10920, %vm10921
        %v10923 = vsel %vm10922, %v10915, %v10919
        %v10924 = vand.u32 2147483647, %v10475
        %vm10925 = vcmp.eq.f32.partialorder %v10924, 8.507059e+37
        %v10926 = vand.u32 %v10475, 2147483648
        %v10927 = vor.u32 1.1754944e-38, %v10926
        %v10928 = vsel %vm10925, %v10927, %v10923
        %v10929 = vmul.f32 1.0, %v10928
        %v10930 = vrcp.pop %v10476
        %v10931 = vmul.f32 %v10476, %v10930
        %v10932 = vsub.f32 1.0, %v10931
        %v10933 = vmul.f32 %v10930, %v10932
        %v10934 = vadd.f32 %v10930, %v10933
        %vm10935 = vweird.f32 %v10476
        %vm10936 = vweird.f32 %v10930
        %vm10937 = vmor %vm10935, %vm10936
        %v10938 = vsel %vm10937, %v10930, %v10934
        %v10939 = vand.u32 2147483647, %v10476
        %vm10940 = vcmp.eq.f32.partialorder %v10939, 8.507059e+37
        %v10941 = vand.u32 %v10476, 2147483648
        %v10942 = vor.u32 1.1754944e-38, %v10941
        %v10943 = vsel %vm10940, %v10942, %v10938
        %v10944 = vmul.f32 1.0, %v10943
        %v10945 = vrcp.pop %v10477
        %v10946 = vmul.f32 %v10477, %v10945
        %v10947 = vsub.f32 1.0, %v10946
        %v10948 = vmul.f32 %v10945, %v10947
        %v10949 = vadd.f32 %v10945, %v10948
        %vm10950 = vweird.f32 %v10477
        %vm10951 = vweird.f32 %v10945
        %vm10952 = vmor %vm10950, %vm10951
        %v10953 = vsel %vm10952, %v10945, %v10949
        %v10954 = vand.u32 2147483647, %v10477
        %vm10955 = vcmp.eq.f32.partialorder %v10954, 8.507059e+37
        %v10956 = vand.u32 %v10477, 2147483648
        %v10957 = vor.u32 1.1754944e-38, %v10956
        %v10958 = vsel %vm10955, %v10957, %v10953
        %v10959 = vmul.f32 1.0, %v10958
        %v10960 = vrcp.pop %v10478
        %v10961 = vmul.f32 %v10478, %v10960
        %v10962 = vsub.f32 1.0, %v10961
        %v10963 = vmul.f32 %v10960, %v10962
        %v10964 = vadd.f32 %v10960, %v10963
        %vm10965 = vweird.f32 %v10478
        %vm10966 = vweird.f32 %v10960
        %vm10967 = vmor %vm10965, %vm10966
        %v10968 = vsel %vm10967, %v10960, %v10964
        %v10969 = vand.u32 2147483647, %v10478
        %vm10970 = vcmp.eq.f32.partialorder %v10969, 8.507059e+37
        %v10971 = vand.u32 %v10478, 2147483648
        %v10972 = vor.u32 1.1754944e-38, %v10971
        %v10973 = vsel %vm10970, %v10972, %v10968
        %v10974 = vmul.f32 1.0, %v10973
        %v10975 = vrcp.pop %v10479
        %v10976 = vmul.f32 %v10479, %v10975
        %v10977 = vsub.f32 1.0, %v10976
        %v10978 = vmul.f32 %v10975, %v10977
        %v10979 = vadd.f32 %v10975, %v10978
        %vm10980 = vweird.f32 %v10479
        %vm10981 = vweird.f32 %v10975
        %vm10982 = vmor %vm10980, %vm10981
        %v10983 = vsel %vm10982, %v10975, %v10979
        %v10984 = vand.u32 2147483647, %v10479
        %vm10985 = vcmp.eq.f32.partialorder %v10984, 8.507059e+37
        %v10986 = vand.u32 %v10479, 2147483648
        %v10987 = vor.u32 1.1754944e-38, %v10986
        %v10988 = vsel %vm10985, %v10987, %v10983
        %v10989 = vmul.f32 1.0, %v10988
        %v10990 = vtanh.pop %v10310
        %v10991 = vtanh.pop %v10311
        %v10992 = vtanh.pop %v10312
        %v10993 = vtanh.pop %v10313
        %v10994 = vtanh.pop %v10314
        %v10995 = vtanh.pop %v10315
        %v10996 = vtanh.pop %v10316
        %v10997 = vtanh.pop %v10317
        %v10998 = vtanh.pop %v10318
        %v10999 = vtanh.pop %v10319
        %v11000 = vtanh.pop %v10320
        %v11001 = vtanh.pop %v10321
        %v11002 = vtanh.pop %v10322
        %v11003 = vtanh.pop %v10323
        %v11004 = vtanh.pop %v10324
        %v11005 = vtanh.pop %v10325
        %v11006 = vtanh.pop %v10326
        %v11007 = vtanh.pop %v10327
        %v11008 = vtanh.pop %v10328
        %v11009 = vtanh.pop %v10329
        %v11010 = vtanh.pop %v10330
        %v11011 = vtanh.pop %v10331
        %v11012 = vtanh.pop %v10332
        %v11013 = vtanh.pop %v10333
        %v11014 = vtanh.pop %v10334
        %v11015 = vtanh.pop %v10335
        %v11016 = vtanh.pop %v10336
        %v11017 = vtanh.pop %v10337
        %v11018 = vtanh.pop %v10338
        %v11019 = vtanh.pop %v10339
        %v11020 = vtanh.pop %v10340
        %v11021 = vtanh.pop %v10341
        %v11022 = vtanh.pop %v10342
        %v11023 = vtanh.pop %v10343
        %v11024 = vld [vmem:[#allocation5] sm:$0xff]
        %v11025 = vld [vmem:[#allocation5 + $0x8] sm:$0xff]
        %v11026 = vld [vmem:[#allocation5 + $0x10] sm:$0xff]
        %v11027 = vld [vmem:[#allocation5 + $0x18] sm:$0xff]
        %v11028 = vld [vmem:[#allocation5 + $0x20] sm:$0xff]
        %v11029 = vld [vmem:[#allocation5 + $0x28] sm:$0xff]
        %v11030 = vld [vmem:[#allocation5 + $0x30] sm:$0xff]
        %v11031 = vld [vmem:[#allocation5 + $0x38] sm:$0xff]
        %v11032 = vld [vmem:[#allocation5 + $0x40] sm:$0xff]
        %v11033 = vld [vmem:[#allocation5 + $0x48] sm:$0xff]
        %v11034 = vld [vmem:[#allocation5 + $0x50] sm:$0xff]
        %v11035 = vld [vmem:[#allocation5 + $0x58] sm:$0xff]
        %v11036 = vld [vmem:[#allocation5 + $0x60] sm:$0xff]
        %v11037 = vld [vmem:[#allocation5 + $0x68] sm:$0xff]
        %v11038 = vld [vmem:[#allocation5 + $0x70] sm:$0xff]
        %v11039 = vld [vmem:[#allocation5 + $0x78] sm:$0xff]
        %v11040 = vld [vmem:[#allocation5 + $0x80] sm:$0xff]
        %v11041 = vld [vmem:[#allocation5 + $0x88] sm:$0xff]
        %v11042 = vld [vmem:[#allocation5 + $0x90] sm:$0xff]
        %v11043 = vld [vmem:[#allocation5 + $0x98] sm:$0xff]
        %v11044 = vld [vmem:[#allocation5 + $0xa0] sm:$0xff]
        %v11045 = vld [vmem:[#allocation5 + $0xa8] sm:$0xff]
        %v11046 = vld [vmem:[#allocation5 + $0xb0] sm:$0xff]
        %v11047 = vld [vmem:[#allocation5 + $0xb8] sm:$0xff]
        %v11048 = vld [vmem:[#allocation5 + $0xc0] sm:$0xff]
        %v11049 = vld [vmem:[#allocation5 + $0xc8] sm:$0xff]
        %v11050 = vld [vmem:[#allocation5 + $0xd0] sm:$0xff]
        %v11051 = vld [vmem:[#allocation5 + $0xd8] sm:$0xff]
        %v11052 = vld [vmem:[#allocation5 + $0xe0] sm:$0xff]
        %v11053 = vld [vmem:[#allocation5 + $0xe8] sm:$0xff]
        %v11054 = vld [vmem:[#allocation5 + $0xf0] sm:$0xff]
        %v11055 = vld [vmem:[#allocation5 + $0xf8] sm:$0xff]
        %v11056 = vld [vmem:[#allocation5 + $0x100] sm:$0xff]
        %v11057 = vld [vmem:[#allocation5 + $0x108] sm:$0xff]
        %11092 = vrot.lane.b32.xlu0 %v11024, 32
        %v11093 = vpop.permute.xlu0 %11092
        %11094 = vrot.lane.b32.xlu0 %v11025, 32
        %v11095 = vpop.permute.xlu0 %11094
        %11096 = vrot.lane.b32.xlu0 %v11026, 32
        %v11097 = vpop.permute.xlu0 %11096
        %11098 = vrot.lane.b32.xlu0 %v11027, 32
        %v11099 = vpop.permute.xlu0 %11098
        %11100 = vrot.lane.b32.xlu0 %v11028, 32
        %v11101 = vpop.permute.xlu0 %11100
        %11102 = vrot.lane.b32.xlu0 %v11029, 32
        %v11103 = vpop.permute.xlu0 %11102
        %11104 = vrot.lane.b32.xlu0 %v11030, 32
        %v11105 = vpop.permute.xlu0 %11104
        %11106 = vrot.lane.b32.xlu0 %v11031, 32
        %v11107 = vpop.permute.xlu0 %11106
        %11108 = vrot.lane.b32.xlu0 %v11032, 32
        %v11109 = vpop.permute.xlu0 %11108
        %11110 = vrot.lane.b32.xlu0 %v11033, 32
        %v11111 = vpop.permute.xlu0 %11110
        %11112 = vrot.lane.b32.xlu0 %v11034, 32
        %v11113 = vpop.permute.xlu0 %11112
        %11114 = vrot.lane.b32.xlu0 %v11035, 32
        %v11115 = vpop.permute.xlu0 %11114
        %11116 = vrot.lane.b32.xlu0 %v11036, 32
        %v11117 = vpop.permute.xlu0 %11116
        %11118 = vrot.lane.b32.xlu0 %v11037, 32
        %v11119 = vpop.permute.xlu0 %11118
        %11120 = vrot.lane.b32.xlu0 %v11038, 32
        %v11121 = vpop.permute.xlu0 %11120
        %11122 = vrot.lane.b32.xlu0 %v11039, 32
        %v11123 = vpop.permute.xlu0 %11122
        %11124 = vrot.lane.b32.xlu0 %v11040, 32
        %v11125 = vpop.permute.xlu0 %11124
        %11126 = vrot.lane.b32.xlu0 %v11041, 32
        %v11127 = vpop.permute.xlu0 %11126
        %11128 = vrot.lane.b32.xlu0 %v11042, 32
        %v11129 = vpop.permute.xlu0 %11128
        %11130 = vrot.lane.b32.xlu0 %v11043, 32
        %v11131 = vpop.permute.xlu0 %11130
        %11132 = vrot.lane.b32.xlu0 %v11044, 32
        %v11133 = vpop.permute.xlu0 %11132
        %11134 = vrot.lane.b32.xlu0 %v11045, 32
        %v11135 = vpop.permute.xlu0 %11134
        %11136 = vrot.lane.b32.xlu0 %v11046, 32
        %v11137 = vpop.permute.xlu0 %11136
        %11138 = vrot.lane.b32.xlu0 %v11047, 32
        %v11139 = vpop.permute.xlu0 %11138
        %11140 = vrot.lane.b32.xlu0 %v11048, 32
        %v11141 = vpop.permute.xlu0 %11140
        %11142 = vrot.lane.b32.xlu0 %v11049, 32
        %v11143 = vpop.permute.xlu0 %11142
        %11144 = vrot.lane.b32.xlu0 %v11050, 32
        %v11145 = vpop.permute.xlu0 %11144
        %11146 = vrot.lane.b32.xlu0 %v11051, 32
        %v11147 = vpop.permute.xlu0 %11146
        %11148 = vrot.lane.b32.xlu0 %v11052, 32
        %v11149 = vpop.permute.xlu0 %11148
        %11150 = vrot.lane.b32.xlu0 %v11053, 32
        %v11151 = vpop.permute.xlu0 %11150
        %11152 = vrot.lane.b32.xlu0 %v11054, 32
        %v11153 = vpop.permute.xlu0 %11152
        %11154 = vrot.lane.b32.xlu0 %v11055, 32
        %v11155 = vpop.permute.xlu0 %11154
        %11156 = vrot.lane.b32.xlu0 %v11056, 32
        %v11157 = vpop.permute.xlu0 %11156
        %11158 = vrot.lane.b32.xlu0 %v11057, 32
        %v11159 = vpop.permute.xlu0 %11158
        %v11194 = vmul.f32 %v10494, %v11093
        %v11195 = vmul.f32 %v10509, %v11095
        %v11196 = vmul.f32 %v10524, %v11097
        %v11197 = vmul.f32 %v10539, %v11099
        %v11198 = vmul.f32 %v10554, %v11101
        %v11199 = vmul.f32 %v10569, %v11103
        %v11200 = vmul.f32 %v10584, %v11105
        %v11201 = vmul.f32 %v10599, %v11107
        %v11202 = vmul.f32 %v10614, %v11109
        %v11203 = vmul.f32 %v10629, %v11111
        %v11204 = vmul.f32 %v10644, %v11113
        %v11205 = vmul.f32 %v10659, %v11115
        %v11206 = vmul.f32 %v10674, %v11117
        %v11207 = vmul.f32 %v10689, %v11119
        %v11208 = vmul.f32 %v10704, %v11121
        %v11209 = vmul.f32 %v10719, %v11123
        %v11210 = vmul.f32 %v10734, %v11125
        %v11211 = vmul.f32 %v10749, %v11127
        %v11212 = vmul.f32 %v10764, %v11129
        %v11213 = vmul.f32 %v10779, %v11131
        %v11214 = vmul.f32 %v10794, %v11133
        %v11215 = vmul.f32 %v10809, %v11135
        %v11216 = vmul.f32 %v10824, %v11137
        %v11217 = vmul.f32 %v10839, %v11139
        %v11218 = vmul.f32 %v10854, %v11141
        %v11219 = vmul.f32 %v10869, %v11143
        %v11220 = vmul.f32 %v10884, %v11145
        %v11221 = vmul.f32 %v10899, %v11147
        %v11222 = vmul.f32 %v10914, %v11149
        %v11223 = vmul.f32 %v10929, %v11151
        %v11224 = vmul.f32 %v10944, %v11153
        %v11225 = vmul.f32 %v10959, %v11155
        %v11226 = vmul.f32 %v10974, %v11157
        %v11227 = vmul.f32 %v10989, %v11159
        %11262 = vrot.lane.b32.xlu0 %v10990, 32
        %v11263 = vpop.permute.xlu0 %11262
        %11264 = vrot.lane.b32.xlu0 %v10991, 32
        %v11265 = vpop.permute.xlu0 %11264
        %11266 = vrot.lane.b32.xlu0 %v10992, 32
        %v11267 = vpop.permute.xlu0 %11266
        %11268 = vrot.lane.b32.xlu0 %v10993, 32
        %v11269 = vpop.permute.xlu0 %11268
        %11270 = vrot.lane.b32.xlu0 %v10994, 32
        %v11271 = vpop.permute.xlu0 %11270
        %11272 = vrot.lane.b32.xlu0 %v10995, 32
        %v11273 = vpop.permute.xlu0 %11272
        %11274 = vrot.lane.b32.xlu0 %v10996, 32
        %v11275 = vpop.permute.xlu0 %11274
        %11276 = vrot.lane.b32.xlu0 %v10997, 32
        %v11277 = vpop.permute.xlu0 %11276
        %11278 = vrot.lane.b32.xlu0 %v10998, 32
        %v11279 = vpop.permute.xlu0 %11278
        %11280 = vrot.lane.b32.xlu0 %v10999, 32
        %v11281 = vpop.permute.xlu0 %11280
        %11282 = vrot.lane.b32.xlu0 %v11000, 32
        %v11283 = vpop.permute.xlu0 %11282
        %11284 = vrot.lane.b32.xlu0 %v11001, 32
        %v11285 = vpop.permute.xlu0 %11284
        %11286 = vrot.lane.b32.xlu0 %v11002, 32
        %v11287 = vpop.permute.xlu0 %11286
        %11288 = vrot.lane.b32.xlu0 %v11003, 32
        %v11289 = vpop.permute.xlu0 %11288
        %11290 = vrot.lane.b32.xlu0 %v11004, 32
        %v11291 = vpop.permute.xlu0 %11290
        %11292 = vrot.lane.b32.xlu0 %v11005, 32
        %v11293 = vpop.permute.xlu0 %11292
        %11294 = vrot.lane.b32.xlu0 %v11006, 32
        %v11295 = vpop.permute.xlu0 %11294
        %11296 = vrot.lane.b32.xlu0 %v11007, 32
        %v11297 = vpop.permute.xlu0 %11296
        %11298 = vrot.lane.b32.xlu0 %v11008, 32
        %v11299 = vpop.permute.xlu0 %11298
        %11300 = vrot.lane.b32.xlu0 %v11009, 32
        %v11301 = vpop.permute.xlu0 %11300
        %11302 = vrot.lane.b32.xlu0 %v11010, 32
        %v11303 = vpop.permute.xlu0 %11302
        %11304 = vrot.lane.b32.xlu0 %v11011, 32
        %v11305 = vpop.permute.xlu0 %11304
        %11306 = vrot.lane.b32.xlu0 %v11012, 32
        %v11307 = vpop.permute.xlu0 %11306
        %11308 = vrot.lane.b32.xlu0 %v11013, 32
        %v11309 = vpop.permute.xlu0 %11308
        %11310 = vrot.lane.b32.xlu0 %v11014, 32
        %v11311 = vpop.permute.xlu0 %11310
        %11312 = vrot.lane.b32.xlu0 %v11015, 32
        %v11313 = vpop.permute.xlu0 %11312
        %11314 = vrot.lane.b32.xlu0 %v11016, 32
        %v11315 = vpop.permute.xlu0 %11314
        %11316 = vrot.lane.b32.xlu0 %v11017, 32
        %v11317 = vpop.permute.xlu0 %11316
        %11318 = vrot.lane.b32.xlu0 %v11018, 32
        %v11319 = vpop.permute.xlu0 %11318
        %11320 = vrot.lane.b32.xlu0 %v11019, 32
        %v11321 = vpop.permute.xlu0 %11320
        %11322 = vrot.lane.b32.xlu0 %v11020, 32
        %v11323 = vpop.permute.xlu0 %11322
        %11324 = vrot.lane.b32.xlu0 %v11021, 32
        %v11325 = vpop.permute.xlu0 %11324
        %11326 = vrot.lane.b32.xlu0 %v11022, 32
        %v11327 = vpop.permute.xlu0 %11326
        %11328 = vrot.lane.b32.xlu0 %v11023, 32
        %v11329 = vpop.permute.xlu0 %11328
        %v11364 = vmul.f32 %v10494, %v11263
        %v11365 = vmul.f32 %v10509, %v11265
        %v11366 = vmul.f32 %v10524, %v11267
        %v11367 = vmul.f32 %v10539, %v11269
        %v11368 = vmul.f32 %v10554, %v11271
        %v11369 = vmul.f32 %v10569, %v11273
        %v11370 = vmul.f32 %v10584, %v11275
        %v11371 = vmul.f32 %v10599, %v11277
        %v11372 = vmul.f32 %v10614, %v11279
        %v11373 = vmul.f32 %v10629, %v11281
        %v11374 = vmul.f32 %v10644, %v11283
        %v11375 = vmul.f32 %v10659, %v11285
        %v11376 = vmul.f32 %v10674, %v11287
        %v11377 = vmul.f32 %v10689, %v11289
        %v11378 = vmul.f32 %v10704, %v11291
        %v11379 = vmul.f32 %v10719, %v11293
        %v11380 = vmul.f32 %v10734, %v11295
        %v11381 = vmul.f32 %v10749, %v11297
        %v11382 = vmul.f32 %v10764, %v11299
        %v11383 = vmul.f32 %v10779, %v11301
        %v11384 = vmul.f32 %v10794, %v11303
        %v11385 = vmul.f32 %v10809, %v11305
        %v11386 = vmul.f32 %v10824, %v11307
        %v11387 = vmul.f32 %v10839, %v11309
        %v11388 = vmul.f32 %v10854, %v11311
        %v11389 = vmul.f32 %v10869, %v11313
        %v11390 = vmul.f32 %v10884, %v11315
        %v11391 = vmul.f32 %v10899, %v11317
        %v11392 = vmul.f32 %v10914, %v11319
        %v11393 = vmul.f32 %v10929, %v11321
        %v11394 = vmul.f32 %v10944, %v11323
        %v11395 = vmul.f32 %v10959, %v11325
        %v11396 = vmul.f32 %v10974, %v11327
        %v11397 = vmul.f32 %v10989, %v11329
        %11432 = vrot.lane.b32.xlu0 %v11364, 32
        %v11433 = vpop.permute.xlu0 %11432
        %11434 = vrot.lane.b32.xlu0 %v11365, 32
        %v11435 = vpop.permute.xlu0 %11434
        %11436 = vrot.lane.b32.xlu0 %v11366, 32
        %v11437 = vpop.permute.xlu0 %11436
        %11438 = vrot.lane.b32.xlu0 %v11367, 32
        %v11439 = vpop.permute.xlu0 %11438
        %11440 = vrot.lane.b32.xlu0 %v11368, 32
        %v11441 = vpop.permute.xlu0 %11440
        %11442 = vrot.lane.b32.xlu0 %v11369, 32
        %v11443 = vpop.permute.xlu0 %11442
        %11444 = vrot.lane.b32.xlu0 %v11370, 32
        %v11445 = vpop.permute.xlu0 %11444
        %11446 = vrot.lane.b32.xlu0 %v11371, 32
        %v11447 = vpop.permute.xlu0 %11446
        %11448 = vrot.lane.b32.xlu0 %v11372, 32
        %v11449 = vpop.permute.xlu0 %11448
        %11450 = vrot.lane.b32.xlu0 %v11373, 32
        %v11451 = vpop.permute.xlu0 %11450
        %11452 = vrot.lane.b32.xlu0 %v11374, 32
        %v11453 = vpop.permute.xlu0 %11452
        %11454 = vrot.lane.b32.xlu0 %v11375, 32
        %v11455 = vpop.permute.xlu0 %11454
        %11456 = vrot.lane.b32.xlu0 %v11376, 32
        %v11457 = vpop.permute.xlu0 %11456
        %11458 = vrot.lane.b32.xlu0 %v11377, 32
        %v11459 = vpop.permute.xlu0 %11458
        %11460 = vrot.lane.b32.xlu0 %v11378, 32
        %v11461 = vpop.permute.xlu0 %11460
        %11462 = vrot.lane.b32.xlu0 %v11379, 32
        %v11463 = vpop.permute.xlu0 %11462
        %11464 = vrot.lane.b32.xlu0 %v11380, 32
        %v11465 = vpop.permute.xlu0 %11464
        %11466 = vrot.lane.b32.xlu0 %v11381, 32
        %v11467 = vpop.permute.xlu0 %11466
        %11468 = vrot.lane.b32.xlu0 %v11382, 32
        %v11469 = vpop.permute.xlu0 %11468
        %11470 = vrot.lane.b32.xlu0 %v11383, 32
        %v11471 = vpop.permute.xlu0 %11470
        %11472 = vrot.lane.b32.xlu0 %v11384, 32
        %v11473 = vpop.permute.xlu0 %11472
        %11474 = vrot.lane.b32.xlu0 %v11385, 32
        %v11475 = vpop.permute.xlu0 %11474
        %11476 = vrot.lane.b32.xlu0 %v11386, 32
        %v11477 = vpop.permute.xlu0 %11476
        %11478 = vrot.lane.b32.xlu0 %v11387, 32
        %v11479 = vpop.permute.xlu0 %11478
        %11480 = vrot.lane.b32.xlu0 %v11388, 32
        %v11481 = vpop.permute.xlu0 %11480
        %11482 = vrot.lane.b32.xlu0 %v11389, 32
        %v11483 = vpop.permute.xlu0 %11482
        %11484 = vrot.lane.b32.xlu0 %v11390, 32
        %v11485 = vpop.permute.xlu0 %11484
        %11486 = vrot.lane.b32.xlu0 %v11391, 32
        %v11487 = vpop.permute.xlu0 %11486
        %11488 = vrot.lane.b32.xlu0 %v11392, 32
        %v11489 = vpop.permute.xlu0 %11488
        %11490 = vrot.lane.b32.xlu0 %v11393, 32
        %v11491 = vpop.permute.xlu0 %11490
        %11492 = vrot.lane.b32.xlu0 %v11394, 32
        %v11493 = vpop.permute.xlu0 %11492
        %11494 = vrot.lane.b32.xlu0 %v11395, 32
        %v11495 = vpop.permute.xlu0 %11494
        %11496 = vrot.lane.b32.xlu0 %v11396, 32
        %v11497 = vpop.permute.xlu0 %11496
        %11498 = vrot.lane.b32.xlu0 %v11397, 32
        %v11499 = vpop.permute.xlu0 %11498
        %v11534 = vadd.f32 %v11194, %v11433
        %v11535 = vadd.f32 %v11195, %v11435
        %v11536 = vadd.f32 %v11196, %v11437
        %v11537 = vadd.f32 %v11197, %v11439
        %v11538 = vadd.f32 %v11198, %v11441
        %v11539 = vadd.f32 %v11199, %v11443
        %v11540 = vadd.f32 %v11200, %v11445
        %v11541 = vadd.f32 %v11201, %v11447
        %v11542 = vadd.f32 %v11202, %v11449
        %v11543 = vadd.f32 %v11203, %v11451
        %v11544 = vadd.f32 %v11204, %v11453
        %v11545 = vadd.f32 %v11205, %v11455
        %v11546 = vadd.f32 %v11206, %v11457
        %v11547 = vadd.f32 %v11207, %v11459
        %v11548 = vadd.f32 %v11208, %v11461
        %v11549 = vadd.f32 %v11209, %v11463
        %v11550 = vadd.f32 %v11210, %v11465
        %v11551 = vadd.f32 %v11211, %v11467
        %v11552 = vadd.f32 %v11212, %v11469
        %v11553 = vadd.f32 %v11213, %v11471
        %v11554 = vadd.f32 %v11214, %v11473
        %v11555 = vadd.f32 %v11215, %v11475
        %v11556 = vadd.f32 %v11216, %v11477
        %v11557 = vadd.f32 %v11217, %v11479
        %v11558 = vadd.f32 %v11218, %v11481
        %v11559 = vadd.f32 %v11219, %v11483
        %v11560 = vadd.f32 %v11220, %v11485
        %v11561 = vadd.f32 %v11221, %v11487
        %v11562 = vadd.f32 %v11222, %v11489
        %v11563 = vadd.f32 %v11223, %v11491
        %v11564 = vadd.f32 %v11224, %v11493
        %v11565 = vadd.f32 %v11225, %v11495
        %v11566 = vadd.f32 %v11226, %v11497
        %v11567 = vadd.f32 %v11227, %v11499
        %v11568 = vtanh.pop %v11534
        %v11569 = vtanh.pop %v11535
        %v11570 = vtanh.pop %v11536
        %v11571 = vtanh.pop %v11537
        %v11572 = vtanh.pop %v11538
        %v11573 = vtanh.pop %v11539
        %v11574 = vtanh.pop %v11540
        %v11575 = vtanh.pop %v11541
        %v11576 = vtanh.pop %v11542
        %v11577 = vtanh.pop %v11543
        %v11578 = vtanh.pop %v11544
        %v11579 = vtanh.pop %v11545
        %v11580 = vtanh.pop %v11546
        %v11581 = vtanh.pop %v11547
        %v11582 = vtanh.pop %v11548
        %v11583 = vtanh.pop %v11549
        %v11584 = vtanh.pop %v11550
        %v11585 = vtanh.pop %v11551
        %v11586 = vtanh.pop %v11552
        %v11587 = vtanh.pop %v11553
        %v11588 = vtanh.pop %v11554
        %v11589 = vtanh.pop %v11555
        %v11590 = vtanh.pop %v11556
        %v11591 = vtanh.pop %v11557
        %v11592 = vtanh.pop %v11558
        %v11593 = vtanh.pop %v11559
        %v11594 = vtanh.pop %v11560
        %v11595 = vtanh.pop %v11561
        %v11596 = vtanh.pop %v11562
        %v11597 = vtanh.pop %v11563
        %v11598 = vtanh.pop %v11564
        %v11599 = vtanh.pop %v11565
        %v11600 = vtanh.pop %v11566
        %v11601 = vtanh.pop %v11567
        %11636 = vrot.lane.b32.xlu0 %v11568, 32
        %v11637 = vpop.permute.xlu0 %11636
        %11638 = vrot.lane.b32.xlu0 %v11569, 32
        %v11639 = vpop.permute.xlu0 %11638
        %11640 = vrot.lane.b32.xlu0 %v11570, 32
        %v11641 = vpop.permute.xlu0 %11640
        %11642 = vrot.lane.b32.xlu0 %v11571, 32
        %v11643 = vpop.permute.xlu0 %11642
        %11644 = vrot.lane.b32.xlu0 %v11572, 32
        %v11645 = vpop.permute.xlu0 %11644
        %11646 = vrot.lane.b32.xlu0 %v11573, 32
        %v11647 = vpop.permute.xlu0 %11646
        %11648 = vrot.lane.b32.xlu0 %v11574, 32
        %v11649 = vpop.permute.xlu0 %11648
        %11650 = vrot.lane.b32.xlu0 %v11575, 32
        %v11651 = vpop.permute.xlu0 %11650
        %11652 = vrot.lane.b32.xlu0 %v11576, 32
        %v11653 = vpop.permute.xlu0 %11652
        %11654 = vrot.lane.b32.xlu0 %v11577, 32
        %v11655 = vpop.permute.xlu0 %11654
        %11656 = vrot.lane.b32.xlu0 %v11578, 32
        %v11657 = vpop.permute.xlu0 %11656
        %11658 = vrot.lane.b32.xlu0 %v11579, 32
        %v11659 = vpop.permute.xlu0 %11658
        %11660 = vrot.lane.b32.xlu0 %v11580, 32
        %v11661 = vpop.permute.xlu0 %11660
        %11662 = vrot.lane.b32.xlu0 %v11581, 32
        %v11663 = vpop.permute.xlu0 %11662
        %11664 = vrot.lane.b32.xlu0 %v11582, 32
        %v11665 = vpop.permute.xlu0 %11664
        %11666 = vrot.lane.b32.xlu0 %v11583, 32
        %v11667 = vpop.permute.xlu0 %11666
        %11668 = vrot.lane.b32.xlu0 %v11584, 32
        %v11669 = vpop.permute.xlu0 %11668
        %11670 = vrot.lane.b32.xlu0 %v11585, 32
        %v11671 = vpop.permute.xlu0 %11670
        %11672 = vrot.lane.b32.xlu0 %v11586, 32
        %v11673 = vpop.permute.xlu0 %11672
        %11674 = vrot.lane.b32.xlu0 %v11587, 32
        %v11675 = vpop.permute.xlu0 %11674
        %11676 = vrot.lane.b32.xlu0 %v11588, 32
        %v11677 = vpop.permute.xlu0 %11676
        %11678 = vrot.lane.b32.xlu0 %v11589, 32
        %v11679 = vpop.permute.xlu0 %11678
        %11680 = vrot.lane.b32.xlu0 %v11590, 32
        %v11681 = vpop.permute.xlu0 %11680
        %11682 = vrot.lane.b32.xlu0 %v11591, 32
        %v11683 = vpop.permute.xlu0 %11682
        %11684 = vrot.lane.b32.xlu0 %v11592, 32
        %v11685 = vpop.permute.xlu0 %11684
        %11686 = vrot.lane.b32.xlu0 %v11593, 32
        %v11687 = vpop.permute.xlu0 %11686
        %11688 = vrot.lane.b32.xlu0 %v11594, 32
        %v11689 = vpop.permute.xlu0 %11688
        %11690 = vrot.lane.b32.xlu0 %v11595, 32
        %v11691 = vpop.permute.xlu0 %11690
        %11692 = vrot.lane.b32.xlu0 %v11596, 32
        %v11693 = vpop.permute.xlu0 %11692
        %11694 = vrot.lane.b32.xlu0 %v11597, 32
        %v11695 = vpop.permute.xlu0 %11694
        %11696 = vrot.lane.b32.xlu0 %v11598, 32
        %v11697 = vpop.permute.xlu0 %11696
        %11698 = vrot.lane.b32.xlu0 %v11599, 32
        %v11699 = vpop.permute.xlu0 %11698
        %11700 = vrot.lane.b32.xlu0 %v11600, 32
        %v11701 = vpop.permute.xlu0 %11700
        %11702 = vrot.lane.b32.xlu0 %v11601, 32
        %v11703 = vpop.permute.xlu0 %11702
        %v11738 = vmul.f32 %v10494, %v11637
        %v11739 = vmul.f32 %v10509, %v11639
        %v11740 = vmul.f32 %v10524, %v11641
        %v11741 = vmul.f32 %v10539, %v11643
        %v11742 = vmul.f32 %v10554, %v11645
        %v11743 = vmul.f32 %v10569, %v11647
        %v11744 = vmul.f32 %v10584, %v11649
        %v11745 = vmul.f32 %v10599, %v11651
        %v11746 = vmul.f32 %v10614, %v11653
        %v11747 = vmul.f32 %v10629, %v11655
        %v11748 = vmul.f32 %v10644, %v11657
        %v11749 = vmul.f32 %v10659, %v11659
        %v11750 = vmul.f32 %v10674, %v11661
        %v11751 = vmul.f32 %v10689, %v11663
        %v11752 = vmul.f32 %v10704, %v11665
        %v11753 = vmul.f32 %v10719, %v11667
        %v11754 = vmul.f32 %v10734, %v11669
        %v11755 = vmul.f32 %v10749, %v11671
        %v11756 = vmul.f32 %v10764, %v11673
        %v11757 = vmul.f32 %v10779, %v11675
        %v11758 = vmul.f32 %v10794, %v11677
        %v11759 = vmul.f32 %v10809, %v11679
        %v11760 = vmul.f32 %v10824, %v11681
        %v11761 = vmul.f32 %v10839, %v11683
        %v11762 = vmul.f32 %v10854, %v11685
        %v11763 = vmul.f32 %v10869, %v11687
        %v11764 = vmul.f32 %v10884, %v11689
        %v11765 = vmul.f32 %v10899, %v11691
        %v11766 = vmul.f32 %v10914, %v11693
        %v11767 = vmul.f32 %v10929, %v11695
        %v11768 = vmul.f32 %v10944, %v11697
        %v11769 = vmul.f32 %v10959, %v11699
        %v11770 = vmul.f32 %v10974, %v11701
        %v11771 = vmul.f32 %v10989, %v11703
        %v11772 = vmul.f32 %v11738, %v1690
        %v11773 = vmul.f32 %v11739, %v1691
        %v11774 = vmul.f32 %v11740, %v1692
        %v11775 = vmul.f32 %v11741, %v1693
        %v11776 = vmul.f32 %v11742, %v1694
        %v11777 = vmul.f32 %v11743, %v1695
        %v11778 = vmul.f32 %v11744, %v1696
        %v11779 = vmul.f32 %v11745, %v1697
        %v11780 = vmul.f32 %v11746, %v1698
        %v11781 = vmul.f32 %v11747, %v1699
        %v11782 = vmul.f32 %v11748, %v1700
        %v11783 = vmul.f32 %v11749, %v1701
        %v11784 = vmul.f32 %v11750, %v1702
        %v11785 = vmul.f32 %v11751, %v1703
        %v11786 = vmul.f32 %v11752, %v1704
        %v11787 = vmul.f32 %v11753, %v1705
        %v11788 = vmul.f32 %v11754, %v1706
        %v11789 = vmul.f32 %v11755, %v1707
        %v11790 = vmul.f32 %v11756, %v1708
        %v11791 = vmul.f32 %v11757, %v1709
        %v11792 = vmul.f32 %v11758, %v1710
        %v11793 = vmul.f32 %v11759, %v1711
        %v11794 = vmul.f32 %v11760, %v1712
        %v11795 = vmul.f32 %v11761, %v1713
        %v11796 = vmul.f32 %v11762, %v1714
        %v11797 = vmul.f32 %v11763, %v1715
        %v11798 = vmul.f32 %v11764, %v1716
        %v11799 = vmul.f32 %v11765, %v1717
        %v11800 = vmul.f32 %v11766, %v1718
        %v11801 = vmul.f32 %v11767, %v1719
        %v11802 = vmul.f32 %v11768, %v1720
        %v11803 = vmul.f32 %v11769, %v1721
        %v11804 = vmul.f32 %v11770, %v1722
        %v11805 = vmul.f32 %v11771, %v1723
        %11840 = vrot.lane.b32.xlu0 %v11534, 96
        %v11841 = vpop.permute.xlu0 %11840
        %11842 = vrot.lane.b32.xlu0 %v11535, 96
        %v11843 = vpop.permute.xlu0 %11842
        %11844 = vrot.lane.b32.xlu0 %v11536, 96
        %v11845 = vpop.permute.xlu0 %11844
        %11846 = vrot.lane.b32.xlu0 %v11537, 96
        %v11847 = vpop.permute.xlu0 %11846
        %11848 = vrot.lane.b32.xlu0 %v11538, 96
        %v11849 = vpop.permute.xlu0 %11848
        %11850 = vrot.lane.b32.xlu0 %v11539, 96
        %v11851 = vpop.permute.xlu0 %11850
        %11852 = vrot.lane.b32.xlu0 %v11540, 96
        %v11853 = vpop.permute.xlu0 %11852
        %11854 = vrot.lane.b32.xlu0 %v11541, 96
        %v11855 = vpop.permute.xlu0 %11854
        %11856 = vrot.lane.b32.xlu0 %v11542, 96
        %v11857 = vpop.permute.xlu0 %11856
        %11858 = vrot.lane.b32.xlu0 %v11543, 96
        %v11859 = vpop.permute.xlu0 %11858
        %11860 = vrot.lane.b32.xlu0 %v11544, 96
        %v11861 = vpop.permute.xlu0 %11860
        %11862 = vrot.lane.b32.xlu0 %v11545, 96
        %v11863 = vpop.permute.xlu0 %11862
        %11864 = vrot.lane.b32.xlu0 %v11546, 96
        %v11865 = vpop.permute.xlu0 %11864
        %11866 = vrot.lane.b32.xlu0 %v11547, 96
        %v11867 = vpop.permute.xlu0 %11866
        %11868 = vrot.lane.b32.xlu0 %v11548, 96
        %v11869 = vpop.permute.xlu0 %11868
        %11870 = vrot.lane.b32.xlu0 %v11549, 96
        %v11871 = vpop.permute.xlu0 %11870
        %11872 = vrot.lane.b32.xlu0 %v11550, 96
        %v11873 = vpop.permute.xlu0 %11872
        %11874 = vrot.lane.b32.xlu0 %v11551, 96
        %v11875 = vpop.permute.xlu0 %11874
        %11876 = vrot.lane.b32.xlu0 %v11552, 96
        %v11877 = vpop.permute.xlu0 %11876
        %11878 = vrot.lane.b32.xlu0 %v11553, 96
        %v11879 = vpop.permute.xlu0 %11878
        %11880 = vrot.lane.b32.xlu0 %v11554, 96
        %v11881 = vpop.permute.xlu0 %11880
        %11882 = vrot.lane.b32.xlu0 %v11555, 96
        %v11883 = vpop.permute.xlu0 %11882
        %11884 = vrot.lane.b32.xlu0 %v11556, 96
        %v11885 = vpop.permute.xlu0 %11884
        %11886 = vrot.lane.b32.xlu0 %v11557, 96
        %v11887 = vpop.permute.xlu0 %11886
        %11888 = vrot.lane.b32.xlu0 %v11558, 96
        %v11889 = vpop.permute.xlu0 %11888
        %11890 = vrot.lane.b32.xlu0 %v11559, 96
        %v11891 = vpop.permute.xlu0 %11890
        %11892 = vrot.lane.b32.xlu0 %v11560, 96
        %v11893 = vpop.permute.xlu0 %11892
        %11894 = vrot.lane.b32.xlu0 %v11561, 96
        %v11895 = vpop.permute.xlu0 %11894
        %11896 = vrot.lane.b32.xlu0 %v11562, 96
        %v11897 = vpop.permute.xlu0 %11896
        %11898 = vrot.lane.b32.xlu0 %v11563, 96
        %v11899 = vpop.permute.xlu0 %11898
        %11900 = vrot.lane.b32.xlu0 %v11564, 96
        %v11901 = vpop.permute.xlu0 %11900
        %11902 = vrot.lane.b32.xlu0 %v11565, 96
        %v11903 = vpop.permute.xlu0 %11902
        %11904 = vrot.lane.b32.xlu0 %v11566, 96
        %v11905 = vpop.permute.xlu0 %11904
        %11906 = vrot.lane.b32.xlu0 %v11567, 96
        %v11907 = vpop.permute.xlu0 %11906
        %11942 = vst.msk [vmem:[#allocation5] sm:$0xff] %vm321, %v11841
        %11943 = vst.msk [vmem:[#allocation5 + $0x8] sm:$0xff] %vm321, %v11843
        %11944 = vst.msk [vmem:[#allocation5 + $0x10] sm:$0xff] %vm321, %v11845
        %11945 = vst.msk [vmem:[#allocation5 + $0x18] sm:$0xff] %vm321, %v11847
        %11946 = vst.msk [vmem:[#allocation5 + $0x20] sm:$0xff] %vm321, %v11849
        %11947 = vst.msk [vmem:[#allocation5 + $0x28] sm:$0xff] %vm321, %v11851
        %11948 = vst.msk [vmem:[#allocation5 + $0x30] sm:$0xff] %vm321, %v11853
        %11949 = vst.msk [vmem:[#allocation5 + $0x38] sm:$0xff] %vm321, %v11855
        %11950 = vst.msk [vmem:[#allocation5 + $0x40] sm:$0xff] %vm321, %v11857
        %11951 = vst.msk [vmem:[#allocation5 + $0x48] sm:$0xff] %vm321, %v11859
        %11952 = vst.msk [vmem:[#allocation5 + $0x50] sm:$0xff] %vm321, %v11861
        %11953 = vst.msk [vmem:[#allocation5 + $0x58] sm:$0xff] %vm321, %v11863
        %11954 = vst.msk [vmem:[#allocation5 + $0x60] sm:$0xff] %vm321, %v11865
        %11955 = vst.msk [vmem:[#allocation5 + $0x68] sm:$0xff] %vm321, %v11867
        %11956 = vst.msk [vmem:[#allocation5 + $0x70] sm:$0xff] %vm321, %v11869
        %11957 = vst.msk [vmem:[#allocation5 + $0x78] sm:$0xff] %vm321, %v11871
        %11958 = vst.msk [vmem:[#allocation5 + $0x80] sm:$0xff] %vm321, %v11873
        %11959 = vst.msk [vmem:[#allocation5 + $0x88] sm:$0xff] %vm321, %v11875
        %11960 = vst.msk [vmem:[#allocation5 + $0x90] sm:$0xff] %vm321, %v11877
        %11961 = vst.msk [vmem:[#allocation5 + $0x98] sm:$0xff] %vm321, %v11879
        %11962 = vst.msk [vmem:[#allocation5 + $0xa0] sm:$0xff] %vm321, %v11881
        %11963 = vst.msk [vmem:[#allocation5 + $0xa8] sm:$0xff] %vm321, %v11883
        %11964 = vst.msk [vmem:[#allocation5 + $0xb0] sm:$0xff] %vm321, %v11885
        %11965 = vst.msk [vmem:[#allocation5 + $0xb8] sm:$0xff] %vm321, %v11887
        %11966 = vst.msk [vmem:[#allocation5 + $0xc0] sm:$0xff] %vm321, %v11889
        %11967 = vst.msk [vmem:[#allocation5 + $0xc8] sm:$0xff] %vm321, %v11891
        %11968 = vst.msk [vmem:[#allocation5 + $0xd0] sm:$0xff] %vm321, %v11893
        %11969 = vst.msk [vmem:[#allocation5 + $0xd8] sm:$0xff] %vm321, %v11895
        %11970 = vst.msk [vmem:[#allocation5 + $0xe0] sm:$0xff] %vm321, %v11897
        %11971 = vst.msk [vmem:[#allocation5 + $0xe8] sm:$0xff] %vm321, %v11899
        %11972 = vst.msk [vmem:[#allocation5 + $0xf0] sm:$0xff] %vm321, %v11901
        %11973 = vst.msk [vmem:[#allocation5 + $0xf8] sm:$0xff] %vm321, %v11903
        %11974 = vst.msk [vmem:[#allocation5 + $0x100] sm:$0xff] %vm321, %v11905
        %11975 = vst.msk [vmem:[#allocation5 + $0x108] sm:$0xff] %vm321, %v11907
        %v11976 = vpack.c.bf16 %v11772, %v11772
        %v11977 = vpack.c.bf16 %v11773, %v11773
        %v11978 = vpack.c.bf16 %v11774, %v11774
        %v11979 = vpack.c.bf16 %v11775, %v11775
        %v11980 = vpack.c.bf16 %v11776, %v11776
        %v11981 = vpack.c.bf16 %v11777, %v11777
        %v11982 = vpack.c.bf16 %v11778, %v11778
        %v11983 = vpack.c.bf16 %v11779, %v11779
        %v11984 = vpack.c.bf16 %v11780, %v11780
        %v11985 = vpack.c.bf16 %v11781, %v11781
        %v11986 = vpack.c.bf16 %v11782, %v11782
        %v11987 = vpack.c.bf16 %v11783, %v11783
        %v11988 = vpack.c.bf16 %v11784, %v11784
        %v11989 = vpack.c.bf16 %v11785, %v11785
        %v11990 = vpack.c.bf16 %v11786, %v11786
        %v11991 = vpack.c.bf16 %v11787, %v11787
        %v11992 = vpack.c.bf16 %v11788, %v11788
        %v11993 = vpack.c.bf16 %v11789, %v11789
        %v11994 = vpack.c.bf16 %v11790, %v11790
        %v11995 = vpack.c.bf16 %v11791, %v11791
        %v11996 = vpack.c.bf16 %v11792, %v11792
        %v11997 = vpack.c.bf16 %v11793, %v11793
        %v11998 = vpack.c.bf16 %v11794, %v11794
        %v11999 = vpack.c.bf16 %v11795, %v11795
        %v12000 = vpack.c.bf16 %v11796, %v11796
        %v12001 = vpack.c.bf16 %v11797, %v11797
        %v12002 = vpack.c.bf16 %v11798, %v11798
        %v12003 = vpack.c.bf16 %v11799, %v11799
        %v12004 = vpack.c.bf16 %v11800, %v11800
        %v12005 = vpack.c.bf16 %v11801, %v11801
        %v12006 = vpack.c.bf16 %v11802, %v11802
        %v12007 = vpack.c.bf16 %v11803, %v11803
        %v12008 = vpack.c.bf16 %v11804, %v11804
        %v12009 = vpack.c.bf16 %v11805, %v11805
        %12044 = vrot.lane.b32.xlu0 %v11976, 64
        %v12045 = vpop.permute.xlu0 %12044
        %12046 = vrot.lane.b32.xlu0 %v11977, 64
        %v12047 = vpop.permute.xlu0 %12046
        %12048 = vrot.lane.b32.xlu0 %v11978, 64
        %v12049 = vpop.permute.xlu0 %12048
        %12050 = vrot.lane.b32.xlu0 %v11979, 64
        %v12051 = vpop.permute.xlu0 %12050
        %12052 = vrot.lane.b32.xlu0 %v11980, 64
        %v12053 = vpop.permute.xlu0 %12052
        %12054 = vrot.lane.b32.xlu0 %v11981, 64
        %v12055 = vpop.permute.xlu0 %12054
        %12056 = vrot.lane.b32.xlu0 %v11982, 64
        %v12057 = vpop.permute.xlu0 %12056
        %12058 = vrot.lane.b32.xlu0 %v11983, 64
        %v12059 = vpop.permute.xlu0 %12058
        %12060 = vrot.lane.b32.xlu0 %v11984, 64
        %v12061 = vpop.permute.xlu0 %12060
        %12062 = vrot.lane.b32.xlu0 %v11985, 64
        %v12063 = vpop.permute.xlu0 %12062
        %12064 = vrot.lane.b32.xlu0 %v11986, 64
        %v12065 = vpop.permute.xlu0 %12064
        %12066 = vrot.lane.b32.xlu0 %v11987, 64
        %v12067 = vpop.permute.xlu0 %12066
        %12068 = vrot.lane.b32.xlu0 %v11988, 64
        %v12069 = vpop.permute.xlu0 %12068
        %12070 = vrot.lane.b32.xlu0 %v11989, 64
        %v12071 = vpop.permute.xlu0 %12070
        %12072 = vrot.lane.b32.xlu0 %v11990, 64
        %v12073 = vpop.permute.xlu0 %12072
        %12074 = vrot.lane.b32.xlu0 %v11991, 64
        %v12075 = vpop.permute.xlu0 %12074
        %12076 = vrot.lane.b32.xlu0 %v11992, 64
        %v12077 = vpop.permute.xlu0 %12076
        %12078 = vrot.lane.b32.xlu0 %v11993, 64
        %v12079 = vpop.permute.xlu0 %12078
        %12080 = vrot.lane.b32.xlu0 %v11994, 64
        %v12081 = vpop.permute.xlu0 %12080
        %12082 = vrot.lane.b32.xlu0 %v11995, 64
        %v12083 = vpop.permute.xlu0 %12082
        %12084 = vrot.lane.b32.xlu0 %v11996, 64
        %v12085 = vpop.permute.xlu0 %12084
        %12086 = vrot.lane.b32.xlu0 %v11997, 64
        %v12087 = vpop.permute.xlu0 %12086
        %12088 = vrot.lane.b32.xlu0 %v11998, 64
        %v12089 = vpop.permute.xlu0 %12088
        %12090 = vrot.lane.b32.xlu0 %v11999, 64
        %v12091 = vpop.permute.xlu0 %12090
        %12092 = vrot.lane.b32.xlu0 %v12000, 64
        %v12093 = vpop.permute.xlu0 %12092
        %12094 = vrot.lane.b32.xlu0 %v12001, 64
        %v12095 = vpop.permute.xlu0 %12094
        %12096 = vrot.lane.b32.xlu0 %v12002, 64
        %v12097 = vpop.permute.xlu0 %12096
        %12098 = vrot.lane.b32.xlu0 %v12003, 64
        %v12099 = vpop.permute.xlu0 %12098
        %12100 = vrot.lane.b32.xlu0 %v12004, 64
        %v12101 = vpop.permute.xlu0 %12100
        %12102 = vrot.lane.b32.xlu0 %v12005, 64
        %v12103 = vpop.permute.xlu0 %12102
        %12104 = vrot.lane.b32.xlu0 %v12006, 64
        %v12105 = vpop.permute.xlu0 %12104
        %12106 = vrot.lane.b32.xlu0 %v12007, 64
        %v12107 = vpop.permute.xlu0 %12106
        %12108 = vrot.lane.b32.xlu0 %v12008, 64
        %v12109 = vpop.permute.xlu0 %12108
        %12110 = vrot.lane.b32.xlu0 %v12009, 64
        %v12111 = vpop.permute.xlu0 %12110
        %12146 = vst.msk [vmem:[#allocation4 + $0xc] sm:$0xf] %vm6935, %v12045
        %12147 = vst.msk [vmem:[#allocation4 + $0x10] sm:$0xf] %vm6935, %v12047
        %12148 = vst.msk [vmem:[#allocation4 + $0x14] sm:$0xf] %vm6935, %v12049
        %12149 = vst.msk [vmem:[#allocation4 + $0x18] sm:$0xf] %vm6935, %v12051
        %12150 = vst.msk [vmem:[#allocation4 + $0x1c] sm:$0xf] %vm6935, %v12053
        %12151 = vst.msk [vmem:[#allocation4 + $0x20] sm:$0xf] %vm6935, %v12055
        %12152 = vst.msk [vmem:[#allocation4 + $0x24] sm:$0xf] %vm6935, %v12057
        %12153 = vst.msk [vmem:[#allocation4 + $0x28] sm:$0xf] %vm6935, %v12059
        %12154 = vst.msk [vmem:[#allocation4 + $0x2c] sm:$0xf] %vm6935, %v12061
        %12155 = vst.msk [vmem:[#allocation4 + $0x30] sm:$0xf] %vm6935, %v12063
        %12156 = vst.msk [vmem:[#allocation4 + $0x34] sm:$0xf] %vm6935, %v12065
        %12157 = vst.msk [vmem:[#allocation4 + $0x38] sm:$0xf] %vm6935, %v12067
        %12158 = vst.msk [vmem:[#allocation4 + $0x3c] sm:$0xf] %vm6935, %v12069
        %12159 = vst.msk [vmem:[#allocation4 + $0x40] sm:$0xf] %vm6935, %v12071
        %12160 = vst.msk [vmem:[#allocation4 + $0x44] sm:$0xf] %vm6935, %v12073
        %12161 = vst.msk [vmem:[#allocation4 + $0x48] sm:$0xf] %vm6935, %v12075
        %12162 = vst.msk [vmem:[#allocation4 + $0x4c] sm:$0xf] %vm6935, %v12077
        %12163 = vst.msk [vmem:[#allocation4 + $0x50] sm:$0xf] %vm6935, %v12079
        %12164 = vst.msk [vmem:[#allocation4 + $0x54] sm:$0xf] %vm6935, %v12081
        %12165 = vst.msk [vmem:[#allocation4 + $0x58] sm:$0xf] %vm6935, %v12083
        %12166 = vst.msk [vmem:[#allocation4 + $0x5c] sm:$0xf] %vm6935, %v12085
        %12167 = vst.msk [vmem:[#allocation4 + $0x60] sm:$0xf] %vm6935, %v12087
        %12168 = vst.msk [vmem:[#allocation4 + $0x64] sm:$0xf] %vm6935, %v12089
        %12169 = vst.msk [vmem:[#allocation4 + $0x68] sm:$0xf] %vm6935, %v12091
        %12170 = vst.msk [vmem:[#allocation4 + $0x6c] sm:$0xf] %vm6935, %v12093
        %12171 = vst.msk [vmem:[#allocation4 + $0x70] sm:$0xf] %vm6935, %v12095
        %12172 = vst.msk [vmem:[#allocation4 + $0x74] sm:$0xf] %vm6935, %v12097
        %12173 = vst.msk [vmem:[#allocation4 + $0x78] sm:$0xf] %vm6935, %v12099
        %12174 = vst.msk [vmem:[#allocation4 + $0x7c] sm:$0xf] %vm6935, %v12101
        %12175 = vst.msk [vmem:[#allocation4 + $0x80] sm:$0xf] %vm6935, %v12103
        %12176 = vst.msk [vmem:[#allocation4 + $0x84] sm:$0xf] %vm6935, %v12105
        %12177 = vst.msk [vmem:[#allocation4 + $0x88] sm:$0xf] %vm6935, %v12107
        %12178 = vst.msk [vmem:[#allocation4 + $0x8c] sm:$0xf] %vm6935, %v12109
        %12179 = vst.msk [vmem:[#allocation4 + $0x90] sm:$0xf] %vm6935, %v12111
      $region53: #{convlstm_forward.1} parent=47 // loop_footer
        %s1729 = sadd.s32 1, %s1725
      $region54: #{convlstm_forward.1} parent=47 // loop_footer_branch
        %1724 = sbr.rel target = $region50
      $region55: #{convlstm_forward.1} parent=47 // loop_exit
        _
      %v12180 = vld [vmem:[%s5] sm:$0xff]
      %v12181 = vld [vmem:[%s5 + $0x8] sm:$0xff]
      %v12182 = vld [vmem:[%s5 + $0x10] sm:$0xff]
      %v12183 = vld [vmem:[%s5 + $0x18] sm:$0xff]
      %v12184 = vld [vmem:[%s6] sm:$0x1]
      %v12186 = vperm.slane %v12184, 0
      %12222 = vrot.lane.b32.xlu0 %v1730, 64
      %v12223 = vpop.permute.xlu0 %12222
      %12224 = vrot.lane.b32.xlu0 %v1731, 64
      %v12225 = vpop.permute.xlu0 %12224
      %12226 = vrot.lane.b32.xlu0 %v1732, 64
      %v12227 = vpop.permute.xlu0 %12226
      %12228 = vrot.lane.b32.xlu0 %v1733, 64
      %v12229 = vpop.permute.xlu0 %12228
      %12230 = vrot.lane.b32.xlu0 %v1734, 64
      %v12231 = vpop.permute.xlu0 %12230
      %12232 = vrot.lane.b32.xlu0 %v1735, 64
      %v12233 = vpop.permute.xlu0 %12232
      %12234 = vrot.lane.b32.xlu0 %v1736, 64
      %v12235 = vpop.permute.xlu0 %12234
      %12236 = vrot.lane.b32.xlu0 %v1737, 64
      %v12237 = vpop.permute.xlu0 %12236
      %12238 = vrot.lane.b32.xlu0 %v1738, 64
      %v12239 = vpop.permute.xlu0 %12238
      %12240 = vrot.lane.b32.xlu0 %v1739, 64
      %v12241 = vpop.permute.xlu0 %12240
      %12242 = vrot.lane.b32.xlu0 %v1740, 64
      %v12243 = vpop.permute.xlu0 %12242
      %12244 = vrot.lane.b32.xlu0 %v1741, 64
      %v12245 = vpop.permute.xlu0 %12244
      %12246 = vrot.lane.b32.xlu0 %v1742, 64
      %v12247 = vpop.permute.xlu0 %12246
      %12248 = vrot.lane.b32.xlu0 %v1743, 64
      %v12249 = vpop.permute.xlu0 %12248
      %12250 = vrot.lane.b32.xlu0 %v1744, 64
      %v12251 = vpop.permute.xlu0 %12250
      %12252 = vrot.lane.b32.xlu0 %v1745, 64
      %v12253 = vpop.permute.xlu0 %12252
      %12254 = vrot.lane.b32.xlu0 %v1746, 64
      %v12255 = vpop.permute.xlu0 %12254
      %12256 = vrot.lane.b32.xlu0 %v1747, 64
      %v12257 = vpop.permute.xlu0 %12256
      %12258 = vrot.lane.b32.xlu0 %v1748, 64
      %v12259 = vpop.permute.xlu0 %12258
      %12260 = vrot.lane.b32.xlu0 %v1749, 64
      %v12261 = vpop.permute.xlu0 %12260
      %12262 = vrot.lane.b32.xlu0 %v1750, 64
      %v12263 = vpop.permute.xlu0 %12262
      %12264 = vrot.lane.b32.xlu0 %v1751, 64
      %v12265 = vpop.permute.xlu0 %12264
      %12266 = vrot.lane.b32.xlu0 %v1752, 64
      %v12267 = vpop.permute.xlu0 %12266
      %12268 = vrot.lane.b32.xlu0 %v1753, 64
      %v12269 = vpop.permute.xlu0 %12268
      %12270 = vrot.lane.b32.xlu0 %v1754, 64
      %v12271 = vpop.permute.xlu0 %12270
      %12272 = vrot.lane.b32.xlu0 %v1755, 64
      %v12273 = vpop.permute.xlu0 %12272
      %12274 = vrot.lane.b32.xlu0 %v1756, 64
      %v12275 = vpop.permute.xlu0 %12274
      %12276 = vrot.lane.b32.xlu0 %v1757, 64
      %v12277 = vpop.permute.xlu0 %12276
      %12278 = vrot.lane.b32.xlu0 %v1758, 64
      %v12279 = vpop.permute.xlu0 %12278
      %12280 = vrot.lane.b32.xlu0 %v1759, 64
      %v12281 = vpop.permute.xlu0 %12280
      %12282 = vrot.lane.b32.xlu0 %v1760, 64
      %v12283 = vpop.permute.xlu0 %12282
      %12284 = vrot.lane.b32.xlu0 %v1761, 64
      %v12285 = vpop.permute.xlu0 %12284
      %12286 = vrot.lane.b32.xlu0 %v1762, 64
      %v12287 = vpop.permute.xlu0 %12286
      %12288 = vrot.lane.b32.xlu0 %v1763, 64
      %v12289 = vpop.permute.xlu0 %12288
      %v12290 = vsel %vm321, %v12223, 0
      %v12292 = vsel %vm321, %v12225, 0
      %v12294 = vsel %vm321, %v12227, 0
      %v12296 = vsel %vm321, %v12229, 0
      %v12298 = vsel %vm321, %v12231, 0
      %v12300 = vsel %vm321, %v12233, 0
      %v12302 = vsel %vm321, %v12235, 0
      %v12304 = vsel %vm321, %v12237, 0
      %v12306 = vsel %vm321, %v12239, 0
      %v12308 = vsel %vm321, %v12241, 0
      %v12310 = vsel %vm321, %v12243, 0
      %v12312 = vsel %vm321, %v12245, 0
      %v12314 = vsel %vm321, %v12247, 0
      %v12316 = vsel %vm321, %v12249, 0
      %v12318 = vsel %vm321, %v12251, 0
      %v12320 = vsel %vm321, %v12253, 0
      %v12322 = vsel %vm321, %v12255, 0
      %v12324 = vsel %vm321, %v12257, 0
      %v12326 = vsel %vm321, %v12259, 0
      %v12328 = vsel %vm321, %v12261, 0
      %v12330 = vsel %vm321, %v12263, 0
      %v12332 = vsel %vm321, %v12265, 0
      %v12334 = vsel %vm321, %v12267, 0
      %v12336 = vsel %vm321, %v12269, 0
      %v12338 = vsel %vm321, %v12271, 0
      %v12340 = vsel %vm321, %v12273, 0
      %v12342 = vsel %vm321, %v12275, 0
      %v12344 = vsel %vm321, %v12277, 0
      %v12346 = vsel %vm321, %v12279, 0
      %v12348 = vsel %vm321, %v12281, 0
      %v12350 = vsel %vm321, %v12283, 0
      %v12352 = vsel %vm321, %v12285, 0
      %v12354 = vsel %vm321, %v12287, 0
      %v12356 = vsel %vm321, %v12289, 0
      %12358 = vmatpush.msra.mxu0 0.0
      %12359 = vmatpush.msra.mxu0 0.0
      %12360 = vmatpush.msra.mxu0 0.0
      %12361 = vmatpush.msra.mxu0 0.0
      %12362 = vmatpush.msra.mxu0 0.0
      %12363 = vmatpush.msra.mxu0 0.0
      %12364 = vmatpush.msra.mxu0 0.0
      %12365 = vmatpush.msra.mxu0 0.0
      %12366 = vmatpush.msra.mxu0 0.0
      %12367 = vmatpush.msra.mxu0 0.0
      %12368 = vmatpush.msra.mxu0 0.0
      %12369 = vmatpush.msra.mxu0 0.0
      %12370 = vmatpush.msra.mxu0 %v12183
      %12371 = vmatpush.msra.mxu0 %v12182
      %12372 = vmatpush.msra.mxu0 %v12181
      %12373 = vmatpush.msra.mxu0 %v12180
      %12374 = vmatmul.f32.gmra.mxu0 %v12290
      %v12375 = vpop.f32.mrf.mxu0
      %v12376 = vadd.f32 %v12186, %v12375
      %12377 = vmatmul.f32.gmra.mxu0 %v12292
      %v12378 = vpop.f32.mrf.mxu0
      %v12379 = vadd.f32 %v12186, %v12378
      %12380 = vmatmul.f32.gmra.mxu0 %v12294
      %v12381 = vpop.f32.mrf.mxu0
      %v12382 = vadd.f32 %v12186, %v12381
      %12383 = vmatmul.f32.gmra.mxu0 %v12296
      %v12384 = vpop.f32.mrf.mxu0
      %v12385 = vadd.f32 %v12186, %v12384
      %12386 = vmatmul.f32.gmra.mxu0 %v12298
      %v12387 = vpop.f32.mrf.mxu0
      %v12388 = vadd.f32 %v12186, %v12387
      %12389 = vmatmul.f32.gmra.mxu0 %v12300
      %v12390 = vpop.f32.mrf.mxu0
      %v12391 = vadd.f32 %v12186, %v12390
      %12392 = vmatmul.f32.gmra.mxu0 %v12302
      %v12393 = vpop.f32.mrf.mxu0
      %v12394 = vadd.f32 %v12186, %v12393
      %12395 = vmatmul.f32.gmra.mxu0 %v12304
      %v12396 = vpop.f32.mrf.mxu0
      %v12397 = vadd.f32 %v12186, %v12396
      %12398 = vmatmul.f32.gmra.mxu0 %v12306
      %v12399 = vpop.f32.mrf.mxu0
      %v12400 = vadd.f32 %v12186, %v12399
      %12401 = vmatmul.f32.gmra.mxu0 %v12308
      %v12402 = vpop.f32.mrf.mxu0
      %v12403 = vadd.f32 %v12186, %v12402
      %12404 = vmatmul.f32.gmra.mxu0 %v12310
      %v12405 = vpop.f32.mrf.mxu0
      %v12406 = vadd.f32 %v12186, %v12405
      %12407 = vmatmul.f32.gmra.mxu0 %v12312
      %v12408 = vpop.f32.mrf.mxu0
      %v12409 = vadd.f32 %v12186, %v12408
      %12410 = vmatmul.f32.gmra.mxu0 %v12314
      %v12411 = vpop.f32.mrf.mxu0
      %v12412 = vadd.f32 %v12186, %v12411
      %12413 = vmatmul.f32.gmra.mxu0 %v12316
      %v12414 = vpop.f32.mrf.mxu0
      %v12415 = vadd.f32 %v12186, %v12414
      %12416 = vmatmul.f32.gmra.mxu0 %v12318
      %v12417 = vpop.f32.mrf.mxu0
      %v12418 = vadd.f32 %v12186, %v12417
      %12419 = vmatmul.f32.gmra.mxu0 %v12320
      %v12420 = vpop.f32.mrf.mxu0
      %v12421 = vadd.f32 %v12186, %v12420
      %12422 = vmatmul.f32.gmra.mxu0 %v12322
      %v12423 = vpop.f32.mrf.mxu0
      %v12424 = vadd.f32 %v12186, %v12423
      %12425 = vmatmul.f32.gmra.mxu0 %v12324
      %v12426 = vpop.f32.mrf.mxu0
      %v12427 = vadd.f32 %v12186, %v12426
      %12428 = vmatmul.f32.gmra.mxu0 %v12326
      %v12429 = vpop.f32.mrf.mxu0
      %v12430 = vadd.f32 %v12186, %v12429
      %12431 = vmatmul.f32.gmra.mxu0 %v12328
      %v12432 = vpop.f32.mrf.mxu0
      %v12433 = vadd.f32 %v12186, %v12432
      %12434 = vmatmul.f32.gmra.mxu0 %v12330
      %v12435 = vpop.f32.mrf.mxu0
      %v12436 = vadd.f32 %v12186, %v12435
      %12437 = vmatmul.f32.gmra.mxu0 %v12332
      %v12438 = vpop.f32.mrf.mxu0
      %v12439 = vadd.f32 %v12186, %v12438
      %12440 = vmatmul.f32.gmra.mxu0 %v12334
      %v12441 = vpop.f32.mrf.mxu0
      %v12442 = vadd.f32 %v12186, %v12441
      %12443 = vmatmul.f32.gmra.mxu0 %v12336
      %v12444 = vpop.f32.mrf.mxu0
      %v12445 = vadd.f32 %v12186, %v12444
      %12446 = vmatmul.f32.gmra.mxu0 %v12338
      %v12447 = vpop.f32.mrf.mxu0
      %v12448 = vadd.f32 %v12186, %v12447
      %12449 = vmatmul.f32.gmra.mxu0 %v12340
      %v12450 = vpop.f32.mrf.mxu0
      %v12451 = vadd.f32 %v12186, %v12450
      %12452 = vmatmul.f32.gmra.mxu0 %v12342
      %v12453 = vpop.f32.mrf.mxu0
      %v12454 = vadd.f32 %v12186, %v12453
      %12455 = vmatmul.f32.gmra.mxu0 %v12344
      %v12456 = vpop.f32.mrf.mxu0
      %v12457 = vadd.f32 %v12186, %v12456
      %12458 = vmatmul.f32.gmra.mxu0 %v12346
      %v12459 = vpop.f32.mrf.mxu0
      %v12460 = vadd.f32 %v12186, %v12459
      %12461 = vmatmul.f32.gmra.mxu0 %v12348
      %v12462 = vpop.f32.mrf.mxu0
      %v12463 = vadd.f32 %v12186, %v12462
      %12464 = vmatmul.f32.gmra.mxu0 %v12350
      %v12465 = vpop.f32.mrf.mxu0
      %v12466 = vadd.f32 %v12186, %v12465
      %12467 = vmatmul.f32.gmra.mxu0 %v12352
      %v12468 = vpop.f32.mrf.mxu0
      %v12469 = vadd.f32 %v12186, %v12468
      %12470 = vmatmul.f32.gmra.mxu0 %v12354
      %v12471 = vpop.f32.mrf.mxu0
      %v12472 = vadd.f32 %v12186, %v12471
      %12473 = vmatmul.f32.gmra.mxu0 %v12356
      %v12474 = vpop.f32.mrf.mxu0
      %v12475 = vadd.f32 %v12186, %v12474
      %12476 = vdwg.mxu0
      %v12477 = vmax.f32 %v12376, 0.0
      %v12478 = vmax.f32 %v12379, 0.0
      %v12479 = vmax.f32 %v12382, 0.0
      %v12480 = vmax.f32 %v12385, 0.0
      %v12481 = vmax.f32 %v12388, 0.0
      %v12482 = vmax.f32 %v12391, 0.0
      %v12483 = vmax.f32 %v12394, 0.0
      %v12484 = vmax.f32 %v12397, 0.0
      %v12485 = vmax.f32 %v12400, 0.0
      %v12486 = vmax.f32 %v12403, 0.0
      %v12487 = vmax.f32 %v12406, 0.0
      %v12488 = vmax.f32 %v12409, 0.0
      %v12489 = vmax.f32 %v12412, 0.0
      %v12490 = vmax.f32 %v12415, 0.0
      %v12491 = vmax.f32 %v12418, 0.0
      %v12492 = vmax.f32 %v12421, 0.0
      %v12493 = vmax.f32 %v12424, 0.0
      %v12494 = vmax.f32 %v12427, 0.0
      %v12495 = vmax.f32 %v12430, 0.0
      %v12496 = vmax.f32 %v12433, 0.0
      %v12497 = vmax.f32 %v12436, 0.0
      %v12498 = vmax.f32 %v12439, 0.0
      %v12499 = vmax.f32 %v12442, 0.0
      %v12500 = vmax.f32 %v12445, 0.0
      %v12501 = vmax.f32 %v12448, 0.0
      %v12502 = vmax.f32 %v12451, 0.0
      %v12503 = vmax.f32 %v12454, 0.0
      %v12504 = vmax.f32 %v12457, 0.0
      %v12505 = vmax.f32 %v12460, 0.0
      %v12506 = vmax.f32 %v12463, 0.0
      %v12507 = vmax.f32 %v12466, 0.0
      %v12508 = vmax.f32 %v12469, 0.0
      %v12509 = vmax.f32 %v12472, 0.0
      %v12510 = vmax.f32 %v12475, 0.0
      %v12511 = vmin.f32 %v12477, 1.0
      %v12512 = vmin.f32 %v12478, 1.0
      %v12513 = vmin.f32 %v12479, 1.0
      %v12514 = vmin.f32 %v12480, 1.0
      %v12515 = vmin.f32 %v12481, 1.0
      %v12516 = vmin.f32 %v12482, 1.0
      %v12517 = vmin.f32 %v12483, 1.0
      %v12518 = vmin.f32 %v12484, 1.0
      %v12519 = vmin.f32 %v12485, 1.0
      %v12520 = vmin.f32 %v12486, 1.0
      %v12521 = vmin.f32 %v12487, 1.0
      %v12522 = vmin.f32 %v12488, 1.0
      %v12523 = vmin.f32 %v12489, 1.0
      %v12524 = vmin.f32 %v12490, 1.0
      %v12525 = vmin.f32 %v12491, 1.0
      %v12526 = vmin.f32 %v12492, 1.0
      %v12527 = vmin.f32 %v12493, 1.0
      %v12528 = vmin.f32 %v12494, 1.0
      %v12529 = vmin.f32 %v12495, 1.0
      %v12530 = vmin.f32 %v12496, 1.0
      %v12531 = vmin.f32 %v12497, 1.0
      %v12532 = vmin.f32 %v12498, 1.0
      %v12533 = vmin.f32 %v12499, 1.0
      %v12534 = vmin.f32 %v12500, 1.0
      %v12535 = vmin.f32 %v12501, 1.0
      %v12536 = vmin.f32 %v12502, 1.0
      %v12537 = vmin.f32 %v12503, 1.0
      %v12538 = vmin.f32 %v12504, 1.0
      %v12539 = vmin.f32 %v12505, 1.0
      %v12540 = vmin.f32 %v12506, 1.0
      %v12541 = vmin.f32 %v12507, 1.0
      %v12542 = vmin.f32 %v12508, 1.0
      %v12543 = vmin.f32 %v12509, 1.0
      %v12544 = vmin.f32 %v12510, 1.0
      %vm12545 = vcmask 31744
      %12546 = vst.msk [vmem:[%s278] sm:$0xff] %vm12545, %v12511
      %12547 = vst.msk [vmem:[%s278 + $0x8] sm:$0xff] %vm12545, %v12512
      %12548 = vst.msk [vmem:[%s278 + $0x10] sm:$0xff] %vm12545, %v12513
      %12549 = vst.msk [vmem:[%s278 + $0x18] sm:$0xff] %vm12545, %v12514
      %12550 = vst.msk [vmem:[%s278 + $0x20] sm:$0xff] %vm12545, %v12515
      %12551 = vst.msk [vmem:[%s278 + $0x28] sm:$0xff] %vm12545, %v12516
      %12552 = vst.msk [vmem:[%s278 + $0x30] sm:$0xff] %vm12545, %v12517
      %12553 = vst.msk [vmem:[%s278 + $0x38] sm:$0xff] %vm12545, %v12518
      %12554 = vst.msk [vmem:[%s278 + $0x40] sm:$0xff] %vm12545, %v12519
      %12555 = vst.msk [vmem:[%s278 + $0x48] sm:$0xff] %vm12545, %v12520
      %12556 = vst.msk [vmem:[%s278 + $0x50] sm:$0xff] %vm12545, %v12521
      %12557 = vst.msk [vmem:[%s278 + $0x58] sm:$0xff] %vm12545, %v12522
      %12558 = vst.msk [vmem:[%s278 + $0x60] sm:$0xff] %vm12545, %v12523
      %12559 = vst.msk [vmem:[%s278 + $0x68] sm:$0xff] %vm12545, %v12524
      %12560 = vst.msk [vmem:[%s278 + $0x70] sm:$0xff] %vm12545, %v12525
      %12561 = vst.msk [vmem:[%s278 + $0x78] sm:$0xff] %vm12545, %v12526
      %12562 = vst.msk [vmem:[%s278 + $0x80] sm:$0xff] %vm12545, %v12527
      %12563 = vst.msk [vmem:[%s278 + $0x88] sm:$0xff] %vm12545, %v12528
      %12564 = vst.msk [vmem:[%s278 + $0x90] sm:$0xff] %vm12545, %v12529
      %12565 = vst.msk [vmem:[%s278 + $0x98] sm:$0xff] %vm12545, %v12530
      %12566 = vst.msk [vmem:[%s278 + $0xa0] sm:$0xff] %vm12545, %v12531
      %12567 = vst.msk [vmem:[%s278 + $0xa8] sm:$0xff] %vm12545, %v12532
      %12568 = vst.msk [vmem:[%s278 + $0xb0] sm:$0xff] %vm12545, %v12533
      %12569 = vst.msk [vmem:[%s278 + $0xb8] sm:$0xff] %vm12545, %v12534
      %12570 = vst.msk [vmem:[%s278 + $0xc0] sm:$0xff] %vm12545, %v12535
      %12571 = vst.msk [vmem:[%s278 + $0xc8] sm:$0xff] %vm12545, %v12536
      %12572 = vst.msk [vmem:[%s278 + $0xd0] sm:$0xff] %vm12545, %v12537
      %12573 = vst.msk [vmem:[%s278 + $0xd8] sm:$0xff] %vm12545, %v12538
      %12574 = vst.msk [vmem:[%s278 + $0xe0] sm:$0xff] %vm12545, %v12539
      %12575 = vst.msk [vmem:[%s278 + $0xe8] sm:$0xff] %vm12545, %v12540
      %12576 = vst.msk [vmem:[%s278 + $0xf0] sm:$0xff] %vm12545, %v12541
      %12577 = vst.msk [vmem:[%s278 + $0xf8] sm:$0xff] %vm12545, %v12542
      %12578 = vst.msk [vmem:[%s278 + $0x100] sm:$0xff] %vm12545, %v12543
      %12579 = vst.msk [vmem:[%s278 + $0x108] sm:$0xff] %vm12545, %v12544
      %p12580 = scmp.lt.s32.totalorder %s18, 1
      %s12581 = scalar_select %p12580, %s18, 1
      %s12582 = smul.addr %s12581, 34
      %s12583 = smul.addr %s12582, 8
      %s12584 = scalar_lea.vmem %s7, %s12583
      // Predicated region
      $region56: #{convlstm_forward.1} parent=47 // pred_check
        %p12585 = pneg %p188
      $region57: #{convlstm_forward.1} parent=47 // pred_check_branch
        %12587 = sbr.rel (%p12585) target = $region59
      $region58: #{convlstm_forward.1} parent=47 // pred_region
        _
      $region59: #{convlstm_forward.1} parent=47 // pred_fallthru
        _
    $region48: #{convlstm_forward.1} parent=5 // pred_fallthru
      _
    %p12588 = scmp.le.s32.totalorder 2, %s13
    // Predicated region
    $region60: #{convlstm_forward.1} parent=5 // pred_check
      %p12589 = pneg %p12588
    $region61: #{convlstm_forward.1} parent=5 // pred_check_branch
      %12591 = sbr.rel (%p12589) target = $region63
    $region62: #{convlstm_forward.1} parent=5 // pred_region
      %s12592 = ssub.s32 %s13, 2
      // Predicated region
      $region64: #{convlstm_forward.1} parent=62 // pred_check
        %p12593 = pneg %p194
      $region65: #{convlstm_forward.1} parent=62 // pred_check_branch
        %12595 = sbr.rel (%p12593) target = $region67
      $region66: #{convlstm_forward.1} parent=62 // pred_region
        %p12596 = scmp.lt.s32.totalorder %s19, 1
        %s12597 = scalar_select %p12596, %s19, 1
        %s12598 = smul.addr %s12597, 34
        %s12599 = smul.addr %s12598, 8
        %s12600 = scalar_lea.vmem %s7, %s12599
      $region67: #{convlstm_forward.1} parent=62 // pred_fallthru
        _
    $region63: #{convlstm_forward.1} parent=5 // pred_fallthru
      _
  $region6: #{convlstm_forward.1} parent=0 // loop_footer
    %s17 = sadd.s32 1, %s13
  $region7: #{convlstm_forward.1} parent=0 // loop_footer_branch
    %12 = sbr.rel target = $region3
  $region8: #{convlstm_forward.1} parent=0 // loop_exit
    _

</llo_original>
